<compile_context>
chip_gen: v7x
topology: tpu7x:2x2x1
jax: 0.10.0
libtpu: 0.0.40
codegen_flags: <defaults>
</compile_context>

<pallas_src>
import jax
import jax.numpy as jnp
from jax.experimental import pallas as pl
from jax.experimental.pallas import tpu as pltpu


# ----------------------------------------------------------------------------
# Pallas kernels
# ----------------------------------------------------------------------------
def _convT_bn_relu_kernel(w_ref, x_ref, scale_ref, shift_ref, o_ref):
    # y = relu((W @ patches) * scale + shift)   (Conv + folded BN + ReLU)
    # W: (Cout, K) bf16, patches block: (K, tn) bf16, scale/shift: (Cout, 1) f32.
    acc = jnp.dot(w_ref[...], x_ref[...], preferred_element_type=jnp.float32)
    y = acc * scale_ref[...] + shift_ref[...]
    o_ref[...] = jnp.maximum(y, 0.0).astype(o_ref.dtype)


def convT_bn_relu(w, patches, scale, shift, *, tn=1024):
    """w: (Cout, K) bf16, patches: (K, M) bf16, scale/shift: (Cout, 1) f32.

    Returns (Cout, M) bf16 — M (batch*spatial) on the lane axis -> dense stores.
    """
    C, K = w.shape
    Kp, M = patches.shape
    assert K == Kp
    tn = M if M <= tn else tn              # full-dim block for small M
    grid = (pl.cdiv(M, tn),)
    return pl.pallas_call(
        _convT_bn_relu_kernel,
        out_shape=jax.ShapeDtypeStruct((C, M), jnp.bfloat16),
        grid_spec=pltpu.PrefetchScalarGridSpec(
            num_scalar_prefetch=0,
            grid=grid,
            in_specs=[
                pl.BlockSpec((C, K), lambda i: (0, 0)),
                pl.BlockSpec((K, tn), lambda i: (0, i)),
                pl.BlockSpec((C, 1), lambda i: (0, 0)),
                pl.BlockSpec((C, 1), lambda i: (0, 0)),
            ],
            out_specs=pl.BlockSpec((C, tn), lambda i: (0, i)),
        ),
        compiler_params=pltpu.CompilerParams(
            dimension_semantics=("parallel",)),
    )(w, patches, scale, shift)


def _fc_fused_kernel(x_ref, w1_ref, b1_ref, w2_ref, b2_ref, o_ref):
    # Single step: h = relu(flat @ W1 + b1);  o = h @ W2 + b2.
    # No accumulator scratch / pl.when needed since the full K is resident.
    h = jnp.dot(x_ref[...], w1_ref[...], preferred_element_type=jnp.float32)
    h = jnp.maximum(h + b1_ref[...], 0.0).astype(jnp.bfloat16)
    o = jnp.dot(h, w2_ref[...], preferred_element_type=jnp.float32)
    o_ref[...] = (o + b2_ref[...]).astype(o_ref.dtype)


def fc_fused(flat, w1, b1, w2, b2, *, tm=256):
    """flat:(M,6272) bf16, w1:(6272,256) bf16, b1:(1,256) f32,
    w2:(256,A) bf16, b2:(1,A) f32 -> (M, A) f32."""
    M, K = flat.shape
    K1, H = w1.shape
    H2, A = w2.shape
    assert K == K1 and H == H2
    tm = M if M <= tm else tm              # full-dim block for small batch
    grid = (pl.cdiv(M, tm),)
    # VMEM at tm=256: flat block 3.2 MB + w1 3.2 MB (x2 buffers) ~= 13 MB,
    # under the 32 MiB scoped default on every generation incl. v7x.
    return pl.pallas_call(
        _fc_fused_kernel,
        out_shape=jax.ShapeDtypeStruct((M, A), jnp.float32),
        grid_spec=pltpu.PrefetchScalarGridSpec(
            num_scalar_prefetch=0,
            grid=grid,
            in_specs=[
                pl.BlockSpec((tm, K), lambda i: (i, 0)),
                pl.BlockSpec((K, H), lambda i: (0, 0)),
                pl.BlockSpec((1, H), lambda i: (0, 0)),
                pl.BlockSpec((H, A), lambda i: (0, 0)),
                pl.BlockSpec((1, A), lambda i: (0, 0)),
            ],
            out_specs=pl.BlockSpec((tm, A), lambda i: (i, 0)),
        ),
        compiler_params=pltpu.CompilerParams(
            dimension_semantics=("parallel",)),
    )(flat, w1, b1, w2, b2)


# ----------------------------------------------------------------------------
# Plain-JAX glue: channel-major im2col via static strided slices (no gathers)
# ----------------------------------------------------------------------------
def im2col_t(x_cm, k, s):
    """x_cm: (C, N, H, W) -> patches (k*k*C, N*Ho*Wo), row order (kh, kw, c)."""
    C, N, H, W = x_cm.shape
    Ho = (H - k) // s + 1
    Wo = (W - k) // s + 1
    pieces = []
    for kh in range(k):
        for kw in range(k):
            sl = jax.lax.slice(
                x_cm,
                (0, 0, kh, kw),
                (C, N, kh + (Ho - 1) * s + 1, kw + (Wo - 1) * s + 1),
                (1, 1, s, s))                         # (C, N, Ho, Wo)
            pieces.append(sl)
    p = jnp.stack(pieces, axis=0)                     # (k*k, C, N, Ho, Wo)
    return p.reshape(k * k * C, N * Ho * Wo), Ho, Wo


# ----------------------------------------------------------------------------
# Parameters: torch-layout synthetic init, kernel-ready transform, reference
# ----------------------------------------------------------------------------
def init_torch_params(key, action_size):
    ks = jax.random.split(key, 16)
    f32 = jnp.float32
    return dict(
        conv1_w=0.05 * jax.random.normal(ks[0], (16, 1, 8, 8), f32),
        conv1_b=0.05 * jax.random.normal(ks[1], (16,), f32),
        bn1_g=1.0 + 0.1 * jax.random.normal(ks[2], (16,), f32),
        bn1_b=0.1 * jax.random.normal(ks[3], (16,), f32),
        bn1_m=0.05 * jax.random.normal(ks[4], (16,), f32),
        bn1_v=1.0 + 0.1 * jax.random.uniform(ks[5], (16,), f32),
        conv2_w=0.05 * jax.random.normal(ks[6], (32, 16, 4, 4), f32),
        conv2_b=0.05 * jax.random.normal(ks[7], (32,), f32),
        bn2_g=1.0 + 0.1 * jax.random.normal(ks[8], (32,), f32),
        bn2_b=0.1 * jax.random.normal(ks[9], (32,), f32),
        bn2_m=0.05 * jax.random.normal(ks[10], (32,), f32),
        bn2_v=1.0 + 0.1 * jax.random.uniform(ks[11], (32,), f32),
        fc1_w=0.01 * jax.random.normal(ks[12], (256, 32 * 14 * 14), f32),
        fc1_b=0.01 * jax.random.normal(ks[13], (256,), f32),
        fc2_w=0.05 * jax.random.normal(ks[14], (action_size, 256), f32),
        fc2_b=0.01 * jax.random.normal(ks[15], (action_size,), f32),
    )


def prepare_params(tp):
    """Torch-layout params -> kernel-ready (bf16 MXU weights, folded BN)."""
    eps = 1e-5

    def fold_bn(gamma, beta, mean, var, conv_b):
        scale = gamma / jnp.sqrt(var + eps)
        shift = beta + (conv_b - mean) * scale
        return scale, shift

    def conv_w_mat(w):  # (Cout, Cin, kh, kw) -> (Cout, kh*kw*Cin)
        cout = w.shape[0]
        return jnp.transpose(w, (0, 2, 3, 1)).reshape(cout, -1)

    s1, t1 = fold_bn(tp["bn1_g"], tp["bn1_b"], tp["bn1_m"], tp["bn1_v"], tp["conv1_b"])
    s2, t2 = fold_bn(tp["bn2_g"], tp["bn2_b"], tp["bn2_m"], tp["bn2_v"], tp["conv2_b"])

    # Channel-major intermediates mean the flatten feeding fc1 is exactly
    # torch's (c, h, w) order -> no fc1_w row permutation needed.
    return dict(
        w1=conv_w_mat(tp["conv1_w"]).astype(jnp.bfloat16),           # (16, 64)
        scale1=s1.reshape(-1, 1).astype(jnp.float32),
        shift1=t1.reshape(-1, 1).astype(jnp.float32),
        w2=conv_w_mat(tp["conv2_w"]).astype(jnp.bfloat16),           # (32, 256)
        scale2=s2.reshape(-1, 1).astype(jnp.float32),
        shift2=t2.reshape(-1, 1).astype(jnp.float32),
        fc1_w=tp["fc1_w"].T.astype(jnp.bfloat16),                    # (6272, 256)
        fc1_b=tp["fc1_b"].reshape(1, -1).astype(jnp.float32),
        fc2_w=tp["fc2_w"].T.astype(jnp.bfloat16),                    # (256, A)
        fc2_b=tp["fc2_b"].reshape(1, -1).astype(jnp.float32),
    )


@jax.jit
def reference_forward(x, p):
    """Plain-JAX f32 reference of the original NCHW torch graph (eval-mode BN)."""
    eps = 1e-5
    hp = jax.lax.Precision.HIGHEST

    def conv_bn_relu(x, w, b, g, beta, m, v, s):
        y = jax.lax.conv_general_dilated(
            x, w, window_strides=(s, s), padding="VALID",
            dimension_numbers=("NCHW", "OIHW", "NCHW"), precision=hp)
        y = y + b.reshape(1, -1, 1, 1)
        y = (y - m.reshape(1, -1, 1, 1)) * jax.lax.rsqrt(v.reshape(1, -1, 1, 1) + eps)
        y = y * g.reshape(1, -1, 1, 1) + beta.reshape(1, -1, 1, 1)
        return jnp.maximum(y, 0.0)

    y = conv_bn_relu(x, p["conv1_w"], p["conv1_b"],
                     p["bn1_g"], p["bn1_b"], p["bn1_m"], p["bn1_v"], 4)
    y = conv_bn_relu(y, p["conv2_w"], p["conv2_b"],
                     p["bn2_g"], p["bn2_b"], p["bn2_m"], p["bn2_v"], 2)
    flat = y.reshape(y.shape[0], -1)                     # torch.flatten (C,H,W)
    h = jnp.maximum(jnp.dot(flat, p["fc1_w"].T, precision=hp) + p["fc1_b"], 0.0)
    return jnp.dot(h, p["fc2_w"].T, precision=hp) + p["fc2_b"]


# ----------------------------------------------------------------------------
# Forward pass
# ----------------------------------------------------------------------------
@jax.jit
def qnetwork_forward(x, kp):
    N = x.shape[0]
    # Channel-major bf16 input (C=1): (1, N, 124, 124).  All MXU feeds are
    # bf16; accumulation stays f32 in-kernel.
    x_cm = jnp.transpose(x.astype(jnp.bfloat16), (1, 0, 2, 3))

    # block1: Conv(1->16, k=8, s=4) + BN + ReLU     (transposed matmul)
    p1, Ho1, Wo1 = im2col_t(x_cm, 8, 4)                          # (64, N*900)
    y1 = convT_bn_relu(kp["w1"], p1, kp["scale1"], kp["shift1"]) # (16, N*900)
    y1 = y1.reshape(16, N, Ho1, Wo1)                             # channel-major

    # block2: Conv(16->32, k=4, s=2) + BN + ReLU
    p2, Ho2, Wo2 = im2col_t(y1, 4, 2)                            # (256, N*196)
    y2 = convT_bn_relu(kp["w2"], p2, kp["scale2"], kp["shift2"]) # (32, N*196)

    # Flatten to torch's (c, h, w) order: (32, N, 196) -> (N, 32*196).
    flat = jnp.transpose(y2.reshape(32, N, Ho2 * Wo2), (1, 0, 2)).reshape(N, -1)

    # Single-step fused fc1(+ReLU)+fc2(+bias); full fc1 weight resident in VMEM.
    return fc_fused(flat, kp["fc1_w"], kp["fc1_b"], kp["fc2_w"], kp["fc2_b"])


if __name__ == "__main__":
    key = jax.random.PRNGKey(0)
    k_x, k_p = jax.random.split(key)

    batch = 2
    action_size = 4
    # Input spatial size 124x124 is forced by the fc input dim 32*14*14.
    x = jax.random.normal(k_x, (batch, 1, 124, 124), jnp.float32)

    torch_params = init_torch_params(k_p, action_size)
    kernel_params = prepare_params(torch_params)

    q = qnetwork_forward(x, kernel_params)
    jax.block_until_ready(q)
    assert q.shape == (batch, action_size), q.shape
    assert q.dtype == jnp.float32

    # Relaxed-tolerance check against the f32 reference (kernels use bf16
    # weights/activations with f32 accumulation).
    q_ref = reference_forward(x, torch_params)
    jax.block_until_ready(q_ref)
    err = float(jnp.max(jnp.abs(q - q_ref)))
    assert err < 5e-2, f"max abs err vs f32 reference: {err}"
    print("KERNEL_OK")
</pallas_src>

<mosaic_0001>
module attributes {stable_mosaic.version = 11 : i64} {
  func.func @_convT_bn_relu_kernel(%arg0: i32, %arg1: memref<16x64xbf16, #tpu.memory_space<vmem>>, %arg2: memref<64x1024xbf16, #tpu.memory_space<vmem>>, %arg3: memref<16x1xf32, #tpu.memory_space<vmem>>, %arg4: memref<16x1xf32, #tpu.memory_space<vmem>>, %arg5: memref<16x1024xbf16, #tpu.memory_space<vmem>>) attributes {dimension_semantics = [#tpu.dimension_semantics<parallel>], iteration_bounds = array<i64: 2>, scalar_prefetch = 0 : i64, scratch_operands = 0 : i64, tpu.core_type = #tpu.core_type<tc>, window_params = [{pipeline_mode = #tpu.pipeline_mode<synchronous>, transform_indices = @transform_0, window_bounds = array<i64: 16, 64>}, {transform_indices = @transform_1, window_bounds = array<i64: 64, 1024>}, {pipeline_mode = #tpu.pipeline_mode<synchronous>, transform_indices = @transform_2, window_bounds = array<i64: 16, 1>}, {pipeline_mode = #tpu.pipeline_mode<synchronous>, transform_indices = @transform_3, window_bounds = array<i64: 16, 1>}, {transform_indices = @transform_4, window_bounds = array<i64: 16, 1024>}]} {
    %c0 = arith.constant 0 : index
    %c0_0 = arith.constant 0 : index
    %0 = vector.load %arg1[%c0, %c0_0] : memref<16x64xbf16, #tpu.memory_space<vmem>>, vector<16x64xbf16>
    %c0_1 = arith.constant 0 : index
    %c0_2 = arith.constant 0 : index
    %1 = vector.load %arg2[%c0_1, %c0_2] : memref<64x1024xbf16, #tpu.memory_space<vmem>>, vector<64x1024xbf16>
    %cst = arith.constant dense<0.000000e+00> : vector<16x1024xf32>
    %2 = tpu.matmul %0, %1, %cst {dimension_numbers = #tpu.dot_dimension_numbers<[1], [0], [0], [1], [0, 0, 1, 1], [], []>} : vector<16x64xbf16>, vector<64x1024xbf16>, vector<16x1024xf32> -> vector<16x1024xf32>
    %c0_3 = arith.constant 0 : index
    %c0_4 = arith.constant 0 : index
    %3 = vector.load %arg3[%c0_3, %c0_4] : memref<16x1xf32, #tpu.memory_space<vmem>>, vector<16x1xf32>
    %4 = vector.broadcast %3 : vector<16x1xf32> to vector<16x1024xf32>
    %5 = arith.mulf %2, %4 : vector<16x1024xf32>
    %c0_5 = arith.constant 0 : index
    %c0_6 = arith.constant 0 : index
    %6 = vector.load %arg4[%c0_5, %c0_6] : memref<16x1xf32, #tpu.memory_space<vmem>>, vector<16x1xf32>
    %7 = vector.broadcast %6 : vector<16x1xf32> to vector<16x1024xf32>
    %8 = arith.addf %5, %7 : vector<16x1024xf32>
    %cst_7 = arith.constant 0.000000e+00 : f32
    %9 = vector.broadcast %cst_7 : f32 to vector<16x1024xf32>
    %10 = arith.maximumf %8, %9 : vector<16x1024xf32>
    %11 = arith.truncf %10 : vector<16x1024xf32> to vector<16x1024xbf16>
    %c0_8 = arith.constant 0 : index
    %c0_9 = arith.constant 0 : index
    %12 = vector.load %arg5[%c0_8, %c0_9] : memref<16x1024xbf16, #tpu.memory_space<vmem>>, vector<16x1024xbf16>
    tpu.vector_store %arg5[%c0_8, %c0_9], %11 {strides = array<i32>} : memref<16x1024xbf16, #tpu.memory_space<vmem>>, vector<16x1024xbf16>,
    return
  }
  func.func @transform_0(%arg0: i32) -> (i32, i32) {
    %c0_i32 = arith.constant 0 : i32
    %c0_i32_0 = arith.constant 0 : i32
    %c0_i32_1 = arith.constant 0 : i32
    return %c0_i32, %c0_i32_0 : i32, i32
  }
  func.func @transform_1(%arg0: i32) -> (i32, i32) {
    %c0_i32 = arith.constant 0 : i32
    %c0_i32_0 = arith.constant 0 : i32
    return %c0_i32, %arg0 : i32, i32
  }
  func.func @transform_2(%arg0: i32) -> (i32, i32) {
    %c0_i32 = arith.constant 0 : i32
    %c0_i32_0 = arith.constant 0 : i32
    %c0_i32_1 = arith.constant 0 : i32
    return %c0_i32, %c0_i32_0 : i32, i32
  }
  func.func @transform_3(%arg0: i32) -> (i32, i32) {
    %c0_i32 = arith.constant 0 : i32
    %c0_i32_0 = arith.constant 0 : i32
    %c0_i32_1 = arith.constant 0 : i32
    return %c0_i32, %c0_i32_0 : i32, i32
  }
  func.func @transform_4(%arg0: i32) -> (i32, i32) {
    %c0_i32 = arith.constant 0 : i32
    %c0_i32_0 = arith.constant 0 : i32
    return %c0_i32, %arg0 : i32, i32
  }
}

module attributes {stable_mosaic.version = 11 : i64} {
  func.func @_convT_bn_relu_kernel(%arg0: i32, %arg1: memref<32x256xbf16, #tpu.memory_space<vmem>>, %arg2: memref<256x392xbf16, #tpu.memory_space<vmem>>, %arg3: memref<32x1xf32, #tpu.memory_space<vmem>>, %arg4: memref<32x1xf32, #tpu.memory_space<vmem>>, %arg5: memref<32x392xbf16, #tpu.memory_space<vmem>>) attributes {dimension_semantics = [#tpu.dimension_semantics<parallel>], iteration_bounds = array<i64: 1>, scalar_prefetch = 0 : i64, scratch_operands = 0 : i64, tpu.core_type = #tpu.core_type<tc>, window_params = [{pipeline_mode = #tpu.pipeline_mode<synchronous>, transform_indices = @transform_0, window_bounds = array<i64: 32, 256>}, {transform_indices = @transform_1, window_bounds = array<i64: 256, 392>}, {pipeline_mode = #tpu.pipeline_mode<synchronous>, transform_indices = @transform_2, window_bounds = array<i64: 32, 1>}, {pipeline_mode = #tpu.pipeline_mode<synchronous>, transform_indices = @transform_3, window_bounds = array<i64: 32, 1>}, {transform_indices = @transform_4, window_bounds = array<i64: 32, 392>}]} {
    %c0 = arith.constant 0 : index
    %c0_0 = arith.constant 0 : index
    %0 = vector.load %arg1[%c0, %c0_0] : memref<32x256xbf16, #tpu.memory_space<vmem>>, vector<32x256xbf16>
    %c0_1 = arith.constant 0 : index
    %c0_2 = arith.constant 0 : index
    %1 = vector.load %arg2[%c0_1, %c0_2] : memref<256x392xbf16, #tpu.memory_space<vmem>>, vector<256x392xbf16>
    %cst = arith.constant dense<0.000000e+00> : vector<32x392xf32>
    %2 = tpu.matmul %0, %1, %cst {dimension_numbers = #tpu.dot_dimension_numbers<[1], [0], [0], [1], [0, 0, 1, 1], [], []>} : vector<32x256xbf16>, vector<256x392xbf16>, vector<32x392xf32> -> vector<32x392xf32>
    %c0_3 = arith.constant 0 : index
    %c0_4 = arith.constant 0 : index
    %3 = vector.load %arg3[%c0_3, %c0_4] : memref<32x1xf32, #tpu.memory_space<vmem>>, vector<32x1xf32>
    %4 = vector.broadcast %3 : vector<32x1xf32> to vector<32x392xf32>
    %5 = arith.mulf %2, %4 : vector<32x392xf32>
    %c0_5 = arith.constant 0 : index
    %c0_6 = arith.constant 0 : index
    %6 = vector.load %arg4[%c0_5, %c0_6] : memref<32x1xf32, #tpu.memory_space<vmem>>, vector<32x1xf32>
    %7 = vector.broadcast %6 : vector<32x1xf32> to vector<32x392xf32>
    %8 = arith.addf %5, %7 : vector<32x392xf32>
    %cst_7 = arith.constant 0.000000e+00 : f32
    %9 = vector.broadcast %cst_7 : f32 to vector<32x392xf32>
    %10 = arith.maximumf %8, %9 : vector<32x392xf32>
    %11 = arith.truncf %10 : vector<32x392xf32> to vector<32x392xbf16>
    %c0_8 = arith.constant 0 : index
    %c0_9 = arith.constant 0 : index
    %12 = vector.load %arg5[%c0_8, %c0_9] : memref<32x392xbf16, #tpu.memory_space<vmem>>, vector<32x392xbf16>
    tpu.vector_store %arg5[%c0_8, %c0_9], %11 {strides = array<i32>} : memref<32x392xbf16, #tpu.memory_space<vmem>>, vector<32x392xbf16>,
    return
  }
  func.func @transform_0(%arg0: i32) -> (i32, i32) {
    %c0_i32 = arith.constant 0 : i32
    %c0_i32_0 = arith.constant 0 : i32
    %c0_i32_1 = arith.constant 0 : i32
    return %c0_i32, %c0_i32_0 : i32, i32
  }
  func.func @transform_1(%arg0: i32) -> (i32, i32) {
    %c0_i32 = arith.constant 0 : i32
    %c0_i32_0 = arith.constant 0 : i32
    return %c0_i32, %arg0 : i32, i32
  }
  func.func @transform_2(%arg0: i32) -> (i32, i32) {
    %c0_i32 = arith.constant 0 : i32
    %c0_i32_0 = arith.constant 0 : i32
    %c0_i32_1 = arith.constant 0 : i32
    return %c0_i32, %c0_i32_0 : i32, i32
  }
  func.func @transform_3(%arg0: i32) -> (i32, i32) {
    %c0_i32 = arith.constant 0 : i32
    %c0_i32_0 = arith.constant 0 : i32
    %c0_i32_1 = arith.constant 0 : i32
    return %c0_i32, %c0_i32_0 : i32, i32
  }
  func.func @transform_4(%arg0: i32) -> (i32, i32) {
    %c0_i32 = arith.constant 0 : i32
    %c0_i32_0 = arith.constant 0 : i32
    return %c0_i32, %arg0 : i32, i32
  }
}

module attributes {stable_mosaic.version = 11 : i64} {
  func.func @_fc_fused_kernel(%arg0: i32, %arg1: memref<2x6272xbf16, #tpu.memory_space<vmem>>, %arg2: memref<6272x256xbf16, #tpu.memory_space<vmem>>, %arg3: memref<1x256xf32, #tpu.memory_space<vmem>>, %arg4: memref<256x4xbf16, #tpu.memory_space<vmem>>, %arg5: memref<1x4xf32, #tpu.memory_space<vmem>>, %arg6: memref<2x4xf32, #tpu.memory_space<vmem>>) attributes {dimension_semantics = [#tpu.dimension_semantics<parallel>], iteration_bounds = array<i64: 1>, scalar_prefetch = 0 : i64, scratch_operands = 0 : i64, tpu.core_type = #tpu.core_type<tc>, window_params = [{transform_indices = @transform_0, window_bounds = array<i64: 2, 6272>}, {pipeline_mode = #tpu.pipeline_mode<synchronous>, transform_indices = @transform_1, window_bounds = array<i64: 6272, 256>}, {pipeline_mode = #tpu.pipeline_mode<synchronous>, transform_indices = @transform_2, window_bounds = array<i64: 1, 256>}, {pipeline_mode = #tpu.pipeline_mode<synchronous>, transform_indices = @transform_3, window_bounds = array<i64: 256, 4>}, {pipeline_mode = #tpu.pipeline_mode<synchronous>, transform_indices = @transform_4, window_bounds = array<i64: 1, 4>}, {transform_indices = @transform_5, window_bounds = array<i64: 2, 4>}]} {
    %c0 = arith.constant 0 : index
    %c0_0 = arith.constant 0 : index
    %0 = vector.load %arg1[%c0, %c0_0] : memref<2x6272xbf16, #tpu.memory_space<vmem>>, vector<2x6272xbf16>
    %c0_1 = arith.constant 0 : index
    %c0_2 = arith.constant 0 : index
    %1 = vector.load %arg2[%c0_1, %c0_2] : memref<6272x256xbf16, #tpu.memory_space<vmem>>, vector<6272x256xbf16>
    %cst = arith.constant dense<0.000000e+00> : vector<2x256xf32>
    %2 = tpu.matmul %0, %1, %cst {dimension_numbers = #tpu.dot_dimension_numbers<[1], [0], [0], [1], [0, 0, 1, 1], [], []>} : vector<2x6272xbf16>, vector<6272x256xbf16>, vector<2x256xf32> -> vector<2x256xf32>
    %c0_3 = arith.constant 0 : index
    %c0_4 = arith.constant 0 : index
    %3 = vector.load %arg3[%c0_3, %c0_4] : memref<1x256xf32, #tpu.memory_space<vmem>>, vector<1x256xf32>
    %4 = vector.broadcast %3 : vector<1x256xf32> to vector<2x256xf32>
    %5 = arith.addf %2, %4 : vector<2x256xf32>
    %cst_5 = arith.constant 0.000000e+00 : f32
    %6 = vector.broadcast %cst_5 : f32 to vector<2x256xf32>
    %7 = arith.maximumf %5, %6 : vector<2x256xf32>
    %8 = arith.truncf %7 : vector<2x256xf32> to vector<2x256xbf16>
    %c0_6 = arith.constant 0 : index
    %c0_7 = arith.constant 0 : index
    %9 = vector.load %arg4[%c0_6, %c0_7] : memref<256x4xbf16, #tpu.memory_space<vmem>>, vector<256x4xbf16>
    %cst_8 = arith.constant dense<0.000000e+00> : vector<2x4xf32>
    %10 = tpu.matmul %8, %9, %cst_8 {dimension_numbers = #tpu.dot_dimension_numbers<[1], [0], [0], [1], [0, 0, 1, 1], [], []>} : vector<2x256xbf16>, vector<256x4xbf16>, vector<2x4xf32> -> vector<2x4xf32>
    %c0_9 = arith.constant 0 : index
    %c0_10 = arith.constant 0 : index
    %11 = vector.load %arg5[%c0_9, %c0_10] : memref<1x4xf32, #tpu.memory_space<vmem>>, vector<1x4xf32>
    %12 = vector.broadcast %11 : vector<1x4xf32> to vector<2x4xf32>
    %13 = arith.addf %10, %12 : vector<2x4xf32>
    %c0_11 = arith.constant 0 : index
    %c0_12 = arith.constant 0 : index
    %14 = vector.load %arg6[%c0_11, %c0_12] : memref<2x4xf32, #tpu.memory_space<vmem>>, vector<2x4xf32>
    tpu.vector_store %arg6[%c0_11, %c0_12], %13 {strides = array<i32>} : memref<2x4xf32, #tpu.memory_space<vmem>>, vector<2x4xf32>,
    return
  }
  func.func @transform_0(%arg0: i32) -> (i32, i32) {
    %c0_i32 = arith.constant 0 : i32
    %c0_i32_0 = arith.constant 0 : i32
    return %arg0, %c0_i32 : i32, i32
  }
  func.func @transform_1(%arg0: i32) -> (i32, i32) {
    %c0_i32 = arith.constant 0 : i32
    %c0_i32_0 = arith.constant 0 : i32
    %c0_i32_1 = arith.constant 0 : i32
    return %c0_i32, %c0_i32_0 : i32, i32
  }
  func.func @transform_2(%arg0: i32) -> (i32, i32) {
    %c0_i32 = arith.constant 0 : i32
    %c0_i32_0 = arith.constant 0 : i32
    %c0_i32_1 = arith.constant 0 : i32
    return %c0_i32, %c0_i32_0 : i32, i32
  }
  func.func @transform_3(%arg0: i32) -> (i32, i32) {
    %c0_i32 = arith.constant 0 : i32
    %c0_i32_0 = arith.constant 0 : i32
    %c0_i32_1 = arith.constant 0 : i32
    return %c0_i32, %c0_i32_0 : i32, i32
  }
  func.func @transform_4(%arg0: i32) -> (i32, i32) {
    %c0_i32 = arith.constant 0 : i32
    %c0_i32_0 = arith.constant 0 : i32
    %c0_i32_1 = arith.constant 0 : i32
    return %c0_i32, %c0_i32_0 : i32, i32
  }
  func.func @transform_5(%arg0: i32) -> (i32, i32) {
    %c0_i32 = arith.constant 0 : i32
    %c0_i32_0 = arith.constant 0 : i32
    return %arg0, %c0_i32 : i32, i32
  }
}

</mosaic_0001>

<llo_original>
// kernel: qnetwork_forward.3
$region0: #{qnetwork_forward.3}
  #allocation0 [shape = 'u32[]', space=smem, size = 0x4, offset = 0x4, fixed_abs, tag = 'smem constant byte address 0x4 - core index']
  #allocation1 [shape = 'u32[144,128]{1,0:T(1,128)}', space=vmem, size = 0x12000, scoped, tag = 'internal scratch']
  %s0 = inlined_call_operand.vmem [shape: bf16[16,64], index: 0, kind: input, shape index: {}]
  %s1 = inlined_call_operand.vmem [shape: bf16[64,1800], index: 1, kind: input, shape index: {}]
  %s2 = inlined_call_operand.vmem [shape: f32[16,1], index: 2, kind: input, shape index: {}]
  %s3 = inlined_call_operand.vmem [shape: f32[16,1], index: 3, kind: input, shape index: {}]
  %s4 = inlined_call_operand.vmem [shape: bf16[16,1800], index: 4, kind: output, shape index: {}]
  %s5 = sld [smem:[#allocation0]]
  $region177: #{qnetwork_forward.3} parent=0
    _
  %s7 = ssub.s32 1, %s5
  %s8 = scalar_select 0, %s7, %s5
  $region1: #{qnetwork_forward.3} parent=0
    #allocation2 [shape = 'u8[262144]{0}', space=vmem, size = 0x40000, scoped, tag = 'input window, operand 1']
    #allocation3 [shape = 'u8[65536]{0}', space=vmem, size = 0x10000, scoped, tag = 'output window, operand 0']
    loop: start=0, step=1, limit=4
    $region2: #{qnetwork_forward.3} parent=1 // loop_pre_header
      _
    $region3: #{qnetwork_forward.3} parent=1 // loop_header
      %s10 = sphi 0, %s14
      %p11 = scmp.ge.s32.totalorder %s10, 4
      %s18 = sphi 0, %s18
      %s20 = sphi 0, %s18
      %s21 = sphi 0, %s20
      %s35 = sphi 0, %s21
      %s41 = sphi 0, %s43
      %s44 = sphi 0, %s41
      %s45 = sphi 0, %s44
      %s61 = sphi 0, %s45
      %s65 = sphi 0, %s65
      %s67 = sphi 0, %s65
      %s68 = sphi 0, %s67
      %s82 = sphi 0, %s68
      %s86 = sphi 0, %s86
      %s88 = sphi 0, %s86
      %s89 = sphi 0, %s88
      %s103 = sphi 0, %s89
      %s109 = sphi 0, %s111
      %s112 = sphi 0, %s109
      %s113 = sphi 0, %s112
      %s129 = sphi 0, %s113
    $region4: #{qnetwork_forward.3} parent=1 // loop_header_branch
      %13 = sbr.rel (%p11) target = $region8
    $region5: #{qnetwork_forward.3} parent=1 // loop_body
      %s15 = ssub.s32 %s10, 1
      %s16 = ssub.s32 %s10, 2
      %s17 = sadd.s32 %s10, 1
      %s19 = sadd.s32 %s18, 1
      %p22 = scmp.eq.s32.totalorder %s10, 1
      %p23 = scmp.ne.s32.totalorder %s18, %s20
      %p24 = scmp.eq.s32.totalorder %s10, 0
      %p25 = por %p23, %p24
      %p26 = scmp.ne.s32.totalorder %s18, %s20
      %p27 = scmp.eq.s32.totalorder %s15, 1
      %p28 = por %p26, %p27
      %p29 = scmp.ne.s32.totalorder %s20, %s21
      %p30 = scmp.eq.s32.totalorder %s15, 0
      %p31 = por %p29, %p30
      %p32 = scmp.ne.s32.totalorder %s20, %s21
      %p33 = scmp.eq.s32.totalorder %s16, 1
      %p34 = por %p32, %p33
      %p36 = scmp.ne.s32.totalorder %s21, %s35
      %p37 = scmp.eq.s32.totalorder %s16, 0
      %p38 = por %p36, %p37
      %s39 = ssub.s32 %s10, %s17
      %p40 = scmp.eq.s32.totalorder %s39, 0
      %s42 = sadd.s32 %s41, 1
      %s43 = scalar_select %p40, %s41, %s42
      %p46 = pneg %p40
      %p47 = scmp.eq.s32.totalorder %s10, 1
      %p48 = por %p46, %p47
      %p49 = scmp.ne.s32.totalorder %s41, %s44
      %p50 = scmp.eq.s32.totalorder %s10, 0
      %p51 = por %p49, %p50
      %p52 = scmp.ne.s32.totalorder %s41, %s44
      %p53 = scmp.eq.s32.totalorder %s15, 1
      %p54 = por %p52, %p53
      %p55 = scmp.ne.s32.totalorder %s44, %s45
      %p56 = scmp.eq.s32.totalorder %s15, 0
      %p57 = por %p55, %p56
      %p58 = scmp.ne.s32.totalorder %s44, %s45
      %p59 = scmp.eq.s32.totalorder %s16, 1
      %p60 = por %p58, %p59
      %p62 = scmp.ne.s32.totalorder %s45, %s61
      %p63 = scmp.eq.s32.totalorder %s16, 0
      %p64 = por %p62, %p63
      %s66 = sadd.s32 %s65, 1
      %p69 = scmp.eq.s32.totalorder %s10, 1
      %p70 = scmp.ne.s32.totalorder %s65, %s67
      %p71 = scmp.eq.s32.totalorder %s10, 0
      %p72 = por %p70, %p71
      %p73 = scmp.ne.s32.totalorder %s65, %s67
      %p74 = scmp.eq.s32.totalorder %s15, 1
      %p75 = por %p73, %p74
      %p76 = scmp.ne.s32.totalorder %s67, %s68
      %p77 = scmp.eq.s32.totalorder %s15, 0
      %p78 = por %p76, %p77
      %p79 = scmp.ne.s32.totalorder %s67, %s68
      %p80 = scmp.eq.s32.totalorder %s16, 1
      %p81 = por %p79, %p80
      %p83 = scmp.ne.s32.totalorder %s68, %s82
      %p84 = scmp.eq.s32.totalorder %s16, 0
      %p85 = por %p83, %p84
      %s87 = sadd.s32 %s86, 1
      %p90 = scmp.eq.s32.totalorder %s10, 1
      %p91 = scmp.ne.s32.totalorder %s86, %s88
      %p92 = scmp.eq.s32.totalorder %s10, 0
      %p93 = por %p91, %p92
      %p94 = scmp.ne.s32.totalorder %s86, %s88
      %p95 = scmp.eq.s32.totalorder %s15, 1
      %p96 = por %p94, %p95
      %p97 = scmp.ne.s32.totalorder %s88, %s89
      %p98 = scmp.eq.s32.totalorder %s15, 0
      %p99 = por %p97, %p98
      %p100 = scmp.ne.s32.totalorder %s88, %s89
      %p101 = scmp.eq.s32.totalorder %s16, 1
      %p102 = por %p100, %p101
      %p104 = scmp.ne.s32.totalorder %s89, %s103
      %p105 = scmp.eq.s32.totalorder %s16, 0
      %p106 = por %p104, %p105
      %s107 = ssub.s32 %s10, %s17
      %p108 = scmp.eq.s32.totalorder %s107, 0
      %s110 = sadd.s32 %s109, 1
      %s111 = scalar_select %p108, %s109, %s110
      %p114 = pneg %p108
      %p115 = scmp.eq.s32.totalorder %s10, 1
      %p116 = por %p114, %p115
      %p117 = scmp.ne.s32.totalorder %s109, %s112
      %p118 = scmp.eq.s32.totalorder %s10, 0
      %p119 = por %p117, %p118
      %p120 = scmp.ne.s32.totalorder %s109, %s112
      %p121 = scmp.eq.s32.totalorder %s15, 1
      %p122 = por %p120, %p121
      %p123 = scmp.ne.s32.totalorder %s112, %s113
      %p124 = scmp.eq.s32.totalorder %s15, 0
      %p125 = por %p123, %p124
      %p126 = scmp.ne.s32.totalorder %s112, %s113
      %p127 = scmp.eq.s32.totalorder %s16, 1
      %p128 = por %p126, %p127
      %p130 = scmp.ne.s32.totalorder %s113, %s129
      %p131 = scmp.eq.s32.totalorder %s16, 0
      %p132 = por %p130, %p131
      %p133 = scmp.le.s32.totalorder 1, %s10
      %p134 = scmp.lt.s32.totalorder %s10, 3
      %p135 = pnand %p133, %p134
      %p136 = pneg %p135
      // Predicated region
      $region9: #{qnetwork_forward.3} parent=5 // pred_check
        _
      $region10: #{qnetwork_forward.3} parent=5 // pred_check_branch
        %138 = sbr.rel (%p135) target = $region12
      $region11: #{qnetwork_forward.3} parent=5 // pred_region
        %s139 = ssub.s32 %s10, 1
        // Predicated region
        $region13: #{qnetwork_forward.3} parent=11 // pred_check
          %p140 = pneg %p31
        $region14: #{qnetwork_forward.3} parent=11 // pred_check_branch
          %142 = sbr.rel (%p140) target = $region16
        $region15: #{qnetwork_forward.3} parent=11 // pred_region
          _
        $region16: #{qnetwork_forward.3} parent=11 // pred_fallthru
          _
        // Predicated region
        $region17: #{qnetwork_forward.3} parent=11 // pred_check
          %p143 = pneg %p78
        $region18: #{qnetwork_forward.3} parent=11 // pred_check_branch
          %145 = sbr.rel (%p143) target = $region20
        $region19: #{qnetwork_forward.3} parent=11 // pred_region
          _
        $region20: #{qnetwork_forward.3} parent=11 // pred_fallthru
          _
        // Predicated region
        $region21: #{qnetwork_forward.3} parent=11 // pred_check
          %p146 = pneg %p99
        $region22: #{qnetwork_forward.3} parent=11 // pred_check_branch
          %148 = sbr.rel (%p146) target = $region24
        $region23: #{qnetwork_forward.3} parent=11 // pred_region
          _
        $region24: #{qnetwork_forward.3} parent=11 // pred_fallthru
          _
      $region12: #{qnetwork_forward.3} parent=5 // pred_fallthru
        _
      %p149 = scmp.lt.s32.totalorder %s10, 2
      // Predicated region
      $region25: #{qnetwork_forward.3} parent=5 // pred_check
        %p150 = pneg %p149
      $region26: #{qnetwork_forward.3} parent=5 // pred_check_branch
        %152 = sbr.rel (%p150) target = $region28
      $region27: #{qnetwork_forward.3} parent=5 // pred_region
        // Predicated region
        $region29: #{qnetwork_forward.3} parent=27 // pred_check
          %p153 = pneg %p51
        $region30: #{qnetwork_forward.3} parent=27 // pred_check_branch
          %155 = sbr.rel (%p153) target = $region32
        $region31: #{qnetwork_forward.3} parent=27 // pred_region
          %s156 = sand.u32 %s41, 1
          %s157 = sand.u32 %s41, 1
          %s158 = smul.addr %s157, 256
          %s159 = scalar_lea.vmem [#allocation2], %s158
          %s160 = smul.u32 8, %s10
          %s161 = ssub.s32 15, %s160
          %p162 = scmp.lt.s32.totalorder %s161, 8
          %s163 = scalar_select %p162, %s161, 8
          %s164 = smul.u32 512, %s163
          %p165 = scmp.ne.s32.totalorder 0, %s164
          %s166 = smul.addr %s160, 4
          %s167 = scalar_lea.vmem %s1, %s166
          %s168 = smul.u32 %s163, 4
          // Predicated region
          $region33: #{qnetwork_forward.3} parent=31 // pred_check
            %p169 = pneg %p165
          $region34: #{qnetwork_forward.3} parent=31 // pred_check_branch
            %171 = sbr.rel (%p169) target = $region36
          $region35: #{qnetwork_forward.3} parent=31 // pred_region
            %p172 = scmp.lt.u32.totalorder %s168, 8
            %p173 = pneg %p172
            // Predicated region
            $region37: #{qnetwork_forward.3} parent=35 // pred_check
              _
            $region38: #{qnetwork_forward.3} parent=35 // pred_check_branch
              %175 = sbr.rel (%p172) target = $region40
            $region39: #{qnetwork_forward.3} parent=35 // pred_region
              %s204 = sand.u32 %s168, 7
              %p205 = scmp.eq.s32.totalorder %s204, 0
              // Predicated region
              $region52: #{qnetwork_forward.3} parent=39 // pred_check
                %p206 = pneg %p205
              $region53: #{qnetwork_forward.3} parent=39 // pred_check_branch
                %208 = sbr.rel (%p206) target = $region55
              $region54: #{qnetwork_forward.3} parent=39 // pred_region
                %s209 = sshrl.u32 %s168, 3
                %s210 = sshrl.u32 %s209, 3
                // While loop
                $region56: #{qnetwork_forward.3} parent=54 // loop_pre_header
                  _
                $region57: #{qnetwork_forward.3} parent=54 // loop_header
                  %s214 = sphi 0, %s216
                  %p215 = scmp.ge.s32.totalorder %s214, %s210
                  %s219 = sphi 0, %s352
                  %s220 = sphi %s167, %s355
                  %s221 = sphi %s159, %s356
                $region58: #{qnetwork_forward.3} parent=54 // loop_header_branch
                  %218 = sbr.rel (%p215) target = $region62
                $region59: #{qnetwork_forward.3} parent=54 // loop_body
                  %v222 = vld [vmem:[%s220] sm:$0xff]
                  %223 = vst [vmem:[%s221] sm:$0xff] %v222
                  %v224 = vld [vmem:[%s220 + $0x8] sm:$0xff]
                  %225 = vst [vmem:[%s221 + $0x8] sm:$0xff] %v224
                  %v226 = vld [vmem:[%s220 + $0x10] sm:$0xff]
                  %227 = vst [vmem:[%s221 + $0x10] sm:$0xff] %v226
                  %v228 = vld [vmem:[%s220 + $0x18] sm:$0xff]
                  %229 = vst [vmem:[%s221 + $0x18] sm:$0xff] %v228
                  %v230 = vld [vmem:[%s220 + $0x20] sm:$0xff]
                  %231 = vst [vmem:[%s221 + $0x20] sm:$0xff] %v230
                  %v232 = vld [vmem:[%s220 + $0x28] sm:$0xff]
                  %233 = vst [vmem:[%s221 + $0x28] sm:$0xff] %v232
                  %v234 = vld [vmem:[%s220 + $0x30] sm:$0xff]
                  %235 = vst [vmem:[%s221 + $0x30] sm:$0xff] %v234
                  %v236 = vld [vmem:[%s220 + $0x38] sm:$0xff]
                  %237 = vst [vmem:[%s221 + $0x38] sm:$0xff] %v236
                  %v238 = vld [vmem:[%s220 + $0x3c] sm:$0xff]
                  %239 = vst [vmem:[%s221 + $0x20] sm:$0xff] %v238
                  %v240 = vld [vmem:[%s220 + $0x44] sm:$0xff]
                  %241 = vst [vmem:[%s221 + $0x28] sm:$0xff] %v240
                  %v242 = vld [vmem:[%s220 + $0x4c] sm:$0xff]
                  %243 = vst [vmem:[%s221 + $0x30] sm:$0xff] %v242
                  %v244 = vld [vmem:[%s220 + $0x54] sm:$0xff]
                  %245 = vst [vmem:[%s221 + $0x38] sm:$0xff] %v244
                  %v246 = vld [vmem:[%s220 + $0x5c] sm:$0xff]
                  %247 = vst [vmem:[%s221 + $0x40] sm:$0xff] %v246
                  %v248 = vld [vmem:[%s220 + $0x64] sm:$0xff]
                  %249 = vst [vmem:[%s221 + $0x48] sm:$0xff] %v248
                  %v250 = vld [vmem:[%s220 + $0x6c] sm:$0xff]
                  %251 = vst [vmem:[%s221 + $0x50] sm:$0xff] %v250
                  %v252 = vld [vmem:[%s220 + $0x74] sm:$0xff]
                  %253 = vst [vmem:[%s221 + $0x58] sm:$0xff] %v252
                  %v254 = vld [vmem:[%s220 + $0x78] sm:$0xff]
                  %255 = vst [vmem:[%s221 + $0x40] sm:$0xff] %v254
                  %v256 = vld [vmem:[%s220 + $0x80] sm:$0xff]
                  %257 = vst [vmem:[%s221 + $0x48] sm:$0xff] %v256
                  %v258 = vld [vmem:[%s220 + $0x88] sm:$0xff]
                  %259 = vst [vmem:[%s221 + $0x50] sm:$0xff] %v258
                  %v260 = vld [vmem:[%s220 + $0x90] sm:$0xff]
                  %261 = vst [vmem:[%s221 + $0x58] sm:$0xff] %v260
                  %v262 = vld [vmem:[%s220 + $0x98] sm:$0xff]
                  %263 = vst [vmem:[%s221 + $0x60] sm:$0xff] %v262
                  %v264 = vld [vmem:[%s220 + $0xa0] sm:$0xff]
                  %265 = vst [vmem:[%s221 + $0x68] sm:$0xff] %v264
                  %v266 = vld [vmem:[%s220 + $0xa8] sm:$0xff]
                  %267 = vst [vmem:[%s221 + $0x70] sm:$0xff] %v266
                  %v268 = vld [vmem:[%s220 + $0xb0] sm:$0xff]
                  %269 = vst [vmem:[%s221 + $0x78] sm:$0xff] %v268
                  %v270 = vld [vmem:[%s220 + $0xb4] sm:$0xff]
                  %271 = vst [vmem:[%s221 + $0x60] sm:$0xff] %v270
                  %v272 = vld [vmem:[%s220 + $0xbc] sm:$0xff]
                  %273 = vst [vmem:[%s221 + $0x68] sm:$0xff] %v272
                  %v274 = vld [vmem:[%s220 + $0xc4] sm:$0xff]
                  %275 = vst [vmem:[%s221 + $0x70] sm:$0xff] %v274
                  %v276 = vld [vmem:[%s220 + $0xcc] sm:$0xff]
                  %277 = vst [vmem:[%s221 + $0x78] sm:$0xff] %v276
                  %v278 = vld [vmem:[%s220 + $0xd4] sm:$0xff]
                  %279 = vst [vmem:[%s221 + $0x80] sm:$0xff] %v278
                  %v280 = vld [vmem:[%s220 + $0xdc] sm:$0xff]
                  %281 = vst [vmem:[%s221 + $0x88] sm:$0xff] %v280
                  %v282 = vld [vmem:[%s220 + $0xe4] sm:$0xff]
                  %283 = vst [vmem:[%s221 + $0x90] sm:$0xff] %v282
                  %v284 = vld [vmem:[%s220 + $0xec] sm:$0xff]
                  %285 = vst [vmem:[%s221 + $0x98] sm:$0xff] %v284
                  %v286 = vld [vmem:[%s220 + $0xf0] sm:$0xff]
                  %287 = vst [vmem:[%s221 + $0x80] sm:$0xff] %v286
                  %v288 = vld [vmem:[%s220 + $0xf8] sm:$0xff]
                  %289 = vst [vmem:[%s221 + $0x88] sm:$0xff] %v288
                  %v290 = vld [vmem:[%s220 + $0x100] sm:$0xff]
                  %291 = vst [vmem:[%s221 + $0x90] sm:$0xff] %v290
                  %v292 = vld [vmem:[%s220 + $0x108] sm:$0xff]
                  %293 = vst [vmem:[%s221 + $0x98] sm:$0xff] %v292
                  %v294 = vld [vmem:[%s220 + $0x110] sm:$0xff]
                  %295 = vst [vmem:[%s221 + $0xa0] sm:$0xff] %v294
                  %v296 = vld [vmem:[%s220 + $0x118] sm:$0xff]
                  %297 = vst [vmem:[%s221 + $0xa8] sm:$0xff] %v296
                  %v298 = vld [vmem:[%s220 + $0x120] sm:$0xff]
                  %299 = vst [vmem:[%s221 + $0xb0] sm:$0xff] %v298
                  %v300 = vld [vmem:[%s220 + $0x128] sm:$0xff]
                  %301 = vst [vmem:[%s221 + $0xb8] sm:$0xff] %v300
                  %v302 = vld [vmem:[%s220 + $0x12c] sm:$0xff]
                  %303 = vst [vmem:[%s221 + $0xa0] sm:$0xff] %v302
                  %v304 = vld [vmem:[%s220 + $0x134] sm:$0xff]
                  %305 = vst [vmem:[%s221 + $0xa8] sm:$0xff] %v304
                  %v306 = vld [vmem:[%s220 + $0x13c] sm:$0xff]
                  %307 = vst [vmem:[%s221 + $0xb0] sm:$0xff] %v306
                  %v308 = vld [vmem:[%s220 + $0x144] sm:$0xff]
                  %309 = vst [vmem:[%s221 + $0xb8] sm:$0xff] %v308
                  %v310 = vld [vmem:[%s220 + $0x14c] sm:$0xff]
                  %311 = vst [vmem:[%s221 + $0xc0] sm:$0xff] %v310
                  %v312 = vld [vmem:[%s220 + $0x154] sm:$0xff]
                  %313 = vst [vmem:[%s221 + $0xc8] sm:$0xff] %v312
                  %v314 = vld [vmem:[%s220 + $0x15c] sm:$0xff]
                  %315 = vst [vmem:[%s221 + $0xd0] sm:$0xff] %v314
                  %v316 = vld [vmem:[%s220 + $0x164] sm:$0xff]
                  %317 = vst [vmem:[%s221 + $0xd8] sm:$0xff] %v316
                  %v318 = vld [vmem:[%s220 + $0x168] sm:$0xff]
                  %319 = vst [vmem:[%s221 + $0xc0] sm:$0xff] %v318
                  %v320 = vld [vmem:[%s220 + $0x170] sm:$0xff]
                  %321 = vst [vmem:[%s221 + $0xc8] sm:$0xff] %v320
                  %v322 = vld [vmem:[%s220 + $0x178] sm:$0xff]
                  %323 = vst [vmem:[%s221 + $0xd0] sm:$0xff] %v322
                  %v324 = vld [vmem:[%s220 + $0x180] sm:$0xff]
                  %325 = vst [vmem:[%s221 + $0xd8] sm:$0xff] %v324
                  %v326 = vld [vmem:[%s220 + $0x188] sm:$0xff]
                  %327 = vst [vmem:[%s221 + $0xe0] sm:$0xff] %v326
                  %v328 = vld [vmem:[%s220 + $0x190] sm:$0xff]
                  %329 = vst [vmem:[%s221 + $0xe8] sm:$0xff] %v328
                  %v330 = vld [vmem:[%s220 + $0x198] sm:$0xff]
                  %331 = vst [vmem:[%s221 + $0xf0] sm:$0xff] %v330
                  %v332 = vld [vmem:[%s220 + $0x1a0] sm:$0xff]
                  %333 = vst [vmem:[%s221 + $0xf8] sm:$0xff] %v332
                  %v334 = vld [vmem:[%s220 + $0x1a4] sm:$0xff]
                  %335 = vst [vmem:[%s221 + $0xe0] sm:$0xff] %v334
                  %v336 = vld [vmem:[%s220 + $0x1ac] sm:$0xff]
                  %337 = vst [vmem:[%s221 + $0xe8] sm:$0xff] %v336
                  %v338 = vld [vmem:[%s220 + $0x1b4] sm:$0xff]
                  %339 = vst [vmem:[%s221 + $0xf0] sm:$0xff] %v338
                  %v340 = vld [vmem:[%s220 + $0x1bc] sm:$0xff]
                  %341 = vst [vmem:[%s221 + $0xf8] sm:$0xff] %v340
                  %v342 = vld [vmem:[%s220 + $0x1c4] sm:$0xff]
                  %343 = vst [vmem:[%s221 + $0x100] sm:$0xff] %v342
                  %v344 = vld [vmem:[%s220 + $0x1cc] sm:$0xff]
                  %345 = vst [vmem:[%s221 + $0x108] sm:$0xff] %v344
                  %v346 = vld [vmem:[%s220 + $0x1d4] sm:$0xff]
                  %347 = vst [vmem:[%s221 + $0x110] sm:$0xff] %v346
                  %v348 = vld [vmem:[%s220 + $0x1dc] sm:$0xff]
                  %349 = vst [vmem:[%s221 + $0x118] sm:$0xff] %v348
                  %s350 = sadd.s32 1, %s219
                  %p351 = scmp.ge.s32.totalorder %s350, %s210
                  %s352 = scalar_select %p351, 0, %s350
                  %s353 = smul.u32 %s352, 64
                  %s354 = smul.u32 %s352, 64
                  %s355 = scalar_lea.vmem %s167, %s353
                  %s356 = scalar_lea.vmem %s159, %s354 [#allocation2]
                $region60: #{qnetwork_forward.3} parent=54 // loop_footer
                  %s216 = sadd.s32 %s214, 1
                $region61: #{qnetwork_forward.3} parent=54 // loop_footer_branch
                  %213 = sbr.rel target = $region57
                $region62: #{qnetwork_forward.3} parent=54 // loop_exit
                  _
                %s357 = sshrl.u32 %s209, 3
                %s358 = sand.u32 %s209, 7
                %s359 = smul.u32 %s357, 8
                %s360 = smul.u32 128, %s359
                %s361 = sshra.s32 %s360, 4
                %s362 = scalar_lea.vmem %s167, %s361
                %s363 = smul.u32 128, %s359
                %s364 = sshra.s32 %s363, 4
                %s365 = scalar_lea.vmem %s159, %s364 [#allocation2]
                // While loop
                $region63: #{qnetwork_forward.3} parent=54 // loop_pre_header
                  _
                $region64: #{qnetwork_forward.3} parent=54 // loop_header
                  %s369 = sphi 0, %s371
                  %p370 = scmp.ge.s32.totalorder %s369, %s358
                  %s374 = sphi 0, %s395
                  %s375 = sphi %s362, %s398
                  %s376 = sphi %s365, %s399
                $region65: #{qnetwork_forward.3} parent=54 // loop_header_branch
                  %373 = sbr.rel (%p370) target = $region69
                $region66: #{qnetwork_forward.3} parent=54 // loop_body
                  %v377 = vld [vmem:[%s375] sm:$0xff]
                  %378 = vst [vmem:[%s376] sm:$0xff] %v377
                  %v379 = vld [vmem:[%s375 + $0x3c] sm:$0xff]
                  %380 = vst [vmem:[%s376 + $0x20] sm:$0xff] %v379
                  %v381 = vld [vmem:[%s375 + $0x78] sm:$0xff]
                  %382 = vst [vmem:[%s376 + $0x40] sm:$0xff] %v381
                  %v383 = vld [vmem:[%s375 + $0xb4] sm:$0xff]
                  %384 = vst [vmem:[%s376 + $0x60] sm:$0xff] %v383
                  %v385 = vld [vmem:[%s375 + $0xf0] sm:$0xff]
                  %386 = vst [vmem:[%s376 + $0x80] sm:$0xff] %v385
                  %v387 = vld [vmem:[%s375 + $0x12c] sm:$0xff]
                  %388 = vst [vmem:[%s376 + $0xa0] sm:$0xff] %v387
                  %v389 = vld [vmem:[%s375 + $0x168] sm:$0xff]
                  %390 = vst [vmem:[%s376 + $0xc0] sm:$0xff] %v389
                  %v391 = vld [vmem:[%s375 + $0x1a4] sm:$0xff]
                  %392 = vst [vmem:[%s376 + $0xe0] sm:$0xff] %v391
                  %s393 = sadd.s32 1, %s374
                  %p394 = scmp.ge.s32.totalorder %s393, %s358
                  %s395 = scalar_select %p394, 0, %s393
                  %s396 = smul.u32 %s395, 8
                  %s397 = smul.u32 %s395, 8
                  %s398 = scalar_lea.vmem %s362, %s396
                  %s399 = scalar_lea.vmem %s365, %s397 [#allocation2]
                $region67: #{qnetwork_forward.3} parent=54 // loop_footer
                  %s371 = sadd.s32 %s369, 1
                $region68: #{qnetwork_forward.3} parent=54 // loop_footer_branch
                  %368 = sbr.rel target = $region64
                $region69: #{qnetwork_forward.3} parent=54 // loop_exit
                  _
              $region55: #{qnetwork_forward.3} parent=39 // pred_fallthru
                _
              %p400 = pneg %p205
              // Predicated region
              $region70: #{qnetwork_forward.3} parent=39 // pred_check
                _
              $region71: #{qnetwork_forward.3} parent=39 // pred_check_branch
                %402 = sbr.rel (%p205) target = $region73
              $region72: #{qnetwork_forward.3} parent=39 // pred_region
                %s403 = sand.u32 %s168, 7
                %s404 = ssub.s32 %s168, %s403
                %s405 = scalar_lea.vmem %s167, %s404
                %s406 = ssub.s32 %s168, %s403
                %s407 = scalar_lea.vmem %s159, %s406 [#allocation2]
                %s408 = sshrl.u32 %s168, 3
                %s409 = sshrl.u32 %s408, 3
                // While loop
                $region74: #{qnetwork_forward.3} parent=72 // loop_pre_header
                  _
                $region75: #{qnetwork_forward.3} parent=72 // loop_header
                  %s413 = sphi 0, %s415
                  %p414 = scmp.ge.s32.totalorder %s413, %s409
                  %s418 = sphi 0, %s551
                  %s419 = sphi %s167, %s554
                  %s420 = sphi %s159, %s555
                $region76: #{qnetwork_forward.3} parent=72 // loop_header_branch
                  %417 = sbr.rel (%p414) target = $region80
                $region77: #{qnetwork_forward.3} parent=72 // loop_body
                  %v421 = vld [vmem:[%s419] sm:$0xff]
                  %422 = vst [vmem:[%s420] sm:$0xff] %v421
                  %v423 = vld [vmem:[%s419 + $0x8] sm:$0xff]
                  %424 = vst [vmem:[%s420 + $0x8] sm:$0xff] %v423
                  %v425 = vld [vmem:[%s419 + $0x10] sm:$0xff]
                  %426 = vst [vmem:[%s420 + $0x10] sm:$0xff] %v425
                  %v427 = vld [vmem:[%s419 + $0x18] sm:$0xff]
                  %428 = vst [vmem:[%s420 + $0x18] sm:$0xff] %v427
                  %v429 = vld [vmem:[%s419 + $0x20] sm:$0xff]
                  %430 = vst [vmem:[%s420 + $0x20] sm:$0xff] %v429
                  %v431 = vld [vmem:[%s419 + $0x28] sm:$0xff]
                  %432 = vst [vmem:[%s420 + $0x28] sm:$0xff] %v431
                  %v433 = vld [vmem:[%s419 + $0x30] sm:$0xff]
                  %434 = vst [vmem:[%s420 + $0x30] sm:$0xff] %v433
                  %v435 = vld [vmem:[%s419 + $0x38] sm:$0xff]
                  %436 = vst [vmem:[%s420 + $0x38] sm:$0xff] %v435
                  %v437 = vld [vmem:[%s419 + $0x3c] sm:$0xff]
                  %438 = vst [vmem:[%s420 + $0x20] sm:$0xff] %v437
                  %v439 = vld [vmem:[%s419 + $0x44] sm:$0xff]
                  %440 = vst [vmem:[%s420 + $0x28] sm:$0xff] %v439
                  %v441 = vld [vmem:[%s419 + $0x4c] sm:$0xff]
                  %442 = vst [vmem:[%s420 + $0x30] sm:$0xff] %v441
                  %v443 = vld [vmem:[%s419 + $0x54] sm:$0xff]
                  %444 = vst [vmem:[%s420 + $0x38] sm:$0xff] %v443
                  %v445 = vld [vmem:[%s419 + $0x5c] sm:$0xff]
                  %446 = vst [vmem:[%s420 + $0x40] sm:$0xff] %v445
                  %v447 = vld [vmem:[%s419 + $0x64] sm:$0xff]
                  %448 = vst [vmem:[%s420 + $0x48] sm:$0xff] %v447
                  %v449 = vld [vmem:[%s419 + $0x6c] sm:$0xff]
                  %450 = vst [vmem:[%s420 + $0x50] sm:$0xff] %v449
                  %v451 = vld [vmem:[%s419 + $0x74] sm:$0xff]
                  %452 = vst [vmem:[%s420 + $0x58] sm:$0xff] %v451
                  %v453 = vld [vmem:[%s419 + $0x78] sm:$0xff]
                  %454 = vst [vmem:[%s420 + $0x40] sm:$0xff] %v453
                  %v455 = vld [vmem:[%s419 + $0x80] sm:$0xff]
                  %456 = vst [vmem:[%s420 + $0x48] sm:$0xff] %v455
                  %v457 = vld [vmem:[%s419 + $0x88] sm:$0xff]
                  %458 = vst [vmem:[%s420 + $0x50] sm:$0xff] %v457
                  %v459 = vld [vmem:[%s419 + $0x90] sm:$0xff]
                  %460 = vst [vmem:[%s420 + $0x58] sm:$0xff] %v459
                  %v461 = vld [vmem:[%s419 + $0x98] sm:$0xff]
                  %462 = vst [vmem:[%s420 + $0x60] sm:$0xff] %v461
                  %v463 = vld [vmem:[%s419 + $0xa0] sm:$0xff]
                  %464 = vst [vmem:[%s420 + $0x68] sm:$0xff] %v463
                  %v465 = vld [vmem:[%s419 + $0xa8] sm:$0xff]
                  %466 = vst [vmem:[%s420 + $0x70] sm:$0xff] %v465
                  %v467 = vld [vmem:[%s419 + $0xb0] sm:$0xff]
                  %468 = vst [vmem:[%s420 + $0x78] sm:$0xff] %v467
                  %v469 = vld [vmem:[%s419 + $0xb4] sm:$0xff]
                  %470 = vst [vmem:[%s420 + $0x60] sm:$0xff] %v469
                  %v471 = vld [vmem:[%s419 + $0xbc] sm:$0xff]
                  %472 = vst [vmem:[%s420 + $0x68] sm:$0xff] %v471
                  %v473 = vld [vmem:[%s419 + $0xc4] sm:$0xff]
                  %474 = vst [vmem:[%s420 + $0x70] sm:$0xff] %v473
                  %v475 = vld [vmem:[%s419 + $0xcc] sm:$0xff]
                  %476 = vst [vmem:[%s420 + $0x78] sm:$0xff] %v475
                  %v477 = vld [vmem:[%s419 + $0xd4] sm:$0xff]
                  %478 = vst [vmem:[%s420 + $0x80] sm:$0xff] %v477
                  %v479 = vld [vmem:[%s419 + $0xdc] sm:$0xff]
                  %480 = vst [vmem:[%s420 + $0x88] sm:$0xff] %v479
                  %v481 = vld [vmem:[%s419 + $0xe4] sm:$0xff]
                  %482 = vst [vmem:[%s420 + $0x90] sm:$0xff] %v481
                  %v483 = vld [vmem:[%s419 + $0xec] sm:$0xff]
                  %484 = vst [vmem:[%s420 + $0x98] sm:$0xff] %v483
                  %v485 = vld [vmem:[%s419 + $0xf0] sm:$0xff]
                  %486 = vst [vmem:[%s420 + $0x80] sm:$0xff] %v485
                  %v487 = vld [vmem:[%s419 + $0xf8] sm:$0xff]
                  %488 = vst [vmem:[%s420 + $0x88] sm:$0xff] %v487
                  %v489 = vld [vmem:[%s419 + $0x100] sm:$0xff]
                  %490 = vst [vmem:[%s420 + $0x90] sm:$0xff] %v489
                  %v491 = vld [vmem:[%s419 + $0x108] sm:$0xff]
                  %492 = vst [vmem:[%s420 + $0x98] sm:$0xff] %v491
                  %v493 = vld [vmem:[%s419 + $0x110] sm:$0xff]
                  %494 = vst [vmem:[%s420 + $0xa0] sm:$0xff] %v493
                  %v495 = vld [vmem:[%s419 + $0x118] sm:$0xff]
                  %496 = vst [vmem:[%s420 + $0xa8] sm:$0xff] %v495
                  %v497 = vld [vmem:[%s419 + $0x120] sm:$0xff]
                  %498 = vst [vmem:[%s420 + $0xb0] sm:$0xff] %v497
                  %v499 = vld [vmem:[%s419 + $0x128] sm:$0xff]
                  %500 = vst [vmem:[%s420 + $0xb8] sm:$0xff] %v499
                  %v501 = vld [vmem:[%s419 + $0x12c] sm:$0xff]
                  %502 = vst [vmem:[%s420 + $0xa0] sm:$0xff] %v501
                  %v503 = vld [vmem:[%s419 + $0x134] sm:$0xff]
                  %504 = vst [vmem:[%s420 + $0xa8] sm:$0xff] %v503
                  %v505 = vld [vmem:[%s419 + $0x13c] sm:$0xff]
                  %506 = vst [vmem:[%s420 + $0xb0] sm:$0xff] %v505
                  %v507 = vld [vmem:[%s419 + $0x144] sm:$0xff]
                  %508 = vst [vmem:[%s420 + $0xb8] sm:$0xff] %v507
                  %v509 = vld [vmem:[%s419 + $0x14c] sm:$0xff]
                  %510 = vst [vmem:[%s420 + $0xc0] sm:$0xff] %v509
                  %v511 = vld [vmem:[%s419 + $0x154] sm:$0xff]
                  %512 = vst [vmem:[%s420 + $0xc8] sm:$0xff] %v511
                  %v513 = vld [vmem:[%s419 + $0x15c] sm:$0xff]
                  %514 = vst [vmem:[%s420 + $0xd0] sm:$0xff] %v513
                  %v515 = vld [vmem:[%s419 + $0x164] sm:$0xff]
                  %516 = vst [vmem:[%s420 + $0xd8] sm:$0xff] %v515
                  %v517 = vld [vmem:[%s419 + $0x168] sm:$0xff]
                  %518 = vst [vmem:[%s420 + $0xc0] sm:$0xff] %v517
                  %v519 = vld [vmem:[%s419 + $0x170] sm:$0xff]
                  %520 = vst [vmem:[%s420 + $0xc8] sm:$0xff] %v519
                  %v521 = vld [vmem:[%s419 + $0x178] sm:$0xff]
                  %522 = vst [vmem:[%s420 + $0xd0] sm:$0xff] %v521
                  %v523 = vld [vmem:[%s419 + $0x180] sm:$0xff]
                  %524 = vst [vmem:[%s420 + $0xd8] sm:$0xff] %v523
                  %v525 = vld [vmem:[%s419 + $0x188] sm:$0xff]
                  %526 = vst [vmem:[%s420 + $0xe0] sm:$0xff] %v525
                  %v527 = vld [vmem:[%s419 + $0x190] sm:$0xff]
                  %528 = vst [vmem:[%s420 + $0xe8] sm:$0xff] %v527
                  %v529 = vld [vmem:[%s419 + $0x198] sm:$0xff]
                  %530 = vst [vmem:[%s420 + $0xf0] sm:$0xff] %v529
                  %v531 = vld [vmem:[%s419 + $0x1a0] sm:$0xff]
                  %532 = vst [vmem:[%s420 + $0xf8] sm:$0xff] %v531
                  %v533 = vld [vmem:[%s419 + $0x1a4] sm:$0xff]
                  %534 = vst [vmem:[%s420 + $0xe0] sm:$0xff] %v533
                  %v535 = vld [vmem:[%s419 + $0x1ac] sm:$0xff]
                  %536 = vst [vmem:[%s420 + $0xe8] sm:$0xff] %v535
                  %v537 = vld [vmem:[%s419 + $0x1b4] sm:$0xff]
                  %538 = vst [vmem:[%s420 + $0xf0] sm:$0xff] %v537
                  %v539 = vld [vmem:[%s419 + $0x1bc] sm:$0xff]
                  %540 = vst [vmem:[%s420 + $0xf8] sm:$0xff] %v539
                  %v541 = vld [vmem:[%s419 + $0x1c4] sm:$0xff]
                  %542 = vst [vmem:[%s420 + $0x100] sm:$0xff] %v541
                  %v543 = vld [vmem:[%s419 + $0x1cc] sm:$0xff]
                  %544 = vst [vmem:[%s420 + $0x108] sm:$0xff] %v543
                  %v545 = vld [vmem:[%s419 + $0x1d4] sm:$0xff]
                  %546 = vst [vmem:[%s420 + $0x110] sm:$0xff] %v545
                  %v547 = vld [vmem:[%s419 + $0x1dc] sm:$0xff]
                  %548 = vst [vmem:[%s420 + $0x118] sm:$0xff] %v547
                  %s549 = sadd.s32 1, %s418
                  %p550 = scmp.ge.s32.totalorder %s549, %s409
                  %s551 = scalar_select %p550, 0, %s549
                  %s552 = smul.u32 %s551, 64
                  %s553 = smul.u32 %s551, 64
                  %s554 = scalar_lea.vmem %s167, %s552
                  %s555 = scalar_lea.vmem %s159, %s553 [#allocation2]
                $region78: #{qnetwork_forward.3} parent=72 // loop_footer
                  %s415 = sadd.s32 %s413, 1
                $region79: #{qnetwork_forward.3} parent=72 // loop_footer_branch
                  %412 = sbr.rel target = $region75
                $region80: #{qnetwork_forward.3} parent=72 // loop_exit
                  _
                %s556 = sshrl.u32 %s408, 3
                %s557 = sand.u32 %s408, 7
                %s558 = smul.u32 %s556, 8
                %s559 = smul.u32 128, %s558
                %s560 = sshra.s32 %s559, 4
                %s561 = scalar_lea.vmem %s167, %s560
                %s562 = smul.u32 128, %s558
                %s563 = sshra.s32 %s562, 4
                %s564 = scalar_lea.vmem %s159, %s563 [#allocation2]
                // While loop
                $region81: #{qnetwork_forward.3} parent=72 // loop_pre_header
                  _
                $region82: #{qnetwork_forward.3} parent=72 // loop_header
                  %s568 = sphi 0, %s570
                  %p569 = scmp.ge.s32.totalorder %s568, %s557
                  %s573 = sphi 0, %s594
                  %s574 = sphi %s561, %s597
                  %s575 = sphi %s564, %s598
                $region83: #{qnetwork_forward.3} parent=72 // loop_header_branch
                  %572 = sbr.rel (%p569) target = $region87
                $region84: #{qnetwork_forward.3} parent=72 // loop_body
                  %v576 = vld [vmem:[%s574] sm:$0xff]
                  %577 = vst [vmem:[%s575] sm:$0xff] %v576
                  %v578 = vld [vmem:[%s574 + $0x3c] sm:$0xff]
                  %579 = vst [vmem:[%s575 + $0x20] sm:$0xff] %v578
                  %v580 = vld [vmem:[%s574 + $0x78] sm:$0xff]
                  %581 = vst [vmem:[%s575 + $0x40] sm:$0xff] %v580
                  %v582 = vld [vmem:[%s574 + $0xb4] sm:$0xff]
                  %583 = vst [vmem:[%s575 + $0x60] sm:$0xff] %v582
                  %v584 = vld [vmem:[%s574 + $0xf0] sm:$0xff]
                  %585 = vst [vmem:[%s575 + $0x80] sm:$0xff] %v584
                  %v586 = vld [vmem:[%s574 + $0x12c] sm:$0xff]
                  %587 = vst [vmem:[%s575 + $0xa0] sm:$0xff] %v586
                  %v588 = vld [vmem:[%s574 + $0x168] sm:$0xff]
                  %589 = vst [vmem:[%s575 + $0xc0] sm:$0xff] %v588
                  %v590 = vld [vmem:[%s574 + $0x1a4] sm:$0xff]
                  %591 = vst [vmem:[%s575 + $0xe0] sm:$0xff] %v590
                  %s592 = sadd.s32 1, %s573
                  %p593 = scmp.ge.s32.totalorder %s592, %s557
                  %s594 = scalar_select %p593, 0, %s592
                  %s595 = smul.u32 %s594, 8
                  %s596 = smul.u32 %s594, 8
                  %s597 = scalar_lea.vmem %s561, %s595
                  %s598 = scalar_lea.vmem %s564, %s596 [#allocation2]
                $region85: #{qnetwork_forward.3} parent=72 // loop_footer
                  %s570 = sadd.s32 %s568, 1
                $region86: #{qnetwork_forward.3} parent=72 // loop_footer_branch
                  %567 = sbr.rel target = $region82
                $region87: #{qnetwork_forward.3} parent=72 // loop_exit
                  _
                %s599 = sshllo.u32 0, %s403
                loop: start=0, step=1, limit=1
                $region88: #{qnetwork_forward.3} parent=72 // loop_pre_header
                  _
                $region89: #{qnetwork_forward.3} parent=72 // loop_header
                  %s601 = sphi 0, %s605
                  %p602 = scmp.ge.s32.totalorder %s601, 1
                  %s606 = sphi %s405, %s405
                  %s607 = sphi %s407, %s407
                $region90: #{qnetwork_forward.3} parent=72 // loop_header_branch
                  %604 = sbr.rel (%p602) target = $region94
                $region91: #{qnetwork_forward.3} parent=72 // loop_body
                  %v608 = vld [vmem:[%s606] sm:%s599]
                  %609 = vst [vmem:[%s607] sm:%s599] %v608
                  %v610 = vld [vmem:[%s606 + $0x3c] sm:%s599]
                  %611 = vst [vmem:[%s607 + $0x20] sm:%s599] %v610
                  %v612 = vld [vmem:[%s606 + $0x78] sm:%s599]
                  %613 = vst [vmem:[%s607 + $0x40] sm:%s599] %v612
                  %v614 = vld [vmem:[%s606 + $0xb4] sm:%s599]
                  %615 = vst [vmem:[%s607 + $0x60] sm:%s599] %v614
                  %v616 = vld [vmem:[%s606 + $0xf0] sm:%s599]
                  %617 = vst [vmem:[%s607 + $0x80] sm:%s599] %v616
                  %v618 = vld [vmem:[%s606 + $0x12c] sm:%s599]
                  %619 = vst [vmem:[%s607 + $0xa0] sm:%s599] %v618
                  %v620 = vld [vmem:[%s606 + $0x168] sm:%s599]
                  %621 = vst [vmem:[%s607 + $0xc0] sm:%s599] %v620
                  %v622 = vld [vmem:[%s606 + $0x1a4] sm:%s599]
                  %623 = vst [vmem:[%s607 + $0xe0] sm:%s599] %v622
                $region92: #{qnetwork_forward.3} parent=72 // loop_footer
                  %s605 = sadd.s32 1, %s601
                $region93: #{qnetwork_forward.3} parent=72 // loop_footer_branch
                  %600 = sbr.rel target = $region89
                $region94: #{qnetwork_forward.3} parent=72 // loop_exit
                  _
              $region73: #{qnetwork_forward.3} parent=39 // pred_fallthru
                _
            $region40: #{qnetwork_forward.3} parent=35 // pred_fallthru
              _
            // Predicated region
            $region41: #{qnetwork_forward.3} parent=35 // pred_check
              %p176 = pneg %p172
            $region42: #{qnetwork_forward.3} parent=35 // pred_check_branch
              %178 = sbr.rel (%p176) target = $region44
            $region43: #{qnetwork_forward.3} parent=35 // pred_region
              %s179 = sshllo.u32 0, %s168
              loop: start=0, step=1, limit=1
              $region45: #{qnetwork_forward.3} parent=43 // loop_pre_header
                _
              $region46: #{qnetwork_forward.3} parent=43 // loop_header
                %s181 = sphi 0, %s185
                %p182 = scmp.ge.s32.totalorder %s181, 1
                %s186 = sphi %s167, %s167
                %s187 = sphi %s159, %s159
              $region47: #{qnetwork_forward.3} parent=43 // loop_header_branch
                %184 = sbr.rel (%p182) target = $region51
              $region48: #{qnetwork_forward.3} parent=43 // loop_body
                %v188 = vld [vmem:[%s186] sm:%s179]
                %189 = vst [vmem:[%s187] sm:%s179] %v188
                %v190 = vld [vmem:[%s186 + $0x3c] sm:%s179]
                %191 = vst [vmem:[%s187 + $0x20] sm:%s179] %v190
                %v192 = vld [vmem:[%s186 + $0x78] sm:%s179]
                %193 = vst [vmem:[%s187 + $0x40] sm:%s179] %v192
                %v194 = vld [vmem:[%s186 + $0xb4] sm:%s179]
                %195 = vst [vmem:[%s187 + $0x60] sm:%s179] %v194
                %v196 = vld [vmem:[%s186 + $0xf0] sm:%s179]
                %197 = vst [vmem:[%s187 + $0x80] sm:%s179] %v196
                %v198 = vld [vmem:[%s186 + $0x12c] sm:%s179]
                %199 = vst [vmem:[%s187 + $0xa0] sm:%s179] %v198
                %v200 = vld [vmem:[%s186 + $0x168] sm:%s179]
                %201 = vst [vmem:[%s187 + $0xc0] sm:%s179] %v200
                %v202 = vld [vmem:[%s186 + $0x1a4] sm:%s179]
                %203 = vst [vmem:[%s187 + $0xe0] sm:%s179] %v202
              $region49: #{qnetwork_forward.3} parent=43 // loop_footer
                %s185 = sadd.s32 1, %s181
              $region50: #{qnetwork_forward.3} parent=43 // loop_footer_branch
                %180 = sbr.rel target = $region46
              $region51: #{qnetwork_forward.3} parent=43 // loop_exit
                _
            $region44: #{qnetwork_forward.3} parent=35 // pred_fallthru
              _
          $region36: #{qnetwork_forward.3} parent=31 // pred_fallthru
            _
          %624 = vnop
        $region32: #{qnetwork_forward.3} parent=27 // pred_fallthru
          _
      $region28: #{qnetwork_forward.3} parent=5 // pred_fallthru
        _
      %p625 = scmp.le.s32.totalorder 1, %s10
      %p626 = scmp.lt.s32.totalorder %s10, 3
      %p627 = pnand %p625, %p626
      %p628 = pneg %p627
      // Predicated region
      $region95: #{qnetwork_forward.3} parent=5 // pred_check
        _
      $region96: #{qnetwork_forward.3} parent=5 // pred_check_branch
        %630 = sbr.rel (%p627) target = $region98
      $region97: #{qnetwork_forward.3} parent=5 // pred_region
        %s631 = ssub.s32 %s10, 1
        %s632 = sand.u32 %s44, 1
        %s633 = sand.u32 %s44, 1
        %s634 = smul.addr %s633, 256
        %s635 = scalar_lea.vmem [#allocation2], %s634
        // Predicated region
        $region99: #{qnetwork_forward.3} parent=97 // pred_check
          %p636 = pneg %p57
        $region100: #{qnetwork_forward.3} parent=97 // pred_check_branch
          %638 = sbr.rel (%p636) target = $region102
        $region101: #{qnetwork_forward.3} parent=97 // pred_region
          _
        $region102: #{qnetwork_forward.3} parent=97 // pred_fallthru
          _
        %p639 = pneg %p31
        %p640 = pneg %p28
        %s641 = sand.u32 %s44, 1
        %s642 = sand.u32 %s44, 1
        %s643 = smul.addr %s642, 256
        %s644 = scalar_lea.vmem [#allocation2], %s643
        %p645 = pneg %p57
        %p646 = pneg %p54
        %p647 = pneg %p78
        %p648 = pneg %p75
        %p649 = pneg %p99
        %p650 = pneg %p96
        %p651 = pneg %p125
        %p652 = pneg %p122
        %s653 = sand.u32 %s112, 1
        %s654 = sand.u32 %s112, 1
        %s655 = smul.addr %s654, 64
        %s656 = scalar_lea.vmem [#allocation3], %s655
        %s657 = smul.u32 8, %s15
        %s658 = ssub.s32 15, %s657
        %p659 = scmp.lt.s32.totalorder %s658, 8
        %s660 = scalar_select %p659, %s658, 8
        %s661 = smul.u32 512, %s660
        %s662 = smul.u32 8, %s15
        %s663 = ssub.s32 15, %s662
        %p664 = scmp.lt.s32.totalorder %s663, 8
        %s665 = scalar_select %p664, %s663, 8
        %s666 = smul.u32 128, %s665
        %v668 = vld [vmem:[%s0] sm:$0xf]
        %v669 = vld [vmem:[%s0 + $0x4] sm:$0xf]
        %v670 = vld [vmem:[%s635] sm:$0xff]
        %v671 = vld [vmem:[%s635 + $0x8] sm:$0xff]
        %v672 = vld [vmem:[%s635 + $0x10] sm:$0xff]
        %v673 = vld [vmem:[%s635 + $0x18] sm:$0xff]
        %v674 = vld [vmem:[%s635 + $0x20] sm:$0xff]
        %v675 = vld [vmem:[%s635 + $0x28] sm:$0xff]
        %v676 = vld [vmem:[%s635 + $0x30] sm:$0xff]
        %v677 = vld [vmem:[%s635 + $0x38] sm:$0xff]
        %v678 = vld [vmem:[%s635 + $0x40] sm:$0xff]
        %v679 = vld [vmem:[%s635 + $0x48] sm:$0xff]
        %v680 = vld [vmem:[%s635 + $0x50] sm:$0xff]
        %v681 = vld [vmem:[%s635 + $0x58] sm:$0xff]
        %v682 = vld [vmem:[%s635 + $0x60] sm:$0xff]
        %v683 = vld [vmem:[%s635 + $0x68] sm:$0xff]
        %v684 = vld [vmem:[%s635 + $0x70] sm:$0xff]
        %v685 = vld [vmem:[%s635 + $0x78] sm:$0xff]
        %v686 = vld [vmem:[%s635 + $0x80] sm:$0xff]
        %v687 = vld [vmem:[%s635 + $0x88] sm:$0xff]
        %v688 = vld [vmem:[%s635 + $0x90] sm:$0xff]
        %v689 = vld [vmem:[%s635 + $0x98] sm:$0xff]
        %v690 = vld [vmem:[%s635 + $0xa0] sm:$0xff]
        %v691 = vld [vmem:[%s635 + $0xa8] sm:$0xff]
        %v692 = vld [vmem:[%s635 + $0xb0] sm:$0xff]
        %v693 = vld [vmem:[%s635 + $0xb8] sm:$0xff]
        %v694 = vld [vmem:[%s635 + $0xc0] sm:$0xff]
        %v695 = vld [vmem:[%s635 + $0xc8] sm:$0xff]
        %v696 = vld [vmem:[%s635 + $0xd0] sm:$0xff]
        %v697 = vld [vmem:[%s635 + $0xd8] sm:$0xff]
        %v698 = vld [vmem:[%s635 + $0xe0] sm:$0xff]
        %v699 = vld [vmem:[%s635 + $0xe8] sm:$0xff]
        %v700 = vld [vmem:[%s635 + $0xf0] sm:$0xff]
        %v701 = vld [vmem:[%s635 + $0xf8] sm:$0xff]
        %v704 = vunpack.c.l.b16 %v668
        %v705 = vunpack.c.l.b16 %v669
        %v706 = vpack.c.b16 %v705, %v704
        %v739 = vunpack.c.l.b16 %v670
        %v740 = vunpack.c.h.b16 %v670
        %v741 = vunpack.c.l.b16 %v671
        %v742 = vunpack.c.h.b16 %v671
        %v743 = vunpack.c.l.b16 %v672
        %v744 = vunpack.c.h.b16 %v672
        %v745 = vunpack.c.l.b16 %v673
        %v746 = vunpack.c.h.b16 %v673
        %v747 = vunpack.c.l.b16 %v674
        %v748 = vunpack.c.h.b16 %v674
        %v749 = vunpack.c.l.b16 %v675
        %v750 = vunpack.c.h.b16 %v675
        %v751 = vunpack.c.l.b16 %v676
        %v752 = vunpack.c.h.b16 %v676
        %v753 = vunpack.c.l.b16 %v677
        %v754 = vunpack.c.h.b16 %v677
        %v755 = vunpack.c.l.b16 %v678
        %v756 = vunpack.c.h.b16 %v678
        %v757 = vunpack.c.l.b16 %v679
        %v758 = vunpack.c.h.b16 %v679
        %v759 = vunpack.c.l.b16 %v680
        %v760 = vunpack.c.h.b16 %v680
        %v761 = vunpack.c.l.b16 %v681
        %v762 = vunpack.c.h.b16 %v681
        %v763 = vunpack.c.l.b16 %v682
        %v764 = vunpack.c.h.b16 %v682
        %v765 = vunpack.c.l.b16 %v683
        %v766 = vunpack.c.h.b16 %v683
        %v767 = vunpack.c.l.b16 %v684
        %v768 = vunpack.c.h.b16 %v684
        %v769 = vunpack.c.l.b16 %v685
        %v770 = vunpack.c.h.b16 %v685
        %v771 = vunpack.c.l.b16 %v686
        %v772 = vunpack.c.h.b16 %v686
        %v773 = vunpack.c.l.b16 %v687
        %v774 = vunpack.c.h.b16 %v687
        %v775 = vunpack.c.l.b16 %v688
        %v776 = vunpack.c.h.b16 %v688
        %v777 = vunpack.c.l.b16 %v689
        %v778 = vunpack.c.h.b16 %v689
        %v779 = vunpack.c.l.b16 %v690
        %v780 = vunpack.c.h.b16 %v690
        %v781 = vunpack.c.l.b16 %v691
        %v782 = vunpack.c.h.b16 %v691
        %v783 = vunpack.c.l.b16 %v692
        %v784 = vunpack.c.h.b16 %v692
        %v785 = vunpack.c.l.b16 %v693
        %v786 = vunpack.c.h.b16 %v693
        %v787 = vunpack.c.l.b16 %v694
        %v788 = vunpack.c.h.b16 %v694
        %v789 = vunpack.c.l.b16 %v695
        %v790 = vunpack.c.h.b16 %v695
        %v791 = vunpack.c.l.b16 %v696
        %v792 = vunpack.c.h.b16 %v696
        %v793 = vunpack.c.l.b16 %v697
        %v794 = vunpack.c.h.b16 %v697
        %v795 = vunpack.c.l.b16 %v698
        %v796 = vunpack.c.h.b16 %v698
        %v797 = vunpack.c.l.b16 %v699
        %v798 = vunpack.c.h.b16 %v699
        %v799 = vunpack.c.l.b16 %v700
        %v800 = vunpack.c.h.b16 %v700
        %v801 = vunpack.c.l.b16 %v701
        %v802 = vunpack.c.h.b16 %v701
        %v803 = vpack.c.b16 %v747, %v739
        %v804 = vpack.c.b16 %v748, %v740
        %v805 = vpack.c.b16 %v749, %v741
        %v806 = vpack.c.b16 %v750, %v742
        %v807 = vpack.c.b16 %v751, %v743
        %v808 = vpack.c.b16 %v752, %v744
        %v809 = vpack.c.b16 %v753, %v745
        %v810 = vpack.c.b16 %v754, %v746
        %v811 = vpack.c.b16 %v763, %v755
        %v812 = vpack.c.b16 %v764, %v756
        %v813 = vpack.c.b16 %v765, %v757
        %v814 = vpack.c.b16 %v766, %v758
        %v815 = vpack.c.b16 %v767, %v759
        %v816 = vpack.c.b16 %v768, %v760
        %v817 = vpack.c.b16 %v769, %v761
        %v818 = vpack.c.b16 %v770, %v762
        %v819 = vpack.c.b16 %v779, %v771
        %v820 = vpack.c.b16 %v780, %v772
        %v821 = vpack.c.b16 %v781, %v773
        %v822 = vpack.c.b16 %v782, %v774
        %v823 = vpack.c.b16 %v783, %v775
        %v824 = vpack.c.b16 %v784, %v776
        %v825 = vpack.c.b16 %v785, %v777
        %v826 = vpack.c.b16 %v786, %v778
        %v827 = vpack.c.b16 %v795, %v787
        %v828 = vpack.c.b16 %v796, %v788
        %v829 = vpack.c.b16 %v797, %v789
        %v830 = vpack.c.b16 %v798, %v790
        %v831 = vpack.c.b16 %v799, %v791
        %v832 = vpack.c.b16 %v800, %v792
        %v833 = vpack.c.b16 %v801, %v793
        %v834 = vpack.c.b16 %v802, %v794
        %vm867 = vcmask 523264
        %v869 = vsel %vm867, %v706, 0
        %871 = vmatprep.subr.bf16.mxu0 %v804
        %872 = vmatpush1.bf16.msra.mxu0 %v803
        %873 = vmatprep.subr.bf16.mxu0 %v812
        %874 = vmatpush1.bf16.msra.mxu0 %v811
        %875 = vmatprep.subr.bf16.mxu0 %v820
        %876 = vmatpush1.bf16.msra.mxu0 %v819
        %877 = vmatprep.subr.bf16.mxu0 %v828
        %878 = vmatpush1.bf16.msra.mxu0 %v827
        %879 = vmatprep.subr.bf16.mxu0 0
        %880 = vmatpush1.bf16.msra.mxu0 0
        %881 = vmatprep.subr.bf16.mxu0 0
        %882 = vmatpush1.bf16.msra.mxu0 0
        %883 = vmatprep.subr.bf16.mxu0 0
        %884 = vmatpush1.bf16.msra.mxu0 0
        %885 = vmatprep.subr.bf16.mxu0 0
        %886 = vmatpush1.bf16.msra.mxu0 0
        %887 = vmatprep.subr.bf16.mxu0 0
        %888 = vmatpush1.bf16.msra.mxu0 0
        %889 = vmatprep.subr.bf16.mxu0 0
        %890 = vmatpush1.bf16.msra.mxu0 0
        %891 = vmatprep.subr.bf16.mxu0 0
        %892 = vmatpush1.bf16.msra.mxu0 0
        %893 = vmatprep.subr.bf16.mxu0 0
        %894 = vmatpush1.bf16.msra.mxu0 0
        %895 = vmatprep.subr.bf16.mxu0 0
        %896 = vmatpush1.bf16.msra.mxu0 0
        %897 = vmatprep.subr.bf16.mxu0 0
        %898 = vmatpush1.bf16.msra.mxu0 0
        %899 = vmatprep.subr.bf16.mxu0 0
        %900 = vmatpush1.bf16.msra.mxu0 0
        %901 = vmatprep.subr.bf16.mxu0 0
        %902 = vmatpush1.bf16.msra.mxu0 0
        %903 = vmatprep.mubr.bf16.mxu0 0
        %904 = vmatmul.mubr.bf16.gmra.mrb[0].mxu0 %v869
        %v905 = vpop.f32.mrb[0].mxu0
        %v906 = vadd.f32 0.0, %v905
        %v907 = vpop.f32.mrb[0].mxu0
        %v908 = vadd.f32 0.0, %v907
        %v909 = vpop.f32.mrb[0].mxu0
        %v910 = vadd.f32 0.0, %v909
        %v911 = vpop.f32.mrb[0].mxu0
        %v912 = vadd.f32 0.0, %v911
        %913 = vdwg.mxu0
        %914 = vmatprep.subr.bf16.mxu0 %v806
        %915 = vmatpush1.bf16.msra.mxu0 %v805
        %916 = vmatprep.subr.bf16.mxu0 %v814
        %917 = vmatpush1.bf16.msra.mxu0 %v813
        %918 = vmatprep.subr.bf16.mxu0 %v822
        %919 = vmatpush1.bf16.msra.mxu0 %v821
        %920 = vmatprep.subr.bf16.mxu0 %v830
        %921 = vmatpush1.bf16.msra.mxu0 %v829
        %922 = vmatprep.subr.bf16.mxu0 0
        %923 = vmatpush1.bf16.msra.mxu0 0
        %924 = vmatprep.subr.bf16.mxu0 0
        %925 = vmatpush1.bf16.msra.mxu0 0
        %926 = vmatprep.subr.bf16.mxu0 0
        %927 = vmatpush1.bf16.msra.mxu0 0
        %928 = vmatprep.subr.bf16.mxu0 0
        %929 = vmatpush1.bf16.msra.mxu0 0
        %930 = vmatprep.subr.bf16.mxu0 0
        %931 = vmatpush1.bf16.msra.mxu0 0
        %932 = vmatprep.subr.bf16.mxu0 0
        %933 = vmatpush1.bf16.msra.mxu0 0
        %934 = vmatprep.subr.bf16.mxu0 0
        %935 = vmatpush1.bf16.msra.mxu0 0
        %936 = vmatprep.subr.bf16.mxu0 0
        %937 = vmatpush1.bf16.msra.mxu0 0
        %938 = vmatprep.subr.bf16.mxu0 0
        %939 = vmatpush1.bf16.msra.mxu0 0
        %940 = vmatprep.subr.bf16.mxu0 0
        %941 = vmatpush1.bf16.msra.mxu0 0
        %942 = vmatprep.subr.bf16.mxu0 0
        %943 = vmatpush1.bf16.msra.mxu0 0
        %944 = vmatprep.subr.bf16.mxu0 0
        %945 = vmatpush1.bf16.msra.mxu0 0
        %946 = vmatprep.mubr.bf16.mxu0 0
        %947 = vmatmul.mubr.bf16.gmra.mrb[0].mxu0 %v869
        %v948 = vpop.f32.mrb[0].mxu0
        %v949 = vadd.f32 0.0, %v948
        %v950 = vpop.f32.mrb[0].mxu0
        %v951 = vadd.f32 0.0, %v950
        %v952 = vpop.f32.mrb[0].mxu0
        %v953 = vadd.f32 0.0, %v952
        %v954 = vpop.f32.mrb[0].mxu0
        %v955 = vadd.f32 0.0, %v954
        %956 = vdwg.mxu0
        %957 = vmatprep.subr.bf16.mxu0 %v808
        %958 = vmatpush1.bf16.msra.mxu0 %v807
        %959 = vmatprep.subr.bf16.mxu0 %v816
        %960 = vmatpush1.bf16.msra.mxu0 %v815
        %961 = vmatprep.subr.bf16.mxu0 %v824
        %962 = vmatpush1.bf16.msra.mxu0 %v823
        %963 = vmatprep.subr.bf16.mxu0 %v832
        %964 = vmatpush1.bf16.msra.mxu0 %v831
        %965 = vmatprep.subr.bf16.mxu0 0
        %966 = vmatpush1.bf16.msra.mxu0 0
        %967 = vmatprep.subr.bf16.mxu0 0
        %968 = vmatpush1.bf16.msra.mxu0 0
        %969 = vmatprep.subr.bf16.mxu0 0
        %970 = vmatpush1.bf16.msra.mxu0 0
        %971 = vmatprep.subr.bf16.mxu0 0
        %972 = vmatpush1.bf16.msra.mxu0 0
        %973 = vmatprep.subr.bf16.mxu0 0
        %974 = vmatpush1.bf16.msra.mxu0 0
        %975 = vmatprep.subr.bf16.mxu0 0
        %976 = vmatpush1.bf16.msra.mxu0 0
        %977 = vmatprep.subr.bf16.mxu0 0
        %978 = vmatpush1.bf16.msra.mxu0 0
        %979 = vmatprep.subr.bf16.mxu0 0
        %980 = vmatpush1.bf16.msra.mxu0 0
        %981 = vmatprep.subr.bf16.mxu0 0
        %982 = vmatpush1.bf16.msra.mxu0 0
        %983 = vmatprep.subr.bf16.mxu0 0
        %984 = vmatpush1.bf16.msra.mxu0 0
        %985 = vmatprep.subr.bf16.mxu0 0
        %986 = vmatpush1.bf16.msra.mxu0 0
        %987 = vmatprep.subr.bf16.mxu0 0
        %988 = vmatpush1.bf16.msra.mxu0 0
        %989 = vmatprep.mubr.bf16.mxu0 0
        %990 = vmatmul.mubr.bf16.gmra.mrb[0].mxu0 %v869
        %v991 = vpop.f32.mrb[0].mxu0
        %v992 = vadd.f32 0.0, %v991
        %v993 = vpop.f32.mrb[0].mxu0
        %v994 = vadd.f32 0.0, %v993
        %v995 = vpop.f32.mrb[0].mxu0
        %v996 = vadd.f32 0.0, %v995
        %v997 = vpop.f32.mrb[0].mxu0
        %v998 = vadd.f32 0.0, %v997
        %999 = vdwg.mxu0
        %1000 = vmatprep.subr.bf16.mxu0 %v810
        %1001 = vmatpush1.bf16.msra.mxu0 %v809
        %1002 = vmatprep.subr.bf16.mxu0 %v818
        %1003 = vmatpush1.bf16.msra.mxu0 %v817
        %1004 = vmatprep.subr.bf16.mxu0 %v826
        %1005 = vmatpush1.bf16.msra.mxu0 %v825
        %1006 = vmatprep.subr.bf16.mxu0 %v834
        %1007 = vmatpush1.bf16.msra.mxu0 %v833
        %1008 = vmatprep.subr.bf16.mxu0 0
        %1009 = vmatpush1.bf16.msra.mxu0 0
        %1010 = vmatprep.subr.bf16.mxu0 0
        %1011 = vmatpush1.bf16.msra.mxu0 0
        %1012 = vmatprep.subr.bf16.mxu0 0
        %1013 = vmatpush1.bf16.msra.mxu0 0
        %1014 = vmatprep.subr.bf16.mxu0 0
        %1015 = vmatpush1.bf16.msra.mxu0 0
        %1016 = vmatprep.subr.bf16.mxu0 0
        %1017 = vmatpush1.bf16.msra.mxu0 0
        %1018 = vmatprep.subr.bf16.mxu0 0
        %1019 = vmatpush1.bf16.msra.mxu0 0
        %1020 = vmatprep.subr.bf16.mxu0 0
        %1021 = vmatpush1.bf16.msra.mxu0 0
        %1022 = vmatprep.subr.bf16.mxu0 0
        %1023 = vmatpush1.bf16.msra.mxu0 0
        %1024 = vmatprep.subr.bf16.mxu0 0
        %1025 = vmatpush1.bf16.msra.mxu0 0
        %1026 = vmatprep.subr.bf16.mxu0 0
        %1027 = vmatpush1.bf16.msra.mxu0 0
        %1028 = vmatprep.subr.bf16.mxu0 0
        %1029 = vmatpush1.bf16.msra.mxu0 0
        %1030 = vmatprep.subr.bf16.mxu0 0
        %1031 = vmatpush1.bf16.msra.mxu0 0
        %1032 = vmatprep.mubr.bf16.mxu0 0
        %1033 = vmatmul.mubr.bf16.gmra.mrb[0].mxu0 %v869
        %v1034 = vpop.f32.mrb[0].mxu0
        %v1035 = vadd.f32 0.0, %v1034
        %v1036 = vpop.f32.mrb[0].mxu0
        %v1037 = vadd.f32 0.0, %v1036
        %v1038 = vpop.f32.mrb[0].mxu0
        %v1039 = vadd.f32 0.0, %v1038
        %v1040 = vpop.f32.mrb[0].mxu0
        %v1041 = vadd.f32 0.0, %v1040
        %1042 = vdwg.mxu0
        %v1043 = vld [vmem:[%s2] sm:$0xff]
        %v1044 = vld [vmem:[%s2 + $0x8] sm:$0xff]
        %1046 = vset.pattern.permute.xlu0 0
        %1047 = vperm.xlu0 %1046, %v1043
        %v1048 = vpop.permute.xlu0 %1047
        %1051 = vset.pattern.permute.xlu0 0
        %1052 = vperm.xlu0 %1051, %v1044
        %v1053 = vpop.permute.xlu0 %1052
        %v1055 = vmul.f32 %v906, %v1048
        %v1056 = vmul.f32 %v908, %v1048
        %v1057 = vmul.f32 %v949, %v1048
        %v1058 = vmul.f32 %v951, %v1048
        %v1059 = vmul.f32 %v992, %v1048
        %v1060 = vmul.f32 %v994, %v1048
        %v1061 = vmul.f32 %v1035, %v1048
        %v1062 = vmul.f32 %v1037, %v1048
        %v1063 = vmul.f32 %v910, %v1053
        %v1064 = vmul.f32 %v912, %v1053
        %v1065 = vmul.f32 %v953, %v1053
        %v1066 = vmul.f32 %v955, %v1053
        %v1067 = vmul.f32 %v996, %v1053
        %v1068 = vmul.f32 %v998, %v1053
        %v1069 = vmul.f32 %v1039, %v1053
        %v1070 = vmul.f32 %v1041, %v1053
        %v1071 = vld [vmem:[%s3] sm:$0xff]
        %v1072 = vld [vmem:[%s3 + $0x8] sm:$0xff]
        %1074 = vset.pattern.permute.xlu0 0
        %1075 = vperm.xlu0 %1074, %v1071
        %v1076 = vpop.permute.xlu0 %1075
        %1079 = vset.pattern.permute.xlu0 0
        %1080 = vperm.xlu0 %1079, %v1072
        %v1081 = vpop.permute.xlu0 %1080
        %v1083 = vadd.f32 %v1055, %v1076
        %v1084 = vadd.f32 %v1056, %v1076
        %v1085 = vadd.f32 %v1057, %v1076
        %v1086 = vadd.f32 %v1058, %v1076
        %v1087 = vadd.f32 %v1059, %v1076
        %v1088 = vadd.f32 %v1060, %v1076
        %v1089 = vadd.f32 %v1061, %v1076
        %v1090 = vadd.f32 %v1062, %v1076
        %v1091 = vadd.f32 %v1063, %v1081
        %v1092 = vadd.f32 %v1064, %v1081
        %v1093 = vadd.f32 %v1065, %v1081
        %v1094 = vadd.f32 %v1066, %v1081
        %v1095 = vadd.f32 %v1067, %v1081
        %v1096 = vadd.f32 %v1068, %v1081
        %v1097 = vadd.f32 %v1069, %v1081
        %v1098 = vadd.f32 %v1070, %v1081
        %v1099 = vmax.f32 %v1083, 0.0
        %v1100 = vmax.f32 %v1084, 0.0
        %v1101 = vmax.f32 %v1085, 0.0
        %v1102 = vmax.f32 %v1086, 0.0
        %v1103 = vmax.f32 %v1087, 0.0
        %v1104 = vmax.f32 %v1088, 0.0
        %v1105 = vmax.f32 %v1089, 0.0
        %v1106 = vmax.f32 %v1090, 0.0
        %v1107 = vmax.f32 %v1091, 0.0
        %v1108 = vmax.f32 %v1092, 0.0
        %v1109 = vmax.f32 %v1093, 0.0
        %v1110 = vmax.f32 %v1094, 0.0
        %v1111 = vmax.f32 %v1095, 0.0
        %v1112 = vmax.f32 %v1096, 0.0
        %v1113 = vmax.f32 %v1097, 0.0
        %v1114 = vmax.f32 %v1098, 0.0
        %v1115 = vpack.c.bf16 %v1107, %v1099
        %v1116 = vpack.c.bf16 %v1108, %v1100
        %v1117 = vpack.c.bf16 %v1109, %v1101
        %v1118 = vpack.c.bf16 %v1110, %v1102
        %v1119 = vpack.c.bf16 %v1111, %v1103
        %v1120 = vpack.c.bf16 %v1112, %v1104
        %v1121 = vpack.c.bf16 %v1113, %v1105
        %v1122 = vpack.c.bf16 %v1114, %v1106
        %v1131 = vunpack.c.l.b16 %v1115
        %v1132 = vunpack.c.l.b16 %v1116
        %v1133 = vunpack.c.l.b16 %v1117
        %v1134 = vunpack.c.l.b16 %v1118
        %v1135 = vunpack.c.l.b16 %v1119
        %v1136 = vunpack.c.l.b16 %v1120
        %v1137 = vunpack.c.l.b16 %v1121
        %v1138 = vunpack.c.l.b16 %v1122
        %v1139 = vunpack.c.h.b16 %v1115
        %v1140 = vunpack.c.h.b16 %v1116
        %v1141 = vunpack.c.h.b16 %v1117
        %v1142 = vunpack.c.h.b16 %v1118
        %v1143 = vunpack.c.h.b16 %v1119
        %v1144 = vunpack.c.h.b16 %v1120
        %v1145 = vunpack.c.h.b16 %v1121
        %v1146 = vunpack.c.h.b16 %v1122
        %v1147 = vpack.c.b16 %v1132, %v1131
        %v1148 = vpack.c.b16 %v1134, %v1133
        %v1149 = vpack.c.b16 %v1136, %v1135
        %v1150 = vpack.c.b16 %v1138, %v1137
        %v1151 = vpack.c.b16 %v1140, %v1139
        %v1152 = vpack.c.b16 %v1142, %v1141
        %v1153 = vpack.c.b16 %v1144, %v1143
        %v1154 = vpack.c.b16 %v1146, %v1145
        %1163 = vst [vmem:[%s656] sm:$0xff] %v1147
        %1164 = vst [vmem:[%s656 + $0x8] sm:$0xff] %v1148
        %1165 = vst [vmem:[%s656 + $0x10] sm:$0xff] %v1149
        %1166 = vst [vmem:[%s656 + $0x18] sm:$0xff] %v1150
        %1167 = vst [vmem:[%s656 + $0x20] sm:$0xff] %v1151
        %1168 = vst [vmem:[%s656 + $0x28] sm:$0xff] %v1152
        %1169 = vst [vmem:[%s656 + $0x30] sm:$0xff] %v1153
        %1170 = vst [vmem:[%s656 + $0x38] sm:$0xff] %v1154
        %s1171 = sand.u32 %s112, 1
        %s1172 = sand.u32 %s112, 1
        %s1173 = smul.addr %s1172, 64
        %s1174 = scalar_lea.vmem [#allocation3], %s1173
        // Predicated region
        $region103: #{qnetwork_forward.3} parent=97 // pred_check
          %p1175 = pneg %p122
        $region104: #{qnetwork_forward.3} parent=97 // pred_check_branch
          %1177 = sbr.rel (%p1175) target = $region106
        $region105: #{qnetwork_forward.3} parent=97 // pred_region
          %s1178 = smul.u32 8, %s15
          %s1179 = ssub.s32 15, %s1178
          %p1180 = scmp.lt.s32.totalorder %s1179, 8
          %s1181 = scalar_select %p1180, %s1179, 8
          %s1182 = smul.u32 128, %s1181
          %p1183 = scmp.ne.s32.totalorder 0, %s1182
          %s1184 = smul.addr %s1178, 4
          %s1185 = scalar_lea.vmem %s4, %s1184
          %s1186 = smul.u32 %s1181, 4
          // Predicated region
          $region107: #{qnetwork_forward.3} parent=105 // pred_check
            %p1187 = pneg %p1183
          $region108: #{qnetwork_forward.3} parent=105 // pred_check_branch
            %1189 = sbr.rel (%p1187) target = $region110
          $region109: #{qnetwork_forward.3} parent=105 // pred_region
            %p1190 = scmp.lt.u32.totalorder %s1186, 8
            %p1191 = pneg %p1190
            // Predicated region
            $region111: #{qnetwork_forward.3} parent=109 // pred_check
              _
            $region112: #{qnetwork_forward.3} parent=109 // pred_check_branch
              %1193 = sbr.rel (%p1190) target = $region114
            $region113: #{qnetwork_forward.3} parent=109 // pred_region
              %s1210 = sand.u32 %s1186, 7
              %p1211 = scmp.eq.s32.totalorder %s1210, 0
              // Predicated region
              $region126: #{qnetwork_forward.3} parent=113 // pred_check
                %p1212 = pneg %p1211
              $region127: #{qnetwork_forward.3} parent=113 // pred_check_branch
                %1214 = sbr.rel (%p1212) target = $region129
              $region128: #{qnetwork_forward.3} parent=113 // pred_region
                %s1215 = sshrl.u32 %s1186, 3
                %s1216 = sshrl.u32 %s1215, 5
                // While loop
                $region130: #{qnetwork_forward.3} parent=128 // loop_pre_header
                  _
                $region131: #{qnetwork_forward.3} parent=128 // loop_header
                  %s1220 = sphi 0, %s1222
                  %p1221 = scmp.ge.s32.totalorder %s1220, %s1216
                  %s1225 = sphi 0, %s1358
                  %s1226 = sphi %s1174, %s1361
                  %s1227 = sphi %s1185, %s1362
                $region132: #{qnetwork_forward.3} parent=128 // loop_header_branch
                  %1224 = sbr.rel (%p1221) target = $region136
                $region133: #{qnetwork_forward.3} parent=128 // loop_body
                  %v1228 = vld [vmem:[%s1226] sm:$0xff]
                  %1229 = vst [vmem:[%s1227] sm:$0xff] %v1228
                  %v1230 = vld [vmem:[%s1226 + $0x8] sm:$0xff]
                  %1231 = vst [vmem:[%s1227 + $0x8] sm:$0xff] %v1230
                  %v1232 = vld [vmem:[%s1226 + $0x10] sm:$0xff]
                  %1233 = vst [vmem:[%s1227 + $0x10] sm:$0xff] %v1232
                  %v1234 = vld [vmem:[%s1226 + $0x18] sm:$0xff]
                  %1235 = vst [vmem:[%s1227 + $0x18] sm:$0xff] %v1234
                  %v1236 = vld [vmem:[%s1226 + $0x20] sm:$0xff]
                  %1237 = vst [vmem:[%s1227 + $0x20] sm:$0xff] %v1236
                  %v1238 = vld [vmem:[%s1226 + $0x28] sm:$0xff]
                  %1239 = vst [vmem:[%s1227 + $0x28] sm:$0xff] %v1238
                  %v1240 = vld [vmem:[%s1226 + $0x30] sm:$0xff]
                  %1241 = vst [vmem:[%s1227 + $0x30] sm:$0xff] %v1240
                  %v1242 = vld [vmem:[%s1226 + $0x38] sm:$0xff]
                  %1243 = vst [vmem:[%s1227 + $0x38] sm:$0xff] %v1242
                  %v1244 = vld [vmem:[%s1226 + $0x40] sm:$0xff]
                  %1245 = vst [vmem:[%s1227 + $0x40] sm:$0xff] %v1244
                  %v1246 = vld [vmem:[%s1226 + $0x48] sm:$0xff]
                  %1247 = vst [vmem:[%s1227 + $0x48] sm:$0xff] %v1246
                  %v1248 = vld [vmem:[%s1226 + $0x50] sm:$0xff]
                  %1249 = vst [vmem:[%s1227 + $0x50] sm:$0xff] %v1248
                  %v1250 = vld [vmem:[%s1226 + $0x58] sm:$0xff]
                  %1251 = vst [vmem:[%s1227 + $0x58] sm:$0xff] %v1250
                  %v1252 = vld [vmem:[%s1226 + $0x60] sm:$0xff]
                  %1253 = vst [vmem:[%s1227 + $0x60] sm:$0xff] %v1252
                  %v1254 = vld [vmem:[%s1226 + $0x68] sm:$0xff]
                  %1255 = vst [vmem:[%s1227 + $0x68] sm:$0xff] %v1254
                  %v1256 = vld [vmem:[%s1226 + $0x70] sm:$0xff]
                  %1257 = vst [vmem:[%s1227 + $0x70] sm:$0xff] %v1256
                  %v1258 = vld [vmem:[%s1226 + $0x78] sm:$0xff]
                  %1259 = vst [vmem:[%s1227 + $0x78] sm:$0xff] %v1258
                  %v1260 = vld [vmem:[%s1226 + $0x80] sm:$0xff]
                  %1261 = vst [vmem:[%s1227 + $0x80] sm:$0xff] %v1260
                  %v1262 = vld [vmem:[%s1226 + $0x88] sm:$0xff]
                  %1263 = vst [vmem:[%s1227 + $0x88] sm:$0xff] %v1262
                  %v1264 = vld [vmem:[%s1226 + $0x90] sm:$0xff]
                  %1265 = vst [vmem:[%s1227 + $0x90] sm:$0xff] %v1264
                  %v1266 = vld [vmem:[%s1226 + $0x98] sm:$0xff]
                  %1267 = vst [vmem:[%s1227 + $0x98] sm:$0xff] %v1266
                  %v1268 = vld [vmem:[%s1226 + $0xa0] sm:$0xff]
                  %1269 = vst [vmem:[%s1227 + $0xa0] sm:$0xff] %v1268
                  %v1270 = vld [vmem:[%s1226 + $0xa8] sm:$0xff]
                  %1271 = vst [vmem:[%s1227 + $0xa8] sm:$0xff] %v1270
                  %v1272 = vld [vmem:[%s1226 + $0xb0] sm:$0xff]
                  %1273 = vst [vmem:[%s1227 + $0xb0] sm:$0xff] %v1272
                  %v1274 = vld [vmem:[%s1226 + $0xb8] sm:$0xff]
                  %1275 = vst [vmem:[%s1227 + $0xb8] sm:$0xff] %v1274
                  %v1276 = vld [vmem:[%s1226 + $0xc0] sm:$0xff]
                  %1277 = vst [vmem:[%s1227 + $0xc0] sm:$0xff] %v1276
                  %v1278 = vld [vmem:[%s1226 + $0xc8] sm:$0xff]
                  %1279 = vst [vmem:[%s1227 + $0xc8] sm:$0xff] %v1278
                  %v1280 = vld [vmem:[%s1226 + $0xd0] sm:$0xff]
                  %1281 = vst [vmem:[%s1227 + $0xd0] sm:$0xff] %v1280
                  %v1282 = vld [vmem:[%s1226 + $0xd8] sm:$0xff]
                  %1283 = vst [vmem:[%s1227 + $0xd8] sm:$0xff] %v1282
                  %v1284 = vld [vmem:[%s1226 + $0xe0] sm:$0xff]
                  %1285 = vst [vmem:[%s1227 + $0xe0] sm:$0xff] %v1284
                  %v1286 = vld [vmem:[%s1226 + $0xe8] sm:$0xff]
                  %1287 = vst [vmem:[%s1227 + $0xe8] sm:$0xff] %v1286
                  %v1288 = vld [vmem:[%s1226 + $0xf0] sm:$0xff]
                  %1289 = vst [vmem:[%s1227 + $0xf0] sm:$0xff] %v1288
                  %v1290 = vld [vmem:[%s1226 + $0xf8] sm:$0xff]
                  %1291 = vst [vmem:[%s1227 + $0xf8] sm:$0xff] %v1290
                  %v1292 = vld [vmem:[%s1226 + $0x20] sm:$0xff]
                  %1293 = vst [vmem:[%s1227 + $0x3c] sm:$0xff] %v1292
                  %v1294 = vld [vmem:[%s1226 + $0x28] sm:$0xff]
                  %1295 = vst [vmem:[%s1227 + $0x44] sm:$0xff] %v1294
                  %v1296 = vld [vmem:[%s1226 + $0x30] sm:$0xff]
                  %1297 = vst [vmem:[%s1227 + $0x4c] sm:$0xff] %v1296
                  %v1298 = vld [vmem:[%s1226 + $0x38] sm:$0xff]
                  %1299 = vst [vmem:[%s1227 + $0x54] sm:$0xff] %v1298
                  %v1300 = vld [vmem:[%s1226 + $0x40] sm:$0xff]
                  %1301 = vst [vmem:[%s1227 + $0x5c] sm:$0xff] %v1300
                  %v1302 = vld [vmem:[%s1226 + $0x48] sm:$0xff]
                  %1303 = vst [vmem:[%s1227 + $0x64] sm:$0xff] %v1302
                  %v1304 = vld [vmem:[%s1226 + $0x50] sm:$0xff]
                  %1305 = vst [vmem:[%s1227 + $0x6c] sm:$0xff] %v1304
                  %v1306 = vld [vmem:[%s1226 + $0x58] sm:$0xff]
                  %1307 = vst [vmem:[%s1227 + $0x74] sm:$0xff] %v1306
                  %v1308 = vld [vmem:[%s1226 + $0x60] sm:$0xff]
                  %1309 = vst [vmem:[%s1227 + $0x7c] sm:$0xff] %v1308
                  %v1310 = vld [vmem:[%s1226 + $0x68] sm:$0xff]
                  %1311 = vst [vmem:[%s1227 + $0x84] sm:$0xff] %v1310
                  %v1312 = vld [vmem:[%s1226 + $0x70] sm:$0xff]
                  %1313 = vst [vmem:[%s1227 + $0x8c] sm:$0xff] %v1312
                  %v1314 = vld [vmem:[%s1226 + $0x78] sm:$0xff]
                  %1315 = vst [vmem:[%s1227 + $0x94] sm:$0xff] %v1314
                  %v1316 = vld [vmem:[%s1226 + $0x80] sm:$0xff]
                  %1317 = vst [vmem:[%s1227 + $0x9c] sm:$0xff] %v1316
                  %v1318 = vld [vmem:[%s1226 + $0x88] sm:$0xff]
                  %1319 = vst [vmem:[%s1227 + $0xa4] sm:$0xff] %v1318
                  %v1320 = vld [vmem:[%s1226 + $0x90] sm:$0xff]
                  %1321 = vst [vmem:[%s1227 + $0xac] sm:$0xff] %v1320
                  %v1322 = vld [vmem:[%s1226 + $0x98] sm:$0xff]
                  %1323 = vst [vmem:[%s1227 + $0xb4] sm:$0xff] %v1322
                  %v1324 = vld [vmem:[%s1226 + $0xa0] sm:$0xff]
                  %1325 = vst [vmem:[%s1227 + $0xbc] sm:$0xff] %v1324
                  %v1326 = vld [vmem:[%s1226 + $0xa8] sm:$0xff]
                  %1327 = vst [vmem:[%s1227 + $0xc4] sm:$0xff] %v1326
                  %v1328 = vld [vmem:[%s1226 + $0xb0] sm:$0xff]
                  %1329 = vst [vmem:[%s1227 + $0xcc] sm:$0xff] %v1328
                  %v1330 = vld [vmem:[%s1226 + $0xb8] sm:$0xff]
                  %1331 = vst [vmem:[%s1227 + $0xd4] sm:$0xff] %v1330
                  %v1332 = vld [vmem:[%s1226 + $0xc0] sm:$0xff]
                  %1333 = vst [vmem:[%s1227 + $0xdc] sm:$0xff] %v1332
                  %v1334 = vld [vmem:[%s1226 + $0xc8] sm:$0xff]
                  %1335 = vst [vmem:[%s1227 + $0xe4] sm:$0xff] %v1334
                  %v1336 = vld [vmem:[%s1226 + $0xd0] sm:$0xff]
                  %1337 = vst [vmem:[%s1227 + $0xec] sm:$0xff] %v1336
                  %v1338 = vld [vmem:[%s1226 + $0xd8] sm:$0xff]
                  %1339 = vst [vmem:[%s1227 + $0xf4] sm:$0xff] %v1338
                  %v1340 = vld [vmem:[%s1226 + $0xe0] sm:$0xff]
                  %1341 = vst [vmem:[%s1227 + $0xfc] sm:$0xff] %v1340
                  %v1342 = vld [vmem:[%s1226 + $0xe8] sm:$0xff]
                  %1343 = vst [vmem:[%s1227 + $0x104] sm:$0xff] %v1342
                  %v1344 = vld [vmem:[%s1226 + $0xf0] sm:$0xff]
                  %1345 = vst [vmem:[%s1227 + $0x10c] sm:$0xff] %v1344
                  %v1346 = vld [vmem:[%s1226 + $0xf8] sm:$0xff]
                  %1347 = vst [vmem:[%s1227 + $0x114] sm:$0xff] %v1346
                  %v1348 = vld [vmem:[%s1226 + $0x100] sm:$0xff]
                  %1349 = vst [vmem:[%s1227 + $0x11c] sm:$0xff] %v1348
                  %v1350 = vld [vmem:[%s1226 + $0x108] sm:$0xff]
                  %1351 = vst [vmem:[%s1227 + $0x124] sm:$0xff] %v1350
                  %v1352 = vld [vmem:[%s1226 + $0x110] sm:$0xff]
                  %1353 = vst [vmem:[%s1227 + $0x12c] sm:$0xff] %v1352
                  %v1354 = vld [vmem:[%s1226 + $0x118] sm:$0xff]
                  %1355 = vst [vmem:[%s1227 + $0x134] sm:$0xff] %v1354
                  %s1356 = sadd.s32 1, %s1225
                  %p1357 = scmp.ge.s32.totalorder %s1356, %s1216
                  %s1358 = scalar_select %p1357, 0, %s1356
                  %s1359 = smul.u32 %s1358, 256
                  %s1360 = smul.u32 %s1358, 256
                  %s1361 = scalar_lea.vmem %s1174, %s1359 [#allocation3]
                  %s1362 = scalar_lea.vmem %s1185, %s1360
                $region134: #{qnetwork_forward.3} parent=128 // loop_footer
                  %s1222 = sadd.s32 %s1220, 1
                $region135: #{qnetwork_forward.3} parent=128 // loop_footer_branch
                  %1219 = sbr.rel target = $region131
                $region136: #{qnetwork_forward.3} parent=128 // loop_exit
                  _
                %s1363 = sshrl.u32 %s1215, 5
                %s1364 = sand.u32 %s1215, 31
                %s1365 = smul.u32 %s1363, 32
                %s1366 = smul.u32 128, %s1365
                %s1367 = sshra.s32 %s1366, 4
                %s1368 = scalar_lea.vmem %s1174, %s1367 [#allocation3]
                %s1369 = smul.u32 128, %s1365
                %s1370 = sshra.s32 %s1369, 4
                %s1371 = scalar_lea.vmem %s1185, %s1370
                // While loop
                $region137: #{qnetwork_forward.3} parent=128 // loop_pre_header
                  _
                $region138: #{qnetwork_forward.3} parent=128 // loop_header
                  %s1375 = sphi 0, %s1377
                  %p1376 = scmp.ge.s32.totalorder %s1375, %s1364
                  %s1380 = sphi 0, %s1389
                  %s1381 = sphi %s1368, %s1392
                  %s1382 = sphi %s1371, %s1393
                $region139: #{qnetwork_forward.3} parent=128 // loop_header_branch
                  %1379 = sbr.rel (%p1376) target = $region143
                $region140: #{qnetwork_forward.3} parent=128 // loop_body
                  %v1383 = vld [vmem:[%s1381] sm:$0xff]
                  %1384 = vst [vmem:[%s1382] sm:$0xff] %v1383
                  %v1385 = vld [vmem:[%s1381 + $0x20] sm:$0xff]
                  %1386 = vst [vmem:[%s1382 + $0x3c] sm:$0xff] %v1385
                  %s1387 = sadd.s32 1, %s1380
                  %p1388 = scmp.ge.s32.totalorder %s1387, %s1364
                  %s1389 = scalar_select %p1388, 0, %s1387
                  %s1390 = smul.u32 %s1389, 8
                  %s1391 = smul.u32 %s1389, 8
                  %s1392 = scalar_lea.vmem %s1368, %s1390 [#allocation3]
                  %s1393 = scalar_lea.vmem %s1371, %s1391
                $region141: #{qnetwork_forward.3} parent=128 // loop_footer
                  %s1377 = sadd.s32 %s1375, 1
                $region142: #{qnetwork_forward.3} parent=128 // loop_footer_branch
                  %1374 = sbr.rel target = $region138
                $region143: #{qnetwork_forward.3} parent=128 // loop_exit
                  _
              $region129: #{qnetwork_forward.3} parent=113 // pred_fallthru
                _
              %p1394 = pneg %p1211
              // Predicated region
              $region144: #{qnetwork_forward.3} parent=113 // pred_check
                _
              $region145: #{qnetwork_forward.3} parent=113 // pred_check_branch
                %1396 = sbr.rel (%p1211) target = $region147
              $region146: #{qnetwork_forward.3} parent=113 // pred_region
                %s1397 = sand.u32 %s1186, 7
                %s1398 = ssub.s32 %s1186, %s1397
                %s1399 = scalar_lea.vmem %s1174, %s1398 [#allocation3]
                %s1400 = ssub.s32 %s1186, %s1397
                %s1401 = scalar_lea.vmem %s1185, %s1400
                %s1402 = sshrl.u32 %s1186, 3
                %s1403 = sshrl.u32 %s1402, 5
                // While loop
                $region148: #{qnetwork_forward.3} parent=146 // loop_pre_header
                  _
                $region149: #{qnetwork_forward.3} parent=146 // loop_header
                  %s1407 = sphi 0, %s1409
                  %p1408 = scmp.ge.s32.totalorder %s1407, %s1403
                  %s1412 = sphi 0, %s1545
                  %s1413 = sphi %s1174, %s1548
                  %s1414 = sphi %s1185, %s1549
                $region150: #{qnetwork_forward.3} parent=146 // loop_header_branch
                  %1411 = sbr.rel (%p1408) target = $region154
                $region151: #{qnetwork_forward.3} parent=146 // loop_body
                  %v1415 = vld [vmem:[%s1413] sm:$0xff]
                  %1416 = vst [vmem:[%s1414] sm:$0xff] %v1415
                  %v1417 = vld [vmem:[%s1413 + $0x8] sm:$0xff]
                  %1418 = vst [vmem:[%s1414 + $0x8] sm:$0xff] %v1417
                  %v1419 = vld [vmem:[%s1413 + $0x10] sm:$0xff]
                  %1420 = vst [vmem:[%s1414 + $0x10] sm:$0xff] %v1419
                  %v1421 = vld [vmem:[%s1413 + $0x18] sm:$0xff]
                  %1422 = vst [vmem:[%s1414 + $0x18] sm:$0xff] %v1421
                  %v1423 = vld [vmem:[%s1413 + $0x20] sm:$0xff]
                  %1424 = vst [vmem:[%s1414 + $0x20] sm:$0xff] %v1423
                  %v1425 = vld [vmem:[%s1413 + $0x28] sm:$0xff]
                  %1426 = vst [vmem:[%s1414 + $0x28] sm:$0xff] %v1425
                  %v1427 = vld [vmem:[%s1413 + $0x30] sm:$0xff]
                  %1428 = vst [vmem:[%s1414 + $0x30] sm:$0xff] %v1427
                  %v1429 = vld [vmem:[%s1413 + $0x38] sm:$0xff]
                  %1430 = vst [vmem:[%s1414 + $0x38] sm:$0xff] %v1429
                  %v1431 = vld [vmem:[%s1413 + $0x40] sm:$0xff]
                  %1432 = vst [vmem:[%s1414 + $0x40] sm:$0xff] %v1431
                  %v1433 = vld [vmem:[%s1413 + $0x48] sm:$0xff]
                  %1434 = vst [vmem:[%s1414 + $0x48] sm:$0xff] %v1433
                  %v1435 = vld [vmem:[%s1413 + $0x50] sm:$0xff]
                  %1436 = vst [vmem:[%s1414 + $0x50] sm:$0xff] %v1435
                  %v1437 = vld [vmem:[%s1413 + $0x58] sm:$0xff]
                  %1438 = vst [vmem:[%s1414 + $0x58] sm:$0xff] %v1437
                  %v1439 = vld [vmem:[%s1413 + $0x60] sm:$0xff]
                  %1440 = vst [vmem:[%s1414 + $0x60] sm:$0xff] %v1439
                  %v1441 = vld [vmem:[%s1413 + $0x68] sm:$0xff]
                  %1442 = vst [vmem:[%s1414 + $0x68] sm:$0xff] %v1441
                  %v1443 = vld [vmem:[%s1413 + $0x70] sm:$0xff]
                  %1444 = vst [vmem:[%s1414 + $0x70] sm:$0xff] %v1443
                  %v1445 = vld [vmem:[%s1413 + $0x78] sm:$0xff]
                  %1446 = vst [vmem:[%s1414 + $0x78] sm:$0xff] %v1445
                  %v1447 = vld [vmem:[%s1413 + $0x80] sm:$0xff]
                  %1448 = vst [vmem:[%s1414 + $0x80] sm:$0xff] %v1447
                  %v1449 = vld [vmem:[%s1413 + $0x88] sm:$0xff]
                  %1450 = vst [vmem:[%s1414 + $0x88] sm:$0xff] %v1449
                  %v1451 = vld [vmem:[%s1413 + $0x90] sm:$0xff]
                  %1452 = vst [vmem:[%s1414 + $0x90] sm:$0xff] %v1451
                  %v1453 = vld [vmem:[%s1413 + $0x98] sm:$0xff]
                  %1454 = vst [vmem:[%s1414 + $0x98] sm:$0xff] %v1453
                  %v1455 = vld [vmem:[%s1413 + $0xa0] sm:$0xff]
                  %1456 = vst [vmem:[%s1414 + $0xa0] sm:$0xff] %v1455
                  %v1457 = vld [vmem:[%s1413 + $0xa8] sm:$0xff]
                  %1458 = vst [vmem:[%s1414 + $0xa8] sm:$0xff] %v1457
                  %v1459 = vld [vmem:[%s1413 + $0xb0] sm:$0xff]
                  %1460 = vst [vmem:[%s1414 + $0xb0] sm:$0xff] %v1459
                  %v1461 = vld [vmem:[%s1413 + $0xb8] sm:$0xff]
                  %1462 = vst [vmem:[%s1414 + $0xb8] sm:$0xff] %v1461
                  %v1463 = vld [vmem:[%s1413 + $0xc0] sm:$0xff]
                  %1464 = vst [vmem:[%s1414 + $0xc0] sm:$0xff] %v1463
                  %v1465 = vld [vmem:[%s1413 + $0xc8] sm:$0xff]
                  %1466 = vst [vmem:[%s1414 + $0xc8] sm:$0xff] %v1465
                  %v1467 = vld [vmem:[%s1413 + $0xd0] sm:$0xff]
                  %1468 = vst [vmem:[%s1414 + $0xd0] sm:$0xff] %v1467
                  %v1469 = vld [vmem:[%s1413 + $0xd8] sm:$0xff]
                  %1470 = vst [vmem:[%s1414 + $0xd8] sm:$0xff] %v1469
                  %v1471 = vld [vmem:[%s1413 + $0xe0] sm:$0xff]
                  %1472 = vst [vmem:[%s1414 + $0xe0] sm:$0xff] %v1471
                  %v1473 = vld [vmem:[%s1413 + $0xe8] sm:$0xff]
                  %1474 = vst [vmem:[%s1414 + $0xe8] sm:$0xff] %v1473
                  %v1475 = vld [vmem:[%s1413 + $0xf0] sm:$0xff]
                  %1476 = vst [vmem:[%s1414 + $0xf0] sm:$0xff] %v1475
                  %v1477 = vld [vmem:[%s1413 + $0xf8] sm:$0xff]
                  %1478 = vst [vmem:[%s1414 + $0xf8] sm:$0xff] %v1477
                  %v1479 = vld [vmem:[%s1413 + $0x20] sm:$0xff]
                  %1480 = vst [vmem:[%s1414 + $0x3c] sm:$0xff] %v1479
                  %v1481 = vld [vmem:[%s1413 + $0x28] sm:$0xff]
                  %1482 = vst [vmem:[%s1414 + $0x44] sm:$0xff] %v1481
                  %v1483 = vld [vmem:[%s1413 + $0x30] sm:$0xff]
                  %1484 = vst [vmem:[%s1414 + $0x4c] sm:$0xff] %v1483
                  %v1485 = vld [vmem:[%s1413 + $0x38] sm:$0xff]
                  %1486 = vst [vmem:[%s1414 + $0x54] sm:$0xff] %v1485
                  %v1487 = vld [vmem:[%s1413 + $0x40] sm:$0xff]
                  %1488 = vst [vmem:[%s1414 + $0x5c] sm:$0xff] %v1487
                  %v1489 = vld [vmem:[%s1413 + $0x48] sm:$0xff]
                  %1490 = vst [vmem:[%s1414 + $0x64] sm:$0xff] %v1489
                  %v1491 = vld [vmem:[%s1413 + $0x50] sm:$0xff]
                  %1492 = vst [vmem:[%s1414 + $0x6c] sm:$0xff] %v1491
                  %v1493 = vld [vmem:[%s1413 + $0x58] sm:$0xff]
                  %1494 = vst [vmem:[%s1414 + $0x74] sm:$0xff] %v1493
                  %v1495 = vld [vmem:[%s1413 + $0x60] sm:$0xff]
                  %1496 = vst [vmem:[%s1414 + $0x7c] sm:$0xff] %v1495
                  %v1497 = vld [vmem:[%s1413 + $0x68] sm:$0xff]
                  %1498 = vst [vmem:[%s1414 + $0x84] sm:$0xff] %v1497
                  %v1499 = vld [vmem:[%s1413 + $0x70] sm:$0xff]
                  %1500 = vst [vmem:[%s1414 + $0x8c] sm:$0xff] %v1499
                  %v1501 = vld [vmem:[%s1413 + $0x78] sm:$0xff]
                  %1502 = vst [vmem:[%s1414 + $0x94] sm:$0xff] %v1501
                  %v1503 = vld [vmem:[%s1413 + $0x80] sm:$0xff]
                  %1504 = vst [vmem:[%s1414 + $0x9c] sm:$0xff] %v1503
                  %v1505 = vld [vmem:[%s1413 + $0x88] sm:$0xff]
                  %1506 = vst [vmem:[%s1414 + $0xa4] sm:$0xff] %v1505
                  %v1507 = vld [vmem:[%s1413 + $0x90] sm:$0xff]
                  %1508 = vst [vmem:[%s1414 + $0xac] sm:$0xff] %v1507
                  %v1509 = vld [vmem:[%s1413 + $0x98] sm:$0xff]
                  %1510 = vst [vmem:[%s1414 + $0xb4] sm:$0xff] %v1509
                  %v1511 = vld [vmem:[%s1413 + $0xa0] sm:$0xff]
                  %1512 = vst [vmem:[%s1414 + $0xbc] sm:$0xff] %v1511
                  %v1513 = vld [vmem:[%s1413 + $0xa8] sm:$0xff]
                  %1514 = vst [vmem:[%s1414 + $0xc4] sm:$0xff] %v1513
                  %v1515 = vld [vmem:[%s1413 + $0xb0] sm:$0xff]
                  %1516 = vst [vmem:[%s1414 + $0xcc] sm:$0xff] %v1515
                  %v1517 = vld [vmem:[%s1413 + $0xb8] sm:$0xff]
                  %1518 = vst [vmem:[%s1414 + $0xd4] sm:$0xff] %v1517
                  %v1519 = vld [vmem:[%s1413 + $0xc0] sm:$0xff]
                  %1520 = vst [vmem:[%s1414 + $0xdc] sm:$0xff] %v1519
                  %v1521 = vld [vmem:[%s1413 + $0xc8] sm:$0xff]
                  %1522 = vst [vmem:[%s1414 + $0xe4] sm:$0xff] %v1521
                  %v1523 = vld [vmem:[%s1413 + $0xd0] sm:$0xff]
                  %1524 = vst [vmem:[%s1414 + $0xec] sm:$0xff] %v1523
                  %v1525 = vld [vmem:[%s1413 + $0xd8] sm:$0xff]
                  %1526 = vst [vmem:[%s1414 + $0xf4] sm:$0xff] %v1525
                  %v1527 = vld [vmem:[%s1413 + $0xe0] sm:$0xff]
                  %1528 = vst [vmem:[%s1414 + $0xfc] sm:$0xff] %v1527
                  %v1529 = vld [vmem:[%s1413 + $0xe8] sm:$0xff]
                  %1530 = vst [vmem:[%s1414 + $0x104] sm:$0xff] %v1529
                  %v1531 = vld [vmem:[%s1413 + $0xf0] sm:$0xff]
                  %1532 = vst [vmem:[%s1414 + $0x10c] sm:$0xff] %v1531
                  %v1533 = vld [vmem:[%s1413 + $0xf8] sm:$0xff]
                  %1534 = vst [vmem:[%s1414 + $0x114] sm:$0xff] %v1533
                  %v1535 = vld [vmem:[%s1413 + $0x100] sm:$0xff]
                  %1536 = vst [vmem:[%s1414 + $0x11c] sm:$0xff] %v1535
                  %v1537 = vld [vmem:[%s1413 + $0x108] sm:$0xff]
                  %1538 = vst [vmem:[%s1414 + $0x124] sm:$0xff] %v1537
                  %v1539 = vld [vmem:[%s1413 + $0x110] sm:$0xff]
                  %1540 = vst [vmem:[%s1414 + $0x12c] sm:$0xff] %v1539
                  %v1541 = vld [vmem:[%s1413 + $0x118] sm:$0xff]
                  %1542 = vst [vmem:[%s1414 + $0x134] sm:$0xff] %v1541
                  %s1543 = sadd.s32 1, %s1412
                  %p1544 = scmp.ge.s32.totalorder %s1543, %s1403
                  %s1545 = scalar_select %p1544, 0, %s1543
                  %s1546 = smul.u32 %s1545, 256
                  %s1547 = smul.u32 %s1545, 256
                  %s1548 = scalar_lea.vmem %s1174, %s1546 [#allocation3]
                  %s1549 = scalar_lea.vmem %s1185, %s1547
                $region152: #{qnetwork_forward.3} parent=146 // loop_footer
                  %s1409 = sadd.s32 %s1407, 1
                $region153: #{qnetwork_forward.3} parent=146 // loop_footer_branch
                  %1406 = sbr.rel target = $region149
                $region154: #{qnetwork_forward.3} parent=146 // loop_exit
                  _
                %s1550 = sshrl.u32 %s1402, 5
                %s1551 = sand.u32 %s1402, 31
                %s1552 = smul.u32 %s1550, 32
                %s1553 = smul.u32 128, %s1552
                %s1554 = sshra.s32 %s1553, 4
                %s1555 = scalar_lea.vmem %s1174, %s1554 [#allocation3]
                %s1556 = smul.u32 128, %s1552
                %s1557 = sshra.s32 %s1556, 4
                %s1558 = scalar_lea.vmem %s1185, %s1557
                // While loop
                $region155: #{qnetwork_forward.3} parent=146 // loop_pre_header
                  _
                $region156: #{qnetwork_forward.3} parent=146 // loop_header
                  %s1562 = sphi 0, %s1564
                  %p1563 = scmp.ge.s32.totalorder %s1562, %s1551
                  %s1567 = sphi 0, %s1576
                  %s1568 = sphi %s1555, %s1579
                  %s1569 = sphi %s1558, %s1580
                $region157: #{qnetwork_forward.3} parent=146 // loop_header_branch
                  %1566 = sbr.rel (%p1563) target = $region161
                $region158: #{qnetwork_forward.3} parent=146 // loop_body
                  %v1570 = vld [vmem:[%s1568] sm:$0xff]
                  %1571 = vst [vmem:[%s1569] sm:$0xff] %v1570
                  %v1572 = vld [vmem:[%s1568 + $0x20] sm:$0xff]
                  %1573 = vst [vmem:[%s1569 + $0x3c] sm:$0xff] %v1572
                  %s1574 = sadd.s32 1, %s1567
                  %p1575 = scmp.ge.s32.totalorder %s1574, %s1551
                  %s1576 = scalar_select %p1575, 0, %s1574
                  %s1577 = smul.u32 %s1576, 8
                  %s1578 = smul.u32 %s1576, 8
                  %s1579 = scalar_lea.vmem %s1555, %s1577 [#allocation3]
                  %s1580 = scalar_lea.vmem %s1558, %s1578
                $region159: #{qnetwork_forward.3} parent=146 // loop_footer
                  %s1564 = sadd.s32 %s1562, 1
                $region160: #{qnetwork_forward.3} parent=146 // loop_footer_branch
                  %1561 = sbr.rel target = $region156
                $region161: #{qnetwork_forward.3} parent=146 // loop_exit
                  _
                %s1581 = sshllo.u32 0, %s1397
                loop: start=0, step=1, limit=1
                $region162: #{qnetwork_forward.3} parent=146 // loop_pre_header
                  _
                $region163: #{qnetwork_forward.3} parent=146 // loop_header
                  %s1583 = sphi 0, %s1587
                  %p1584 = scmp.ge.s32.totalorder %s1583, 1
                  %s1588 = sphi %s1399, %s1399
                  %s1589 = sphi %s1401, %s1401
                $region164: #{qnetwork_forward.3} parent=146 // loop_header_branch
                  %1586 = sbr.rel (%p1584) target = $region168
                $region165: #{qnetwork_forward.3} parent=146 // loop_body
                  %v1590 = vld [vmem:[%s1588] sm:%s1581]
                  %1591 = vst [vmem:[%s1589] sm:%s1581] %v1590
                  %v1592 = vld [vmem:[%s1588 + $0x20] sm:%s1581]
                  %1593 = vst [vmem:[%s1589 + $0x3c] sm:%s1581] %v1592
                $region166: #{qnetwork_forward.3} parent=146 // loop_footer
                  %s1587 = sadd.s32 1, %s1583
                $region167: #{qnetwork_forward.3} parent=146 // loop_footer_branch
                  %1582 = sbr.rel target = $region163
                $region168: #{qnetwork_forward.3} parent=146 // loop_exit
                  _
              $region147: #{qnetwork_forward.3} parent=113 // pred_fallthru
                _
            $region114: #{qnetwork_forward.3} parent=109 // pred_fallthru
              _
            // Predicated region
            $region115: #{qnetwork_forward.3} parent=109 // pred_check
              %p1194 = pneg %p1190
            $region116: #{qnetwork_forward.3} parent=109 // pred_check_branch
              %1196 = sbr.rel (%p1194) target = $region118
            $region117: #{qnetwork_forward.3} parent=109 // pred_region
              %s1197 = sshllo.u32 0, %s1186
              loop: start=0, step=1, limit=1
              $region119: #{qnetwork_forward.3} parent=117 // loop_pre_header
                _
              $region120: #{qnetwork_forward.3} parent=117 // loop_header
                %s1199 = sphi 0, %s1203
                %p1200 = scmp.ge.s32.totalorder %s1199, 1
                %s1204 = sphi %s1174, %s1174
                %s1205 = sphi %s1185, %s1185
              $region121: #{qnetwork_forward.3} parent=117 // loop_header_branch
                %1202 = sbr.rel (%p1200) target = $region125
              $region122: #{qnetwork_forward.3} parent=117 // loop_body
                %v1206 = vld [vmem:[%s1204] sm:%s1197]
                %1207 = vst [vmem:[%s1205] sm:%s1197] %v1206
                %v1208 = vld [vmem:[%s1204 + $0x20] sm:%s1197]
                %1209 = vst [vmem:[%s1205 + $0x3c] sm:%s1197] %v1208
              $region123: #{qnetwork_forward.3} parent=117 // loop_footer
                %s1203 = sadd.s32 1, %s1199
              $region124: #{qnetwork_forward.3} parent=117 // loop_footer_branch
                %1198 = sbr.rel target = $region120
              $region125: #{qnetwork_forward.3} parent=117 // loop_exit
                _
            $region118: #{qnetwork_forward.3} parent=109 // pred_fallthru
              _
          $region110: #{qnetwork_forward.3} parent=105 // pred_fallthru
            _
          %1594 = vnop
        $region106: #{qnetwork_forward.3} parent=97 // pred_fallthru
          _
      $region98: #{qnetwork_forward.3} parent=5 // pred_fallthru
        _
      %p1595 = scmp.le.s32.totalorder 2, %s10
      // Predicated region
      $region169: #{qnetwork_forward.3} parent=5 // pred_check
        %p1596 = pneg %p1595
      $region170: #{qnetwork_forward.3} parent=5 // pred_check_branch
        %1598 = sbr.rel (%p1596) target = $region172
      $region171: #{qnetwork_forward.3} parent=5 // pred_region
        %s1599 = ssub.s32 %s10, 2
        // Predicated region
        $region173: #{qnetwork_forward.3} parent=171 // pred_check
          %p1600 = pneg %p128
        $region174: #{qnetwork_forward.3} parent=171 // pred_check_branch
          %1602 = sbr.rel (%p1600) target = $region176
        $region175: #{qnetwork_forward.3} parent=171 // pred_region
          %s1603 = sand.u32 %s113, 1
          %s1604 = sand.u32 %s113, 1
          %s1605 = smul.addr %s1604, 64
          %s1606 = scalar_lea.vmem [#allocation3], %s1605
        $region176: #{qnetwork_forward.3} parent=171 // pred_fallthru
          _
      $region172: #{qnetwork_forward.3} parent=5 // pred_fallthru
        _
    $region6: #{qnetwork_forward.3} parent=1 // loop_footer
      %s14 = sadd.s32 1, %s10
    $region7: #{qnetwork_forward.3} parent=1 // loop_footer_branch
      %9 = sbr.rel target = $region3
    $region8: #{qnetwork_forward.3} parent=1 // loop_exit
      _

// kernel: qnetwork_forward.4
$region0: #{qnetwork_forward.4}
  #allocation0 [shape = 'u32[]', space=smem, size = 0x4, offset = 0x4, fixed_abs, tag = 'smem constant byte address 0x4 - core index']
  #allocation1 [shape = 'u32[144,128]{1,0:T(1,128)}', space=vmem, size = 0x12000, scoped, tag = 'internal scratch']
  %s0 = inlined_call_operand.vmem [shape: bf16[32,256], index: 0, kind: input, shape index: {}]
  %s1 = inlined_call_operand.vmem [shape: bf16[256,392], index: 1, kind: input, shape index: {}]
  %s2 = inlined_call_operand.vmem [shape: f32[32,1], index: 2, kind: input, shape index: {}]
  %s3 = inlined_call_operand.vmem [shape: f32[32,1], index: 3, kind: input, shape index: {}]
  %s4 = inlined_call_operand.vmem [shape: bf16[32,392], index: 4, kind: output, shape index: {}]
  %s5 = sld [smem:[#allocation0]]
  $region26: #{qnetwork_forward.4} parent=0
    _
  %s7 = ssub.s32 1, %s5
  %s8 = scalar_select 0, %s7, %s5
  // Predicated region
  $region2: #{qnetwork_forward.4} parent=0 // pred_check
    _
  $region3: #{qnetwork_forward.4} parent=0 // pred_check_branch
    %10 = sbr.rel (0) target = $region5
  $region4: #{qnetwork_forward.4} parent=0 // pred_region
    _
  $region5: #{qnetwork_forward.4} parent=0 // pred_fallthru
    _
  // Predicated region
  $region6: #{qnetwork_forward.4} parent=0 // pred_check
    _
  $region7: #{qnetwork_forward.4} parent=0 // pred_check_branch
    %12 = sbr.rel (0) target = $region9
  $region8: #{qnetwork_forward.4} parent=0 // pred_region
    _
  $region9: #{qnetwork_forward.4} parent=0 // pred_fallthru
    _
  // Predicated region
  $region10: #{qnetwork_forward.4} parent=0 // pred_check
    _
  $region11: #{qnetwork_forward.4} parent=0 // pred_check_branch
    %14 = sbr.rel (0) target = $region13
  $region12: #{qnetwork_forward.4} parent=0 // pred_region
    _
  $region13: #{qnetwork_forward.4} parent=0 // pred_fallthru
    _
  // Predicated region
  $region14: #{qnetwork_forward.4} parent=0 // pred_check
    _
  $region15: #{qnetwork_forward.4} parent=0 // pred_check_branch
    %16 = sbr.rel (0) target = $region17
  $region16: #{qnetwork_forward.4} parent=0 // pred_region
    _
  $region17: #{qnetwork_forward.4} parent=0 // pred_fallthru
    _
  %v17 = vld [vmem:[%s0] sm:$0xff]
  %v18 = vld [vmem:[%s0 + $0x8] sm:$0xff]
  %v19 = vld [vmem:[%s0 + $0x10] sm:$0xff]
  %v20 = vld [vmem:[%s0 + $0x18] sm:$0xff]
  %v21 = vld [vmem:[%s1] sm:$0xff]
  %v22 = vld [vmem:[%s1 + $0x8] sm:$0xff]
  %v23 = vld [vmem:[%s1 + $0x10] sm:$0xff]
  %v24 = vld [vmem:[%s1 + $0x18] sm:$0xff]
  %v25 = vld [vmem:[%s1 + $0x20] sm:$0xff]
  %v26 = vld [vmem:[%s1 + $0x28] sm:$0xff]
  %v27 = vld [vmem:[%s1 + $0x30] sm:$0xff]
  %v28 = vld [vmem:[%s1 + $0x38] sm:$0xff]
  %v29 = vld [vmem:[%s1 + $0x40] sm:$0xff]
  %v30 = vld [vmem:[%s1 + $0x48] sm:$0xff]
  %v31 = vld [vmem:[%s1 + $0x50] sm:$0xff]
  %v32 = vld [vmem:[%s1 + $0x58] sm:$0xff]
  %v33 = vld [vmem:[%s1 + $0x60] sm:$0xff]
  %v34 = vld [vmem:[%s1 + $0x68] sm:$0xff]
  %v35 = vld [vmem:[%s1 + $0x70] sm:$0xff]
  %v36 = vld [vmem:[%s1 + $0x78] sm:$0xff]
  %v37 = vld [vmem:[%s1 + $0x80] sm:$0xff]
  %v38 = vld [vmem:[%s1 + $0x88] sm:$0xff]
  %v39 = vld [vmem:[%s1 + $0x90] sm:$0xff]
  %v40 = vld [vmem:[%s1 + $0x98] sm:$0xff]
  %v41 = vld [vmem:[%s1 + $0xa0] sm:$0xff]
  %v42 = vld [vmem:[%s1 + $0xa8] sm:$0xff]
  %v43 = vld [vmem:[%s1 + $0xb0] sm:$0xff]
  %v44 = vld [vmem:[%s1 + $0xb8] sm:$0xff]
  %v45 = vld [vmem:[%s1 + $0xc0] sm:$0xff]
  %v46 = vld [vmem:[%s1 + $0xc8] sm:$0xff]
  %v47 = vld [vmem:[%s1 + $0xd0] sm:$0xff]
  %v48 = vld [vmem:[%s1 + $0xd8] sm:$0xff]
  %v49 = vld [vmem:[%s1 + $0xe0] sm:$0xff]
  %v50 = vld [vmem:[%s1 + $0xe8] sm:$0xff]
  %v51 = vld [vmem:[%s1 + $0xf0] sm:$0xff]
  %v52 = vld [vmem:[%s1 + $0xf8] sm:$0xff]
  %v53 = vld [vmem:[%s1 + $0x100] sm:$0xff]
  %v54 = vld [vmem:[%s1 + $0x108] sm:$0xff]
  %v55 = vld [vmem:[%s1 + $0x110] sm:$0xff]
  %v56 = vld [vmem:[%s1 + $0x118] sm:$0xff]
  %v57 = vld [vmem:[%s1 + $0x120] sm:$0xff]
  %v58 = vld [vmem:[%s1 + $0x128] sm:$0xff]
  %v59 = vld [vmem:[%s1 + $0x130] sm:$0xff]
  %v60 = vld [vmem:[%s1 + $0x138] sm:$0xff]
  %v61 = vld [vmem:[%s1 + $0x140] sm:$0xff]
  %v62 = vld [vmem:[%s1 + $0x148] sm:$0xff]
  %v63 = vld [vmem:[%s1 + $0x150] sm:$0xff]
  %v64 = vld [vmem:[%s1 + $0x158] sm:$0xff]
  %v65 = vld [vmem:[%s1 + $0x160] sm:$0xff]
  %v66 = vld [vmem:[%s1 + $0x168] sm:$0xff]
  %v67 = vld [vmem:[%s1 + $0x170] sm:$0xff]
  %v68 = vld [vmem:[%s1 + $0x178] sm:$0xff]
  %v69 = vld [vmem:[%s1 + $0x180] sm:$0xff]
  %v70 = vld [vmem:[%s1 + $0x188] sm:$0xff]
  %v71 = vld [vmem:[%s1 + $0x190] sm:$0xff]
  %v72 = vld [vmem:[%s1 + $0x198] sm:$0xff]
  %v73 = vld [vmem:[%s1 + $0x1a0] sm:$0xff]
  %v74 = vld [vmem:[%s1 + $0x1a8] sm:$0xff]
  %v75 = vld [vmem:[%s1 + $0x1b0] sm:$0xff]
  %v76 = vld [vmem:[%s1 + $0x1b8] sm:$0xff]
  %v77 = vld [vmem:[%s1 + $0x1c0] sm:$0xff]
  %v78 = vld [vmem:[%s1 + $0x1c8] sm:$0xff]
  %v79 = vld [vmem:[%s1 + $0x1d0] sm:$0xff]
  %v80 = vld [vmem:[%s1 + $0x1d8] sm:$0xff]
  %v81 = vld [vmem:[%s1 + $0x1e0] sm:$0xff]
  %v82 = vld [vmem:[%s1 + $0x1e8] sm:$0xff]
  %v83 = vld [vmem:[%s1 + $0x1f0] sm:$0xff]
  %v84 = vld [vmem:[%s1 + $0x1f8] sm:$0xff]
  %v89 = vunpack.c.l.b16 %v17
  %v90 = vunpack.c.h.b16 %v17
  %v91 = vunpack.c.l.b16 %v18
  %v92 = vunpack.c.h.b16 %v18
  %v93 = vunpack.c.l.b16 %v19
  %v94 = vunpack.c.h.b16 %v19
  %v95 = vunpack.c.l.b16 %v20
  %v96 = vunpack.c.h.b16 %v20
  %v97 = vpack.c.b16 %v91, %v89
  %v98 = vpack.c.b16 %v92, %v90
  %v99 = vpack.c.b16 %v95, %v93
  %v100 = vpack.c.b16 %v96, %v94
  %v169 = vunpack.c.l.b16 %v21
  %v170 = vunpack.c.h.b16 %v21
  %v171 = vunpack.c.l.b16 %v22
  %v172 = vunpack.c.h.b16 %v22
  %v173 = vunpack.c.l.b16 %v23
  %v174 = vunpack.c.h.b16 %v23
  %v175 = vunpack.c.l.b16 %v24
  %v176 = vunpack.c.h.b16 %v24
  %v177 = vunpack.c.l.b16 %v25
  %v178 = vunpack.c.h.b16 %v25
  %v179 = vunpack.c.l.b16 %v26
  %v180 = vunpack.c.h.b16 %v26
  %v181 = vunpack.c.l.b16 %v27
  %v182 = vunpack.c.h.b16 %v27
  %v183 = vunpack.c.l.b16 %v28
  %v184 = vunpack.c.h.b16 %v28
  %v185 = vunpack.c.l.b16 %v29
  %v186 = vunpack.c.h.b16 %v29
  %v187 = vunpack.c.l.b16 %v30
  %v188 = vunpack.c.h.b16 %v30
  %v189 = vunpack.c.l.b16 %v31
  %v190 = vunpack.c.h.b16 %v31
  %v191 = vunpack.c.l.b16 %v32
  %v192 = vunpack.c.h.b16 %v32
  %v193 = vunpack.c.l.b16 %v33
  %v194 = vunpack.c.h.b16 %v33
  %v195 = vunpack.c.l.b16 %v34
  %v196 = vunpack.c.h.b16 %v34
  %v197 = vunpack.c.l.b16 %v35
  %v198 = vunpack.c.h.b16 %v35
  %v199 = vunpack.c.l.b16 %v36
  %v200 = vunpack.c.h.b16 %v36
  %v201 = vunpack.c.l.b16 %v37
  %v202 = vunpack.c.h.b16 %v37
  %v203 = vunpack.c.l.b16 %v38
  %v204 = vunpack.c.h.b16 %v38
  %v205 = vunpack.c.l.b16 %v39
  %v206 = vunpack.c.h.b16 %v39
  %v207 = vunpack.c.l.b16 %v40
  %v208 = vunpack.c.h.b16 %v40
  %v209 = vunpack.c.l.b16 %v41
  %v210 = vunpack.c.h.b16 %v41
  %v211 = vunpack.c.l.b16 %v42
  %v212 = vunpack.c.h.b16 %v42
  %v213 = vunpack.c.l.b16 %v43
  %v214 = vunpack.c.h.b16 %v43
  %v215 = vunpack.c.l.b16 %v44
  %v216 = vunpack.c.h.b16 %v44
  %v217 = vunpack.c.l.b16 %v45
  %v218 = vunpack.c.h.b16 %v45
  %v219 = vunpack.c.l.b16 %v46
  %v220 = vunpack.c.h.b16 %v46
  %v221 = vunpack.c.l.b16 %v47
  %v222 = vunpack.c.h.b16 %v47
  %v223 = vunpack.c.l.b16 %v48
  %v224 = vunpack.c.h.b16 %v48
  %v225 = vunpack.c.l.b16 %v49
  %v226 = vunpack.c.h.b16 %v49
  %v227 = vunpack.c.l.b16 %v50
  %v228 = vunpack.c.h.b16 %v50
  %v229 = vunpack.c.l.b16 %v51
  %v230 = vunpack.c.h.b16 %v51
  %v231 = vunpack.c.l.b16 %v52
  %v232 = vunpack.c.h.b16 %v52
  %v233 = vunpack.c.l.b16 %v53
  %v234 = vunpack.c.h.b16 %v53
  %v235 = vunpack.c.l.b16 %v54
  %v236 = vunpack.c.h.b16 %v54
  %v237 = vunpack.c.l.b16 %v55
  %v238 = vunpack.c.h.b16 %v55
  %v239 = vunpack.c.l.b16 %v56
  %v240 = vunpack.c.h.b16 %v56
  %v241 = vunpack.c.l.b16 %v57
  %v242 = vunpack.c.h.b16 %v57
  %v243 = vunpack.c.l.b16 %v58
  %v244 = vunpack.c.h.b16 %v58
  %v245 = vunpack.c.l.b16 %v59
  %v246 = vunpack.c.h.b16 %v59
  %v247 = vunpack.c.l.b16 %v60
  %v248 = vunpack.c.h.b16 %v60
  %v249 = vunpack.c.l.b16 %v61
  %v250 = vunpack.c.h.b16 %v61
  %v251 = vunpack.c.l.b16 %v62
  %v252 = vunpack.c.h.b16 %v62
  %v253 = vunpack.c.l.b16 %v63
  %v254 = vunpack.c.h.b16 %v63
  %v255 = vunpack.c.l.b16 %v64
  %v256 = vunpack.c.h.b16 %v64
  %v257 = vunpack.c.l.b16 %v65
  %v258 = vunpack.c.h.b16 %v65
  %v259 = vunpack.c.l.b16 %v66
  %v260 = vunpack.c.h.b16 %v66
  %v261 = vunpack.c.l.b16 %v67
  %v262 = vunpack.c.h.b16 %v67
  %v263 = vunpack.c.l.b16 %v68
  %v264 = vunpack.c.h.b16 %v68
  %v265 = vunpack.c.l.b16 %v69
  %v266 = vunpack.c.h.b16 %v69
  %v267 = vunpack.c.l.b16 %v70
  %v268 = vunpack.c.h.b16 %v70
  %v269 = vunpack.c.l.b16 %v71
  %v270 = vunpack.c.h.b16 %v71
  %v271 = vunpack.c.l.b16 %v72
  %v272 = vunpack.c.h.b16 %v72
  %v273 = vunpack.c.l.b16 %v73
  %v274 = vunpack.c.h.b16 %v73
  %v275 = vunpack.c.l.b16 %v74
  %v276 = vunpack.c.h.b16 %v74
  %v277 = vunpack.c.l.b16 %v75
  %v278 = vunpack.c.h.b16 %v75
  %v279 = vunpack.c.l.b16 %v76
  %v280 = vunpack.c.h.b16 %v76
  %v281 = vunpack.c.l.b16 %v77
  %v282 = vunpack.c.h.b16 %v77
  %v283 = vunpack.c.l.b16 %v78
  %v284 = vunpack.c.h.b16 %v78
  %v285 = vunpack.c.l.b16 %v79
  %v286 = vunpack.c.h.b16 %v79
  %v287 = vunpack.c.l.b16 %v80
  %v288 = vunpack.c.h.b16 %v80
  %v289 = vunpack.c.l.b16 %v81
  %v290 = vunpack.c.h.b16 %v81
  %v291 = vunpack.c.l.b16 %v82
  %v292 = vunpack.c.h.b16 %v82
  %v293 = vunpack.c.l.b16 %v83
  %v294 = vunpack.c.h.b16 %v83
  %v295 = vunpack.c.l.b16 %v84
  %v296 = vunpack.c.h.b16 %v84
  %v297 = vpack.c.b16 %v173, %v169
  %v298 = vpack.c.b16 %v174, %v170
  %v299 = vpack.c.b16 %v175, %v171
  %v300 = vpack.c.b16 %v176, %v172
  %v301 = vpack.c.b16 %v181, %v177
  %v302 = vpack.c.b16 %v182, %v178
  %v303 = vpack.c.b16 %v183, %v179
  %v304 = vpack.c.b16 %v184, %v180
  %v305 = vpack.c.b16 %v189, %v185
  %v306 = vpack.c.b16 %v190, %v186
  %v307 = vpack.c.b16 %v191, %v187
  %v308 = vpack.c.b16 %v192, %v188
  %v309 = vpack.c.b16 %v197, %v193
  %v310 = vpack.c.b16 %v198, %v194
  %v311 = vpack.c.b16 %v199, %v195
  %v312 = vpack.c.b16 %v200, %v196
  %v313 = vpack.c.b16 %v205, %v201
  %v314 = vpack.c.b16 %v206, %v202
  %v315 = vpack.c.b16 %v207, %v203
  %v316 = vpack.c.b16 %v208, %v204
  %v317 = vpack.c.b16 %v213, %v209
  %v318 = vpack.c.b16 %v214, %v210
  %v319 = vpack.c.b16 %v215, %v211
  %v320 = vpack.c.b16 %v216, %v212
  %v321 = vpack.c.b16 %v221, %v217
  %v322 = vpack.c.b16 %v222, %v218
  %v323 = vpack.c.b16 %v223, %v219
  %v324 = vpack.c.b16 %v224, %v220
  %v325 = vpack.c.b16 %v229, %v225
  %v326 = vpack.c.b16 %v230, %v226
  %v327 = vpack.c.b16 %v231, %v227
  %v328 = vpack.c.b16 %v232, %v228
  %v329 = vpack.c.b16 %v237, %v233
  %v330 = vpack.c.b16 %v238, %v234
  %v331 = vpack.c.b16 %v239, %v235
  %v332 = vpack.c.b16 %v240, %v236
  %v333 = vpack.c.b16 %v245, %v241
  %v334 = vpack.c.b16 %v246, %v242
  %v335 = vpack.c.b16 %v247, %v243
  %v336 = vpack.c.b16 %v248, %v244
  %v337 = vpack.c.b16 %v253, %v249
  %v338 = vpack.c.b16 %v254, %v250
  %v339 = vpack.c.b16 %v255, %v251
  %v340 = vpack.c.b16 %v256, %v252
  %v341 = vpack.c.b16 %v261, %v257
  %v342 = vpack.c.b16 %v262, %v258
  %v343 = vpack.c.b16 %v263, %v259
  %v344 = vpack.c.b16 %v264, %v260
  %v345 = vpack.c.b16 %v269, %v265
  %v346 = vpack.c.b16 %v270, %v266
  %v347 = vpack.c.b16 %v271, %v267
  %v348 = vpack.c.b16 %v272, %v268
  %v349 = vpack.c.b16 %v277, %v273
  %v350 = vpack.c.b16 %v278, %v274
  %v351 = vpack.c.b16 %v279, %v275
  %v352 = vpack.c.b16 %v280, %v276
  %v353 = vpack.c.b16 %v285, %v281
  %v354 = vpack.c.b16 %v286, %v282
  %v355 = vpack.c.b16 %v287, %v283
  %v356 = vpack.c.b16 %v288, %v284
  %v357 = vpack.c.b16 %v293, %v289
  %v358 = vpack.c.b16 %v294, %v290
  %v359 = vpack.c.b16 %v295, %v291
  %v360 = vpack.c.b16 %v296, %v292
  %425 = vmatprep.subr.bf16.mxu0 %v298
  %426 = vmatpush1.bf16.msra.mxu0 %v297
  %427 = vmatprep.subr.bf16.mxu0 %v302
  %428 = vmatpush1.bf16.msra.mxu0 %v301
  %429 = vmatprep.subr.bf16.mxu0 %v306
  %430 = vmatpush1.bf16.msra.mxu0 %v305
  %431 = vmatprep.subr.bf16.mxu0 %v310
  %432 = vmatpush1.bf16.msra.mxu0 %v309
  %433 = vmatprep.subr.bf16.mxu0 %v314
  %434 = vmatpush1.bf16.msra.mxu0 %v313
  %435 = vmatprep.subr.bf16.mxu0 %v318
  %436 = vmatpush1.bf16.msra.mxu0 %v317
  %437 = vmatprep.subr.bf16.mxu0 %v322
  %438 = vmatpush1.bf16.msra.mxu0 %v321
  %439 = vmatprep.subr.bf16.mxu0 %v326
  %440 = vmatpush1.bf16.msra.mxu0 %v325
  %441 = vmatprep.subr.bf16.mxu0 %v330
  %442 = vmatpush1.bf16.msra.mxu0 %v329
  %443 = vmatprep.subr.bf16.mxu0 %v334
  %444 = vmatpush1.bf16.msra.mxu0 %v333
  %445 = vmatprep.subr.bf16.mxu0 %v338
  %446 = vmatpush1.bf16.msra.mxu0 %v337
  %447 = vmatprep.subr.bf16.mxu0 %v342
  %448 = vmatpush1.bf16.msra.mxu0 %v341
  %449 = vmatprep.subr.bf16.mxu0 %v346
  %450 = vmatpush1.bf16.msra.mxu0 %v345
  %451 = vmatprep.subr.bf16.mxu0 %v350
  %452 = vmatpush1.bf16.msra.mxu0 %v349
  %453 = vmatprep.subr.bf16.mxu0 %v354
  %454 = vmatpush1.bf16.msra.mxu0 %v353
  %455 = vmatprep.subr.bf16.mxu0 %v358
  %456 = vmatpush1.bf16.msra.mxu0 %v357
  %457 = vmatprep.mubr.bf16.mxu0 %v98
  %458 = vmatmul.mubr.bf16.gmra.mrb[0].mxu0 %v97
  %v459 = vpop.f32.mrb[0].mxu0
  %v460 = vadd.f32 0.0, %v459
  %v461 = vpop.f32.mrb[0].mxu0
  %v462 = vadd.f32 0.0, %v461
  %v463 = vpop.f32.mrb[0].mxu0
  %v464 = vadd.f32 0.0, %v463
  %v465 = vpop.f32.mrb[0].mxu0
  %v466 = vadd.f32 0.0, %v465
  %467 = vmatprep.mubr.bf16.mxu0 %v100
  %468 = vmatmul.mubr.bf16.gmra.mrb[0].mxu0 %v99
  %v469 = vpop.f32.mrb[0].mxu0
  %v470 = vadd.f32 0.0, %v469
  %v471 = vpop.f32.mrb[0].mxu0
  %v472 = vadd.f32 0.0, %v471
  %v473 = vpop.f32.mrb[0].mxu0
  %v474 = vadd.f32 0.0, %v473
  %v475 = vpop.f32.mrb[0].mxu0
  %v476 = vadd.f32 0.0, %v475
  %477 = vdwg.mxu0
  %478 = vmatprep.subr.bf16.mxu0 %v300
  %479 = vmatpush1.bf16.msra.mxu0 %v299
  %480 = vmatprep.subr.bf16.mxu0 %v304
  %481 = vmatpush1.bf16.msra.mxu0 %v303
  %482 = vmatprep.subr.bf16.mxu0 %v308
  %483 = vmatpush1.bf16.msra.mxu0 %v307
  %484 = vmatprep.subr.bf16.mxu0 %v312
  %485 = vmatpush1.bf16.msra.mxu0 %v311
  %486 = vmatprep.subr.bf16.mxu0 %v316
  %487 = vmatpush1.bf16.msra.mxu0 %v315
  %488 = vmatprep.subr.bf16.mxu0 %v320
  %489 = vmatpush1.bf16.msra.mxu0 %v319
  %490 = vmatprep.subr.bf16.mxu0 %v324
  %491 = vmatpush1.bf16.msra.mxu0 %v323
  %492 = vmatprep.subr.bf16.mxu0 %v328
  %493 = vmatpush1.bf16.msra.mxu0 %v327
  %494 = vmatprep.subr.bf16.mxu0 %v332
  %495 = vmatpush1.bf16.msra.mxu0 %v331
  %496 = vmatprep.subr.bf16.mxu0 %v336
  %497 = vmatpush1.bf16.msra.mxu0 %v335
  %498 = vmatprep.subr.bf16.mxu0 %v340
  %499 = vmatpush1.bf16.msra.mxu0 %v339
  %500 = vmatprep.subr.bf16.mxu0 %v344
  %501 = vmatpush1.bf16.msra.mxu0 %v343
  %502 = vmatprep.subr.bf16.mxu0 %v348
  %503 = vmatpush1.bf16.msra.mxu0 %v347
  %504 = vmatprep.subr.bf16.mxu0 %v352
  %505 = vmatpush1.bf16.msra.mxu0 %v351
  %506 = vmatprep.subr.bf16.mxu0 %v356
  %507 = vmatpush1.bf16.msra.mxu0 %v355
  %508 = vmatprep.subr.bf16.mxu0 %v360
  %509 = vmatpush1.bf16.msra.mxu0 %v359
  %510 = vmatprep.mubr.bf16.mxu0 %v98
  %511 = vmatmul.mubr.bf16.gmra.mrb[0].mxu0 %v97
  %v512 = vpop.f32.mrb[0].mxu0
  %v513 = vadd.f32 0.0, %v512
  %v514 = vpop.f32.mrb[0].mxu0
  %v515 = vadd.f32 0.0, %v514
  %v516 = vpop.f32.mrb[0].mxu0
  %v517 = vadd.f32 0.0, %v516
  %v518 = vpop.f32.mrb[0].mxu0
  %v519 = vadd.f32 0.0, %v518
  %520 = vmatprep.mubr.bf16.mxu0 %v100
  %521 = vmatmul.mubr.bf16.gmra.mrb[0].mxu0 %v99
  %v522 = vpop.f32.mrb[0].mxu0
  %v523 = vadd.f32 0.0, %v522
  %v524 = vpop.f32.mrb[0].mxu0
  %v525 = vadd.f32 0.0, %v524
  %v526 = vpop.f32.mrb[0].mxu0
  %v527 = vadd.f32 0.0, %v526
  %v528 = vpop.f32.mrb[0].mxu0
  %v529 = vadd.f32 0.0, %v528
  %530 = vdwg.mxu0
  %v531 = vld [vmem:[%s2] sm:$0xff]
  %v532 = vld [vmem:[%s2 + $0x8] sm:$0xff]
  %v533 = vld [vmem:[%s2 + $0x10] sm:$0xff]
  %v534 = vld [vmem:[%s2 + $0x18] sm:$0xff]
  %536 = vset.pattern.permute.xlu0 0
  %537 = vperm.xlu0 %536, %v531
  %v538 = vpop.permute.xlu0 %537
  %541 = vset.pattern.permute.xlu0 0
  %542 = vperm.xlu0 %541, %v532
  %v543 = vpop.permute.xlu0 %542
  %546 = vset.pattern.permute.xlu0 0
  %547 = vperm.xlu0 %546, %v533
  %v548 = vpop.permute.xlu0 %547
  %551 = vset.pattern.permute.xlu0 0
  %552 = vperm.xlu0 %551, %v534
  %v553 = vpop.permute.xlu0 %552
  %v555 = vmul.f32 %v460, %v538
  %v556 = vmul.f32 %v462, %v538
  %v557 = vmul.f32 %v513, %v538
  %v558 = vmul.f32 %v515, %v538
  %v559 = vmul.f32 %v464, %v543
  %v560 = vmul.f32 %v466, %v543
  %v561 = vmul.f32 %v517, %v543
  %v562 = vmul.f32 %v519, %v543
  %v563 = vmul.f32 %v470, %v548
  %v564 = vmul.f32 %v472, %v548
  %v565 = vmul.f32 %v523, %v548
  %v566 = vmul.f32 %v525, %v548
  %v567 = vmul.f32 %v474, %v553
  %v568 = vmul.f32 %v476, %v553
  %v569 = vmul.f32 %v527, %v553
  %v570 = vmul.f32 %v529, %v553
  %v571 = vld [vmem:[%s3] sm:$0xff]
  %v572 = vld [vmem:[%s3 + $0x8] sm:$0xff]
  %v573 = vld [vmem:[%s3 + $0x10] sm:$0xff]
  %v574 = vld [vmem:[%s3 + $0x18] sm:$0xff]
  %576 = vset.pattern.permute.xlu0 0
  %577 = vperm.xlu0 %576, %v571
  %v578 = vpop.permute.xlu0 %577
  %581 = vset.pattern.permute.xlu0 0
  %582 = vperm.xlu0 %581, %v572
  %v583 = vpop.permute.xlu0 %582
  %586 = vset.pattern.permute.xlu0 0
  %587 = vperm.xlu0 %586, %v573
  %v588 = vpop.permute.xlu0 %587
  %591 = vset.pattern.permute.xlu0 0
  %592 = vperm.xlu0 %591, %v574
  %v593 = vpop.permute.xlu0 %592
  %v595 = vadd.f32 %v555, %v578
  %v596 = vadd.f32 %v556, %v578
  %v597 = vadd.f32 %v557, %v578
  %v598 = vadd.f32 %v558, %v578
  %v599 = vadd.f32 %v559, %v583
  %v600 = vadd.f32 %v560, %v583
  %v601 = vadd.f32 %v561, %v583
  %v602 = vadd.f32 %v562, %v583
  %v603 = vadd.f32 %v563, %v588
  %v604 = vadd.f32 %v564, %v588
  %v605 = vadd.f32 %v565, %v588
  %v606 = vadd.f32 %v566, %v588
  %v607 = vadd.f32 %v567, %v593
  %v608 = vadd.f32 %v568, %v593
  %v609 = vadd.f32 %v569, %v593
  %v610 = vadd.f32 %v570, %v593
  %v611 = vmax.f32 %v595, 0.0
  %v612 = vmax.f32 %v596, 0.0
  %v613 = vmax.f32 %v597, 0.0
  %v614 = vmax.f32 %v598, 0.0
  %v615 = vmax.f32 %v599, 0.0
  %v616 = vmax.f32 %v600, 0.0
  %v617 = vmax.f32 %v601, 0.0
  %v618 = vmax.f32 %v602, 0.0
  %v619 = vmax.f32 %v603, 0.0
  %v620 = vmax.f32 %v604, 0.0
  %v621 = vmax.f32 %v605, 0.0
  %v622 = vmax.f32 %v606, 0.0
  %v623 = vmax.f32 %v607, 0.0
  %v624 = vmax.f32 %v608, 0.0
  %v625 = vmax.f32 %v609, 0.0
  %v626 = vmax.f32 %v610, 0.0
  %v627 = vpack.c.bf16 %v615, %v611
  %v628 = vpack.c.bf16 %v616, %v612
  %v629 = vpack.c.bf16 %v617, %v613
  %v630 = vpack.c.bf16 %v618, %v614
  %v631 = vpack.c.bf16 %v623, %v619
  %v632 = vpack.c.bf16 %v624, %v620
  %v633 = vpack.c.bf16 %v625, %v621
  %v634 = vpack.c.bf16 %v626, %v622
  %v643 = vunpack.c.l.b16 %v627
  %v644 = vunpack.c.l.b16 %v628
  %v645 = vunpack.c.l.b16 %v629
  %v646 = vunpack.c.l.b16 %v630
  %v647 = vunpack.c.h.b16 %v627
  %v648 = vunpack.c.h.b16 %v628
  %v649 = vunpack.c.h.b16 %v629
  %v650 = vunpack.c.h.b16 %v630
  %v651 = vunpack.c.l.b16 %v631
  %v652 = vunpack.c.l.b16 %v632
  %v653 = vunpack.c.l.b16 %v633
  %v654 = vunpack.c.l.b16 %v634
  %v655 = vunpack.c.h.b16 %v631
  %v656 = vunpack.c.h.b16 %v632
  %v657 = vunpack.c.h.b16 %v633
  %v658 = vunpack.c.h.b16 %v634
  %v659 = vpack.c.b16 %v644, %v643
  %v660 = vpack.c.b16 %v646, %v645
  %v661 = vpack.c.b16 %v648, %v647
  %v662 = vpack.c.b16 %v650, %v649
  %v663 = vpack.c.b16 %v652, %v651
  %v664 = vpack.c.b16 %v654, %v653
  %v665 = vpack.c.b16 %v656, %v655
  %v666 = vpack.c.b16 %v658, %v657
  %675 = vst [vmem:[%s4] sm:$0xff] %v659
  %vm676 = vcmask 1043456
  %vm677 = vcmask 64516
  %vm678 = vmor %vm677, %vm676
  %679 = vst.msk [vmem:[%s4 + $0x8] sm:$0xff] %vm678, %v660
  %680 = vst [vmem:[%s4 + $0x10] sm:$0xff] %v661
  %681 = vst.msk [vmem:[%s4 + $0x18] sm:$0xff] %vm678, %v662
  %682 = vst [vmem:[%s4 + $0x20] sm:$0xff] %v663
  %683 = vst.msk [vmem:[%s4 + $0x28] sm:$0xff] %vm678, %v664
  %684 = vst [vmem:[%s4 + $0x30] sm:$0xff] %v665
  %685 = vst.msk [vmem:[%s4 + $0x38] sm:$0xff] %vm678, %v666
  // Predicated region
  $region18: #{qnetwork_forward.4} parent=0 // pred_check
    _
  $region19: #{qnetwork_forward.4} parent=0 // pred_check_branch
    %687 = sbr.rel (0) target = $region21
  $region20: #{qnetwork_forward.4} parent=0 // pred_region
    _
  $region21: #{qnetwork_forward.4} parent=0 // pred_fallthru
    _
  // Predicated region
  $region22: #{qnetwork_forward.4} parent=0 // pred_check
    _
  $region23: #{qnetwork_forward.4} parent=0 // pred_check_branch
    %689 = sbr.rel (0) target = $region25
  $region24: #{qnetwork_forward.4} parent=0 // pred_region
    _
  $region25: #{qnetwork_forward.4} parent=0 // pred_fallthru
    _

// kernel: qnetwork_forward.5
$region0: #{qnetwork_forward.5}
  #allocation0 [shape = 'u32[]', space=smem, size = 0x4, offset = 0x4, fixed_abs, tag = 'smem constant byte address 0x4 - core index']
  #allocation1 [shape = 'u32[144,128]{1,0:T(1,128)}', space=vmem, size = 0x12000, scoped, tag = 'internal scratch']
  %s0 = inlined_call_operand.vmem [shape: bf16[2,6272], index: 0, kind: input, shape index: {}]
  %s1 = inlined_call_operand.vmem [shape: bf16[6272,256], index: 1, kind: input, shape index: {}]
  %s2 = inlined_call_operand.vmem [shape: f32[1,256], index: 2, kind: input, shape index: {}]
  %s3 = inlined_call_operand.vmem [shape: bf16[256,4], index: 3, kind: input, shape index: {}]
  %s4 = inlined_call_operand.vmem [shape: f32[1,4], index: 4, kind: input, shape index: {}]
  %s5 = inlined_call_operand.hbm [shape: f32[2,4], index: 5, kind: output, shape index: {}]
  %s6 = sld [smem:[#allocation0]]
  $region30: #{qnetwork_forward.5} parent=0
    _
  %s8 = ssub.s32 1, %s6
  %s9 = scalar_select 0, %s8, %s6
  $region1: #{qnetwork_forward.5} parent=0
    #allocation2 [shape = 'u8[1024]{0}', space=vmem, size = 0x400, scoped, tag = 'output window, operand 0, single buffered']
    #allocation3 [shape = 's32[1]{0}', space=sflag, size = 0x4, scoped, tag = 'scoped memory for qnetwork_forward.5']
    %10 = vsyncpa [#allocation3], 0
    // Predicated region
    $region2: #{qnetwork_forward.5} parent=1 // pred_check
      _
    $region3: #{qnetwork_forward.5} parent=1 // pred_check_branch
      %12 = sbr.rel (0) target = $region5
    $region4: #{qnetwork_forward.5} parent=1 // pred_region
      _
    $region5: #{qnetwork_forward.5} parent=1 // pred_fallthru
      _
    // Predicated region
    $region6: #{qnetwork_forward.5} parent=1 // pred_check
      _
    $region7: #{qnetwork_forward.5} parent=1 // pred_check_branch
      %14 = sbr.rel (0) target = $region9
    $region8: #{qnetwork_forward.5} parent=1 // pred_region
      _
    $region9: #{qnetwork_forward.5} parent=1 // pred_fallthru
      _
    // Predicated region
    $region10: #{qnetwork_forward.5} parent=1 // pred_check
      _
    $region11: #{qnetwork_forward.5} parent=1 // pred_check_branch
      %16 = sbr.rel (0) target = $region13
    $region12: #{qnetwork_forward.5} parent=1 // pred_region
      _
    $region13: #{qnetwork_forward.5} parent=1 // pred_fallthru
      _
    // Predicated region
    $region14: #{qnetwork_forward.5} parent=1 // pred_check
      _
    $region15: #{qnetwork_forward.5} parent=1 // pred_check_branch
      %18 = sbr.rel (0) target = $region17
    $region16: #{qnetwork_forward.5} parent=1 // pred_region
      _
    $region17: #{qnetwork_forward.5} parent=1 // pred_fallthru
      _
    // Predicated region
    $region18: #{qnetwork_forward.5} parent=1 // pred_check
      _
    $region19: #{qnetwork_forward.5} parent=1 // pred_check_branch
      %20 = sbr.rel (0) target = $region21
    $region20: #{qnetwork_forward.5} parent=1 // pred_region
      _
    $region21: #{qnetwork_forward.5} parent=1 // pred_fallthru
      _
    %v22 = vld [vmem:[%s0] sm:$0xff]
    %v23 = vld [vmem:[%s0 + $0x8] sm:$0xff]
    %v24 = vld [vmem:[%s0 + $0x10] sm:$0xff]
    %v25 = vld [vmem:[%s0 + $0x18] sm:$0xff]
    %v26 = vld [vmem:[%s0 + $0x20] sm:$0xff]
    %v27 = vld [vmem:[%s0 + $0x28] sm:$0xff]
    %v28 = vld [vmem:[%s0 + $0x30] sm:$0x1]
    %v29 = vld [vmem:[%s1] sm:$0xff]
    %v30 = vld [vmem:[%s1 + $0x8] sm:$0xff]
    %v31 = vld [vmem:[%s1 + $0x10] sm:$0xff]
    %v32 = vld [vmem:[%s1 + $0x18] sm:$0xff]
    %v33 = vld [vmem:[%s1 + $0x20] sm:$0xff]
    %v34 = vld [vmem:[%s1 + $0x28] sm:$0xff]
    %v35 = vld [vmem:[%s1 + $0x30] sm:$0xff]
    %v36 = vld [vmem:[%s1 + $0x38] sm:$0xff]
    %v37 = vld [vmem:[%s1 + $0x40] sm:$0xff]
    %v38 = vld [vmem:[%s1 + $0x48] sm:$0xff]
    %v39 = vld [vmem:[%s1 + $0x50] sm:$0xff]
    %v40 = vld [vmem:[%s1 + $0x58] sm:$0xff]
    %v41 = vld [vmem:[%s1 + $0x60] sm:$0xff]
    %v42 = vld [vmem:[%s1 + $0x68] sm:$0xff]
    %v43 = vld [vmem:[%s1 + $0x70] sm:$0xff]
    %v44 = vld [vmem:[%s1 + $0x78] sm:$0xff]
    %v45 = vld [vmem:[%s1 + $0x80] sm:$0xff]
    %v46 = vld [vmem:[%s1 + $0x88] sm:$0xff]
    %v47 = vld [vmem:[%s1 + $0x90] sm:$0xff]
    %v48 = vld [vmem:[%s1 + $0x98] sm:$0xff]
    %v49 = vld [vmem:[%s1 + $0xa0] sm:$0xff]
    %v50 = vld [vmem:[%s1 + $0xa8] sm:$0xff]
    %v51 = vld [vmem:[%s1 + $0xb0] sm:$0xff]
    %v52 = vld [vmem:[%s1 + $0xb8] sm:$0xff]
    %v53 = vld [vmem:[%s1 + $0xc0] sm:$0xff]
    %v54 = vld [vmem:[%s1 + $0xc8] sm:$0xff]
    %v55 = vld [vmem:[%s1 + $0xd0] sm:$0xff]
    %v56 = vld [vmem:[%s1 + $0xd8] sm:$0xff]
    %v57 = vld [vmem:[%s1 + $0xe0] sm:$0xff]
    %v58 = vld [vmem:[%s1 + $0xe8] sm:$0xff]
    %v59 = vld [vmem:[%s1 + $0xf0] sm:$0xff]
    %v60 = vld [vmem:[%s1 + $0xf8] sm:$0xff]
    %v61 = vld [vmem:[%s1 + $0x100] sm:$0xff]
    %v62 = vld [vmem:[%s1 + $0x108] sm:$0xff]
    %v63 = vld [vmem:[%s1 + $0x110] sm:$0xff]
    %v64 = vld [vmem:[%s1 + $0x118] sm:$0xff]
    %v65 = vld [vmem:[%s1 + $0x120] sm:$0xff]
    %v66 = vld [vmem:[%s1 + $0x128] sm:$0xff]
    %v67 = vld [vmem:[%s1 + $0x130] sm:$0xff]
    %v68 = vld [vmem:[%s1 + $0x138] sm:$0xff]
    %v69 = vld [vmem:[%s1 + $0x140] sm:$0xff]
    %v70 = vld [vmem:[%s1 + $0x148] sm:$0xff]
    %v71 = vld [vmem:[%s1 + $0x150] sm:$0xff]
    %v72 = vld [vmem:[%s1 + $0x158] sm:$0xff]
    %v73 = vld [vmem:[%s1 + $0x160] sm:$0xff]
    %v74 = vld [vmem:[%s1 + $0x168] sm:$0xff]
    %v75 = vld [vmem:[%s1 + $0x170] sm:$0xff]
    %v76 = vld [vmem:[%s1 + $0x178] sm:$0xff]
    %v77 = vld [vmem:[%s1 + $0x180] sm:$0xff]
    %v78 = vld [vmem:[%s1 + $0x188] sm:$0xff]
    %v79 = vld [vmem:[%s1 + $0x190] sm:$0xff]
    %v80 = vld [vmem:[%s1 + $0x198] sm:$0xff]
    %v81 = vld [vmem:[%s1 + $0x1a0] sm:$0xff]
    %v82 = vld [vmem:[%s1 + $0x1a8] sm:$0xff]
    %v83 = vld [vmem:[%s1 + $0x1b0] sm:$0xff]
    %v84 = vld [vmem:[%s1 + $0x1b8] sm:$0xff]
    %v85 = vld [vmem:[%s1 + $0x1c0] sm:$0xff]
    %v86 = vld [vmem:[%s1 + $0x1c8] sm:$0xff]
    %v87 = vld [vmem:[%s1 + $0x1d0] sm:$0xff]
    %v88 = vld [vmem:[%s1 + $0x1d8] sm:$0xff]
    %v89 = vld [vmem:[%s1 + $0x1e0] sm:$0xff]
    %v90 = vld [vmem:[%s1 + $0x1e8] sm:$0xff]
    %v91 = vld [vmem:[%s1 + $0x1f0] sm:$0xff]
    %v92 = vld [vmem:[%s1 + $0x1f8] sm:$0xff]
    %v93 = vld [vmem:[%s1 + $0x200] sm:$0xff]
    %v94 = vld [vmem:[%s1 + $0x208] sm:$0xff]
    %v95 = vld [vmem:[%s1 + $0x210] sm:$0xff]
    %v96 = vld [vmem:[%s1 + $0x218] sm:$0xff]
    %v97 = vld [vmem:[%s1 + $0x220] sm:$0xff]
    %v98 = vld [vmem:[%s1 + $0x228] sm:$0xff]
    %v99 = vld [vmem:[%s1 + $0x230] sm:$0xff]
    %v100 = vld [vmem:[%s1 + $0x238] sm:$0xff]
    %v101 = vld [vmem:[%s1 + $0x240] sm:$0xff]
    %v102 = vld [vmem:[%s1 + $0x248] sm:$0xff]
    %v103 = vld [vmem:[%s1 + $0x250] sm:$0xff]
    %v104 = vld [vmem:[%s1 + $0x258] sm:$0xff]
    %v105 = vld [vmem:[%s1 + $0x260] sm:$0xff]
    %v106 = vld [vmem:[%s1 + $0x268] sm:$0xff]
    %v107 = vld [vmem:[%s1 + $0x270] sm:$0xff]
    %v108 = vld [vmem:[%s1 + $0x278] sm:$0xff]
    %v109 = vld [vmem:[%s1 + $0x280] sm:$0xff]
    %v110 = vld [vmem:[%s1 + $0x288] sm:$0xff]
    %v111 = vld [vmem:[%s1 + $0x290] sm:$0xff]
    %v112 = vld [vmem:[%s1 + $0x298] sm:$0xff]
    %v113 = vld [vmem:[%s1 + $0x2a0] sm:$0xff]
    %v114 = vld [vmem:[%s1 + $0x2a8] sm:$0xff]
    %v115 = vld [vmem:[%s1 + $0x2b0] sm:$0xff]
    %v116 = vld [vmem:[%s1 + $0x2b8] sm:$0xff]
    %v117 = vld [vmem:[%s1 + $0x2c0] sm:$0xff]
    %v118 = vld [vmem:[%s1 + $0x2c8] sm:$0xff]
    %v119 = vld [vmem:[%s1 + $0x2d0] sm:$0xff]
    %v120 = vld [vmem:[%s1 + $0x2d8] sm:$0xff]
    %v121 = vld [vmem:[%s1 + $0x2e0] sm:$0xff]
    %v122 = vld [vmem:[%s1 + $0x2e8] sm:$0xff]
    %v123 = vld [vmem:[%s1 + $0x2f0] sm:$0xff]
    %v124 = vld [vmem:[%s1 + $0x2f8] sm:$0xff]
    %v125 = vld [vmem:[%s1 + $0x300] sm:$0xff]
    %v126 = vld [vmem:[%s1 + $0x308] sm:$0xff]
    %v127 = vld [vmem:[%s1 + $0x310] sm:$0xff]
    %v128 = vld [vmem:[%s1 + $0x318] sm:$0xff]
    %v129 = vld [vmem:[%s1 + $0x320] sm:$0xff]
    %v130 = vld [vmem:[%s1 + $0x328] sm:$0xff]
    %v131 = vld [vmem:[%s1 + $0x330] sm:$0xff]
    %v132 = vld [vmem:[%s1 + $0x338] sm:$0xff]
    %v133 = vld [vmem:[%s1 + $0x340] sm:$0xff]
    %v134 = vld [vmem:[%s1 + $0x348] sm:$0xff]
    %v135 = vld [vmem:[%s1 + $0x350] sm:$0xff]
    %v136 = vld [vmem:[%s1 + $0x358] sm:$0xff]
    %v137 = vld [vmem:[%s1 + $0x360] sm:$0xff]
    %v138 = vld [vmem:[%s1 + $0x368] sm:$0xff]
    %v139 = vld [vmem:[%s1 + $0x370] sm:$0xff]
    %v140 = vld [vmem:[%s1 + $0x378] sm:$0xff]
    %v141 = vld [vmem:[%s1 + $0x380] sm:$0xff]
    %v142 = vld [vmem:[%s1 + $0x388] sm:$0xff]
    %v143 = vld [vmem:[%s1 + $0x390] sm:$0xff]
    %v144 = vld [vmem:[%s1 + $0x398] sm:$0xff]
    %v145 = vld [vmem:[%s1 + $0x3a0] sm:$0xff]
    %v146 = vld [vmem:[%s1 + $0x3a8] sm:$0xff]
    %v147 = vld [vmem:[%s1 + $0x3b0] sm:$0xff]
    %v148 = vld [vmem:[%s1 + $0x3b8] sm:$0xff]
    %v149 = vld [vmem:[%s1 + $0x3c0] sm:$0xff]
    %v150 = vld [vmem:[%s1 + $0x3c8] sm:$0xff]
    %v151 = vld [vmem:[%s1 + $0x3d0] sm:$0xff]
    %v152 = vld [vmem:[%s1 + $0x3d8] sm:$0xff]
    %v153 = vld [vmem:[%s1 + $0x3e0] sm:$0xff]
    %v154 = vld [vmem:[%s1 + $0x3e8] sm:$0xff]
    %v155 = vld [vmem:[%s1 + $0x3f0] sm:$0xff]
    %v156 = vld [vmem:[%s1 + $0x3f8] sm:$0xff]
    %v157 = vld [vmem:[%s1 + $0x400] sm:$0xff]
    %v158 = vld [vmem:[%s1 + $0x408] sm:$0xff]
    %v159 = vld [vmem:[%s1 + $0x410] sm:$0xff]
    %v160 = vld [vmem:[%s1 + $0x418] sm:$0xff]
    %v161 = vld [vmem:[%s1 + $0x420] sm:$0xff]
    %v162 = vld [vmem:[%s1 + $0x428] sm:$0xff]
    %v163 = vld [vmem:[%s1 + $0x430] sm:$0xff]
    %v164 = vld [vmem:[%s1 + $0x438] sm:$0xff]
    %v165 = vld [vmem:[%s1 + $0x440] sm:$0xff]
    %v166 = vld [vmem:[%s1 + $0x448] sm:$0xff]
    %v167 = vld [vmem:[%s1 + $0x450] sm:$0xff]
    %v168 = vld [vmem:[%s1 + $0x458] sm:$0xff]
    %v169 = vld [vmem:[%s1 + $0x460] sm:$0xff]
    %v170 = vld [vmem:[%s1 + $0x468] sm:$0xff]
    %v171 = vld [vmem:[%s1 + $0x470] sm:$0xff]
    %v172 = vld [vmem:[%s1 + $0x478] sm:$0xff]
    %v173 = vld [vmem:[%s1 + $0x480] sm:$0xff]
    %v174 = vld [vmem:[%s1 + $0x488] sm:$0xff]
    %v175 = vld [vmem:[%s1 + $0x490] sm:$0xff]
    %v176 = vld [vmem:[%s1 + $0x498] sm:$0xff]
    %v177 = vld [vmem:[%s1 + $0x4a0] sm:$0xff]
    %v178 = vld [vmem:[%s1 + $0x4a8] sm:$0xff]
    %v179 = vld [vmem:[%s1 + $0x4b0] sm:$0xff]
    %v180 = vld [vmem:[%s1 + $0x4b8] sm:$0xff]
    %v181 = vld [vmem:[%s1 + $0x4c0] sm:$0xff]
    %v182 = vld [vmem:[%s1 + $0x4c8] sm:$0xff]
    %v183 = vld [vmem:[%s1 + $0x4d0] sm:$0xff]
    %v184 = vld [vmem:[%s1 + $0x4d8] sm:$0xff]
    %v185 = vld [vmem:[%s1 + $0x4e0] sm:$0xff]
    %v186 = vld [vmem:[%s1 + $0x4e8] sm:$0xff]
    %v187 = vld [vmem:[%s1 + $0x4f0] sm:$0xff]
    %v188 = vld [vmem:[%s1 + $0x4f8] sm:$0xff]
    %v189 = vld [vmem:[%s1 + $0x500] sm:$0xff]
    %v190 = vld [vmem:[%s1 + $0x508] sm:$0xff]
    %v191 = vld [vmem:[%s1 + $0x510] sm:$0xff]
    %v192 = vld [vmem:[%s1 + $0x518] sm:$0xff]
    %v193 = vld [vmem:[%s1 + $0x520] sm:$0xff]
    %v194 = vld [vmem:[%s1 + $0x528] sm:$0xff]
    %v195 = vld [vmem:[%s1 + $0x530] sm:$0xff]
    %v196 = vld [vmem:[%s1 + $0x538] sm:$0xff]
    %v197 = vld [vmem:[%s1 + $0x540] sm:$0xff]
    %v198 = vld [vmem:[%s1 + $0x548] sm:$0xff]
    %v199 = vld [vmem:[%s1 + $0x550] sm:$0xff]
    %v200 = vld [vmem:[%s1 + $0x558] sm:$0xff]
    %v201 = vld [vmem:[%s1 + $0x560] sm:$0xff]
    %v202 = vld [vmem:[%s1 + $0x568] sm:$0xff]
    %v203 = vld [vmem:[%s1 + $0x570] sm:$0xff]
    %v204 = vld [vmem:[%s1 + $0x578] sm:$0xff]
    %v205 = vld [vmem:[%s1 + $0x580] sm:$0xff]
    %v206 = vld [vmem:[%s1 + $0x588] sm:$0xff]
    %v207 = vld [vmem:[%s1 + $0x590] sm:$0xff]
    %v208 = vld [vmem:[%s1 + $0x598] sm:$0xff]
    %v209 = vld [vmem:[%s1 + $0x5a0] sm:$0xff]
    %v210 = vld [vmem:[%s1 + $0x5a8] sm:$0xff]
    %v211 = vld [vmem:[%s1 + $0x5b0] sm:$0xff]
    %v212 = vld [vmem:[%s1 + $0x5b8] sm:$0xff]
    %v213 = vld [vmem:[%s1 + $0x5c0] sm:$0xff]
    %v214 = vld [vmem:[%s1 + $0x5c8] sm:$0xff]
    %v215 = vld [vmem:[%s1 + $0x5d0] sm:$0xff]
    %v216 = vld [vmem:[%s1 + $0x5d8] sm:$0xff]
    %v217 = vld [vmem:[%s1 + $0x5e0] sm:$0xff]
    %v218 = vld [vmem:[%s1 + $0x5e8] sm:$0xff]
    %v219 = vld [vmem:[%s1 + $0x5f0] sm:$0xff]
    %v220 = vld [vmem:[%s1 + $0x5f8] sm:$0xff]
    %v221 = vld [vmem:[%s1 + $0x600] sm:$0xff]
    %v222 = vld [vmem:[%s1 + $0x608] sm:$0xff]
    %v223 = vld [vmem:[%s1 + $0x610] sm:$0xff]
    %v224 = vld [vmem:[%s1 + $0x618] sm:$0xff]
    %v225 = vld [vmem:[%s1 + $0x620] sm:$0xff]
    %v226 = vld [vmem:[%s1 + $0x628] sm:$0xff]
    %v227 = vld [vmem:[%s1 + $0x630] sm:$0xff]
    %v228 = vld [vmem:[%s1 + $0x638] sm:$0xff]
    %v229 = vld [vmem:[%s1 + $0x640] sm:$0xff]
    %v230 = vld [vmem:[%s1 + $0x648] sm:$0xff]
    %v231 = vld [vmem:[%s1 + $0x650] sm:$0xff]
    %v232 = vld [vmem:[%s1 + $0x658] sm:$0xff]
    %v233 = vld [vmem:[%s1 + $0x660] sm:$0xff]
    %v234 = vld [vmem:[%s1 + $0x668] sm:$0xff]
    %v235 = vld [vmem:[%s1 + $0x670] sm:$0xff]
    %v236 = vld [vmem:[%s1 + $0x678] sm:$0xff]
    %v237 = vld [vmem:[%s1 + $0x680] sm:$0xff]
    %v238 = vld [vmem:[%s1 + $0x688] sm:$0xff]
    %v239 = vld [vmem:[%s1 + $0x690] sm:$0xff]
    %v240 = vld [vmem:[%s1 + $0x698] sm:$0xff]
    %v241 = vld [vmem:[%s1 + $0x6a0] sm:$0xff]
    %v242 = vld [vmem:[%s1 + $0x6a8] sm:$0xff]
    %v243 = vld [vmem:[%s1 + $0x6b0] sm:$0xff]
    %v244 = vld [vmem:[%s1 + $0x6b8] sm:$0xff]
    %v245 = vld [vmem:[%s1 + $0x6c0] sm:$0xff]
    %v246 = vld [vmem:[%s1 + $0x6c8] sm:$0xff]
    %v247 = vld [vmem:[%s1 + $0x6d0] sm:$0xff]
    %v248 = vld [vmem:[%s1 + $0x6d8] sm:$0xff]
    %v249 = vld [vmem:[%s1 + $0x6e0] sm:$0xff]
    %v250 = vld [vmem:[%s1 + $0x6e8] sm:$0xff]
    %v251 = vld [vmem:[%s1 + $0x6f0] sm:$0xff]
    %v252 = vld [vmem:[%s1 + $0x6f8] sm:$0xff]
    %v253 = vld [vmem:[%s1 + $0x700] sm:$0xff]
    %v254 = vld [vmem:[%s1 + $0x708] sm:$0xff]
    %v255 = vld [vmem:[%s1 + $0x710] sm:$0xff]
    %v256 = vld [vmem:[%s1 + $0x718] sm:$0xff]
    %v257 = vld [vmem:[%s1 + $0x720] sm:$0xff]
    %v258 = vld [vmem:[%s1 + $0x728] sm:$0xff]
    %v259 = vld [vmem:[%s1 + $0x730] sm:$0xff]
    %v260 = vld [vmem:[%s1 + $0x738] sm:$0xff]
    %v261 = vld [vmem:[%s1 + $0x740] sm:$0xff]
    %v262 = vld [vmem:[%s1 + $0x748] sm:$0xff]
    %v263 = vld [vmem:[%s1 + $0x750] sm:$0xff]
    %v264 = vld [vmem:[%s1 + $0x758] sm:$0xff]
    %v265 = vld [vmem:[%s1 + $0x760] sm:$0xff]
    %v266 = vld [vmem:[%s1 + $0x768] sm:$0xff]
    %v267 = vld [vmem:[%s1 + $0x770] sm:$0xff]
    %v268 = vld [vmem:[%s1 + $0x778] sm:$0xff]
    %v269 = vld [vmem:[%s1 + $0x780] sm:$0xff]
    %v270 = vld [vmem:[%s1 + $0x788] sm:$0xff]
    %v271 = vld [vmem:[%s1 + $0x790] sm:$0xff]
    %v272 = vld [vmem:[%s1 + $0x798] sm:$0xff]
    %v273 = vld [vmem:[%s1 + $0x7a0] sm:$0xff]
    %v274 = vld [vmem:[%s1 + $0x7a8] sm:$0xff]
    %v275 = vld [vmem:[%s1 + $0x7b0] sm:$0xff]
    %v276 = vld [vmem:[%s1 + $0x7b8] sm:$0xff]
    %v277 = vld [vmem:[%s1 + $0x7c0] sm:$0xff]
    %v278 = vld [vmem:[%s1 + $0x7c8] sm:$0xff]
    %v279 = vld [vmem:[%s1 + $0x7d0] sm:$0xff]
    %v280 = vld [vmem:[%s1 + $0x7d8] sm:$0xff]
    %v281 = vld [vmem:[%s1 + $0x7e0] sm:$0xff]
    %v282 = vld [vmem:[%s1 + $0x7e8] sm:$0xff]
    %v283 = vld [vmem:[%s1 + $0x7f0] sm:$0xff]
    %v284 = vld [vmem:[%s1 + $0x7f8] sm:$0xff]
    %v285 = vld [vmem:[%s1 + $0x800] sm:$0xff]
    %v286 = vld [vmem:[%s1 + $0x808] sm:$0xff]
    %v287 = vld [vmem:[%s1 + $0x810] sm:$0xff]
    %v288 = vld [vmem:[%s1 + $0x818] sm:$0xff]
    %v289 = vld [vmem:[%s1 + $0x820] sm:$0xff]
    %v290 = vld [vmem:[%s1 + $0x828] sm:$0xff]
    %v291 = vld [vmem:[%s1 + $0x830] sm:$0xff]
    %v292 = vld [vmem:[%s1 + $0x838] sm:$0xff]
    %v293 = vld [vmem:[%s1 + $0x840] sm:$0xff]
    %v294 = vld [vmem:[%s1 + $0x848] sm:$0xff]
    %v295 = vld [vmem:[%s1 + $0x850] sm:$0xff]
    %v296 = vld [vmem:[%s1 + $0x858] sm:$0xff]
    %v297 = vld [vmem:[%s1 + $0x860] sm:$0xff]
    %v298 = vld [vmem:[%s1 + $0x868] sm:$0xff]
    %v299 = vld [vmem:[%s1 + $0x870] sm:$0xff]
    %v300 = vld [vmem:[%s1 + $0x878] sm:$0xff]
    %v301 = vld [vmem:[%s1 + $0x880] sm:$0xff]
    %v302 = vld [vmem:[%s1 + $0x888] sm:$0xff]
    %v303 = vld [vmem:[%s1 + $0x890] sm:$0xff]
    %v304 = vld [vmem:[%s1 + $0x898] sm:$0xff]
    %v305 = vld [vmem:[%s1 + $0x8a0] sm:$0xff]
    %v306 = vld [vmem:[%s1 + $0x8a8] sm:$0xff]
    %v307 = vld [vmem:[%s1 + $0x8b0] sm:$0xff]
    %v308 = vld [vmem:[%s1 + $0x8b8] sm:$0xff]
    %v309 = vld [vmem:[%s1 + $0x8c0] sm:$0xff]
    %v310 = vld [vmem:[%s1 + $0x8c8] sm:$0xff]
    %v311 = vld [vmem:[%s1 + $0x8d0] sm:$0xff]
    %v312 = vld [vmem:[%s1 + $0x8d8] sm:$0xff]
    %v313 = vld [vmem:[%s1 + $0x8e0] sm:$0xff]
    %v314 = vld [vmem:[%s1 + $0x8e8] sm:$0xff]
    %v315 = vld [vmem:[%s1 + $0x8f0] sm:$0xff]
    %v316 = vld [vmem:[%s1 + $0x8f8] sm:$0xff]
    %v317 = vld [vmem:[%s1 + $0x900] sm:$0xff]
    %v318 = vld [vmem:[%s1 + $0x908] sm:$0xff]
    %v319 = vld [vmem:[%s1 + $0x910] sm:$0xff]
    %v320 = vld [vmem:[%s1 + $0x918] sm:$0xff]
    %v321 = vld [vmem:[%s1 + $0x920] sm:$0xff]
    %v322 = vld [vmem:[%s1 + $0x928] sm:$0xff]
    %v323 = vld [vmem:[%s1 + $0x930] sm:$0xff]
    %v324 = vld [vmem:[%s1 + $0x938] sm:$0xff]
    %v325 = vld [vmem:[%s1 + $0x940] sm:$0xff]
    %v326 = vld [vmem:[%s1 + $0x948] sm:$0xff]
    %v327 = vld [vmem:[%s1 + $0x950] sm:$0xff]
    %v328 = vld [vmem:[%s1 + $0x958] sm:$0xff]
    %v329 = vld [vmem:[%s1 + $0x960] sm:$0xff]
    %v330 = vld [vmem:[%s1 + $0x968] sm:$0xff]
    %v331 = vld [vmem:[%s1 + $0x970] sm:$0xff]
    %v332 = vld [vmem:[%s1 + $0x978] sm:$0xff]
    %v333 = vld [vmem:[%s1 + $0x980] sm:$0xff]
    %v334 = vld [vmem:[%s1 + $0x988] sm:$0xff]
    %v335 = vld [vmem:[%s1 + $0x990] sm:$0xff]
    %v336 = vld [vmem:[%s1 + $0x998] sm:$0xff]
    %v337 = vld [vmem:[%s1 + $0x9a0] sm:$0xff]
    %v338 = vld [vmem:[%s1 + $0x9a8] sm:$0xff]
    %v339 = vld [vmem:[%s1 + $0x9b0] sm:$0xff]
    %v340 = vld [vmem:[%s1 + $0x9b8] sm:$0xff]
    %v341 = vld [vmem:[%s1 + $0x9c0] sm:$0xff]
    %v342 = vld [vmem:[%s1 + $0x9c8] sm:$0xff]
    %v343 = vld [vmem:[%s1 + $0x9d0] sm:$0xff]
    %v344 = vld [vmem:[%s1 + $0x9d8] sm:$0xff]
    %v345 = vld [vmem:[%s1 + $0x9e0] sm:$0xff]
    %v346 = vld [vmem:[%s1 + $0x9e8] sm:$0xff]
    %v347 = vld [vmem:[%s1 + $0x9f0] sm:$0xff]
    %v348 = vld [vmem:[%s1 + $0x9f8] sm:$0xff]
    %v349 = vld [vmem:[%s1 + $0xa00] sm:$0xff]
    %v350 = vld [vmem:[%s1 + $0xa08] sm:$0xff]
    %v351 = vld [vmem:[%s1 + $0xa10] sm:$0xff]
    %v352 = vld [vmem:[%s1 + $0xa18] sm:$0xff]
    %v353 = vld [vmem:[%s1 + $0xa20] sm:$0xff]
    %v354 = vld [vmem:[%s1 + $0xa28] sm:$0xff]
    %v355 = vld [vmem:[%s1 + $0xa30] sm:$0xff]
    %v356 = vld [vmem:[%s1 + $0xa38] sm:$0xff]
    %v357 = vld [vmem:[%s1 + $0xa40] sm:$0xff]
    %v358 = vld [vmem:[%s1 + $0xa48] sm:$0xff]
    %v359 = vld [vmem:[%s1 + $0xa50] sm:$0xff]
    %v360 = vld [vmem:[%s1 + $0xa58] sm:$0xff]
    %v361 = vld [vmem:[%s1 + $0xa60] sm:$0xff]
    %v362 = vld [vmem:[%s1 + $0xa68] sm:$0xff]
    %v363 = vld [vmem:[%s1 + $0xa70] sm:$0xff]
    %v364 = vld [vmem:[%s1 + $0xa78] sm:$0xff]
    %v365 = vld [vmem:[%s1 + $0xa80] sm:$0xff]
    %v366 = vld [vmem:[%s1 + $0xa88] sm:$0xff]
    %v367 = vld [vmem:[%s1 + $0xa90] sm:$0xff]
    %v368 = vld [vmem:[%s1 + $0xa98] sm:$0xff]
    %v369 = vld [vmem:[%s1 + $0xaa0] sm:$0xff]
    %v370 = vld [vmem:[%s1 + $0xaa8] sm:$0xff]
    %v371 = vld [vmem:[%s1 + $0xab0] sm:$0xff]
    %v372 = vld [vmem:[%s1 + $0xab8] sm:$0xff]
    %v373 = vld [vmem:[%s1 + $0xac0] sm:$0xff]
    %v374 = vld [vmem:[%s1 + $0xac8] sm:$0xff]
    %v375 = vld [vmem:[%s1 + $0xad0] sm:$0xff]
    %v376 = vld [vmem:[%s1 + $0xad8] sm:$0xff]
    %v377 = vld [vmem:[%s1 + $0xae0] sm:$0xff]
    %v378 = vld [vmem:[%s1 + $0xae8] sm:$0xff]
    %v379 = vld [vmem:[%s1 + $0xaf0] sm:$0xff]
    %v380 = vld [vmem:[%s1 + $0xaf8] sm:$0xff]
    %v381 = vld [vmem:[%s1 + $0xb00] sm:$0xff]
    %v382 = vld [vmem:[%s1 + $0xb08] sm:$0xff]
    %v383 = vld [vmem:[%s1 + $0xb10] sm:$0xff]
    %v384 = vld [vmem:[%s1 + $0xb18] sm:$0xff]
    %v385 = vld [vmem:[%s1 + $0xb20] sm:$0xff]
    %v386 = vld [vmem:[%s1 + $0xb28] sm:$0xff]
    %v387 = vld [vmem:[%s1 + $0xb30] sm:$0xff]
    %v388 = vld [vmem:[%s1 + $0xb38] sm:$0xff]
    %v389 = vld [vmem:[%s1 + $0xb40] sm:$0xff]
    %v390 = vld [vmem:[%s1 + $0xb48] sm:$0xff]
    %v391 = vld [vmem:[%s1 + $0xb50] sm:$0xff]
    %v392 = vld [vmem:[%s1 + $0xb58] sm:$0xff]
    %v393 = vld [vmem:[%s1 + $0xb60] sm:$0xff]
    %v394 = vld [vmem:[%s1 + $0xb68] sm:$0xff]
    %v395 = vld [vmem:[%s1 + $0xb70] sm:$0xff]
    %v396 = vld [vmem:[%s1 + $0xb78] sm:$0xff]
    %v397 = vld [vmem:[%s1 + $0xb80] sm:$0xff]
    %v398 = vld [vmem:[%s1 + $0xb88] sm:$0xff]
    %v399 = vld [vmem:[%s1 + $0xb90] sm:$0xff]
    %v400 = vld [vmem:[%s1 + $0xb98] sm:$0xff]
    %v401 = vld [vmem:[%s1 + $0xba0] sm:$0xff]
    %v402 = vld [vmem:[%s1 + $0xba8] sm:$0xff]
    %v403 = vld [vmem:[%s1 + $0xbb0] sm:$0xff]
    %v404 = vld [vmem:[%s1 + $0xbb8] sm:$0xff]
    %v405 = vld [vmem:[%s1 + $0xbc0] sm:$0xff]
    %v406 = vld [vmem:[%s1 + $0xbc8] sm:$0xff]
    %v407 = vld [vmem:[%s1 + $0xbd0] sm:$0xff]
    %v408 = vld [vmem:[%s1 + $0xbd8] sm:$0xff]
    %v409 = vld [vmem:[%s1 + $0xbe0] sm:$0xff]
    %v410 = vld [vmem:[%s1 + $0xbe8] sm:$0xff]
    %v411 = vld [vmem:[%s1 + $0xbf0] sm:$0xff]
    %v412 = vld [vmem:[%s1 + $0xbf8] sm:$0xff]
    %v413 = vld [vmem:[%s1 + $0xc00] sm:$0xff]
    %v414 = vld [vmem:[%s1 + $0xc08] sm:$0xff]
    %v415 = vld [vmem:[%s1 + $0xc10] sm:$0xff]
    %v416 = vld [vmem:[%s1 + $0xc18] sm:$0xff]
    %v417 = vld [vmem:[%s1 + $0xc20] sm:$0xff]
    %v418 = vld [vmem:[%s1 + $0xc28] sm:$0xff]
    %v419 = vld [vmem:[%s1 + $0xc30] sm:$0xff]
    %v420 = vld [vmem:[%s1 + $0xc38] sm:$0xff]
    %v421 = vld [vmem:[%s1 + $0xc40] sm:$0xff]
    %v422 = vld [vmem:[%s1 + $0xc48] sm:$0xff]
    %v423 = vld [vmem:[%s1 + $0xc50] sm:$0xff]
    %v424 = vld [vmem:[%s1 + $0xc58] sm:$0xff]
    %v425 = vld [vmem:[%s1 + $0xc60] sm:$0xff]
    %v426 = vld [vmem:[%s1 + $0xc68] sm:$0xff]
    %v427 = vld [vmem:[%s1 + $0xc70] sm:$0xff]
    %v428 = vld [vmem:[%s1 + $0xc78] sm:$0xff]
    %v429 = vld [vmem:[%s1 + $0xc80] sm:$0xff]
    %v430 = vld [vmem:[%s1 + $0xc88] sm:$0xff]
    %v431 = vld [vmem:[%s1 + $0xc90] sm:$0xff]
    %v432 = vld [vmem:[%s1 + $0xc98] sm:$0xff]
    %v433 = vld [vmem:[%s1 + $0xca0] sm:$0xff]
    %v434 = vld [vmem:[%s1 + $0xca8] sm:$0xff]
    %v435 = vld [vmem:[%s1 + $0xcb0] sm:$0xff]
    %v436 = vld [vmem:[%s1 + $0xcb8] sm:$0xff]
    %v437 = vld [vmem:[%s1 + $0xcc0] sm:$0xff]
    %v438 = vld [vmem:[%s1 + $0xcc8] sm:$0xff]
    %v439 = vld [vmem:[%s1 + $0xcd0] sm:$0xff]
    %v440 = vld [vmem:[%s1 + $0xcd8] sm:$0xff]
    %v441 = vld [vmem:[%s1 + $0xce0] sm:$0xff]
    %v442 = vld [vmem:[%s1 + $0xce8] sm:$0xff]
    %v443 = vld [vmem:[%s1 + $0xcf0] sm:$0xff]
    %v444 = vld [vmem:[%s1 + $0xcf8] sm:$0xff]
    %v445 = vld [vmem:[%s1 + $0xd00] sm:$0xff]
    %v446 = vld [vmem:[%s1 + $0xd08] sm:$0xff]
    %v447 = vld [vmem:[%s1 + $0xd10] sm:$0xff]
    %v448 = vld [vmem:[%s1 + $0xd18] sm:$0xff]
    %v449 = vld [vmem:[%s1 + $0xd20] sm:$0xff]
    %v450 = vld [vmem:[%s1 + $0xd28] sm:$0xff]
    %v451 = vld [vmem:[%s1 + $0xd30] sm:$0xff]
    %v452 = vld [vmem:[%s1 + $0xd38] sm:$0xff]
    %v453 = vld [vmem:[%s1 + $0xd40] sm:$0xff]
    %v454 = vld [vmem:[%s1 + $0xd48] sm:$0xff]
    %v455 = vld [vmem:[%s1 + $0xd50] sm:$0xff]
    %v456 = vld [vmem:[%s1 + $0xd58] sm:$0xff]
    %v457 = vld [vmem:[%s1 + $0xd60] sm:$0xff]
    %v458 = vld [vmem:[%s1 + $0xd68] sm:$0xff]
    %v459 = vld [vmem:[%s1 + $0xd70] sm:$0xff]
    %v460 = vld [vmem:[%s1 + $0xd78] sm:$0xff]
    %v461 = vld [vmem:[%s1 + $0xd80] sm:$0xff]
    %v462 = vld [vmem:[%s1 + $0xd88] sm:$0xff]
    %v463 = vld [vmem:[%s1 + $0xd90] sm:$0xff]
    %v464 = vld [vmem:[%s1 + $0xd98] sm:$0xff]
    %v465 = vld [vmem:[%s1 + $0xda0] sm:$0xff]
    %v466 = vld [vmem:[%s1 + $0xda8] sm:$0xff]
    %v467 = vld [vmem:[%s1 + $0xdb0] sm:$0xff]
    %v468 = vld [vmem:[%s1 + $0xdb8] sm:$0xff]
    %v469 = vld [vmem:[%s1 + $0xdc0] sm:$0xff]
    %v470 = vld [vmem:[%s1 + $0xdc8] sm:$0xff]
    %v471 = vld [vmem:[%s1 + $0xdd0] sm:$0xff]
    %v472 = vld [vmem:[%s1 + $0xdd8] sm:$0xff]
    %v473 = vld [vmem:[%s1 + $0xde0] sm:$0xff]
    %v474 = vld [vmem:[%s1 + $0xde8] sm:$0xff]
    %v475 = vld [vmem:[%s1 + $0xdf0] sm:$0xff]
    %v476 = vld [vmem:[%s1 + $0xdf8] sm:$0xff]
    %v477 = vld [vmem:[%s1 + $0xe00] sm:$0xff]
    %v478 = vld [vmem:[%s1 + $0xe08] sm:$0xff]
    %v479 = vld [vmem:[%s1 + $0xe10] sm:$0xff]
    %v480 = vld [vmem:[%s1 + $0xe18] sm:$0xff]
    %v481 = vld [vmem:[%s1 + $0xe20] sm:$0xff]
    %v482 = vld [vmem:[%s1 + $0xe28] sm:$0xff]
    %v483 = vld [vmem:[%s1 + $0xe30] sm:$0xff]
    %v484 = vld [vmem:[%s1 + $0xe38] sm:$0xff]
    %v485 = vld [vmem:[%s1 + $0xe40] sm:$0xff]
    %v486 = vld [vmem:[%s1 + $0xe48] sm:$0xff]
    %v487 = vld [vmem:[%s1 + $0xe50] sm:$0xff]
    %v488 = vld [vmem:[%s1 + $0xe58] sm:$0xff]
    %v489 = vld [vmem:[%s1 + $0xe60] sm:$0xff]
    %v490 = vld [vmem:[%s1 + $0xe68] sm:$0xff]
    %v491 = vld [vmem:[%s1 + $0xe70] sm:$0xff]
    %v492 = vld [vmem:[%s1 + $0xe78] sm:$0xff]
    %v493 = vld [vmem:[%s1 + $0xe80] sm:$0xff]
    %v494 = vld [vmem:[%s1 + $0xe88] sm:$0xff]
    %v495 = vld [vmem:[%s1 + $0xe90] sm:$0xff]
    %v496 = vld [vmem:[%s1 + $0xe98] sm:$0xff]
    %v497 = vld [vmem:[%s1 + $0xea0] sm:$0xff]
    %v498 = vld [vmem:[%s1 + $0xea8] sm:$0xff]
    %v499 = vld [vmem:[%s1 + $0xeb0] sm:$0xff]
    %v500 = vld [vmem:[%s1 + $0xeb8] sm:$0xff]
    %v501 = vld [vmem:[%s1 + $0xec0] sm:$0xff]
    %v502 = vld [vmem:[%s1 + $0xec8] sm:$0xff]
    %v503 = vld [vmem:[%s1 + $0xed0] sm:$0xff]
    %v504 = vld [vmem:[%s1 + $0xed8] sm:$0xff]
    %v505 = vld [vmem:[%s1 + $0xee0] sm:$0xff]
    %v506 = vld [vmem:[%s1 + $0xee8] sm:$0xff]
    %v507 = vld [vmem:[%s1 + $0xef0] sm:$0xff]
    %v508 = vld [vmem:[%s1 + $0xef8] sm:$0xff]
    %v509 = vld [vmem:[%s1 + $0xf00] sm:$0xff]
    %v510 = vld [vmem:[%s1 + $0xf08] sm:$0xff]
    %v511 = vld [vmem:[%s1 + $0xf10] sm:$0xff]
    %v512 = vld [vmem:[%s1 + $0xf18] sm:$0xff]
    %v513 = vld [vmem:[%s1 + $0xf20] sm:$0xff]
    %v514 = vld [vmem:[%s1 + $0xf28] sm:$0xff]
    %v515 = vld [vmem:[%s1 + $0xf30] sm:$0xff]
    %v516 = vld [vmem:[%s1 + $0xf38] sm:$0xff]
    %v517 = vld [vmem:[%s1 + $0xf40] sm:$0xff]
    %v518 = vld [vmem:[%s1 + $0xf48] sm:$0xff]
    %v519 = vld [vmem:[%s1 + $0xf50] sm:$0xff]
    %v520 = vld [vmem:[%s1 + $0xf58] sm:$0xff]
    %v521 = vld [vmem:[%s1 + $0xf60] sm:$0xff]
    %v522 = vld [vmem:[%s1 + $0xf68] sm:$0xff]
    %v523 = vld [vmem:[%s1 + $0xf70] sm:$0xff]
    %v524 = vld [vmem:[%s1 + $0xf78] sm:$0xff]
    %v525 = vld [vmem:[%s1 + $0xf80] sm:$0xff]
    %v526 = vld [vmem:[%s1 + $0xf88] sm:$0xff]
    %v527 = vld [vmem:[%s1 + $0xf90] sm:$0xff]
    %v528 = vld [vmem:[%s1 + $0xf98] sm:$0xff]
    %v529 = vld [vmem:[%s1 + $0xfa0] sm:$0xff]
    %v530 = vld [vmem:[%s1 + $0xfa8] sm:$0xff]
    %v531 = vld [vmem:[%s1 + $0xfb0] sm:$0xff]
    %v532 = vld [vmem:[%s1 + $0xfb8] sm:$0xff]
    %v533 = vld [vmem:[%s1 + $0xfc0] sm:$0xff]
    %v534 = vld [vmem:[%s1 + $0xfc8] sm:$0xff]
    %v535 = vld [vmem:[%s1 + $0xfd0] sm:$0xff]
    %v536 = vld [vmem:[%s1 + $0xfd8] sm:$0xff]
    %v537 = vld [vmem:[%s1 + $0xfe0] sm:$0xff]
    %v538 = vld [vmem:[%s1 + $0xfe8] sm:$0xff]
    %v539 = vld [vmem:[%s1 + $0xff0] sm:$0xff]
    %v540 = vld [vmem:[%s1 + $0xff8] sm:$0xff]
    %v541 = vld [vmem:[%s1 + $0x1000] sm:$0xff]
    %v542 = vld [vmem:[%s1 + $0x1008] sm:$0xff]
    %v543 = vld [vmem:[%s1 + $0x1010] sm:$0xff]
    %v544 = vld [vmem:[%s1 + $0x1018] sm:$0xff]
    %v545 = vld [vmem:[%s1 + $0x1020] sm:$0xff]
    %v546 = vld [vmem:[%s1 + $0x1028] sm:$0xff]
    %v547 = vld [vmem:[%s1 + $0x1030] sm:$0xff]
    %v548 = vld [vmem:[%s1 + $0x1038] sm:$0xff]
    %v549 = vld [vmem:[%s1 + $0x1040] sm:$0xff]
    %v550 = vld [vmem:[%s1 + $0x1048] sm:$0xff]
    %v551 = vld [vmem:[%s1 + $0x1050] sm:$0xff]
    %v552 = vld [vmem:[%s1 + $0x1058] sm:$0xff]
    %v553 = vld [vmem:[%s1 + $0x1060] sm:$0xff]
    %v554 = vld [vmem:[%s1 + $0x1068] sm:$0xff]
    %v555 = vld [vmem:[%s1 + $0x1070] sm:$0xff]
    %v556 = vld [vmem:[%s1 + $0x1078] sm:$0xff]
    %v557 = vld [vmem:[%s1 + $0x1080] sm:$0xff]
    %v558 = vld [vmem:[%s1 + $0x1088] sm:$0xff]
    %v559 = vld [vmem:[%s1 + $0x1090] sm:$0xff]
    %v560 = vld [vmem:[%s1 + $0x1098] sm:$0xff]
    %v561 = vld [vmem:[%s1 + $0x10a0] sm:$0xff]
    %v562 = vld [vmem:[%s1 + $0x10a8] sm:$0xff]
    %v563 = vld [vmem:[%s1 + $0x10b0] sm:$0xff]
    %v564 = vld [vmem:[%s1 + $0x10b8] sm:$0xff]
    %v565 = vld [vmem:[%s1 + $0x10c0] sm:$0xff]
    %v566 = vld [vmem:[%s1 + $0x10c8] sm:$0xff]
    %v567 = vld [vmem:[%s1 + $0x10d0] sm:$0xff]
    %v568 = vld [vmem:[%s1 + $0x10d8] sm:$0xff]
    %v569 = vld [vmem:[%s1 + $0x10e0] sm:$0xff]
    %v570 = vld [vmem:[%s1 + $0x10e8] sm:$0xff]
    %v571 = vld [vmem:[%s1 + $0x10f0] sm:$0xff]
    %v572 = vld [vmem:[%s1 + $0x10f8] sm:$0xff]
    %v573 = vld [vmem:[%s1 + $0x1100] sm:$0xff]
    %v574 = vld [vmem:[%s1 + $0x1108] sm:$0xff]
    %v575 = vld [vmem:[%s1 + $0x1110] sm:$0xff]
    %v576 = vld [vmem:[%s1 + $0x1118] sm:$0xff]
    %v577 = vld [vmem:[%s1 + $0x1120] sm:$0xff]
    %v578 = vld [vmem:[%s1 + $0x1128] sm:$0xff]
    %v579 = vld [vmem:[%s1 + $0x1130] sm:$0xff]
    %v580 = vld [vmem:[%s1 + $0x1138] sm:$0xff]
    %v581 = vld [vmem:[%s1 + $0x1140] sm:$0xff]
    %v582 = vld [vmem:[%s1 + $0x1148] sm:$0xff]
    %v583 = vld [vmem:[%s1 + $0x1150] sm:$0xff]
    %v584 = vld [vmem:[%s1 + $0x1158] sm:$0xff]
    %v585 = vld [vmem:[%s1 + $0x1160] sm:$0xff]
    %v586 = vld [vmem:[%s1 + $0x1168] sm:$0xff]
    %v587 = vld [vmem:[%s1 + $0x1170] sm:$0xff]
    %v588 = vld [vmem:[%s1 + $0x1178] sm:$0xff]
    %v589 = vld [vmem:[%s1 + $0x1180] sm:$0xff]
    %v590 = vld [vmem:[%s1 + $0x1188] sm:$0xff]
    %v591 = vld [vmem:[%s1 + $0x1190] sm:$0xff]
    %v592 = vld [vmem:[%s1 + $0x1198] sm:$0xff]
    %v593 = vld [vmem:[%s1 + $0x11a0] sm:$0xff]
    %v594 = vld [vmem:[%s1 + $0x11a8] sm:$0xff]
    %v595 = vld [vmem:[%s1 + $0x11b0] sm:$0xff]
    %v596 = vld [vmem:[%s1 + $0x11b8] sm:$0xff]
    %v597 = vld [vmem:[%s1 + $0x11c0] sm:$0xff]
    %v598 = vld [vmem:[%s1 + $0x11c8] sm:$0xff]
    %v599 = vld [vmem:[%s1 + $0x11d0] sm:$0xff]
    %v600 = vld [vmem:[%s1 + $0x11d8] sm:$0xff]
    %v601 = vld [vmem:[%s1 + $0x11e0] sm:$0xff]
    %v602 = vld [vmem:[%s1 + $0x11e8] sm:$0xff]
    %v603 = vld [vmem:[%s1 + $0x11f0] sm:$0xff]
    %v604 = vld [vmem:[%s1 + $0x11f8] sm:$0xff]
    %v605 = vld [vmem:[%s1 + $0x1200] sm:$0xff]
    %v606 = vld [vmem:[%s1 + $0x1208] sm:$0xff]
    %v607 = vld [vmem:[%s1 + $0x1210] sm:$0xff]
    %v608 = vld [vmem:[%s1 + $0x1218] sm:$0xff]
    %v609 = vld [vmem:[%s1 + $0x1220] sm:$0xff]
    %v610 = vld [vmem:[%s1 + $0x1228] sm:$0xff]
    %v611 = vld [vmem:[%s1 + $0x1230] sm:$0xff]
    %v612 = vld [vmem:[%s1 + $0x1238] sm:$0xff]
    %v613 = vld [vmem:[%s1 + $0x1240] sm:$0xff]
    %v614 = vld [vmem:[%s1 + $0x1248] sm:$0xff]
    %v615 = vld [vmem:[%s1 + $0x1250] sm:$0xff]
    %v616 = vld [vmem:[%s1 + $0x1258] sm:$0xff]
    %v617 = vld [vmem:[%s1 + $0x1260] sm:$0xff]
    %v618 = vld [vmem:[%s1 + $0x1268] sm:$0xff]
    %v619 = vld [vmem:[%s1 + $0x1270] sm:$0xff]
    %v620 = vld [vmem:[%s1 + $0x1278] sm:$0xff]
    %v621 = vld [vmem:[%s1 + $0x1280] sm:$0xff]
    %v622 = vld [vmem:[%s1 + $0x1288] sm:$0xff]
    %v623 = vld [vmem:[%s1 + $0x1290] sm:$0xff]
    %v624 = vld [vmem:[%s1 + $0x1298] sm:$0xff]
    %v625 = vld [vmem:[%s1 + $0x12a0] sm:$0xff]
    %v626 = vld [vmem:[%s1 + $0x12a8] sm:$0xff]
    %v627 = vld [vmem:[%s1 + $0x12b0] sm:$0xff]
    %v628 = vld [vmem:[%s1 + $0x12b8] sm:$0xff]
    %v629 = vld [vmem:[%s1 + $0x12c0] sm:$0xff]
    %v630 = vld [vmem:[%s1 + $0x12c8] sm:$0xff]
    %v631 = vld [vmem:[%s1 + $0x12d0] sm:$0xff]
    %v632 = vld [vmem:[%s1 + $0x12d8] sm:$0xff]
    %v633 = vld [vmem:[%s1 + $0x12e0] sm:$0xff]
    %v634 = vld [vmem:[%s1 + $0x12e8] sm:$0xff]
    %v635 = vld [vmem:[%s1 + $0x12f0] sm:$0xff]
    %v636 = vld [vmem:[%s1 + $0x12f8] sm:$0xff]
    %v637 = vld [vmem:[%s1 + $0x1300] sm:$0xff]
    %v638 = vld [vmem:[%s1 + $0x1308] sm:$0xff]
    %v639 = vld [vmem:[%s1 + $0x1310] sm:$0xff]
    %v640 = vld [vmem:[%s1 + $0x1318] sm:$0xff]
    %v641 = vld [vmem:[%s1 + $0x1320] sm:$0xff]
    %v642 = vld [vmem:[%s1 + $0x1328] sm:$0xff]
    %v643 = vld [vmem:[%s1 + $0x1330] sm:$0xff]
    %v644 = vld [vmem:[%s1 + $0x1338] sm:$0xff]
    %v645 = vld [vmem:[%s1 + $0x1340] sm:$0xff]
    %v646 = vld [vmem:[%s1 + $0x1348] sm:$0xff]
    %v647 = vld [vmem:[%s1 + $0x1350] sm:$0xff]
    %v648 = vld [vmem:[%s1 + $0x1358] sm:$0xff]
    %v649 = vld [vmem:[%s1 + $0x1360] sm:$0xff]
    %v650 = vld [vmem:[%s1 + $0x1368] sm:$0xff]
    %v651 = vld [vmem:[%s1 + $0x1370] sm:$0xff]
    %v652 = vld [vmem:[%s1 + $0x1378] sm:$0xff]
    %v653 = vld [vmem:[%s1 + $0x1380] sm:$0xff]
    %v654 = vld [vmem:[%s1 + $0x1388] sm:$0xff]
    %v655 = vld [vmem:[%s1 + $0x1390] sm:$0xff]
    %v656 = vld [vmem:[%s1 + $0x1398] sm:$0xff]
    %v657 = vld [vmem:[%s1 + $0x13a0] sm:$0xff]
    %v658 = vld [vmem:[%s1 + $0x13a8] sm:$0xff]
    %v659 = vld [vmem:[%s1 + $0x13b0] sm:$0xff]
    %v660 = vld [vmem:[%s1 + $0x13b8] sm:$0xff]
    %v661 = vld [vmem:[%s1 + $0x13c0] sm:$0xff]
    %v662 = vld [vmem:[%s1 + $0x13c8] sm:$0xff]
    %v663 = vld [vmem:[%s1 + $0x13d0] sm:$0xff]
    %v664 = vld [vmem:[%s1 + $0x13d8] sm:$0xff]
    %v665 = vld [vmem:[%s1 + $0x13e0] sm:$0xff]
    %v666 = vld [vmem:[%s1 + $0x13e8] sm:$0xff]
    %v667 = vld [vmem:[%s1 + $0x13f0] sm:$0xff]
    %v668 = vld [vmem:[%s1 + $0x13f8] sm:$0xff]
    %v669 = vld [vmem:[%s1 + $0x1400] sm:$0xff]
    %v670 = vld [vmem:[%s1 + $0x1408] sm:$0xff]
    %v671 = vld [vmem:[%s1 + $0x1410] sm:$0xff]
    %v672 = vld [vmem:[%s1 + $0x1418] sm:$0xff]
    %v673 = vld [vmem:[%s1 + $0x1420] sm:$0xff]
    %v674 = vld [vmem:[%s1 + $0x1428] sm:$0xff]
    %v675 = vld [vmem:[%s1 + $0x1430] sm:$0xff]
    %v676 = vld [vmem:[%s1 + $0x1438] sm:$0xff]
    %v677 = vld [vmem:[%s1 + $0x1440] sm:$0xff]
    %v678 = vld [vmem:[%s1 + $0x1448] sm:$0xff]
    %v679 = vld [vmem:[%s1 + $0x1450] sm:$0xff]
    %v680 = vld [vmem:[%s1 + $0x1458] sm:$0xff]
    %v681 = vld [vmem:[%s1 + $0x1460] sm:$0xff]
    %v682 = vld [vmem:[%s1 + $0x1468] sm:$0xff]
    %v683 = vld [vmem:[%s1 + $0x1470] sm:$0xff]
    %v684 = vld [vmem:[%s1 + $0x1478] sm:$0xff]
    %v685 = vld [vmem:[%s1 + $0x1480] sm:$0xff]
    %v686 = vld [vmem:[%s1 + $0x1488] sm:$0xff]
    %v687 = vld [vmem:[%s1 + $0x1490] sm:$0xff]
    %v688 = vld [vmem:[%s1 + $0x1498] sm:$0xff]
    %v689 = vld [vmem:[%s1 + $0x14a0] sm:$0xff]
    %v690 = vld [vmem:[%s1 + $0x14a8] sm:$0xff]
    %v691 = vld [vmem:[%s1 + $0x14b0] sm:$0xff]
    %v692 = vld [vmem:[%s1 + $0x14b8] sm:$0xff]
    %v693 = vld [vmem:[%s1 + $0x14c0] sm:$0xff]
    %v694 = vld [vmem:[%s1 + $0x14c8] sm:$0xff]
    %v695 = vld [vmem:[%s1 + $0x14d0] sm:$0xff]
    %v696 = vld [vmem:[%s1 + $0x14d8] sm:$0xff]
    %v697 = vld [vmem:[%s1 + $0x14e0] sm:$0xff]
    %v698 = vld [vmem:[%s1 + $0x14e8] sm:$0xff]
    %v699 = vld [vmem:[%s1 + $0x14f0] sm:$0xff]
    %v700 = vld [vmem:[%s1 + $0x14f8] sm:$0xff]
    %v701 = vld [vmem:[%s1 + $0x1500] sm:$0xff]
    %v702 = vld [vmem:[%s1 + $0x1508] sm:$0xff]
    %v703 = vld [vmem:[%s1 + $0x1510] sm:$0xff]
    %v704 = vld [vmem:[%s1 + $0x1518] sm:$0xff]
    %v705 = vld [vmem:[%s1 + $0x1520] sm:$0xff]
    %v706 = vld [vmem:[%s1 + $0x1528] sm:$0xff]
    %v707 = vld [vmem:[%s1 + $0x1530] sm:$0xff]
    %v708 = vld [vmem:[%s1 + $0x1538] sm:$0xff]
    %v709 = vld [vmem:[%s1 + $0x1540] sm:$0xff]
    %v710 = vld [vmem:[%s1 + $0x1548] sm:$0xff]
    %v711 = vld [vmem:[%s1 + $0x1550] sm:$0xff]
    %v712 = vld [vmem:[%s1 + $0x1558] sm:$0xff]
    %v713 = vld [vmem:[%s1 + $0x1560] sm:$0xff]
    %v714 = vld [vmem:[%s1 + $0x1568] sm:$0xff]
    %v715 = vld [vmem:[%s1 + $0x1570] sm:$0xff]
    %v716 = vld [vmem:[%s1 + $0x1578] sm:$0xff]
    %v717 = vld [vmem:[%s1 + $0x1580] sm:$0xff]
    %v718 = vld [vmem:[%s1 + $0x1588] sm:$0xff]
    %v719 = vld [vmem:[%s1 + $0x1590] sm:$0xff]
    %v720 = vld [vmem:[%s1 + $0x1598] sm:$0xff]
    %v721 = vld [vmem:[%s1 + $0x15a0] sm:$0xff]
    %v722 = vld [vmem:[%s1 + $0x15a8] sm:$0xff]
    %v723 = vld [vmem:[%s1 + $0x15b0] sm:$0xff]
    %v724 = vld [vmem:[%s1 + $0x15b8] sm:$0xff]
    %v725 = vld [vmem:[%s1 + $0x15c0] sm:$0xff]
    %v726 = vld [vmem:[%s1 + $0x15c8] sm:$0xff]
    %v727 = vld [vmem:[%s1 + $0x15d0] sm:$0xff]
    %v728 = vld [vmem:[%s1 + $0x15d8] sm:$0xff]
    %v729 = vld [vmem:[%s1 + $0x15e0] sm:$0xff]
    %v730 = vld [vmem:[%s1 + $0x15e8] sm:$0xff]
    %v731 = vld [vmem:[%s1 + $0x15f0] sm:$0xff]
    %v732 = vld [vmem:[%s1 + $0x15f8] sm:$0xff]
    %v733 = vld [vmem:[%s1 + $0x1600] sm:$0xff]
    %v734 = vld [vmem:[%s1 + $0x1608] sm:$0xff]
    %v735 = vld [vmem:[%s1 + $0x1610] sm:$0xff]
    %v736 = vld [vmem:[%s1 + $0x1618] sm:$0xff]
    %v737 = vld [vmem:[%s1 + $0x1620] sm:$0xff]
    %v738 = vld [vmem:[%s1 + $0x1628] sm:$0xff]
    %v739 = vld [vmem:[%s1 + $0x1630] sm:$0xff]
    %v740 = vld [vmem:[%s1 + $0x1638] sm:$0xff]
    %v741 = vld [vmem:[%s1 + $0x1640] sm:$0xff]
    %v742 = vld [vmem:[%s1 + $0x1648] sm:$0xff]
    %v743 = vld [vmem:[%s1 + $0x1650] sm:$0xff]
    %v744 = vld [vmem:[%s1 + $0x1658] sm:$0xff]
    %v745 = vld [vmem:[%s1 + $0x1660] sm:$0xff]
    %v746 = vld [vmem:[%s1 + $0x1668] sm:$0xff]
    %v747 = vld [vmem:[%s1 + $0x1670] sm:$0xff]
    %v748 = vld [vmem:[%s1 + $0x1678] sm:$0xff]
    %v749 = vld [vmem:[%s1 + $0x1680] sm:$0xff]
    %v750 = vld [vmem:[%s1 + $0x1688] sm:$0xff]
    %v751 = vld [vmem:[%s1 + $0x1690] sm:$0xff]
    %v752 = vld [vmem:[%s1 + $0x1698] sm:$0xff]
    %v753 = vld [vmem:[%s1 + $0x16a0] sm:$0xff]
    %v754 = vld [vmem:[%s1 + $0x16a8] sm:$0xff]
    %v755 = vld [vmem:[%s1 + $0x16b0] sm:$0xff]
    %v756 = vld [vmem:[%s1 + $0x16b8] sm:$0xff]
    %v757 = vld [vmem:[%s1 + $0x16c0] sm:$0xff]
    %v758 = vld [vmem:[%s1 + $0x16c8] sm:$0xff]
    %v759 = vld [vmem:[%s1 + $0x16d0] sm:$0xff]
    %v760 = vld [vmem:[%s1 + $0x16d8] sm:$0xff]
    %v761 = vld [vmem:[%s1 + $0x16e0] sm:$0xff]
    %v762 = vld [vmem:[%s1 + $0x16e8] sm:$0xff]
    %v763 = vld [vmem:[%s1 + $0x16f0] sm:$0xff]
    %v764 = vld [vmem:[%s1 + $0x16f8] sm:$0xff]
    %v765 = vld [vmem:[%s1 + $0x1700] sm:$0xff]
    %v766 = vld [vmem:[%s1 + $0x1708] sm:$0xff]
    %v767 = vld [vmem:[%s1 + $0x1710] sm:$0xff]
    %v768 = vld [vmem:[%s1 + $0x1718] sm:$0xff]
    %v769 = vld [vmem:[%s1 + $0x1720] sm:$0xff]
    %v770 = vld [vmem:[%s1 + $0x1728] sm:$0xff]
    %v771 = vld [vmem:[%s1 + $0x1730] sm:$0xff]
    %v772 = vld [vmem:[%s1 + $0x1738] sm:$0xff]
    %v773 = vld [vmem:[%s1 + $0x1740] sm:$0xff]
    %v774 = vld [vmem:[%s1 + $0x1748] sm:$0xff]
    %v775 = vld [vmem:[%s1 + $0x1750] sm:$0xff]
    %v776 = vld [vmem:[%s1 + $0x1758] sm:$0xff]
    %v777 = vld [vmem:[%s1 + $0x1760] sm:$0xff]
    %v778 = vld [vmem:[%s1 + $0x1768] sm:$0xff]
    %v779 = vld [vmem:[%s1 + $0x1770] sm:$0xff]
    %v780 = vld [vmem:[%s1 + $0x1778] sm:$0xff]
    %v781 = vld [vmem:[%s1 + $0x1780] sm:$0xff]
    %v782 = vld [vmem:[%s1 + $0x1788] sm:$0xff]
    %v783 = vld [vmem:[%s1 + $0x1790] sm:$0xff]
    %v784 = vld [vmem:[%s1 + $0x1798] sm:$0xff]
    %v785 = vld [vmem:[%s1 + $0x17a0] sm:$0xff]
    %v786 = vld [vmem:[%s1 + $0x17a8] sm:$0xff]
    %v787 = vld [vmem:[%s1 + $0x17b0] sm:$0xff]
    %v788 = vld [vmem:[%s1 + $0x17b8] sm:$0xff]
    %v789 = vld [vmem:[%s1 + $0x17c0] sm:$0xff]
    %v790 = vld [vmem:[%s1 + $0x17c8] sm:$0xff]
    %v791 = vld [vmem:[%s1 + $0x17d0] sm:$0xff]
    %v792 = vld [vmem:[%s1 + $0x17d8] sm:$0xff]
    %v793 = vld [vmem:[%s1 + $0x17e0] sm:$0xff]
    %v794 = vld [vmem:[%s1 + $0x17e8] sm:$0xff]
    %v795 = vld [vmem:[%s1 + $0x17f0] sm:$0xff]
    %v796 = vld [vmem:[%s1 + $0x17f8] sm:$0xff]
    %v797 = vld [vmem:[%s1 + $0x1800] sm:$0xff]
    %v798 = vld [vmem:[%s1 + $0x1808] sm:$0xff]
    %v799 = vld [vmem:[%s1 + $0x1810] sm:$0xff]
    %v800 = vld [vmem:[%s1 + $0x1818] sm:$0xff]
    %v801 = vld [vmem:[%s1 + $0x1820] sm:$0xff]
    %v802 = vld [vmem:[%s1 + $0x1828] sm:$0xff]
    %v803 = vld [vmem:[%s1 + $0x1830] sm:$0xff]
    %v804 = vld [vmem:[%s1 + $0x1838] sm:$0xff]
    %v805 = vld [vmem:[%s1 + $0x1840] sm:$0xff]
    %v806 = vld [vmem:[%s1 + $0x1848] sm:$0xff]
    %v807 = vld [vmem:[%s1 + $0x1850] sm:$0xff]
    %v808 = vld [vmem:[%s1 + $0x1858] sm:$0xff]
    %v809 = vld [vmem:[%s1 + $0x1860] sm:$0xff]
    %v810 = vld [vmem:[%s1 + $0x1868] sm:$0xff]
    %v811 = vld [vmem:[%s1 + $0x1870] sm:$0xff]
    %v812 = vld [vmem:[%s1 + $0x1878] sm:$0xff]
    %v813 = vld [vmem:[%s2] sm:$0x3]
    %v815 = vlaneseq
    %v816 = vshrl.u32 %v815, 7
    %v817 = vsub.s32 0, %v816
    %v818 = vrot.slane %v813, %v817
    %v819 = vlaneseq
    %v820 = vshrl.u32 %v819, 7
    %v821 = vsub.s32 1, %v820
    %v822 = vrot.slane %v813, %v821
    %v832 = vcombine.high %v22, %v22
    %v834 = vunpack.c.l.s4 1966171168
    %v835 = vunpack.c.0.s8 %v834
    %v836 = vlaneseq
    %v837 = vshrl.u32 %v836, 7
    %v838 = vsub.s32 %v835, %v837
    %v839 = vrot.slane %v22, %v838
    %v841 = vunpack.c.l.s4 1966171168
    %v842 = vunpack.c.0.s8 %v841
    %v843 = vlaneseq
    %v844 = vshrl.u32 %v843, 7
    %v845 = vsub.s32 %v842, %v844
    %v846 = vrot.slane %v832, %v845
    %v847 = vcombine.high %v839, %v839
    %v848 = vcombine.high %v846, %v846
    %v850 = vunpack.c.l.s4 1966171168
    %v851 = vunpack.c.0.s8 %v850
    %v852 = vlaneseq
    %v853 = vshrl.u32 %v852, 7
    %v854 = vsub.s32 %v851, %v853
    %v855 = vrot.slane %v839, %v854
    %v857 = vunpack.c.l.s4 1966171168
    %v858 = vunpack.c.0.s8 %v857
    %v859 = vlaneseq
    %v860 = vshrl.u32 %v859, 7
    %v861 = vsub.s32 %v858, %v860
    %v862 = vrot.slane %v846, %v861
    %v864 = vunpack.c.l.s4 1966171168
    %v865 = vunpack.c.0.s8 %v864
    %v866 = vlaneseq
    %v867 = vshrl.u32 %v866, 7
    %v868 = vsub.s32 %v865, %v867
    %v869 = vrot.slane %v847, %v868
    %v871 = vunpack.c.l.s4 1966171168
    %v872 = vunpack.c.0.s8 %v871
    %v873 = vlaneseq
    %v874 = vshrl.u32 %v873, 7
    %v875 = vsub.s32 %v872, %v874
    %v876 = vrot.slane %v848, %v875
    %v877 = vcombine.high %v855, %v855
    %v878 = vcombine.high %v862, %v862
    %v879 = vcombine.high %v869, %v869
    %v880 = vcombine.high %v876, %v876
    %v881 = vcombine.high %v23, %v23
    %v883 = vunpack.c.l.s4 1966171168
    %v884 = vunpack.c.0.s8 %v883
    %v885 = vlaneseq
    %v886 = vshrl.u32 %v885, 7
    %v887 = vsub.s32 %v884, %v886
    %v888 = vrot.slane %v23, %v887
    %v890 = vunpack.c.l.s4 1966171168
    %v891 = vunpack.c.0.s8 %v890
    %v892 = vlaneseq
    %v893 = vshrl.u32 %v892, 7
    %v894 = vsub.s32 %v891, %v893
    %v895 = vrot.slane %v881, %v894
    %v896 = vcombine.high %v888, %v888
    %v897 = vcombine.high %v895, %v895
    %v899 = vunpack.c.l.s4 1966171168
    %v900 = vunpack.c.0.s8 %v899
    %v901 = vlaneseq
    %v902 = vshrl.u32 %v901, 7
    %v903 = vsub.s32 %v900, %v902
    %v904 = vrot.slane %v888, %v903
    %v906 = vunpack.c.l.s4 1966171168
    %v907 = vunpack.c.0.s8 %v906
    %v908 = vlaneseq
    %v909 = vshrl.u32 %v908, 7
    %v910 = vsub.s32 %v907, %v909
    %v911 = vrot.slane %v895, %v910
    %v913 = vunpack.c.l.s4 1966171168
    %v914 = vunpack.c.0.s8 %v913
    %v915 = vlaneseq
    %v916 = vshrl.u32 %v915, 7
    %v917 = vsub.s32 %v914, %v916
    %v918 = vrot.slane %v896, %v917
    %v920 = vunpack.c.l.s4 1966171168
    %v921 = vunpack.c.0.s8 %v920
    %v922 = vlaneseq
    %v923 = vshrl.u32 %v922, 7
    %v924 = vsub.s32 %v921, %v923
    %v925 = vrot.slane %v897, %v924
    %v926 = vcombine.high %v904, %v904
    %v927 = vcombine.high %v911, %v911
    %v928 = vcombine.high %v918, %v918
    %v929 = vcombine.high %v925, %v925
    %v930 = vcombine.high %v24, %v24
    %v932 = vunpack.c.l.s4 1966171168
    %v933 = vunpack.c.0.s8 %v932
    %v934 = vlaneseq
    %v935 = vshrl.u32 %v934, 7
    %v936 = vsub.s32 %v933, %v935
    %v937 = vrot.slane %v24, %v936
    %v939 = vunpack.c.l.s4 1966171168
    %v940 = vunpack.c.0.s8 %v939
    %v941 = vlaneseq
    %v942 = vshrl.u32 %v941, 7
    %v943 = vsub.s32 %v940, %v942
    %v944 = vrot.slane %v930, %v943
    %v945 = vcombine.high %v937, %v937
    %v946 = vcombine.high %v944, %v944
    %v948 = vunpack.c.l.s4 1966171168
    %v949 = vunpack.c.0.s8 %v948
    %v950 = vlaneseq
    %v951 = vshrl.u32 %v950, 7
    %v952 = vsub.s32 %v949, %v951
    %v953 = vrot.slane %v937, %v952
    %v955 = vunpack.c.l.s4 1966171168
    %v956 = vunpack.c.0.s8 %v955
    %v957 = vlaneseq
    %v958 = vshrl.u32 %v957, 7
    %v959 = vsub.s32 %v956, %v958
    %v960 = vrot.slane %v944, %v959
    %v962 = vunpack.c.l.s4 1966171168
    %v963 = vunpack.c.0.s8 %v962
    %v964 = vlaneseq
    %v965 = vshrl.u32 %v964, 7
    %v966 = vsub.s32 %v963, %v965
    %v967 = vrot.slane %v945, %v966
    %v969 = vunpack.c.l.s4 1966171168
    %v970 = vunpack.c.0.s8 %v969
    %v971 = vlaneseq
    %v972 = vshrl.u32 %v971, 7
    %v973 = vsub.s32 %v970, %v972
    %v974 = vrot.slane %v946, %v973
    %v975 = vcombine.high %v953, %v953
    %v976 = vcombine.high %v960, %v960
    %v977 = vcombine.high %v967, %v967
    %v978 = vcombine.high %v974, %v974
    %v979 = vcombine.high %v25, %v25
    %v981 = vunpack.c.l.s4 1966171168
    %v982 = vunpack.c.0.s8 %v981
    %v983 = vlaneseq
    %v984 = vshrl.u32 %v983, 7
    %v985 = vsub.s32 %v982, %v984
    %v986 = vrot.slane %v25, %v985
    %v988 = vunpack.c.l.s4 1966171168
    %v989 = vunpack.c.0.s8 %v988
    %v990 = vlaneseq
    %v991 = vshrl.u32 %v990, 7
    %v992 = vsub.s32 %v989, %v991
    %v993 = vrot.slane %v979, %v992
    %v994 = vcombine.high %v986, %v986
    %v995 = vcombine.high %v993, %v993
    %v997 = vunpack.c.l.s4 1966171168
    %v998 = vunpack.c.0.s8 %v997
    %v999 = vlaneseq
    %v1000 = vshrl.u32 %v999, 7
    %v1001 = vsub.s32 %v998, %v1000
    %v1002 = vrot.slane %v986, %v1001
    %v1004 = vunpack.c.l.s4 1966171168
    %v1005 = vunpack.c.0.s8 %v1004
    %v1006 = vlaneseq
    %v1007 = vshrl.u32 %v1006, 7
    %v1008 = vsub.s32 %v1005, %v1007
    %v1009 = vrot.slane %v993, %v1008
    %v1011 = vunpack.c.l.s4 1966171168
    %v1012 = vunpack.c.0.s8 %v1011
    %v1013 = vlaneseq
    %v1014 = vshrl.u32 %v1013, 7
    %v1015 = vsub.s32 %v1012, %v1014
    %v1016 = vrot.slane %v994, %v1015
    %v1018 = vunpack.c.l.s4 1966171168
    %v1019 = vunpack.c.0.s8 %v1018
    %v1020 = vlaneseq
    %v1021 = vshrl.u32 %v1020, 7
    %v1022 = vsub.s32 %v1019, %v1021
    %v1023 = vrot.slane %v995, %v1022
    %v1024 = vcombine.high %v1002, %v1002
    %v1025 = vcombine.high %v1009, %v1009
    %v1026 = vcombine.high %v1016, %v1016
    %v1027 = vcombine.high %v1023, %v1023
    %v1028 = vcombine.high %v26, %v26
    %v1030 = vunpack.c.l.s4 1966171168
    %v1031 = vunpack.c.0.s8 %v1030
    %v1032 = vlaneseq
    %v1033 = vshrl.u32 %v1032, 7
    %v1034 = vsub.s32 %v1031, %v1033
    %v1035 = vrot.slane %v26, %v1034
    %v1037 = vunpack.c.l.s4 1966171168
    %v1038 = vunpack.c.0.s8 %v1037
    %v1039 = vlaneseq
    %v1040 = vshrl.u32 %v1039, 7
    %v1041 = vsub.s32 %v1038, %v1040
    %v1042 = vrot.slane %v1028, %v1041
    %v1043 = vcombine.high %v1035, %v1035
    %v1044 = vcombine.high %v1042, %v1042
    %v1046 = vunpack.c.l.s4 1966171168
    %v1047 = vunpack.c.0.s8 %v1046
    %v1048 = vlaneseq
    %v1049 = vshrl.u32 %v1048, 7
    %v1050 = vsub.s32 %v1047, %v1049
    %v1051 = vrot.slane %v1035, %v1050
    %v1053 = vunpack.c.l.s4 1966171168
    %v1054 = vunpack.c.0.s8 %v1053
    %v1055 = vlaneseq
    %v1056 = vshrl.u32 %v1055, 7
    %v1057 = vsub.s32 %v1054, %v1056
    %v1058 = vrot.slane %v1042, %v1057
    %v1060 = vunpack.c.l.s4 1966171168
    %v1061 = vunpack.c.0.s8 %v1060
    %v1062 = vlaneseq
    %v1063 = vshrl.u32 %v1062, 7
    %v1064 = vsub.s32 %v1061, %v1063
    %v1065 = vrot.slane %v1043, %v1064
    %v1067 = vunpack.c.l.s4 1966171168
    %v1068 = vunpack.c.0.s8 %v1067
    %v1069 = vlaneseq
    %v1070 = vshrl.u32 %v1069, 7
    %v1071 = vsub.s32 %v1068, %v1070
    %v1072 = vrot.slane %v1044, %v1071
    %v1073 = vcombine.high %v1051, %v1051
    %v1074 = vcombine.high %v1058, %v1058
    %v1075 = vcombine.high %v1065, %v1065
    %v1076 = vcombine.high %v1072, %v1072
    %v1077 = vcombine.high %v27, %v27
    %v1079 = vunpack.c.l.s4 1966171168
    %v1080 = vunpack.c.0.s8 %v1079
    %v1081 = vlaneseq
    %v1082 = vshrl.u32 %v1081, 7
    %v1083 = vsub.s32 %v1080, %v1082
    %v1084 = vrot.slane %v27, %v1083
    %v1086 = vunpack.c.l.s4 1966171168
    %v1087 = vunpack.c.0.s8 %v1086
    %v1088 = vlaneseq
    %v1089 = vshrl.u32 %v1088, 7
    %v1090 = vsub.s32 %v1087, %v1089
    %v1091 = vrot.slane %v1077, %v1090
    %v1092 = vcombine.high %v1084, %v1084
    %v1093 = vcombine.high %v1091, %v1091
    %v1095 = vunpack.c.l.s4 1966171168
    %v1096 = vunpack.c.0.s8 %v1095
    %v1097 = vlaneseq
    %v1098 = vshrl.u32 %v1097, 7
    %v1099 = vsub.s32 %v1096, %v1098
    %v1100 = vrot.slane %v1084, %v1099
    %v1102 = vunpack.c.l.s4 1966171168
    %v1103 = vunpack.c.0.s8 %v1102
    %v1104 = vlaneseq
    %v1105 = vshrl.u32 %v1104, 7
    %v1106 = vsub.s32 %v1103, %v1105
    %v1107 = vrot.slane %v1091, %v1106
    %v1109 = vunpack.c.l.s4 1966171168
    %v1110 = vunpack.c.0.s8 %v1109
    %v1111 = vlaneseq
    %v1112 = vshrl.u32 %v1111, 7
    %v1113 = vsub.s32 %v1110, %v1112
    %v1114 = vrot.slane %v1092, %v1113
    %v1116 = vunpack.c.l.s4 1966171168
    %v1117 = vunpack.c.0.s8 %v1116
    %v1118 = vlaneseq
    %v1119 = vshrl.u32 %v1118, 7
    %v1120 = vsub.s32 %v1117, %v1119
    %v1121 = vrot.slane %v1093, %v1120
    %v1122 = vcombine.high %v1100, %v1100
    %v1123 = vcombine.high %v1107, %v1107
    %v1124 = vcombine.high %v1114, %v1114
    %v1125 = vcombine.high %v1121, %v1121
    %v1127 = vunpack.c.l.s4 1966171168
    %v1128 = vunpack.c.0.s8 %v1127
    %v1129 = vlaneseq
    %v1130 = vshrl.u32 %v1129, 7
    %v1131 = vsub.s32 %v1128, %v1130
    %v1132 = vrot.slane %v28, %v1131
    %v1134 = vunpack.c.l.s4 1966171168
    %v1135 = vunpack.c.0.s8 %v1134
    %v1136 = vlaneseq
    %v1137 = vshrl.u32 %v1136, 7
    %v1138 = vsub.s32 %v1135, %v1137
    %v1139 = vrot.slane %v1132, %v1138
    %v1973 = vunpack.c.l.b16 %v29
    %v1974 = vunpack.c.h.b16 %v29
    %v1975 = vunpack.c.l.b16 %v30
    %v1976 = vunpack.c.h.b16 %v30
    %v1977 = vunpack.c.l.b16 %v31
    %v1978 = vunpack.c.h.b16 %v31
    %v1979 = vunpack.c.l.b16 %v32
    %v1980 = vunpack.c.h.b16 %v32
    %v1981 = vunpack.c.l.b16 %v33
    %v1982 = vunpack.c.h.b16 %v33
    %v1983 = vunpack.c.l.b16 %v34
    %v1984 = vunpack.c.h.b16 %v34
    %v1985 = vunpack.c.l.b16 %v35
    %v1986 = vunpack.c.h.b16 %v35
    %v1987 = vunpack.c.l.b16 %v36
    %v1988 = vunpack.c.h.b16 %v36
    %v1989 = vunpack.c.l.b16 %v37
    %v1990 = vunpack.c.h.b16 %v37
    %v1991 = vunpack.c.l.b16 %v38
    %v1992 = vunpack.c.h.b16 %v38
    %v1993 = vunpack.c.l.b16 %v39
    %v1994 = vunpack.c.h.b16 %v39
    %v1995 = vunpack.c.l.b16 %v40
    %v1996 = vunpack.c.h.b16 %v40
    %v1997 = vunpack.c.l.b16 %v41
    %v1998 = vunpack.c.h.b16 %v41
    %v1999 = vunpack.c.l.b16 %v42
    %v2000 = vunpack.c.h.b16 %v42
    %v2001 = vunpack.c.l.b16 %v43
    %v2002 = vunpack.c.h.b16 %v43
    %v2003 = vunpack.c.l.b16 %v44
    %v2004 = vunpack.c.h.b16 %v44
    %v2005 = vunpack.c.l.b16 %v45
    %v2006 = vunpack.c.h.b16 %v45
    %v2007 = vunpack.c.l.b16 %v46
    %v2008 = vunpack.c.h.b16 %v46
    %v2009 = vunpack.c.l.b16 %v47
    %v2010 = vunpack.c.h.b16 %v47
    %v2011 = vunpack.c.l.b16 %v48
    %v2012 = vunpack.c.h.b16 %v48
    %v2013 = vunpack.c.l.b16 %v49
    %v2014 = vunpack.c.h.b16 %v49
    %v2015 = vunpack.c.l.b16 %v50
    %v2016 = vunpack.c.h.b16 %v50
    %v2017 = vunpack.c.l.b16 %v51
    %v2018 = vunpack.c.h.b16 %v51
    %v2019 = vunpack.c.l.b16 %v52
    %v2020 = vunpack.c.h.b16 %v52
    %v2021 = vunpack.c.l.b16 %v53
    %v2022 = vunpack.c.h.b16 %v53
    %v2023 = vunpack.c.l.b16 %v54
    %v2024 = vunpack.c.h.b16 %v54
    %v2025 = vunpack.c.l.b16 %v55
    %v2026 = vunpack.c.h.b16 %v55
    %v2027 = vunpack.c.l.b16 %v56
    %v2028 = vunpack.c.h.b16 %v56
    %v2029 = vunpack.c.l.b16 %v57
    %v2030 = vunpack.c.h.b16 %v57
    %v2031 = vunpack.c.l.b16 %v58
    %v2032 = vunpack.c.h.b16 %v58
    %v2033 = vunpack.c.l.b16 %v59
    %v2034 = vunpack.c.h.b16 %v59
    %v2035 = vunpack.c.l.b16 %v60
    %v2036 = vunpack.c.h.b16 %v60
    %v2037 = vunpack.c.l.b16 %v61
    %v2038 = vunpack.c.h.b16 %v61
    %v2039 = vunpack.c.l.b16 %v62
    %v2040 = vunpack.c.h.b16 %v62
    %v2041 = vunpack.c.l.b16 %v63
    %v2042 = vunpack.c.h.b16 %v63
    %v2043 = vunpack.c.l.b16 %v64
    %v2044 = vunpack.c.h.b16 %v64
    %v2045 = vunpack.c.l.b16 %v65
    %v2046 = vunpack.c.h.b16 %v65
    %v2047 = vunpack.c.l.b16 %v66
    %v2048 = vunpack.c.h.b16 %v66
    %v2049 = vunpack.c.l.b16 %v67
    %v2050 = vunpack.c.h.b16 %v67
    %v2051 = vunpack.c.l.b16 %v68
    %v2052 = vunpack.c.h.b16 %v68
    %v2053 = vunpack.c.l.b16 %v69
    %v2054 = vunpack.c.h.b16 %v69
    %v2055 = vunpack.c.l.b16 %v70
    %v2056 = vunpack.c.h.b16 %v70
    %v2057 = vunpack.c.l.b16 %v71
    %v2058 = vunpack.c.h.b16 %v71
    %v2059 = vunpack.c.l.b16 %v72
    %v2060 = vunpack.c.h.b16 %v72
    %v2061 = vunpack.c.l.b16 %v73
    %v2062 = vunpack.c.h.b16 %v73
    %v2063 = vunpack.c.l.b16 %v74
    %v2064 = vunpack.c.h.b16 %v74
    %v2065 = vunpack.c.l.b16 %v75
    %v2066 = vunpack.c.h.b16 %v75
    %v2067 = vunpack.c.l.b16 %v76
    %v2068 = vunpack.c.h.b16 %v76
    %v2069 = vunpack.c.l.b16 %v77
    %v2070 = vunpack.c.h.b16 %v77
    %v2071 = vunpack.c.l.b16 %v78
    %v2072 = vunpack.c.h.b16 %v78
    %v2073 = vunpack.c.l.b16 %v79
    %v2074 = vunpack.c.h.b16 %v79
    %v2075 = vunpack.c.l.b16 %v80
    %v2076 = vunpack.c.h.b16 %v80
    %v2077 = vunpack.c.l.b16 %v81
    %v2078 = vunpack.c.h.b16 %v81
    %v2079 = vunpack.c.l.b16 %v82
    %v2080 = vunpack.c.h.b16 %v82
    %v2081 = vunpack.c.l.b16 %v83
    %v2082 = vunpack.c.h.b16 %v83
    %v2083 = vunpack.c.l.b16 %v84
    %v2084 = vunpack.c.h.b16 %v84
    %v2085 = vunpack.c.l.b16 %v85
    %v2086 = vunpack.c.h.b16 %v85
    %v2087 = vunpack.c.l.b16 %v86
    %v2088 = vunpack.c.h.b16 %v86
    %v2089 = vunpack.c.l.b16 %v87
    %v2090 = vunpack.c.h.b16 %v87
    %v2091 = vunpack.c.l.b16 %v88
    %v2092 = vunpack.c.h.b16 %v88
    %v2093 = vunpack.c.l.b16 %v89
    %v2094 = vunpack.c.h.b16 %v89
    %v2095 = vunpack.c.l.b16 %v90
    %v2096 = vunpack.c.h.b16 %v90
    %v2097 = vunpack.c.l.b16 %v91
    %v2098 = vunpack.c.h.b16 %v91
    %v2099 = vunpack.c.l.b16 %v92
    %v2100 = vunpack.c.h.b16 %v92
    %v2101 = vunpack.c.l.b16 %v93
    %v2102 = vunpack.c.h.b16 %v93
    %v2103 = vunpack.c.l.b16 %v94
    %v2104 = vunpack.c.h.b16 %v94
    %v2105 = vunpack.c.l.b16 %v95
    %v2106 = vunpack.c.h.b16 %v95
    %v2107 = vunpack.c.l.b16 %v96
    %v2108 = vunpack.c.h.b16 %v96
    %v2109 = vunpack.c.l.b16 %v97
    %v2110 = vunpack.c.h.b16 %v97
    %v2111 = vunpack.c.l.b16 %v98
    %v2112 = vunpack.c.h.b16 %v98
    %v2113 = vunpack.c.l.b16 %v99
    %v2114 = vunpack.c.h.b16 %v99
    %v2115 = vunpack.c.l.b16 %v100
    %v2116 = vunpack.c.h.b16 %v100
    %v2117 = vunpack.c.l.b16 %v101
    %v2118 = vunpack.c.h.b16 %v101
    %v2119 = vunpack.c.l.b16 %v102
    %v2120 = vunpack.c.h.b16 %v102
    %v2121 = vunpack.c.l.b16 %v103
    %v2122 = vunpack.c.h.b16 %v103
    %v2123 = vunpack.c.l.b16 %v104
    %v2124 = vunpack.c.h.b16 %v104
    %v2125 = vunpack.c.l.b16 %v105
    %v2126 = vunpack.c.h.b16 %v105
    %v2127 = vunpack.c.l.b16 %v106
    %v2128 = vunpack.c.h.b16 %v106
    %v2129 = vunpack.c.l.b16 %v107
    %v2130 = vunpack.c.h.b16 %v107
    %v2131 = vunpack.c.l.b16 %v108
    %v2132 = vunpack.c.h.b16 %v108
    %v2133 = vunpack.c.l.b16 %v109
    %v2134 = vunpack.c.h.b16 %v109
    %v2135 = vunpack.c.l.b16 %v110
    %v2136 = vunpack.c.h.b16 %v110
    %v2137 = vunpack.c.l.b16 %v111
    %v2138 = vunpack.c.h.b16 %v111
    %v2139 = vunpack.c.l.b16 %v112
    %v2140 = vunpack.c.h.b16 %v112
    %v2141 = vunpack.c.l.b16 %v113
    %v2142 = vunpack.c.h.b16 %v113
    %v2143 = vunpack.c.l.b16 %v114
    %v2144 = vunpack.c.h.b16 %v114
    %v2145 = vunpack.c.l.b16 %v115
    %v2146 = vunpack.c.h.b16 %v115
    %v2147 = vunpack.c.l.b16 %v116
    %v2148 = vunpack.c.h.b16 %v116
    %v2149 = vunpack.c.l.b16 %v117
    %v2150 = vunpack.c.h.b16 %v117
    %v2151 = vunpack.c.l.b16 %v118
    %v2152 = vunpack.c.h.b16 %v118
    %v2153 = vunpack.c.l.b16 %v119
    %v2154 = vunpack.c.h.b16 %v119
    %v2155 = vunpack.c.l.b16 %v120
    %v2156 = vunpack.c.h.b16 %v120
    %v2157 = vunpack.c.l.b16 %v121
    %v2158 = vunpack.c.h.b16 %v121
    %v2159 = vunpack.c.l.b16 %v122
    %v2160 = vunpack.c.h.b16 %v122
    %v2161 = vunpack.c.l.b16 %v123
    %v2162 = vunpack.c.h.b16 %v123
    %v2163 = vunpack.c.l.b16 %v124
    %v2164 = vunpack.c.h.b16 %v124
    %v2165 = vunpack.c.l.b16 %v125
    %v2166 = vunpack.c.h.b16 %v125
    %v2167 = vunpack.c.l.b16 %v126
    %v2168 = vunpack.c.h.b16 %v126
    %v2169 = vunpack.c.l.b16 %v127
    %v2170 = vunpack.c.h.b16 %v127
    %v2171 = vunpack.c.l.b16 %v128
    %v2172 = vunpack.c.h.b16 %v128
    %v2173 = vunpack.c.l.b16 %v129
    %v2174 = vunpack.c.h.b16 %v129
    %v2175 = vunpack.c.l.b16 %v130
    %v2176 = vunpack.c.h.b16 %v130
    %v2177 = vunpack.c.l.b16 %v131
    %v2178 = vunpack.c.h.b16 %v131
    %v2179 = vunpack.c.l.b16 %v132
    %v2180 = vunpack.c.h.b16 %v132
    %v2181 = vunpack.c.l.b16 %v133
    %v2182 = vunpack.c.h.b16 %v133
    %v2183 = vunpack.c.l.b16 %v134
    %v2184 = vunpack.c.h.b16 %v134
    %v2185 = vunpack.c.l.b16 %v135
    %v2186 = vunpack.c.h.b16 %v135
    %v2187 = vunpack.c.l.b16 %v136
    %v2188 = vunpack.c.h.b16 %v136
    %v2189 = vunpack.c.l.b16 %v137
    %v2190 = vunpack.c.h.b16 %v137
    %v2191 = vunpack.c.l.b16 %v138
    %v2192 = vunpack.c.h.b16 %v138
    %v2193 = vunpack.c.l.b16 %v139
    %v2194 = vunpack.c.h.b16 %v139
    %v2195 = vunpack.c.l.b16 %v140
    %v2196 = vunpack.c.h.b16 %v140
    %v2197 = vunpack.c.l.b16 %v141
    %v2198 = vunpack.c.h.b16 %v141
    %v2199 = vunpack.c.l.b16 %v142
    %v2200 = vunpack.c.h.b16 %v142
    %v2201 = vunpack.c.l.b16 %v143
    %v2202 = vunpack.c.h.b16 %v143
    %v2203 = vunpack.c.l.b16 %v144
    %v2204 = vunpack.c.h.b16 %v144
    %v2205 = vunpack.c.l.b16 %v145
    %v2206 = vunpack.c.h.b16 %v145
    %v2207 = vunpack.c.l.b16 %v146
    %v2208 = vunpack.c.h.b16 %v146
    %v2209 = vunpack.c.l.b16 %v147
    %v2210 = vunpack.c.h.b16 %v147
    %v2211 = vunpack.c.l.b16 %v148
    %v2212 = vunpack.c.h.b16 %v148
    %v2213 = vunpack.c.l.b16 %v149
    %v2214 = vunpack.c.h.b16 %v149
    %v2215 = vunpack.c.l.b16 %v150
    %v2216 = vunpack.c.h.b16 %v150
    %v2217 = vunpack.c.l.b16 %v151
    %v2218 = vunpack.c.h.b16 %v151
    %v2219 = vunpack.c.l.b16 %v152
    %v2220 = vunpack.c.h.b16 %v152
    %v2221 = vunpack.c.l.b16 %v153
    %v2222 = vunpack.c.h.b16 %v153
    %v2223 = vunpack.c.l.b16 %v154
    %v2224 = vunpack.c.h.b16 %v154
    %v2225 = vunpack.c.l.b16 %v155
    %v2226 = vunpack.c.h.b16 %v155
    %v2227 = vunpack.c.l.b16 %v156
    %v2228 = vunpack.c.h.b16 %v156
    %v2229 = vunpack.c.l.b16 %v157
    %v2230 = vunpack.c.h.b16 %v157
    %v2231 = vunpack.c.l.b16 %v158
    %v2232 = vunpack.c.h.b16 %v158
    %v2233 = vunpack.c.l.b16 %v159
    %v2234 = vunpack.c.h.b16 %v159
    %v2235 = vunpack.c.l.b16 %v160
    %v2236 = vunpack.c.h.b16 %v160
    %v2237 = vunpack.c.l.b16 %v161
    %v2238 = vunpack.c.h.b16 %v161
    %v2239 = vunpack.c.l.b16 %v162
    %v2240 = vunpack.c.h.b16 %v162
    %v2241 = vunpack.c.l.b16 %v163
    %v2242 = vunpack.c.h.b16 %v163
    %v2243 = vunpack.c.l.b16 %v164
    %v2244 = vunpack.c.h.b16 %v164
    %v2245 = vunpack.c.l.b16 %v165
    %v2246 = vunpack.c.h.b16 %v165
    %v2247 = vunpack.c.l.b16 %v166
    %v2248 = vunpack.c.h.b16 %v166
    %v2249 = vunpack.c.l.b16 %v167
    %v2250 = vunpack.c.h.b16 %v167
    %v2251 = vunpack.c.l.b16 %v168
    %v2252 = vunpack.c.h.b16 %v168
    %v2253 = vunpack.c.l.b16 %v169
    %v2254 = vunpack.c.h.b16 %v169
    %v2255 = vunpack.c.l.b16 %v170
    %v2256 = vunpack.c.h.b16 %v170
    %v2257 = vunpack.c.l.b16 %v171
    %v2258 = vunpack.c.h.b16 %v171
    %v2259 = vunpack.c.l.b16 %v172
    %v2260 = vunpack.c.h.b16 %v172
    %v2261 = vunpack.c.l.b16 %v173
    %v2262 = vunpack.c.h.b16 %v173
    %v2263 = vunpack.c.l.b16 %v174
    %v2264 = vunpack.c.h.b16 %v174
    %v2265 = vunpack.c.l.b16 %v175
    %v2266 = vunpack.c.h.b16 %v175
    %v2267 = vunpack.c.l.b16 %v176
    %v2268 = vunpack.c.h.b16 %v176
    %v2269 = vunpack.c.l.b16 %v177
    %v2270 = vunpack.c.h.b16 %v177
    %v2271 = vunpack.c.l.b16 %v178
    %v2272 = vunpack.c.h.b16 %v178
    %v2273 = vunpack.c.l.b16 %v179
    %v2274 = vunpack.c.h.b16 %v179
    %v2275 = vunpack.c.l.b16 %v180
    %v2276 = vunpack.c.h.b16 %v180
    %v2277 = vunpack.c.l.b16 %v181
    %v2278 = vunpack.c.h.b16 %v181
    %v2279 = vunpack.c.l.b16 %v182
    %v2280 = vunpack.c.h.b16 %v182
    %v2281 = vunpack.c.l.b16 %v183
    %v2282 = vunpack.c.h.b16 %v183
    %v2283 = vunpack.c.l.b16 %v184
    %v2284 = vunpack.c.h.b16 %v184
    %v2285 = vunpack.c.l.b16 %v185
    %v2286 = vunpack.c.h.b16 %v185
    %v2287 = vunpack.c.l.b16 %v186
    %v2288 = vunpack.c.h.b16 %v186
    %v2289 = vunpack.c.l.b16 %v187
    %v2290 = vunpack.c.h.b16 %v187
    %v2291 = vunpack.c.l.b16 %v188
    %v2292 = vunpack.c.h.b16 %v188
    %v2293 = vunpack.c.l.b16 %v189
    %v2294 = vunpack.c.h.b16 %v189
    %v2295 = vunpack.c.l.b16 %v190
    %v2296 = vunpack.c.h.b16 %v190
    %v2297 = vunpack.c.l.b16 %v191
    %v2298 = vunpack.c.h.b16 %v191
    %v2299 = vunpack.c.l.b16 %v192
    %v2300 = vunpack.c.h.b16 %v192
    %v2301 = vunpack.c.l.b16 %v193
    %v2302 = vunpack.c.h.b16 %v193
    %v2303 = vunpack.c.l.b16 %v194
    %v2304 = vunpack.c.h.b16 %v194
    %v2305 = vunpack.c.l.b16 %v195
    %v2306 = vunpack.c.h.b16 %v195
    %v2307 = vunpack.c.l.b16 %v196
    %v2308 = vunpack.c.h.b16 %v196
    %v2309 = vunpack.c.l.b16 %v197
    %v2310 = vunpack.c.h.b16 %v197
    %v2311 = vunpack.c.l.b16 %v198
    %v2312 = vunpack.c.h.b16 %v198
    %v2313 = vunpack.c.l.b16 %v199
    %v2314 = vunpack.c.h.b16 %v199
    %v2315 = vunpack.c.l.b16 %v200
    %v2316 = vunpack.c.h.b16 %v200
    %v2317 = vunpack.c.l.b16 %v201
    %v2318 = vunpack.c.h.b16 %v201
    %v2319 = vunpack.c.l.b16 %v202
    %v2320 = vunpack.c.h.b16 %v202
    %v2321 = vunpack.c.l.b16 %v203
    %v2322 = vunpack.c.h.b16 %v203
    %v2323 = vunpack.c.l.b16 %v204
    %v2324 = vunpack.c.h.b16 %v204
    %v2325 = vunpack.c.l.b16 %v205
    %v2326 = vunpack.c.h.b16 %v205
    %v2327 = vunpack.c.l.b16 %v206
    %v2328 = vunpack.c.h.b16 %v206
    %v2329 = vunpack.c.l.b16 %v207
    %v2330 = vunpack.c.h.b16 %v207
    %v2331 = vunpack.c.l.b16 %v208
    %v2332 = vunpack.c.h.b16 %v208
    %v2333 = vunpack.c.l.b16 %v209
    %v2334 = vunpack.c.h.b16 %v209
    %v2335 = vunpack.c.l.b16 %v210
    %v2336 = vunpack.c.h.b16 %v210
    %v2337 = vunpack.c.l.b16 %v211
    %v2338 = vunpack.c.h.b16 %v211
    %v2339 = vunpack.c.l.b16 %v212
    %v2340 = vunpack.c.h.b16 %v212
    %v2341 = vunpack.c.l.b16 %v213
    %v2342 = vunpack.c.h.b16 %v213
    %v2343 = vunpack.c.l.b16 %v214
    %v2344 = vunpack.c.h.b16 %v214
    %v2345 = vunpack.c.l.b16 %v215
    %v2346 = vunpack.c.h.b16 %v215
    %v2347 = vunpack.c.l.b16 %v216
    %v2348 = vunpack.c.h.b16 %v216
    %v2349 = vunpack.c.l.b16 %v217
    %v2350 = vunpack.c.h.b16 %v217
    %v2351 = vunpack.c.l.b16 %v218
    %v2352 = vunpack.c.h.b16 %v218
    %v2353 = vunpack.c.l.b16 %v219
    %v2354 = vunpack.c.h.b16 %v219
    %v2355 = vunpack.c.l.b16 %v220
    %v2356 = vunpack.c.h.b16 %v220
    %v2357 = vunpack.c.l.b16 %v221
    %v2358 = vunpack.c.h.b16 %v221
    %v2359 = vunpack.c.l.b16 %v222
    %v2360 = vunpack.c.h.b16 %v222
    %v2361 = vunpack.c.l.b16 %v223
    %v2362 = vunpack.c.h.b16 %v223
    %v2363 = vunpack.c.l.b16 %v224
    %v2364 = vunpack.c.h.b16 %v224
    %v2365 = vunpack.c.l.b16 %v225
    %v2366 = vunpack.c.h.b16 %v225
    %v2367 = vunpack.c.l.b16 %v226
    %v2368 = vunpack.c.h.b16 %v226
    %v2369 = vunpack.c.l.b16 %v227
    %v2370 = vunpack.c.h.b16 %v227
    %v2371 = vunpack.c.l.b16 %v228
    %v2372 = vunpack.c.h.b16 %v228
    %v2373 = vunpack.c.l.b16 %v229
    %v2374 = vunpack.c.h.b16 %v229
    %v2375 = vunpack.c.l.b16 %v230
    %v2376 = vunpack.c.h.b16 %v230
    %v2377 = vunpack.c.l.b16 %v231
    %v2378 = vunpack.c.h.b16 %v231
    %v2379 = vunpack.c.l.b16 %v232
    %v2380 = vunpack.c.h.b16 %v232
    %v2381 = vunpack.c.l.b16 %v233
    %v2382 = vunpack.c.h.b16 %v233
    %v2383 = vunpack.c.l.b16 %v234
    %v2384 = vunpack.c.h.b16 %v234
    %v2385 = vunpack.c.l.b16 %v235
    %v2386 = vunpack.c.h.b16 %v235
    %v2387 = vunpack.c.l.b16 %v236
    %v2388 = vunpack.c.h.b16 %v236
    %v2389 = vunpack.c.l.b16 %v237
    %v2390 = vunpack.c.h.b16 %v237
    %v2391 = vunpack.c.l.b16 %v238
    %v2392 = vunpack.c.h.b16 %v238
    %v2393 = vunpack.c.l.b16 %v239
    %v2394 = vunpack.c.h.b16 %v239
    %v2395 = vunpack.c.l.b16 %v240
    %v2396 = vunpack.c.h.b16 %v240
    %v2397 = vunpack.c.l.b16 %v241
    %v2398 = vunpack.c.h.b16 %v241
    %v2399 = vunpack.c.l.b16 %v242
    %v2400 = vunpack.c.h.b16 %v242
    %v2401 = vunpack.c.l.b16 %v243
    %v2402 = vunpack.c.h.b16 %v243
    %v2403 = vunpack.c.l.b16 %v244
    %v2404 = vunpack.c.h.b16 %v244
    %v2405 = vunpack.c.l.b16 %v245
    %v2406 = vunpack.c.h.b16 %v245
    %v2407 = vunpack.c.l.b16 %v246
    %v2408 = vunpack.c.h.b16 %v246
    %v2409 = vunpack.c.l.b16 %v247
    %v2410 = vunpack.c.h.b16 %v247
    %v2411 = vunpack.c.l.b16 %v248
    %v2412 = vunpack.c.h.b16 %v248
    %v2413 = vunpack.c.l.b16 %v249
    %v2414 = vunpack.c.h.b16 %v249
    %v2415 = vunpack.c.l.b16 %v250
    %v2416 = vunpack.c.h.b16 %v250
    %v2417 = vunpack.c.l.b16 %v251
    %v2418 = vunpack.c.h.b16 %v251
    %v2419 = vunpack.c.l.b16 %v252
    %v2420 = vunpack.c.h.b16 %v252
    %v2421 = vunpack.c.l.b16 %v253
    %v2422 = vunpack.c.h.b16 %v253
    %v2423 = vunpack.c.l.b16 %v254
    %v2424 = vunpack.c.h.b16 %v254
    %v2425 = vunpack.c.l.b16 %v255
    %v2426 = vunpack.c.h.b16 %v255
    %v2427 = vunpack.c.l.b16 %v256
    %v2428 = vunpack.c.h.b16 %v256
    %v2429 = vunpack.c.l.b16 %v257
    %v2430 = vunpack.c.h.b16 %v257
    %v2431 = vunpack.c.l.b16 %v258
    %v2432 = vunpack.c.h.b16 %v258
    %v2433 = vunpack.c.l.b16 %v259
    %v2434 = vunpack.c.h.b16 %v259
    %v2435 = vunpack.c.l.b16 %v260
    %v2436 = vunpack.c.h.b16 %v260
    %v2437 = vunpack.c.l.b16 %v261
    %v2438 = vunpack.c.h.b16 %v261
    %v2439 = vunpack.c.l.b16 %v262
    %v2440 = vunpack.c.h.b16 %v262
    %v2441 = vunpack.c.l.b16 %v263
    %v2442 = vunpack.c.h.b16 %v263
    %v2443 = vunpack.c.l.b16 %v264
    %v2444 = vunpack.c.h.b16 %v264
    %v2445 = vunpack.c.l.b16 %v265
    %v2446 = vunpack.c.h.b16 %v265
    %v2447 = vunpack.c.l.b16 %v266
    %v2448 = vunpack.c.h.b16 %v266
    %v2449 = vunpack.c.l.b16 %v267
    %v2450 = vunpack.c.h.b16 %v267
    %v2451 = vunpack.c.l.b16 %v268
    %v2452 = vunpack.c.h.b16 %v268
    %v2453 = vunpack.c.l.b16 %v269
    %v2454 = vunpack.c.h.b16 %v269
    %v2455 = vunpack.c.l.b16 %v270
    %v2456 = vunpack.c.h.b16 %v270
    %v2457 = vunpack.c.l.b16 %v271
    %v2458 = vunpack.c.h.b16 %v271
    %v2459 = vunpack.c.l.b16 %v272
    %v2460 = vunpack.c.h.b16 %v272
    %v2461 = vunpack.c.l.b16 %v273
    %v2462 = vunpack.c.h.b16 %v273
    %v2463 = vunpack.c.l.b16 %v274
    %v2464 = vunpack.c.h.b16 %v274
    %v2465 = vunpack.c.l.b16 %v275
    %v2466 = vunpack.c.h.b16 %v275
    %v2467 = vunpack.c.l.b16 %v276
    %v2468 = vunpack.c.h.b16 %v276
    %v2469 = vunpack.c.l.b16 %v277
    %v2470 = vunpack.c.h.b16 %v277
    %v2471 = vunpack.c.l.b16 %v278
    %v2472 = vunpack.c.h.b16 %v278
    %v2473 = vunpack.c.l.b16 %v279
    %v2474 = vunpack.c.h.b16 %v279
    %v2475 = vunpack.c.l.b16 %v280
    %v2476 = vunpack.c.h.b16 %v280
    %v2477 = vunpack.c.l.b16 %v281
    %v2478 = vunpack.c.h.b16 %v281
    %v2479 = vunpack.c.l.b16 %v282
    %v2480 = vunpack.c.h.b16 %v282
    %v2481 = vunpack.c.l.b16 %v283
    %v2482 = vunpack.c.h.b16 %v283
    %v2483 = vunpack.c.l.b16 %v284
    %v2484 = vunpack.c.h.b16 %v284
    %v2485 = vunpack.c.l.b16 %v285
    %v2486 = vunpack.c.h.b16 %v285
    %v2487 = vunpack.c.l.b16 %v286
    %v2488 = vunpack.c.h.b16 %v286
    %v2489 = vunpack.c.l.b16 %v287
    %v2490 = vunpack.c.h.b16 %v287
    %v2491 = vunpack.c.l.b16 %v288
    %v2492 = vunpack.c.h.b16 %v288
    %v2493 = vunpack.c.l.b16 %v289
    %v2494 = vunpack.c.h.b16 %v289
    %v2495 = vunpack.c.l.b16 %v290
    %v2496 = vunpack.c.h.b16 %v290
    %v2497 = vunpack.c.l.b16 %v291
    %v2498 = vunpack.c.h.b16 %v291
    %v2499 = vunpack.c.l.b16 %v292
    %v2500 = vunpack.c.h.b16 %v292
    %v2501 = vunpack.c.l.b16 %v293
    %v2502 = vunpack.c.h.b16 %v293
    %v2503 = vunpack.c.l.b16 %v294
    %v2504 = vunpack.c.h.b16 %v294
    %v2505 = vunpack.c.l.b16 %v295
    %v2506 = vunpack.c.h.b16 %v295
    %v2507 = vunpack.c.l.b16 %v296
    %v2508 = vunpack.c.h.b16 %v296
    %v2509 = vunpack.c.l.b16 %v297
    %v2510 = vunpack.c.h.b16 %v297
    %v2511 = vunpack.c.l.b16 %v298
    %v2512 = vunpack.c.h.b16 %v298
    %v2513 = vunpack.c.l.b16 %v299
    %v2514 = vunpack.c.h.b16 %v299
    %v2515 = vunpack.c.l.b16 %v300
    %v2516 = vunpack.c.h.b16 %v300
    %v2517 = vunpack.c.l.b16 %v301
    %v2518 = vunpack.c.h.b16 %v301
    %v2519 = vunpack.c.l.b16 %v302
    %v2520 = vunpack.c.h.b16 %v302
    %v2521 = vunpack.c.l.b16 %v303
    %v2522 = vunpack.c.h.b16 %v303
    %v2523 = vunpack.c.l.b16 %v304
    %v2524 = vunpack.c.h.b16 %v304
    %v2525 = vunpack.c.l.b16 %v305
    %v2526 = vunpack.c.h.b16 %v305
    %v2527 = vunpack.c.l.b16 %v306
    %v2528 = vunpack.c.h.b16 %v306
    %v2529 = vunpack.c.l.b16 %v307
    %v2530 = vunpack.c.h.b16 %v307
    %v2531 = vunpack.c.l.b16 %v308
    %v2532 = vunpack.c.h.b16 %v308
    %v2533 = vunpack.c.l.b16 %v309
    %v2534 = vunpack.c.h.b16 %v309
    %v2535 = vunpack.c.l.b16 %v310
    %v2536 = vunpack.c.h.b16 %v310
    %v2537 = vunpack.c.l.b16 %v311
    %v2538 = vunpack.c.h.b16 %v311
    %v2539 = vunpack.c.l.b16 %v312
    %v2540 = vunpack.c.h.b16 %v312
    %v2541 = vunpack.c.l.b16 %v313
    %v2542 = vunpack.c.h.b16 %v313
    %v2543 = vunpack.c.l.b16 %v314
    %v2544 = vunpack.c.h.b16 %v314
    %v2545 = vunpack.c.l.b16 %v315
    %v2546 = vunpack.c.h.b16 %v315
    %v2547 = vunpack.c.l.b16 %v316
    %v2548 = vunpack.c.h.b16 %v316
    %v2549 = vunpack.c.l.b16 %v317
    %v2550 = vunpack.c.h.b16 %v317
    %v2551 = vunpack.c.l.b16 %v318
    %v2552 = vunpack.c.h.b16 %v318
    %v2553 = vunpack.c.l.b16 %v319
    %v2554 = vunpack.c.h.b16 %v319
    %v2555 = vunpack.c.l.b16 %v320
    %v2556 = vunpack.c.h.b16 %v320
    %v2557 = vunpack.c.l.b16 %v321
    %v2558 = vunpack.c.h.b16 %v321
    %v2559 = vunpack.c.l.b16 %v322
    %v2560 = vunpack.c.h.b16 %v322
    %v2561 = vunpack.c.l.b16 %v323
    %v2562 = vunpack.c.h.b16 %v323
    %v2563 = vunpack.c.l.b16 %v324
    %v2564 = vunpack.c.h.b16 %v324
    %v2565 = vunpack.c.l.b16 %v325
    %v2566 = vunpack.c.h.b16 %v325
    %v2567 = vunpack.c.l.b16 %v326
    %v2568 = vunpack.c.h.b16 %v326
    %v2569 = vunpack.c.l.b16 %v327
    %v2570 = vunpack.c.h.b16 %v327
    %v2571 = vunpack.c.l.b16 %v328
    %v2572 = vunpack.c.h.b16 %v328
    %v2573 = vunpack.c.l.b16 %v329
    %v2574 = vunpack.c.h.b16 %v329
    %v2575 = vunpack.c.l.b16 %v330
    %v2576 = vunpack.c.h.b16 %v330
    %v2577 = vunpack.c.l.b16 %v331
    %v2578 = vunpack.c.h.b16 %v331
    %v2579 = vunpack.c.l.b16 %v332
    %v2580 = vunpack.c.h.b16 %v332
    %v2581 = vunpack.c.l.b16 %v333
    %v2582 = vunpack.c.h.b16 %v333
    %v2583 = vunpack.c.l.b16 %v334
    %v2584 = vunpack.c.h.b16 %v334
    %v2585 = vunpack.c.l.b16 %v335
    %v2586 = vunpack.c.h.b16 %v335
    %v2587 = vunpack.c.l.b16 %v336
    %v2588 = vunpack.c.h.b16 %v336
    %v2589 = vunpack.c.l.b16 %v337
    %v2590 = vunpack.c.h.b16 %v337
    %v2591 = vunpack.c.l.b16 %v338
    %v2592 = vunpack.c.h.b16 %v338
    %v2593 = vunpack.c.l.b16 %v339
    %v2594 = vunpack.c.h.b16 %v339
    %v2595 = vunpack.c.l.b16 %v340
    %v2596 = vunpack.c.h.b16 %v340
    %v2597 = vunpack.c.l.b16 %v341
    %v2598 = vunpack.c.h.b16 %v341
    %v2599 = vunpack.c.l.b16 %v342
    %v2600 = vunpack.c.h.b16 %v342
    %v2601 = vunpack.c.l.b16 %v343
    %v2602 = vunpack.c.h.b16 %v343
    %v2603 = vunpack.c.l.b16 %v344
    %v2604 = vunpack.c.h.b16 %v344
    %v2605 = vunpack.c.l.b16 %v345
    %v2606 = vunpack.c.h.b16 %v345
    %v2607 = vunpack.c.l.b16 %v346
    %v2608 = vunpack.c.h.b16 %v346
    %v2609 = vunpack.c.l.b16 %v347
    %v2610 = vunpack.c.h.b16 %v347
    %v2611 = vunpack.c.l.b16 %v348
    %v2612 = vunpack.c.h.b16 %v348
    %v2613 = vunpack.c.l.b16 %v349
    %v2614 = vunpack.c.h.b16 %v349
    %v2615 = vunpack.c.l.b16 %v350
    %v2616 = vunpack.c.h.b16 %v350
    %v2617 = vunpack.c.l.b16 %v351
    %v2618 = vunpack.c.h.b16 %v351
    %v2619 = vunpack.c.l.b16 %v352
    %v2620 = vunpack.c.h.b16 %v352
    %v2621 = vunpack.c.l.b16 %v353
    %v2622 = vunpack.c.h.b16 %v353
    %v2623 = vunpack.c.l.b16 %v354
    %v2624 = vunpack.c.h.b16 %v354
    %v2625 = vunpack.c.l.b16 %v355
    %v2626 = vunpack.c.h.b16 %v355
    %v2627 = vunpack.c.l.b16 %v356
    %v2628 = vunpack.c.h.b16 %v356
    %v2629 = vunpack.c.l.b16 %v357
    %v2630 = vunpack.c.h.b16 %v357
    %v2631 = vunpack.c.l.b16 %v358
    %v2632 = vunpack.c.h.b16 %v358
    %v2633 = vunpack.c.l.b16 %v359
    %v2634 = vunpack.c.h.b16 %v359
    %v2635 = vunpack.c.l.b16 %v360
    %v2636 = vunpack.c.h.b16 %v360
    %v2637 = vunpack.c.l.b16 %v361
    %v2638 = vunpack.c.h.b16 %v361
    %v2639 = vunpack.c.l.b16 %v362
    %v2640 = vunpack.c.h.b16 %v362
    %v2641 = vunpack.c.l.b16 %v363
    %v2642 = vunpack.c.h.b16 %v363
    %v2643 = vunpack.c.l.b16 %v364
    %v2644 = vunpack.c.h.b16 %v364
    %v2645 = vunpack.c.l.b16 %v365
    %v2646 = vunpack.c.h.b16 %v365
    %v2647 = vunpack.c.l.b16 %v366
    %v2648 = vunpack.c.h.b16 %v366
    %v2649 = vunpack.c.l.b16 %v367
    %v2650 = vunpack.c.h.b16 %v367
    %v2651 = vunpack.c.l.b16 %v368
    %v2652 = vunpack.c.h.b16 %v368
    %v2653 = vunpack.c.l.b16 %v369
    %v2654 = vunpack.c.h.b16 %v369
    %v2655 = vunpack.c.l.b16 %v370
    %v2656 = vunpack.c.h.b16 %v370
    %v2657 = vunpack.c.l.b16 %v371
    %v2658 = vunpack.c.h.b16 %v371
    %v2659 = vunpack.c.l.b16 %v372
    %v2660 = vunpack.c.h.b16 %v372
    %v2661 = vunpack.c.l.b16 %v373
    %v2662 = vunpack.c.h.b16 %v373
    %v2663 = vunpack.c.l.b16 %v374
    %v2664 = vunpack.c.h.b16 %v374
    %v2665 = vunpack.c.l.b16 %v375
    %v2666 = vunpack.c.h.b16 %v375
    %v2667 = vunpack.c.l.b16 %v376
    %v2668 = vunpack.c.h.b16 %v376
    %v2669 = vunpack.c.l.b16 %v377
    %v2670 = vunpack.c.h.b16 %v377
    %v2671 = vunpack.c.l.b16 %v378
    %v2672 = vunpack.c.h.b16 %v378
    %v2673 = vunpack.c.l.b16 %v379
    %v2674 = vunpack.c.h.b16 %v379
    %v2675 = vunpack.c.l.b16 %v380
    %v2676 = vunpack.c.h.b16 %v380
    %v2677 = vunpack.c.l.b16 %v381
    %v2678 = vunpack.c.h.b16 %v381
    %v2679 = vunpack.c.l.b16 %v382
    %v2680 = vunpack.c.h.b16 %v382
    %v2681 = vunpack.c.l.b16 %v383
    %v2682 = vunpack.c.h.b16 %v383
    %v2683 = vunpack.c.l.b16 %v384
    %v2684 = vunpack.c.h.b16 %v384
    %v2685 = vunpack.c.l.b16 %v385
    %v2686 = vunpack.c.h.b16 %v385
    %v2687 = vunpack.c.l.b16 %v386
    %v2688 = vunpack.c.h.b16 %v386
    %v2689 = vunpack.c.l.b16 %v387
    %v2690 = vunpack.c.h.b16 %v387
    %v2691 = vunpack.c.l.b16 %v388
    %v2692 = vunpack.c.h.b16 %v388
    %v2693 = vunpack.c.l.b16 %v389
    %v2694 = vunpack.c.h.b16 %v389
    %v2695 = vunpack.c.l.b16 %v390
    %v2696 = vunpack.c.h.b16 %v390
    %v2697 = vunpack.c.l.b16 %v391
    %v2698 = vunpack.c.h.b16 %v391
    %v2699 = vunpack.c.l.b16 %v392
    %v2700 = vunpack.c.h.b16 %v392
    %v2701 = vunpack.c.l.b16 %v393
    %v2702 = vunpack.c.h.b16 %v393
    %v2703 = vunpack.c.l.b16 %v394
    %v2704 = vunpack.c.h.b16 %v394
    %v2705 = vunpack.c.l.b16 %v395
    %v2706 = vunpack.c.h.b16 %v395
    %v2707 = vunpack.c.l.b16 %v396
    %v2708 = vunpack.c.h.b16 %v396
    %v2709 = vunpack.c.l.b16 %v397
    %v2710 = vunpack.c.h.b16 %v397
    %v2711 = vunpack.c.l.b16 %v398
    %v2712 = vunpack.c.h.b16 %v398
    %v2713 = vunpack.c.l.b16 %v399
    %v2714 = vunpack.c.h.b16 %v399
    %v2715 = vunpack.c.l.b16 %v400
    %v2716 = vunpack.c.h.b16 %v400
    %v2717 = vunpack.c.l.b16 %v401
    %v2718 = vunpack.c.h.b16 %v401
    %v2719 = vunpack.c.l.b16 %v402
    %v2720 = vunpack.c.h.b16 %v402
    %v2721 = vunpack.c.l.b16 %v403
    %v2722 = vunpack.c.h.b16 %v403
    %v2723 = vunpack.c.l.b16 %v404
    %v2724 = vunpack.c.h.b16 %v404
    %v2725 = vunpack.c.l.b16 %v405
    %v2726 = vunpack.c.h.b16 %v405
    %v2727 = vunpack.c.l.b16 %v406
    %v2728 = vunpack.c.h.b16 %v406
    %v2729 = vunpack.c.l.b16 %v407
    %v2730 = vunpack.c.h.b16 %v407
    %v2731 = vunpack.c.l.b16 %v408
    %v2732 = vunpack.c.h.b16 %v408
    %v2733 = vunpack.c.l.b16 %v409
    %v2734 = vunpack.c.h.b16 %v409
    %v2735 = vunpack.c.l.b16 %v410
    %v2736 = vunpack.c.h.b16 %v410
    %v2737 = vunpack.c.l.b16 %v411
    %v2738 = vunpack.c.h.b16 %v411
    %v2739 = vunpack.c.l.b16 %v412
    %v2740 = vunpack.c.h.b16 %v412
    %v2741 = vunpack.c.l.b16 %v413
    %v2742 = vunpack.c.h.b16 %v413
    %v2743 = vunpack.c.l.b16 %v414
    %v2744 = vunpack.c.h.b16 %v414
    %v2745 = vunpack.c.l.b16 %v415
    %v2746 = vunpack.c.h.b16 %v415
    %v2747 = vunpack.c.l.b16 %v416
    %v2748 = vunpack.c.h.b16 %v416
    %v2749 = vunpack.c.l.b16 %v417
    %v2750 = vunpack.c.h.b16 %v417
    %v2751 = vunpack.c.l.b16 %v418
    %v2752 = vunpack.c.h.b16 %v418
    %v2753 = vunpack.c.l.b16 %v419
    %v2754 = vunpack.c.h.b16 %v419
    %v2755 = vunpack.c.l.b16 %v420
    %v2756 = vunpack.c.h.b16 %v420
    %v2757 = vunpack.c.l.b16 %v421
    %v2758 = vunpack.c.h.b16 %v421
    %v2759 = vunpack.c.l.b16 %v422
    %v2760 = vunpack.c.h.b16 %v422
    %v2761 = vunpack.c.l.b16 %v423
    %v2762 = vunpack.c.h.b16 %v423
    %v2763 = vunpack.c.l.b16 %v424
    %v2764 = vunpack.c.h.b16 %v424
    %v2765 = vunpack.c.l.b16 %v425
    %v2766 = vunpack.c.h.b16 %v425
    %v2767 = vunpack.c.l.b16 %v426
    %v2768 = vunpack.c.h.b16 %v426
    %v2769 = vunpack.c.l.b16 %v427
    %v2770 = vunpack.c.h.b16 %v427
    %v2771 = vunpack.c.l.b16 %v428
    %v2772 = vunpack.c.h.b16 %v428
    %v2773 = vunpack.c.l.b16 %v429
    %v2774 = vunpack.c.h.b16 %v429
    %v2775 = vunpack.c.l.b16 %v430
    %v2776 = vunpack.c.h.b16 %v430
    %v2777 = vunpack.c.l.b16 %v431
    %v2778 = vunpack.c.h.b16 %v431
    %v2779 = vunpack.c.l.b16 %v432
    %v2780 = vunpack.c.h.b16 %v432
    %v2781 = vunpack.c.l.b16 %v433
    %v2782 = vunpack.c.h.b16 %v433
    %v2783 = vunpack.c.l.b16 %v434
    %v2784 = vunpack.c.h.b16 %v434
    %v2785 = vunpack.c.l.b16 %v435
    %v2786 = vunpack.c.h.b16 %v435
    %v2787 = vunpack.c.l.b16 %v436
    %v2788 = vunpack.c.h.b16 %v436
    %v2789 = vunpack.c.l.b16 %v437
    %v2790 = vunpack.c.h.b16 %v437
    %v2791 = vunpack.c.l.b16 %v438
    %v2792 = vunpack.c.h.b16 %v438
    %v2793 = vunpack.c.l.b16 %v439
    %v2794 = vunpack.c.h.b16 %v439
    %v2795 = vunpack.c.l.b16 %v440
    %v2796 = vunpack.c.h.b16 %v440
    %v2797 = vunpack.c.l.b16 %v441
    %v2798 = vunpack.c.h.b16 %v441
    %v2799 = vunpack.c.l.b16 %v442
    %v2800 = vunpack.c.h.b16 %v442
    %v2801 = vunpack.c.l.b16 %v443
    %v2802 = vunpack.c.h.b16 %v443
    %v2803 = vunpack.c.l.b16 %v444
    %v2804 = vunpack.c.h.b16 %v444
    %v2805 = vunpack.c.l.b16 %v445
    %v2806 = vunpack.c.h.b16 %v445
    %v2807 = vunpack.c.l.b16 %v446
    %v2808 = vunpack.c.h.b16 %v446
    %v2809 = vunpack.c.l.b16 %v447
    %v2810 = vunpack.c.h.b16 %v447
    %v2811 = vunpack.c.l.b16 %v448
    %v2812 = vunpack.c.h.b16 %v448
    %v2813 = vunpack.c.l.b16 %v449
    %v2814 = vunpack.c.h.b16 %v449
    %v2815 = vunpack.c.l.b16 %v450
    %v2816 = vunpack.c.h.b16 %v450
    %v2817 = vunpack.c.l.b16 %v451
    %v2818 = vunpack.c.h.b16 %v451
    %v2819 = vunpack.c.l.b16 %v452
    %v2820 = vunpack.c.h.b16 %v452
    %v2821 = vunpack.c.l.b16 %v453
    %v2822 = vunpack.c.h.b16 %v453
    %v2823 = vunpack.c.l.b16 %v454
    %v2824 = vunpack.c.h.b16 %v454
    %v2825 = vunpack.c.l.b16 %v455
    %v2826 = vunpack.c.h.b16 %v455
    %v2827 = vunpack.c.l.b16 %v456
    %v2828 = vunpack.c.h.b16 %v456
    %v2829 = vunpack.c.l.b16 %v457
    %v2830 = vunpack.c.h.b16 %v457
    %v2831 = vunpack.c.l.b16 %v458
    %v2832 = vunpack.c.h.b16 %v458
    %v2833 = vunpack.c.l.b16 %v459
    %v2834 = vunpack.c.h.b16 %v459
    %v2835 = vunpack.c.l.b16 %v460
    %v2836 = vunpack.c.h.b16 %v460
    %v2837 = vunpack.c.l.b16 %v461
    %v2838 = vunpack.c.h.b16 %v461
    %v2839 = vunpack.c.l.b16 %v462
    %v2840 = vunpack.c.h.b16 %v462
    %v2841 = vunpack.c.l.b16 %v463
    %v2842 = vunpack.c.h.b16 %v463
    %v2843 = vunpack.c.l.b16 %v464
    %v2844 = vunpack.c.h.b16 %v464
    %v2845 = vunpack.c.l.b16 %v465
    %v2846 = vunpack.c.h.b16 %v465
    %v2847 = vunpack.c.l.b16 %v466
    %v2848 = vunpack.c.h.b16 %v466
    %v2849 = vunpack.c.l.b16 %v467
    %v2850 = vunpack.c.h.b16 %v467
    %v2851 = vunpack.c.l.b16 %v468
    %v2852 = vunpack.c.h.b16 %v468
    %v2853 = vunpack.c.l.b16 %v469
    %v2854 = vunpack.c.h.b16 %v469
    %v2855 = vunpack.c.l.b16 %v470
    %v2856 = vunpack.c.h.b16 %v470
    %v2857 = vunpack.c.l.b16 %v471
    %v2858 = vunpack.c.h.b16 %v471
    %v2859 = vunpack.c.l.b16 %v472
    %v2860 = vunpack.c.h.b16 %v472
    %v2861 = vunpack.c.l.b16 %v473
    %v2862 = vunpack.c.h.b16 %v473
    %v2863 = vunpack.c.l.b16 %v474
    %v2864 = vunpack.c.h.b16 %v474
    %v2865 = vunpack.c.l.b16 %v475
    %v2866 = vunpack.c.h.b16 %v475
    %v2867 = vunpack.c.l.b16 %v476
    %v2868 = vunpack.c.h.b16 %v476
    %v2869 = vunpack.c.l.b16 %v477
    %v2870 = vunpack.c.h.b16 %v477
    %v2871 = vunpack.c.l.b16 %v478
    %v2872 = vunpack.c.h.b16 %v478
    %v2873 = vunpack.c.l.b16 %v479
    %v2874 = vunpack.c.h.b16 %v479
    %v2875 = vunpack.c.l.b16 %v480
    %v2876 = vunpack.c.h.b16 %v480
    %v2877 = vunpack.c.l.b16 %v481
    %v2878 = vunpack.c.h.b16 %v481
    %v2879 = vunpack.c.l.b16 %v482
    %v2880 = vunpack.c.h.b16 %v482
    %v2881 = vunpack.c.l.b16 %v483
    %v2882 = vunpack.c.h.b16 %v483
    %v2883 = vunpack.c.l.b16 %v484
    %v2884 = vunpack.c.h.b16 %v484
    %v2885 = vunpack.c.l.b16 %v485
    %v2886 = vunpack.c.h.b16 %v485
    %v2887 = vunpack.c.l.b16 %v486
    %v2888 = vunpack.c.h.b16 %v486
    %v2889 = vunpack.c.l.b16 %v487
    %v2890 = vunpack.c.h.b16 %v487
    %v2891 = vunpack.c.l.b16 %v488
    %v2892 = vunpack.c.h.b16 %v488
    %v2893 = vunpack.c.l.b16 %v489
    %v2894 = vunpack.c.h.b16 %v489
    %v2895 = vunpack.c.l.b16 %v490
    %v2896 = vunpack.c.h.b16 %v490
    %v2897 = vunpack.c.l.b16 %v491
    %v2898 = vunpack.c.h.b16 %v491
    %v2899 = vunpack.c.l.b16 %v492
    %v2900 = vunpack.c.h.b16 %v492
    %v2901 = vunpack.c.l.b16 %v493
    %v2902 = vunpack.c.h.b16 %v493
    %v2903 = vunpack.c.l.b16 %v494
    %v2904 = vunpack.c.h.b16 %v494
    %v2905 = vunpack.c.l.b16 %v495
    %v2906 = vunpack.c.h.b16 %v495
    %v2907 = vunpack.c.l.b16 %v496
    %v2908 = vunpack.c.h.b16 %v496
    %v2909 = vunpack.c.l.b16 %v497
    %v2910 = vunpack.c.h.b16 %v497
    %v2911 = vunpack.c.l.b16 %v498
    %v2912 = vunpack.c.h.b16 %v498
    %v2913 = vunpack.c.l.b16 %v499
    %v2914 = vunpack.c.h.b16 %v499
    %v2915 = vunpack.c.l.b16 %v500
    %v2916 = vunpack.c.h.b16 %v500
    %v2917 = vunpack.c.l.b16 %v501
    %v2918 = vunpack.c.h.b16 %v501
    %v2919 = vunpack.c.l.b16 %v502
    %v2920 = vunpack.c.h.b16 %v502
    %v2921 = vunpack.c.l.b16 %v503
    %v2922 = vunpack.c.h.b16 %v503
    %v2923 = vunpack.c.l.b16 %v504
    %v2924 = vunpack.c.h.b16 %v504
    %v2925 = vunpack.c.l.b16 %v505
    %v2926 = vunpack.c.h.b16 %v505
    %v2927 = vunpack.c.l.b16 %v506
    %v2928 = vunpack.c.h.b16 %v506
    %v2929 = vunpack.c.l.b16 %v507
    %v2930 = vunpack.c.h.b16 %v507
    %v2931 = vunpack.c.l.b16 %v508
    %v2932 = vunpack.c.h.b16 %v508
    %v2933 = vunpack.c.l.b16 %v509
    %v2934 = vunpack.c.h.b16 %v509
    %v2935 = vunpack.c.l.b16 %v510
    %v2936 = vunpack.c.h.b16 %v510
    %v2937 = vunpack.c.l.b16 %v511
    %v2938 = vunpack.c.h.b16 %v511
    %v2939 = vunpack.c.l.b16 %v512
    %v2940 = vunpack.c.h.b16 %v512
    %v2941 = vunpack.c.l.b16 %v513
    %v2942 = vunpack.c.h.b16 %v513
    %v2943 = vunpack.c.l.b16 %v514
    %v2944 = vunpack.c.h.b16 %v514
    %v2945 = vunpack.c.l.b16 %v515
    %v2946 = vunpack.c.h.b16 %v515
    %v2947 = vunpack.c.l.b16 %v516
    %v2948 = vunpack.c.h.b16 %v516
    %v2949 = vunpack.c.l.b16 %v517
    %v2950 = vunpack.c.h.b16 %v517
    %v2951 = vunpack.c.l.b16 %v518
    %v2952 = vunpack.c.h.b16 %v518
    %v2953 = vunpack.c.l.b16 %v519
    %v2954 = vunpack.c.h.b16 %v519
    %v2955 = vunpack.c.l.b16 %v520
    %v2956 = vunpack.c.h.b16 %v520
    %v2957 = vunpack.c.l.b16 %v521
    %v2958 = vunpack.c.h.b16 %v521
    %v2959 = vunpack.c.l.b16 %v522
    %v2960 = vunpack.c.h.b16 %v522
    %v2961 = vunpack.c.l.b16 %v523
    %v2962 = vunpack.c.h.b16 %v523
    %v2963 = vunpack.c.l.b16 %v524
    %v2964 = vunpack.c.h.b16 %v524
    %v2965 = vunpack.c.l.b16 %v525
    %v2966 = vunpack.c.h.b16 %v525
    %v2967 = vunpack.c.l.b16 %v526
    %v2968 = vunpack.c.h.b16 %v526
    %v2969 = vunpack.c.l.b16 %v527
    %v2970 = vunpack.c.h.b16 %v527
    %v2971 = vunpack.c.l.b16 %v528
    %v2972 = vunpack.c.h.b16 %v528
    %v2973 = vunpack.c.l.b16 %v529
    %v2974 = vunpack.c.h.b16 %v529
    %v2975 = vunpack.c.l.b16 %v530
    %v2976 = vunpack.c.h.b16 %v530
    %v2977 = vunpack.c.l.b16 %v531
    %v2978 = vunpack.c.h.b16 %v531
    %v2979 = vunpack.c.l.b16 %v532
    %v2980 = vunpack.c.h.b16 %v532
    %v2981 = vunpack.c.l.b16 %v533
    %v2982 = vunpack.c.h.b16 %v533
    %v2983 = vunpack.c.l.b16 %v534
    %v2984 = vunpack.c.h.b16 %v534
    %v2985 = vunpack.c.l.b16 %v535
    %v2986 = vunpack.c.h.b16 %v535
    %v2987 = vunpack.c.l.b16 %v536
    %v2988 = vunpack.c.h.b16 %v536
    %v2989 = vunpack.c.l.b16 %v537
    %v2990 = vunpack.c.h.b16 %v537
    %v2991 = vunpack.c.l.b16 %v538
    %v2992 = vunpack.c.h.b16 %v538
    %v2993 = vunpack.c.l.b16 %v539
    %v2994 = vunpack.c.h.b16 %v539
    %v2995 = vunpack.c.l.b16 %v540
    %v2996 = vunpack.c.h.b16 %v540
    %v2997 = vunpack.c.l.b16 %v541
    %v2998 = vunpack.c.h.b16 %v541
    %v2999 = vunpack.c.l.b16 %v542
    %v3000 = vunpack.c.h.b16 %v542
    %v3001 = vunpack.c.l.b16 %v543
    %v3002 = vunpack.c.h.b16 %v543
    %v3003 = vunpack.c.l.b16 %v544
    %v3004 = vunpack.c.h.b16 %v544
    %v3005 = vunpack.c.l.b16 %v545
    %v3006 = vunpack.c.h.b16 %v545
    %v3007 = vunpack.c.l.b16 %v546
    %v3008 = vunpack.c.h.b16 %v546
    %v3009 = vunpack.c.l.b16 %v547
    %v3010 = vunpack.c.h.b16 %v547
    %v3011 = vunpack.c.l.b16 %v548
    %v3012 = vunpack.c.h.b16 %v548
    %v3013 = vunpack.c.l.b16 %v549
    %v3014 = vunpack.c.h.b16 %v549
    %v3015 = vunpack.c.l.b16 %v550
    %v3016 = vunpack.c.h.b16 %v550
    %v3017 = vunpack.c.l.b16 %v551
    %v3018 = vunpack.c.h.b16 %v551
    %v3019 = vunpack.c.l.b16 %v552
    %v3020 = vunpack.c.h.b16 %v552
    %v3021 = vunpack.c.l.b16 %v553
    %v3022 = vunpack.c.h.b16 %v553
    %v3023 = vunpack.c.l.b16 %v554
    %v3024 = vunpack.c.h.b16 %v554
    %v3025 = vunpack.c.l.b16 %v555
    %v3026 = vunpack.c.h.b16 %v555
    %v3027 = vunpack.c.l.b16 %v556
    %v3028 = vunpack.c.h.b16 %v556
    %v3029 = vunpack.c.l.b16 %v557
    %v3030 = vunpack.c.h.b16 %v557
    %v3031 = vunpack.c.l.b16 %v558
    %v3032 = vunpack.c.h.b16 %v558
    %v3033 = vunpack.c.l.b16 %v559
    %v3034 = vunpack.c.h.b16 %v559
    %v3035 = vunpack.c.l.b16 %v560
    %v3036 = vunpack.c.h.b16 %v560
    %v3037 = vunpack.c.l.b16 %v561
    %v3038 = vunpack.c.h.b16 %v561
    %v3039 = vunpack.c.l.b16 %v562
    %v3040 = vunpack.c.h.b16 %v562
    %v3041 = vunpack.c.l.b16 %v563
    %v3042 = vunpack.c.h.b16 %v563
    %v3043 = vunpack.c.l.b16 %v564
    %v3044 = vunpack.c.h.b16 %v564
    %v3045 = vunpack.c.l.b16 %v565
    %v3046 = vunpack.c.h.b16 %v565
    %v3047 = vunpack.c.l.b16 %v566
    %v3048 = vunpack.c.h.b16 %v566
    %v3049 = vunpack.c.l.b16 %v567
    %v3050 = vunpack.c.h.b16 %v567
    %v3051 = vunpack.c.l.b16 %v568
    %v3052 = vunpack.c.h.b16 %v568
    %v3053 = vunpack.c.l.b16 %v569
    %v3054 = vunpack.c.h.b16 %v569
    %v3055 = vunpack.c.l.b16 %v570
    %v3056 = vunpack.c.h.b16 %v570
    %v3057 = vunpack.c.l.b16 %v571
    %v3058 = vunpack.c.h.b16 %v571
    %v3059 = vunpack.c.l.b16 %v572
    %v3060 = vunpack.c.h.b16 %v572
    %v3061 = vunpack.c.l.b16 %v573
    %v3062 = vunpack.c.h.b16 %v573
    %v3063 = vunpack.c.l.b16 %v574
    %v3064 = vunpack.c.h.b16 %v574
    %v3065 = vunpack.c.l.b16 %v575
    %v3066 = vunpack.c.h.b16 %v575
    %v3067 = vunpack.c.l.b16 %v576
    %v3068 = vunpack.c.h.b16 %v576
    %v3069 = vunpack.c.l.b16 %v577
    %v3070 = vunpack.c.h.b16 %v577
    %v3071 = vunpack.c.l.b16 %v578
    %v3072 = vunpack.c.h.b16 %v578
    %v3073 = vunpack.c.l.b16 %v579
    %v3074 = vunpack.c.h.b16 %v579
    %v3075 = vunpack.c.l.b16 %v580
    %v3076 = vunpack.c.h.b16 %v580
    %v3077 = vunpack.c.l.b16 %v581
    %v3078 = vunpack.c.h.b16 %v581
    %v3079 = vunpack.c.l.b16 %v582
    %v3080 = vunpack.c.h.b16 %v582
    %v3081 = vunpack.c.l.b16 %v583
    %v3082 = vunpack.c.h.b16 %v583
    %v3083 = vunpack.c.l.b16 %v584
    %v3084 = vunpack.c.h.b16 %v584
    %v3085 = vunpack.c.l.b16 %v585
    %v3086 = vunpack.c.h.b16 %v585
    %v3087 = vunpack.c.l.b16 %v586
    %v3088 = vunpack.c.h.b16 %v586
    %v3089 = vunpack.c.l.b16 %v587
    %v3090 = vunpack.c.h.b16 %v587
    %v3091 = vunpack.c.l.b16 %v588
    %v3092 = vunpack.c.h.b16 %v588
    %v3093 = vunpack.c.l.b16 %v589
    %v3094 = vunpack.c.h.b16 %v589
    %v3095 = vunpack.c.l.b16 %v590
    %v3096 = vunpack.c.h.b16 %v590
    %v3097 = vunpack.c.l.b16 %v591
    %v3098 = vunpack.c.h.b16 %v591
    %v3099 = vunpack.c.l.b16 %v592
    %v3100 = vunpack.c.h.b16 %v592
    %v3101 = vunpack.c.l.b16 %v593
    %v3102 = vunpack.c.h.b16 %v593
    %v3103 = vunpack.c.l.b16 %v594
    %v3104 = vunpack.c.h.b16 %v594
    %v3105 = vunpack.c.l.b16 %v595
    %v3106 = vunpack.c.h.b16 %v595
    %v3107 = vunpack.c.l.b16 %v596
    %v3108 = vunpack.c.h.b16 %v596
    %v3109 = vunpack.c.l.b16 %v597
    %v3110 = vunpack.c.h.b16 %v597
    %v3111 = vunpack.c.l.b16 %v598
    %v3112 = vunpack.c.h.b16 %v598
    %v3113 = vunpack.c.l.b16 %v599
    %v3114 = vunpack.c.h.b16 %v599
    %v3115 = vunpack.c.l.b16 %v600
    %v3116 = vunpack.c.h.b16 %v600
    %v3117 = vunpack.c.l.b16 %v601
    %v3118 = vunpack.c.h.b16 %v601
    %v3119 = vunpack.c.l.b16 %v602
    %v3120 = vunpack.c.h.b16 %v602
    %v3121 = vunpack.c.l.b16 %v603
    %v3122 = vunpack.c.h.b16 %v603
    %v3123 = vunpack.c.l.b16 %v604
    %v3124 = vunpack.c.h.b16 %v604
    %v3125 = vunpack.c.l.b16 %v605
    %v3126 = vunpack.c.h.b16 %v605
    %v3127 = vunpack.c.l.b16 %v606
    %v3128 = vunpack.c.h.b16 %v606
    %v3129 = vunpack.c.l.b16 %v607
    %v3130 = vunpack.c.h.b16 %v607
    %v3131 = vunpack.c.l.b16 %v608
    %v3132 = vunpack.c.h.b16 %v608
    %v3133 = vunpack.c.l.b16 %v609
    %v3134 = vunpack.c.h.b16 %v609
    %v3135 = vunpack.c.l.b16 %v610
    %v3136 = vunpack.c.h.b16 %v610
    %v3137 = vunpack.c.l.b16 %v611
    %v3138 = vunpack.c.h.b16 %v611
    %v3139 = vunpack.c.l.b16 %v612
    %v3140 = vunpack.c.h.b16 %v612
    %v3141 = vunpack.c.l.b16 %v613
    %v3142 = vunpack.c.h.b16 %v613
    %v3143 = vunpack.c.l.b16 %v614
    %v3144 = vunpack.c.h.b16 %v614
    %v3145 = vunpack.c.l.b16 %v615
    %v3146 = vunpack.c.h.b16 %v615
    %v3147 = vunpack.c.l.b16 %v616
    %v3148 = vunpack.c.h.b16 %v616
    %v3149 = vunpack.c.l.b16 %v617
    %v3150 = vunpack.c.h.b16 %v617
    %v3151 = vunpack.c.l.b16 %v618
    %v3152 = vunpack.c.h.b16 %v618
    %v3153 = vunpack.c.l.b16 %v619
    %v3154 = vunpack.c.h.b16 %v619
    %v3155 = vunpack.c.l.b16 %v620
    %v3156 = vunpack.c.h.b16 %v620
    %v3157 = vunpack.c.l.b16 %v621
    %v3158 = vunpack.c.h.b16 %v621
    %v3159 = vunpack.c.l.b16 %v622
    %v3160 = vunpack.c.h.b16 %v622
    %v3161 = vunpack.c.l.b16 %v623
    %v3162 = vunpack.c.h.b16 %v623
    %v3163 = vunpack.c.l.b16 %v624
    %v3164 = vunpack.c.h.b16 %v624
    %v3165 = vunpack.c.l.b16 %v625
    %v3166 = vunpack.c.h.b16 %v625
    %v3167 = vunpack.c.l.b16 %v626
    %v3168 = vunpack.c.h.b16 %v626
    %v3169 = vunpack.c.l.b16 %v627
    %v3170 = vunpack.c.h.b16 %v627
    %v3171 = vunpack.c.l.b16 %v628
    %v3172 = vunpack.c.h.b16 %v628
    %v3173 = vunpack.c.l.b16 %v629
    %v3174 = vunpack.c.h.b16 %v629
    %v3175 = vunpack.c.l.b16 %v630
    %v3176 = vunpack.c.h.b16 %v630
    %v3177 = vunpack.c.l.b16 %v631
    %v3178 = vunpack.c.h.b16 %v631
    %v3179 = vunpack.c.l.b16 %v632
    %v3180 = vunpack.c.h.b16 %v632
    %v3181 = vunpack.c.l.b16 %v633
    %v3182 = vunpack.c.h.b16 %v633
    %v3183 = vunpack.c.l.b16 %v634
    %v3184 = vunpack.c.h.b16 %v634
    %v3185 = vunpack.c.l.b16 %v635
    %v3186 = vunpack.c.h.b16 %v635
    %v3187 = vunpack.c.l.b16 %v636
    %v3188 = vunpack.c.h.b16 %v636
    %v3189 = vunpack.c.l.b16 %v637
    %v3190 = vunpack.c.h.b16 %v637
    %v3191 = vunpack.c.l.b16 %v638
    %v3192 = vunpack.c.h.b16 %v638
    %v3193 = vunpack.c.l.b16 %v639
    %v3194 = vunpack.c.h.b16 %v639
    %v3195 = vunpack.c.l.b16 %v640
    %v3196 = vunpack.c.h.b16 %v640
    %v3197 = vunpack.c.l.b16 %v641
    %v3198 = vunpack.c.h.b16 %v641
    %v3199 = vunpack.c.l.b16 %v642
    %v3200 = vunpack.c.h.b16 %v642
    %v3201 = vunpack.c.l.b16 %v643
    %v3202 = vunpack.c.h.b16 %v643
    %v3203 = vunpack.c.l.b16 %v644
    %v3204 = vunpack.c.h.b16 %v644
    %v3205 = vunpack.c.l.b16 %v645
    %v3206 = vunpack.c.h.b16 %v645
    %v3207 = vunpack.c.l.b16 %v646
    %v3208 = vunpack.c.h.b16 %v646
    %v3209 = vunpack.c.l.b16 %v647
    %v3210 = vunpack.c.h.b16 %v647
    %v3211 = vunpack.c.l.b16 %v648
    %v3212 = vunpack.c.h.b16 %v648
    %v3213 = vunpack.c.l.b16 %v649
    %v3214 = vunpack.c.h.b16 %v649
    %v3215 = vunpack.c.l.b16 %v650
    %v3216 = vunpack.c.h.b16 %v650
    %v3217 = vunpack.c.l.b16 %v651
    %v3218 = vunpack.c.h.b16 %v651
    %v3219 = vunpack.c.l.b16 %v652
    %v3220 = vunpack.c.h.b16 %v652
    %v3221 = vunpack.c.l.b16 %v653
    %v3222 = vunpack.c.h.b16 %v653
    %v3223 = vunpack.c.l.b16 %v654
    %v3224 = vunpack.c.h.b16 %v654
    %v3225 = vunpack.c.l.b16 %v655
    %v3226 = vunpack.c.h.b16 %v655
    %v3227 = vunpack.c.l.b16 %v656
    %v3228 = vunpack.c.h.b16 %v656
    %v3229 = vunpack.c.l.b16 %v657
    %v3230 = vunpack.c.h.b16 %v657
    %v3231 = vunpack.c.l.b16 %v658
    %v3232 = vunpack.c.h.b16 %v658
    %v3233 = vunpack.c.l.b16 %v659
    %v3234 = vunpack.c.h.b16 %v659
    %v3235 = vunpack.c.l.b16 %v660
    %v3236 = vunpack.c.h.b16 %v660
    %v3237 = vunpack.c.l.b16 %v661
    %v3238 = vunpack.c.h.b16 %v661
    %v3239 = vunpack.c.l.b16 %v662
    %v3240 = vunpack.c.h.b16 %v662
    %v3241 = vunpack.c.l.b16 %v663
    %v3242 = vunpack.c.h.b16 %v663
    %v3243 = vunpack.c.l.b16 %v664
    %v3244 = vunpack.c.h.b16 %v664
    %v3245 = vunpack.c.l.b16 %v665
    %v3246 = vunpack.c.h.b16 %v665
    %v3247 = vunpack.c.l.b16 %v666
    %v3248 = vunpack.c.h.b16 %v666
    %v3249 = vunpack.c.l.b16 %v667
    %v3250 = vunpack.c.h.b16 %v667
    %v3251 = vunpack.c.l.b16 %v668
    %v3252 = vunpack.c.h.b16 %v668
    %v3253 = vunpack.c.l.b16 %v669
    %v3254 = vunpack.c.h.b16 %v669
    %v3255 = vunpack.c.l.b16 %v670
    %v3256 = vunpack.c.h.b16 %v670
    %v3257 = vunpack.c.l.b16 %v671
    %v3258 = vunpack.c.h.b16 %v671
    %v3259 = vunpack.c.l.b16 %v672
    %v3260 = vunpack.c.h.b16 %v672
    %v3261 = vunpack.c.l.b16 %v673
    %v3262 = vunpack.c.h.b16 %v673
    %v3263 = vunpack.c.l.b16 %v674
    %v3264 = vunpack.c.h.b16 %v674
    %v3265 = vunpack.c.l.b16 %v675
    %v3266 = vunpack.c.h.b16 %v675
    %v3267 = vunpack.c.l.b16 %v676
    %v3268 = vunpack.c.h.b16 %v676
    %v3269 = vunpack.c.l.b16 %v677
    %v3270 = vunpack.c.h.b16 %v677
    %v3271 = vunpack.c.l.b16 %v678
    %v3272 = vunpack.c.h.b16 %v678
    %v3273 = vunpack.c.l.b16 %v679
    %v3274 = vunpack.c.h.b16 %v679
    %v3275 = vunpack.c.l.b16 %v680
    %v3276 = vunpack.c.h.b16 %v680
    %v3277 = vunpack.c.l.b16 %v681
    %v3278 = vunpack.c.h.b16 %v681
    %v3279 = vunpack.c.l.b16 %v682
    %v3280 = vunpack.c.h.b16 %v682
    %v3281 = vunpack.c.l.b16 %v683
    %v3282 = vunpack.c.h.b16 %v683
    %v3283 = vunpack.c.l.b16 %v684
    %v3284 = vunpack.c.h.b16 %v684
    %v3285 = vunpack.c.l.b16 %v685
    %v3286 = vunpack.c.h.b16 %v685
    %v3287 = vunpack.c.l.b16 %v686
    %v3288 = vunpack.c.h.b16 %v686
    %v3289 = vunpack.c.l.b16 %v687
    %v3290 = vunpack.c.h.b16 %v687
    %v3291 = vunpack.c.l.b16 %v688
    %v3292 = vunpack.c.h.b16 %v688
    %v3293 = vunpack.c.l.b16 %v689
    %v3294 = vunpack.c.h.b16 %v689
    %v3295 = vunpack.c.l.b16 %v690
    %v3296 = vunpack.c.h.b16 %v690
    %v3297 = vunpack.c.l.b16 %v691
    %v3298 = vunpack.c.h.b16 %v691
    %v3299 = vunpack.c.l.b16 %v692
    %v3300 = vunpack.c.h.b16 %v692
    %v3301 = vunpack.c.l.b16 %v693
    %v3302 = vunpack.c.h.b16 %v693
    %v3303 = vunpack.c.l.b16 %v694
    %v3304 = vunpack.c.h.b16 %v694
    %v3305 = vunpack.c.l.b16 %v695
    %v3306 = vunpack.c.h.b16 %v695
    %v3307 = vunpack.c.l.b16 %v696
    %v3308 = vunpack.c.h.b16 %v696
    %v3309 = vunpack.c.l.b16 %v697
    %v3310 = vunpack.c.h.b16 %v697
    %v3311 = vunpack.c.l.b16 %v698
    %v3312 = vunpack.c.h.b16 %v698
    %v3313 = vunpack.c.l.b16 %v699
    %v3314 = vunpack.c.h.b16 %v699
    %v3315 = vunpack.c.l.b16 %v700
    %v3316 = vunpack.c.h.b16 %v700
    %v3317 = vunpack.c.l.b16 %v701
    %v3318 = vunpack.c.h.b16 %v701
    %v3319 = vunpack.c.l.b16 %v702
    %v3320 = vunpack.c.h.b16 %v702
    %v3321 = vunpack.c.l.b16 %v703
    %v3322 = vunpack.c.h.b16 %v703
    %v3323 = vunpack.c.l.b16 %v704
    %v3324 = vunpack.c.h.b16 %v704
    %v3325 = vunpack.c.l.b16 %v705
    %v3326 = vunpack.c.h.b16 %v705
    %v3327 = vunpack.c.l.b16 %v706
    %v3328 = vunpack.c.h.b16 %v706
    %v3329 = vunpack.c.l.b16 %v707
    %v3330 = vunpack.c.h.b16 %v707
    %v3331 = vunpack.c.l.b16 %v708
    %v3332 = vunpack.c.h.b16 %v708
    %v3333 = vunpack.c.l.b16 %v709
    %v3334 = vunpack.c.h.b16 %v709
    %v3335 = vunpack.c.l.b16 %v710
    %v3336 = vunpack.c.h.b16 %v710
    %v3337 = vunpack.c.l.b16 %v711
    %v3338 = vunpack.c.h.b16 %v711
    %v3339 = vunpack.c.l.b16 %v712
    %v3340 = vunpack.c.h.b16 %v712
    %v3341 = vunpack.c.l.b16 %v713
    %v3342 = vunpack.c.h.b16 %v713
    %v3343 = vunpack.c.l.b16 %v714
    %v3344 = vunpack.c.h.b16 %v714
    %v3345 = vunpack.c.l.b16 %v715
    %v3346 = vunpack.c.h.b16 %v715
    %v3347 = vunpack.c.l.b16 %v716
    %v3348 = vunpack.c.h.b16 %v716
    %v3349 = vunpack.c.l.b16 %v717
    %v3350 = vunpack.c.h.b16 %v717
    %v3351 = vunpack.c.l.b16 %v718
    %v3352 = vunpack.c.h.b16 %v718
    %v3353 = vunpack.c.l.b16 %v719
    %v3354 = vunpack.c.h.b16 %v719
    %v3355 = vunpack.c.l.b16 %v720
    %v3356 = vunpack.c.h.b16 %v720
    %v3357 = vunpack.c.l.b16 %v721
    %v3358 = vunpack.c.h.b16 %v721
    %v3359 = vunpack.c.l.b16 %v722
    %v3360 = vunpack.c.h.b16 %v722
    %v3361 = vunpack.c.l.b16 %v723
    %v3362 = vunpack.c.h.b16 %v723
    %v3363 = vunpack.c.l.b16 %v724
    %v3364 = vunpack.c.h.b16 %v724
    %v3365 = vunpack.c.l.b16 %v725
    %v3366 = vunpack.c.h.b16 %v725
    %v3367 = vunpack.c.l.b16 %v726
    %v3368 = vunpack.c.h.b16 %v726
    %v3369 = vunpack.c.l.b16 %v727
    %v3370 = vunpack.c.h.b16 %v727
    %v3371 = vunpack.c.l.b16 %v728
    %v3372 = vunpack.c.h.b16 %v728
    %v3373 = vunpack.c.l.b16 %v729
    %v3374 = vunpack.c.h.b16 %v729
    %v3375 = vunpack.c.l.b16 %v730
    %v3376 = vunpack.c.h.b16 %v730
    %v3377 = vunpack.c.l.b16 %v731
    %v3378 = vunpack.c.h.b16 %v731
    %v3379 = vunpack.c.l.b16 %v732
    %v3380 = vunpack.c.h.b16 %v732
    %v3381 = vunpack.c.l.b16 %v733
    %v3382 = vunpack.c.h.b16 %v733
    %v3383 = vunpack.c.l.b16 %v734
    %v3384 = vunpack.c.h.b16 %v734
    %v3385 = vunpack.c.l.b16 %v735
    %v3386 = vunpack.c.h.b16 %v735
    %v3387 = vunpack.c.l.b16 %v736
    %v3388 = vunpack.c.h.b16 %v736
    %v3389 = vunpack.c.l.b16 %v737
    %v3390 = vunpack.c.h.b16 %v737
    %v3391 = vunpack.c.l.b16 %v738
    %v3392 = vunpack.c.h.b16 %v738
    %v3393 = vunpack.c.l.b16 %v739
    %v3394 = vunpack.c.h.b16 %v739
    %v3395 = vunpack.c.l.b16 %v740
    %v3396 = vunpack.c.h.b16 %v740
    %v3397 = vunpack.c.l.b16 %v741
    %v3398 = vunpack.c.h.b16 %v741
    %v3399 = vunpack.c.l.b16 %v742
    %v3400 = vunpack.c.h.b16 %v742
    %v3401 = vunpack.c.l.b16 %v743
    %v3402 = vunpack.c.h.b16 %v743
    %v3403 = vunpack.c.l.b16 %v744
    %v3404 = vunpack.c.h.b16 %v744
    %v3405 = vunpack.c.l.b16 %v745
    %v3406 = vunpack.c.h.b16 %v745
    %v3407 = vunpack.c.l.b16 %v746
    %v3408 = vunpack.c.h.b16 %v746
    %v3409 = vunpack.c.l.b16 %v747
    %v3410 = vunpack.c.h.b16 %v747
    %v3411 = vunpack.c.l.b16 %v748
    %v3412 = vunpack.c.h.b16 %v748
    %v3413 = vunpack.c.l.b16 %v749
    %v3414 = vunpack.c.h.b16 %v749
    %v3415 = vunpack.c.l.b16 %v750
    %v3416 = vunpack.c.h.b16 %v750
    %v3417 = vunpack.c.l.b16 %v751
    %v3418 = vunpack.c.h.b16 %v751
    %v3419 = vunpack.c.l.b16 %v752
    %v3420 = vunpack.c.h.b16 %v752
    %v3421 = vunpack.c.l.b16 %v753
    %v3422 = vunpack.c.h.b16 %v753
    %v3423 = vunpack.c.l.b16 %v754
    %v3424 = vunpack.c.h.b16 %v754
    %v3425 = vunpack.c.l.b16 %v755
    %v3426 = vunpack.c.h.b16 %v755
    %v3427 = vunpack.c.l.b16 %v756
    %v3428 = vunpack.c.h.b16 %v756
    %v3429 = vunpack.c.l.b16 %v757
    %v3430 = vunpack.c.h.b16 %v757
    %v3431 = vunpack.c.l.b16 %v758
    %v3432 = vunpack.c.h.b16 %v758
    %v3433 = vunpack.c.l.b16 %v759
    %v3434 = vunpack.c.h.b16 %v759
    %v3435 = vunpack.c.l.b16 %v760
    %v3436 = vunpack.c.h.b16 %v760
    %v3437 = vunpack.c.l.b16 %v761
    %v3438 = vunpack.c.h.b16 %v761
    %v3439 = vunpack.c.l.b16 %v762
    %v3440 = vunpack.c.h.b16 %v762
    %v3441 = vunpack.c.l.b16 %v763
    %v3442 = vunpack.c.h.b16 %v763
    %v3443 = vunpack.c.l.b16 %v764
    %v3444 = vunpack.c.h.b16 %v764
    %v3445 = vunpack.c.l.b16 %v765
    %v3446 = vunpack.c.h.b16 %v765
    %v3447 = vunpack.c.l.b16 %v766
    %v3448 = vunpack.c.h.b16 %v766
    %v3449 = vunpack.c.l.b16 %v767
    %v3450 = vunpack.c.h.b16 %v767
    %v3451 = vunpack.c.l.b16 %v768
    %v3452 = vunpack.c.h.b16 %v768
    %v3453 = vunpack.c.l.b16 %v769
    %v3454 = vunpack.c.h.b16 %v769
    %v3455 = vunpack.c.l.b16 %v770
    %v3456 = vunpack.c.h.b16 %v770
    %v3457 = vunpack.c.l.b16 %v771
    %v3458 = vunpack.c.h.b16 %v771
    %v3459 = vunpack.c.l.b16 %v772
    %v3460 = vunpack.c.h.b16 %v772
    %v3461 = vunpack.c.l.b16 %v773
    %v3462 = vunpack.c.h.b16 %v773
    %v3463 = vunpack.c.l.b16 %v774
    %v3464 = vunpack.c.h.b16 %v774
    %v3465 = vunpack.c.l.b16 %v775
    %v3466 = vunpack.c.h.b16 %v775
    %v3467 = vunpack.c.l.b16 %v776
    %v3468 = vunpack.c.h.b16 %v776
    %v3469 = vunpack.c.l.b16 %v777
    %v3470 = vunpack.c.h.b16 %v777
    %v3471 = vunpack.c.l.b16 %v778
    %v3472 = vunpack.c.h.b16 %v778
    %v3473 = vunpack.c.l.b16 %v779
    %v3474 = vunpack.c.h.b16 %v779
    %v3475 = vunpack.c.l.b16 %v780
    %v3476 = vunpack.c.h.b16 %v780
    %v3477 = vunpack.c.l.b16 %v781
    %v3478 = vunpack.c.h.b16 %v781
    %v3479 = vunpack.c.l.b16 %v782
    %v3480 = vunpack.c.h.b16 %v782
    %v3481 = vunpack.c.l.b16 %v783
    %v3482 = vunpack.c.h.b16 %v783
    %v3483 = vunpack.c.l.b16 %v784
    %v3484 = vunpack.c.h.b16 %v784
    %v3485 = vunpack.c.l.b16 %v785
    %v3486 = vunpack.c.h.b16 %v785
    %v3487 = vunpack.c.l.b16 %v786
    %v3488 = vunpack.c.h.b16 %v786
    %v3489 = vunpack.c.l.b16 %v787
    %v3490 = vunpack.c.h.b16 %v787
    %v3491 = vunpack.c.l.b16 %v788
    %v3492 = vunpack.c.h.b16 %v788
    %v3493 = vunpack.c.l.b16 %v789
    %v3494 = vunpack.c.h.b16 %v789
    %v3495 = vunpack.c.l.b16 %v790
    %v3496 = vunpack.c.h.b16 %v790
    %v3497 = vunpack.c.l.b16 %v791
    %v3498 = vunpack.c.h.b16 %v791
    %v3499 = vunpack.c.l.b16 %v792
    %v3500 = vunpack.c.h.b16 %v792
    %v3501 = vunpack.c.l.b16 %v793
    %v3502 = vunpack.c.h.b16 %v793
    %v3503 = vunpack.c.l.b16 %v794
    %v3504 = vunpack.c.h.b16 %v794
    %v3505 = vunpack.c.l.b16 %v795
    %v3506 = vunpack.c.h.b16 %v795
    %v3507 = vunpack.c.l.b16 %v796
    %v3508 = vunpack.c.h.b16 %v796
    %v3509 = vunpack.c.l.b16 %v797
    %v3510 = vunpack.c.h.b16 %v797
    %v3511 = vunpack.c.l.b16 %v798
    %v3512 = vunpack.c.h.b16 %v798
    %v3513 = vunpack.c.l.b16 %v799
    %v3514 = vunpack.c.h.b16 %v799
    %v3515 = vunpack.c.l.b16 %v800
    %v3516 = vunpack.c.h.b16 %v800
    %v3517 = vunpack.c.l.b16 %v801
    %v3518 = vunpack.c.h.b16 %v801
    %v3519 = vunpack.c.l.b16 %v802
    %v3520 = vunpack.c.h.b16 %v802
    %v3521 = vunpack.c.l.b16 %v803
    %v3522 = vunpack.c.h.b16 %v803
    %v3523 = vunpack.c.l.b16 %v804
    %v3524 = vunpack.c.h.b16 %v804
    %v3525 = vunpack.c.l.b16 %v805
    %v3526 = vunpack.c.h.b16 %v805
    %v3527 = vunpack.c.l.b16 %v806
    %v3528 = vunpack.c.h.b16 %v806
    %v3529 = vunpack.c.l.b16 %v807
    %v3530 = vunpack.c.h.b16 %v807
    %v3531 = vunpack.c.l.b16 %v808
    %v3532 = vunpack.c.h.b16 %v808
    %v3533 = vunpack.c.l.b16 %v809
    %v3534 = vunpack.c.h.b16 %v809
    %v3535 = vunpack.c.l.b16 %v810
    %v3536 = vunpack.c.h.b16 %v810
    %v3537 = vunpack.c.l.b16 %v811
    %v3538 = vunpack.c.h.b16 %v811
    %v3539 = vunpack.c.l.b16 %v812
    %v3540 = vunpack.c.h.b16 %v812
    %v3541 = vpack.c.b16 %v1975, %v1973
    %v3542 = vpack.c.b16 %v1976, %v1974
    %v3543 = vpack.c.b16 %v1979, %v1977
    %v3544 = vpack.c.b16 %v1980, %v1978
    %v3545 = vpack.c.b16 %v1983, %v1981
    %v3546 = vpack.c.b16 %v1984, %v1982
    %v3547 = vpack.c.b16 %v1987, %v1985
    %v3548 = vpack.c.b16 %v1988, %v1986
    %v3549 = vpack.c.b16 %v1991, %v1989
    %v3550 = vpack.c.b16 %v1992, %v1990
    %v3551 = vpack.c.b16 %v1995, %v1993
    %v3552 = vpack.c.b16 %v1996, %v1994
    %v3553 = vpack.c.b16 %v1999, %v1997
    %v3554 = vpack.c.b16 %v2000, %v1998
    %v3555 = vpack.c.b16 %v2003, %v2001
    %v3556 = vpack.c.b16 %v2004, %v2002
    %v3557 = vpack.c.b16 %v2007, %v2005
    %v3558 = vpack.c.b16 %v2008, %v2006
    %v3559 = vpack.c.b16 %v2011, %v2009
    %v3560 = vpack.c.b16 %v2012, %v2010
    %v3561 = vpack.c.b16 %v2015, %v2013
    %v3562 = vpack.c.b16 %v2016, %v2014
    %v3563 = vpack.c.b16 %v2019, %v2017
    %v3564 = vpack.c.b16 %v2020, %v2018
    %v3565 = vpack.c.b16 %v2023, %v2021
    %v3566 = vpack.c.b16 %v2024, %v2022
    %v3567 = vpack.c.b16 %v2027, %v2025
    %v3568 = vpack.c.b16 %v2028, %v2026
    %v3569 = vpack.c.b16 %v2031, %v2029
    %v3570 = vpack.c.b16 %v2032, %v2030
    %v3571 = vpack.c.b16 %v2035, %v2033
    %v3572 = vpack.c.b16 %v2036, %v2034
    %v3573 = vpack.c.b16 %v2039, %v2037
    %v3574 = vpack.c.b16 %v2040, %v2038
    %v3575 = vpack.c.b16 %v2043, %v2041
    %v3576 = vpack.c.b16 %v2044, %v2042
    %v3577 = vpack.c.b16 %v2047, %v2045
    %v3578 = vpack.c.b16 %v2048, %v2046
    %v3579 = vpack.c.b16 %v2051, %v2049
    %v3580 = vpack.c.b16 %v2052, %v2050
    %v3581 = vpack.c.b16 %v2055, %v2053
    %v3582 = vpack.c.b16 %v2056, %v2054
    %v3583 = vpack.c.b16 %v2059, %v2057
    %v3584 = vpack.c.b16 %v2060, %v2058
    %v3585 = vpack.c.b16 %v2063, %v2061
    %v3586 = vpack.c.b16 %v2064, %v2062
    %v3587 = vpack.c.b16 %v2067, %v2065
    %v3588 = vpack.c.b16 %v2068, %v2066
    %v3589 = vpack.c.b16 %v2071, %v2069
    %v3590 = vpack.c.b16 %v2072, %v2070
    %v3591 = vpack.c.b16 %v2075, %v2073
    %v3592 = vpack.c.b16 %v2076, %v2074
    %v3593 = vpack.c.b16 %v2079, %v2077
    %v3594 = vpack.c.b16 %v2080, %v2078
    %v3595 = vpack.c.b16 %v2083, %v2081
    %v3596 = vpack.c.b16 %v2084, %v2082
    %v3597 = vpack.c.b16 %v2087, %v2085
    %v3598 = vpack.c.b16 %v2088, %v2086
    %v3599 = vpack.c.b16 %v2091, %v2089
    %v3600 = vpack.c.b16 %v2092, %v2090
    %v3601 = vpack.c.b16 %v2095, %v2093
    %v3602 = vpack.c.b16 %v2096, %v2094
    %v3603 = vpack.c.b16 %v2099, %v2097
    %v3604 = vpack.c.b16 %v2100, %v2098
    %v3605 = vpack.c.b16 %v2103, %v2101
    %v3606 = vpack.c.b16 %v2104, %v2102
    %v3607 = vpack.c.b16 %v2107, %v2105
    %v3608 = vpack.c.b16 %v2108, %v2106
    %v3609 = vpack.c.b16 %v2111, %v2109
    %v3610 = vpack.c.b16 %v2112, %v2110
    %v3611 = vpack.c.b16 %v2115, %v2113
    %v3612 = vpack.c.b16 %v2116, %v2114
    %v3613 = vpack.c.b16 %v2119, %v2117
    %v3614 = vpack.c.b16 %v2120, %v2118
    %v3615 = vpack.c.b16 %v2123, %v2121
    %v3616 = vpack.c.b16 %v2124, %v2122
    %v3617 = vpack.c.b16 %v2127, %v2125
    %v3618 = vpack.c.b16 %v2128, %v2126
    %v3619 = vpack.c.b16 %v2131, %v2129
    %v3620 = vpack.c.b16 %v2132, %v2130
    %v3621 = vpack.c.b16 %v2135, %v2133
    %v3622 = vpack.c.b16 %v2136, %v2134
    %v3623 = vpack.c.b16 %v2139, %v2137
    %v3624 = vpack.c.b16 %v2140, %v2138
    %v3625 = vpack.c.b16 %v2143, %v2141
    %v3626 = vpack.c.b16 %v2144, %v2142
    %v3627 = vpack.c.b16 %v2147, %v2145
    %v3628 = vpack.c.b16 %v2148, %v2146
    %v3629 = vpack.c.b16 %v2151, %v2149
    %v3630 = vpack.c.b16 %v2152, %v2150
    %v3631 = vpack.c.b16 %v2155, %v2153
    %v3632 = vpack.c.b16 %v2156, %v2154
    %v3633 = vpack.c.b16 %v2159, %v2157
    %v3634 = vpack.c.b16 %v2160, %v2158
    %v3635 = vpack.c.b16 %v2163, %v2161
    %v3636 = vpack.c.b16 %v2164, %v2162
    %v3637 = vpack.c.b16 %v2167, %v2165
    %v3638 = vpack.c.b16 %v2168, %v2166
    %v3639 = vpack.c.b16 %v2171, %v2169
    %v3640 = vpack.c.b16 %v2172, %v2170
    %v3641 = vpack.c.b16 %v2175, %v2173
    %v3642 = vpack.c.b16 %v2176, %v2174
    %v3643 = vpack.c.b16 %v2179, %v2177
    %v3644 = vpack.c.b16 %v2180, %v2178
    %v3645 = vpack.c.b16 %v2183, %v2181
    %v3646 = vpack.c.b16 %v2184, %v2182
    %v3647 = vpack.c.b16 %v2187, %v2185
    %v3648 = vpack.c.b16 %v2188, %v2186
    %v3649 = vpack.c.b16 %v2191, %v2189
    %v3650 = vpack.c.b16 %v2192, %v2190
    %v3651 = vpack.c.b16 %v2195, %v2193
    %v3652 = vpack.c.b16 %v2196, %v2194
    %v3653 = vpack.c.b16 %v2199, %v2197
    %v3654 = vpack.c.b16 %v2200, %v2198
    %v3655 = vpack.c.b16 %v2203, %v2201
    %v3656 = vpack.c.b16 %v2204, %v2202
    %v3657 = vpack.c.b16 %v2207, %v2205
    %v3658 = vpack.c.b16 %v2208, %v2206
    %v3659 = vpack.c.b16 %v2211, %v2209
    %v3660 = vpack.c.b16 %v2212, %v2210
    %v3661 = vpack.c.b16 %v2215, %v2213
    %v3662 = vpack.c.b16 %v2216, %v2214
    %v3663 = vpack.c.b16 %v2219, %v2217
    %v3664 = vpack.c.b16 %v2220, %v2218
    %v3665 = vpack.c.b16 %v2223, %v2221
    %v3666 = vpack.c.b16 %v2224, %v2222
    %v3667 = vpack.c.b16 %v2227, %v2225
    %v3668 = vpack.c.b16 %v2228, %v2226
    %v3669 = vpack.c.b16 %v2231, %v2229
    %v3670 = vpack.c.b16 %v2232, %v2230
    %v3671 = vpack.c.b16 %v2235, %v2233
    %v3672 = vpack.c.b16 %v2236, %v2234
    %v3673 = vpack.c.b16 %v2239, %v2237
    %v3674 = vpack.c.b16 %v2240, %v2238
    %v3675 = vpack.c.b16 %v2243, %v2241
    %v3676 = vpack.c.b16 %v2244, %v2242
    %v3677 = vpack.c.b16 %v2247, %v2245
    %v3678 = vpack.c.b16 %v2248, %v2246
    %v3679 = vpack.c.b16 %v2251, %v2249
    %v3680 = vpack.c.b16 %v2252, %v2250
    %v3681 = vpack.c.b16 %v2255, %v2253
    %v3682 = vpack.c.b16 %v2256, %v2254
    %v3683 = vpack.c.b16 %v2259, %v2257
    %v3684 = vpack.c.b16 %v2260, %v2258
    %v3685 = vpack.c.b16 %v2263, %v2261
    %v3686 = vpack.c.b16 %v2264, %v2262
    %v3687 = vpack.c.b16 %v2267, %v2265
    %v3688 = vpack.c.b16 %v2268, %v2266
    %v3689 = vpack.c.b16 %v2271, %v2269
    %v3690 = vpack.c.b16 %v2272, %v2270
    %v3691 = vpack.c.b16 %v2275, %v2273
    %v3692 = vpack.c.b16 %v2276, %v2274
    %v3693 = vpack.c.b16 %v2279, %v2277
    %v3694 = vpack.c.b16 %v2280, %v2278
    %v3695 = vpack.c.b16 %v2283, %v2281
    %v3696 = vpack.c.b16 %v2284, %v2282
    %v3697 = vpack.c.b16 %v2287, %v2285
    %v3698 = vpack.c.b16 %v2288, %v2286
    %v3699 = vpack.c.b16 %v2291, %v2289
    %v3700 = vpack.c.b16 %v2292, %v2290
    %v3701 = vpack.c.b16 %v2295, %v2293
    %v3702 = vpack.c.b16 %v2296, %v2294
    %v3703 = vpack.c.b16 %v2299, %v2297
    %v3704 = vpack.c.b16 %v2300, %v2298
    %v3705 = vpack.c.b16 %v2303, %v2301
    %v3706 = vpack.c.b16 %v2304, %v2302
    %v3707 = vpack.c.b16 %v2307, %v2305
    %v3708 = vpack.c.b16 %v2308, %v2306
    %v3709 = vpack.c.b16 %v2311, %v2309
    %v3710 = vpack.c.b16 %v2312, %v2310
    %v3711 = vpack.c.b16 %v2315, %v2313
    %v3712 = vpack.c.b16 %v2316, %v2314
    %v3713 = vpack.c.b16 %v2319, %v2317
    %v3714 = vpack.c.b16 %v2320, %v2318
    %v3715 = vpack.c.b16 %v2323, %v2321
    %v3716 = vpack.c.b16 %v2324, %v2322
    %v3717 = vpack.c.b16 %v2327, %v2325
    %v3718 = vpack.c.b16 %v2328, %v2326
    %v3719 = vpack.c.b16 %v2331, %v2329
    %v3720 = vpack.c.b16 %v2332, %v2330
    %v3721 = vpack.c.b16 %v2335, %v2333
    %v3722 = vpack.c.b16 %v2336, %v2334
    %v3723 = vpack.c.b16 %v2339, %v2337
    %v3724 = vpack.c.b16 %v2340, %v2338
    %v3725 = vpack.c.b16 %v2343, %v2341
    %v3726 = vpack.c.b16 %v2344, %v2342
    %v3727 = vpack.c.b16 %v2347, %v2345
    %v3728 = vpack.c.b16 %v2348, %v2346
    %v3729 = vpack.c.b16 %v2351, %v2349
    %v3730 = vpack.c.b16 %v2352, %v2350
    %v3731 = vpack.c.b16 %v2355, %v2353
    %v3732 = vpack.c.b16 %v2356, %v2354
    %v3733 = vpack.c.b16 %v2359, %v2357
    %v3734 = vpack.c.b16 %v2360, %v2358
    %v3735 = vpack.c.b16 %v2363, %v2361
    %v3736 = vpack.c.b16 %v2364, %v2362
    %v3737 = vpack.c.b16 %v2367, %v2365
    %v3738 = vpack.c.b16 %v2368, %v2366
    %v3739 = vpack.c.b16 %v2371, %v2369
    %v3740 = vpack.c.b16 %v2372, %v2370
    %v3741 = vpack.c.b16 %v2375, %v2373
    %v3742 = vpack.c.b16 %v2376, %v2374
    %v3743 = vpack.c.b16 %v2379, %v2377
    %v3744 = vpack.c.b16 %v2380, %v2378
    %v3745 = vpack.c.b16 %v2383, %v2381
    %v3746 = vpack.c.b16 %v2384, %v2382
    %v3747 = vpack.c.b16 %v2387, %v2385
    %v3748 = vpack.c.b16 %v2388, %v2386
    %v3749 = vpack.c.b16 %v2391, %v2389
    %v3750 = vpack.c.b16 %v2392, %v2390
    %v3751 = vpack.c.b16 %v2395, %v2393
    %v3752 = vpack.c.b16 %v2396, %v2394
    %v3753 = vpack.c.b16 %v2399, %v2397
    %v3754 = vpack.c.b16 %v2400, %v2398
    %v3755 = vpack.c.b16 %v2403, %v2401
    %v3756 = vpack.c.b16 %v2404, %v2402
    %v3757 = vpack.c.b16 %v2407, %v2405
    %v3758 = vpack.c.b16 %v2408, %v2406
    %v3759 = vpack.c.b16 %v2411, %v2409
    %v3760 = vpack.c.b16 %v2412, %v2410
    %v3761 = vpack.c.b16 %v2415, %v2413
    %v3762 = vpack.c.b16 %v2416, %v2414
    %v3763 = vpack.c.b16 %v2419, %v2417
    %v3764 = vpack.c.b16 %v2420, %v2418
    %v3765 = vpack.c.b16 %v2423, %v2421
    %v3766 = vpack.c.b16 %v2424, %v2422
    %v3767 = vpack.c.b16 %v2427, %v2425
    %v3768 = vpack.c.b16 %v2428, %v2426
    %v3769 = vpack.c.b16 %v2431, %v2429
    %v3770 = vpack.c.b16 %v2432, %v2430
    %v3771 = vpack.c.b16 %v2435, %v2433
    %v3772 = vpack.c.b16 %v2436, %v2434
    %v3773 = vpack.c.b16 %v2439, %v2437
    %v3774 = vpack.c.b16 %v2440, %v2438
    %v3775 = vpack.c.b16 %v2443, %v2441
    %v3776 = vpack.c.b16 %v2444, %v2442
    %v3777 = vpack.c.b16 %v2447, %v2445
    %v3778 = vpack.c.b16 %v2448, %v2446
    %v3779 = vpack.c.b16 %v2451, %v2449
    %v3780 = vpack.c.b16 %v2452, %v2450
    %v3781 = vpack.c.b16 %v2455, %v2453
    %v3782 = vpack.c.b16 %v2456, %v2454
    %v3783 = vpack.c.b16 %v2459, %v2457
    %v3784 = vpack.c.b16 %v2460, %v2458
    %v3785 = vpack.c.b16 %v2463, %v2461
    %v3786 = vpack.c.b16 %v2464, %v2462
    %v3787 = vpack.c.b16 %v2467, %v2465
    %v3788 = vpack.c.b16 %v2468, %v2466
    %v3789 = vpack.c.b16 %v2471, %v2469
    %v3790 = vpack.c.b16 %v2472, %v2470
    %v3791 = vpack.c.b16 %v2475, %v2473
    %v3792 = vpack.c.b16 %v2476, %v2474
    %v3793 = vpack.c.b16 %v2479, %v2477
    %v3794 = vpack.c.b16 %v2480, %v2478
    %v3795 = vpack.c.b16 %v2483, %v2481
    %v3796 = vpack.c.b16 %v2484, %v2482
    %v3797 = vpack.c.b16 %v2487, %v2485
    %v3798 = vpack.c.b16 %v2488, %v2486
    %v3799 = vpack.c.b16 %v2491, %v2489
    %v3800 = vpack.c.b16 %v2492, %v2490
    %v3801 = vpack.c.b16 %v2495, %v2493
    %v3802 = vpack.c.b16 %v2496, %v2494
    %v3803 = vpack.c.b16 %v2499, %v2497
    %v3804 = vpack.c.b16 %v2500, %v2498
    %v3805 = vpack.c.b16 %v2503, %v2501
    %v3806 = vpack.c.b16 %v2504, %v2502
    %v3807 = vpack.c.b16 %v2507, %v2505
    %v3808 = vpack.c.b16 %v2508, %v2506
    %v3809 = vpack.c.b16 %v2511, %v2509
    %v3810 = vpack.c.b16 %v2512, %v2510
    %v3811 = vpack.c.b16 %v2515, %v2513
    %v3812 = vpack.c.b16 %v2516, %v2514
    %v3813 = vpack.c.b16 %v2519, %v2517
    %v3814 = vpack.c.b16 %v2520, %v2518
    %v3815 = vpack.c.b16 %v2523, %v2521
    %v3816 = vpack.c.b16 %v2524, %v2522
    %v3817 = vpack.c.b16 %v2527, %v2525
    %v3818 = vpack.c.b16 %v2528, %v2526
    %v3819 = vpack.c.b16 %v2531, %v2529
    %v3820 = vpack.c.b16 %v2532, %v2530
    %v3821 = vpack.c.b16 %v2535, %v2533
    %v3822 = vpack.c.b16 %v2536, %v2534
    %v3823 = vpack.c.b16 %v2539, %v2537
    %v3824 = vpack.c.b16 %v2540, %v2538
    %v3825 = vpack.c.b16 %v2543, %v2541
    %v3826 = vpack.c.b16 %v2544, %v2542
    %v3827 = vpack.c.b16 %v2547, %v2545
    %v3828 = vpack.c.b16 %v2548, %v2546
    %v3829 = vpack.c.b16 %v2551, %v2549
    %v3830 = vpack.c.b16 %v2552, %v2550
    %v3831 = vpack.c.b16 %v2555, %v2553
    %v3832 = vpack.c.b16 %v2556, %v2554
    %v3833 = vpack.c.b16 %v2559, %v2557
    %v3834 = vpack.c.b16 %v2560, %v2558
    %v3835 = vpack.c.b16 %v2563, %v2561
    %v3836 = vpack.c.b16 %v2564, %v2562
    %v3837 = vpack.c.b16 %v2567, %v2565
    %v3838 = vpack.c.b16 %v2568, %v2566
    %v3839 = vpack.c.b16 %v2571, %v2569
    %v3840 = vpack.c.b16 %v2572, %v2570
    %v3841 = vpack.c.b16 %v2575, %v2573
    %v3842 = vpack.c.b16 %v2576, %v2574
    %v3843 = vpack.c.b16 %v2579, %v2577
    %v3844 = vpack.c.b16 %v2580, %v2578
    %v3845 = vpack.c.b16 %v2583, %v2581
    %v3846 = vpack.c.b16 %v2584, %v2582
    %v3847 = vpack.c.b16 %v2587, %v2585
    %v3848 = vpack.c.b16 %v2588, %v2586
    %v3849 = vpack.c.b16 %v2591, %v2589
    %v3850 = vpack.c.b16 %v2592, %v2590
    %v3851 = vpack.c.b16 %v2595, %v2593
    %v3852 = vpack.c.b16 %v2596, %v2594
    %v3853 = vpack.c.b16 %v2599, %v2597
    %v3854 = vpack.c.b16 %v2600, %v2598
    %v3855 = vpack.c.b16 %v2603, %v2601
    %v3856 = vpack.c.b16 %v2604, %v2602
    %v3857 = vpack.c.b16 %v2607, %v2605
    %v3858 = vpack.c.b16 %v2608, %v2606
    %v3859 = vpack.c.b16 %v2611, %v2609
    %v3860 = vpack.c.b16 %v2612, %v2610
    %v3861 = vpack.c.b16 %v2615, %v2613
    %v3862 = vpack.c.b16 %v2616, %v2614
    %v3863 = vpack.c.b16 %v2619, %v2617
    %v3864 = vpack.c.b16 %v2620, %v2618
    %v3865 = vpack.c.b16 %v2623, %v2621
    %v3866 = vpack.c.b16 %v2624, %v2622
    %v3867 = vpack.c.b16 %v2627, %v2625
    %v3868 = vpack.c.b16 %v2628, %v2626
    %v3869 = vpack.c.b16 %v2631, %v2629
    %v3870 = vpack.c.b16 %v2632, %v2630
    %v3871 = vpack.c.b16 %v2635, %v2633
    %v3872 = vpack.c.b16 %v2636, %v2634
    %v3873 = vpack.c.b16 %v2639, %v2637
    %v3874 = vpack.c.b16 %v2640, %v2638
    %v3875 = vpack.c.b16 %v2643, %v2641
    %v3876 = vpack.c.b16 %v2644, %v2642
    %v3877 = vpack.c.b16 %v2647, %v2645
    %v3878 = vpack.c.b16 %v2648, %v2646
    %v3879 = vpack.c.b16 %v2651, %v2649
    %v3880 = vpack.c.b16 %v2652, %v2650
    %v3881 = vpack.c.b16 %v2655, %v2653
    %v3882 = vpack.c.b16 %v2656, %v2654
    %v3883 = vpack.c.b16 %v2659, %v2657
    %v3884 = vpack.c.b16 %v2660, %v2658
    %v3885 = vpack.c.b16 %v2663, %v2661
    %v3886 = vpack.c.b16 %v2664, %v2662
    %v3887 = vpack.c.b16 %v2667, %v2665
    %v3888 = vpack.c.b16 %v2668, %v2666
    %v3889 = vpack.c.b16 %v2671, %v2669
    %v3890 = vpack.c.b16 %v2672, %v2670
    %v3891 = vpack.c.b16 %v2675, %v2673
    %v3892 = vpack.c.b16 %v2676, %v2674
    %v3893 = vpack.c.b16 %v2679, %v2677
    %v3894 = vpack.c.b16 %v2680, %v2678
    %v3895 = vpack.c.b16 %v2683, %v2681
    %v3896 = vpack.c.b16 %v2684, %v2682
    %v3897 = vpack.c.b16 %v2687, %v2685
    %v3898 = vpack.c.b16 %v2688, %v2686
    %v3899 = vpack.c.b16 %v2691, %v2689
    %v3900 = vpack.c.b16 %v2692, %v2690
    %v3901 = vpack.c.b16 %v2695, %v2693
    %v3902 = vpack.c.b16 %v2696, %v2694
    %v3903 = vpack.c.b16 %v2699, %v2697
    %v3904 = vpack.c.b16 %v2700, %v2698
    %v3905 = vpack.c.b16 %v2703, %v2701
    %v3906 = vpack.c.b16 %v2704, %v2702
    %v3907 = vpack.c.b16 %v2707, %v2705
    %v3908 = vpack.c.b16 %v2708, %v2706
    %v3909 = vpack.c.b16 %v2711, %v2709
    %v3910 = vpack.c.b16 %v2712, %v2710
    %v3911 = vpack.c.b16 %v2715, %v2713
    %v3912 = vpack.c.b16 %v2716, %v2714
    %v3913 = vpack.c.b16 %v2719, %v2717
    %v3914 = vpack.c.b16 %v2720, %v2718
    %v3915 = vpack.c.b16 %v2723, %v2721
    %v3916 = vpack.c.b16 %v2724, %v2722
    %v3917 = vpack.c.b16 %v2727, %v2725
    %v3918 = vpack.c.b16 %v2728, %v2726
    %v3919 = vpack.c.b16 %v2731, %v2729
    %v3920 = vpack.c.b16 %v2732, %v2730
    %v3921 = vpack.c.b16 %v2735, %v2733
    %v3922 = vpack.c.b16 %v2736, %v2734
    %v3923 = vpack.c.b16 %v2739, %v2737
    %v3924 = vpack.c.b16 %v2740, %v2738
    %v3925 = vpack.c.b16 %v2743, %v2741
    %v3926 = vpack.c.b16 %v2744, %v2742
    %v3927 = vpack.c.b16 %v2747, %v2745
    %v3928 = vpack.c.b16 %v2748, %v2746
    %v3929 = vpack.c.b16 %v2751, %v2749
    %v3930 = vpack.c.b16 %v2752, %v2750
    %v3931 = vpack.c.b16 %v2755, %v2753
    %v3932 = vpack.c.b16 %v2756, %v2754
    %v3933 = vpack.c.b16 %v2759, %v2757
    %v3934 = vpack.c.b16 %v2760, %v2758
    %v3935 = vpack.c.b16 %v2763, %v2761
    %v3936 = vpack.c.b16 %v2764, %v2762
    %v3937 = vpack.c.b16 %v2767, %v2765
    %v3938 = vpack.c.b16 %v2768, %v2766
    %v3939 = vpack.c.b16 %v2771, %v2769
    %v3940 = vpack.c.b16 %v2772, %v2770
    %v3941 = vpack.c.b16 %v2775, %v2773
    %v3942 = vpack.c.b16 %v2776, %v2774
    %v3943 = vpack.c.b16 %v2779, %v2777
    %v3944 = vpack.c.b16 %v2780, %v2778
    %v3945 = vpack.c.b16 %v2783, %v2781
    %v3946 = vpack.c.b16 %v2784, %v2782
    %v3947 = vpack.c.b16 %v2787, %v2785
    %v3948 = vpack.c.b16 %v2788, %v2786
    %v3949 = vpack.c.b16 %v2791, %v2789
    %v3950 = vpack.c.b16 %v2792, %v2790
    %v3951 = vpack.c.b16 %v2795, %v2793
    %v3952 = vpack.c.b16 %v2796, %v2794
    %v3953 = vpack.c.b16 %v2799, %v2797
    %v3954 = vpack.c.b16 %v2800, %v2798
    %v3955 = vpack.c.b16 %v2803, %v2801
    %v3956 = vpack.c.b16 %v2804, %v2802
    %v3957 = vpack.c.b16 %v2807, %v2805
    %v3958 = vpack.c.b16 %v2808, %v2806
    %v3959 = vpack.c.b16 %v2811, %v2809
    %v3960 = vpack.c.b16 %v2812, %v2810
    %v3961 = vpack.c.b16 %v2815, %v2813
    %v3962 = vpack.c.b16 %v2816, %v2814
    %v3963 = vpack.c.b16 %v2819, %v2817
    %v3964 = vpack.c.b16 %v2820, %v2818
    %v3965 = vpack.c.b16 %v2823, %v2821
    %v3966 = vpack.c.b16 %v2824, %v2822
    %v3967 = vpack.c.b16 %v2827, %v2825
    %v3968 = vpack.c.b16 %v2828, %v2826
    %v3969 = vpack.c.b16 %v2831, %v2829
    %v3970 = vpack.c.b16 %v2832, %v2830
    %v3971 = vpack.c.b16 %v2835, %v2833
    %v3972 = vpack.c.b16 %v2836, %v2834
    %v3973 = vpack.c.b16 %v2839, %v2837
    %v3974 = vpack.c.b16 %v2840, %v2838
    %v3975 = vpack.c.b16 %v2843, %v2841
    %v3976 = vpack.c.b16 %v2844, %v2842
    %v3977 = vpack.c.b16 %v2847, %v2845
    %v3978 = vpack.c.b16 %v2848, %v2846
    %v3979 = vpack.c.b16 %v2851, %v2849
    %v3980 = vpack.c.b16 %v2852, %v2850
    %v3981 = vpack.c.b16 %v2855, %v2853
    %v3982 = vpack.c.b16 %v2856, %v2854
    %v3983 = vpack.c.b16 %v2859, %v2857
    %v3984 = vpack.c.b16 %v2860, %v2858
    %v3985 = vpack.c.b16 %v2863, %v2861
    %v3986 = vpack.c.b16 %v2864, %v2862
    %v3987 = vpack.c.b16 %v2867, %v2865
    %v3988 = vpack.c.b16 %v2868, %v2866
    %v3989 = vpack.c.b16 %v2871, %v2869
    %v3990 = vpack.c.b16 %v2872, %v2870
    %v3991 = vpack.c.b16 %v2875, %v2873
    %v3992 = vpack.c.b16 %v2876, %v2874
    %v3993 = vpack.c.b16 %v2879, %v2877
    %v3994 = vpack.c.b16 %v2880, %v2878
    %v3995 = vpack.c.b16 %v2883, %v2881
    %v3996 = vpack.c.b16 %v2884, %v2882
    %v3997 = vpack.c.b16 %v2887, %v2885
    %v3998 = vpack.c.b16 %v2888, %v2886
    %v3999 = vpack.c.b16 %v2891, %v2889
    %v4000 = vpack.c.b16 %v2892, %v2890
    %v4001 = vpack.c.b16 %v2895, %v2893
    %v4002 = vpack.c.b16 %v2896, %v2894
    %v4003 = vpack.c.b16 %v2899, %v2897
    %v4004 = vpack.c.b16 %v2900, %v2898
    %v4005 = vpack.c.b16 %v2903, %v2901
    %v4006 = vpack.c.b16 %v2904, %v2902
    %v4007 = vpack.c.b16 %v2907, %v2905
    %v4008 = vpack.c.b16 %v2908, %v2906
    %v4009 = vpack.c.b16 %v2911, %v2909
    %v4010 = vpack.c.b16 %v2912, %v2910
    %v4011 = vpack.c.b16 %v2915, %v2913
    %v4012 = vpack.c.b16 %v2916, %v2914
    %v4013 = vpack.c.b16 %v2919, %v2917
    %v4014 = vpack.c.b16 %v2920, %v2918
    %v4015 = vpack.c.b16 %v2923, %v2921
    %v4016 = vpack.c.b16 %v2924, %v2922
    %v4017 = vpack.c.b16 %v2927, %v2925
    %v4018 = vpack.c.b16 %v2928, %v2926
    %v4019 = vpack.c.b16 %v2931, %v2929
    %v4020 = vpack.c.b16 %v2932, %v2930
    %v4021 = vpack.c.b16 %v2935, %v2933
    %v4022 = vpack.c.b16 %v2936, %v2934
    %v4023 = vpack.c.b16 %v2939, %v2937
    %v4024 = vpack.c.b16 %v2940, %v2938
    %v4025 = vpack.c.b16 %v2943, %v2941
    %v4026 = vpack.c.b16 %v2944, %v2942
    %v4027 = vpack.c.b16 %v2947, %v2945
    %v4028 = vpack.c.b16 %v2948, %v2946
    %v4029 = vpack.c.b16 %v2951, %v2949
    %v4030 = vpack.c.b16 %v2952, %v2950
    %v4031 = vpack.c.b16 %v2955, %v2953
    %v4032 = vpack.c.b16 %v2956, %v2954
    %v4033 = vpack.c.b16 %v2959, %v2957
    %v4034 = vpack.c.b16 %v2960, %v2958
    %v4035 = vpack.c.b16 %v2963, %v2961
    %v4036 = vpack.c.b16 %v2964, %v2962
    %v4037 = vpack.c.b16 %v2967, %v2965
    %v4038 = vpack.c.b16 %v2968, %v2966
    %v4039 = vpack.c.b16 %v2971, %v2969
    %v4040 = vpack.c.b16 %v2972, %v2970
    %v4041 = vpack.c.b16 %v2975, %v2973
    %v4042 = vpack.c.b16 %v2976, %v2974
    %v4043 = vpack.c.b16 %v2979, %v2977
    %v4044 = vpack.c.b16 %v2980, %v2978
    %v4045 = vpack.c.b16 %v2983, %v2981
    %v4046 = vpack.c.b16 %v2984, %v2982
    %v4047 = vpack.c.b16 %v2987, %v2985
    %v4048 = vpack.c.b16 %v2988, %v2986
    %v4049 = vpack.c.b16 %v2991, %v2989
    %v4050 = vpack.c.b16 %v2992, %v2990
    %v4051 = vpack.c.b16 %v2995, %v2993
    %v4052 = vpack.c.b16 %v2996, %v2994
    %v4053 = vpack.c.b16 %v2999, %v2997
    %v4054 = vpack.c.b16 %v3000, %v2998
    %v4055 = vpack.c.b16 %v3003, %v3001
    %v4056 = vpack.c.b16 %v3004, %v3002
    %v4057 = vpack.c.b16 %v3007, %v3005
    %v4058 = vpack.c.b16 %v3008, %v3006
    %v4059 = vpack.c.b16 %v3011, %v3009
    %v4060 = vpack.c.b16 %v3012, %v3010
    %v4061 = vpack.c.b16 %v3015, %v3013
    %v4062 = vpack.c.b16 %v3016, %v3014
    %v4063 = vpack.c.b16 %v3019, %v3017
    %v4064 = vpack.c.b16 %v3020, %v3018
    %v4065 = vpack.c.b16 %v3023, %v3021
    %v4066 = vpack.c.b16 %v3024, %v3022
    %v4067 = vpack.c.b16 %v3027, %v3025
    %v4068 = vpack.c.b16 %v3028, %v3026
    %v4069 = vpack.c.b16 %v3031, %v3029
    %v4070 = vpack.c.b16 %v3032, %v3030
    %v4071 = vpack.c.b16 %v3035, %v3033
    %v4072 = vpack.c.b16 %v3036, %v3034
    %v4073 = vpack.c.b16 %v3039, %v3037
    %v4074 = vpack.c.b16 %v3040, %v3038
    %v4075 = vpack.c.b16 %v3043, %v3041
    %v4076 = vpack.c.b16 %v3044, %v3042
    %v4077 = vpack.c.b16 %v3047, %v3045
    %v4078 = vpack.c.b16 %v3048, %v3046
    %v4079 = vpack.c.b16 %v3051, %v3049
    %v4080 = vpack.c.b16 %v3052, %v3050
    %v4081 = vpack.c.b16 %v3055, %v3053
    %v4082 = vpack.c.b16 %v3056, %v3054
    %v4083 = vpack.c.b16 %v3059, %v3057
    %v4084 = vpack.c.b16 %v3060, %v3058
    %v4085 = vpack.c.b16 %v3063, %v3061
    %v4086 = vpack.c.b16 %v3064, %v3062
    %v4087 = vpack.c.b16 %v3067, %v3065
    %v4088 = vpack.c.b16 %v3068, %v3066
    %v4089 = vpack.c.b16 %v3071, %v3069
    %v4090 = vpack.c.b16 %v3072, %v3070
    %v4091 = vpack.c.b16 %v3075, %v3073
    %v4092 = vpack.c.b16 %v3076, %v3074
    %v4093 = vpack.c.b16 %v3079, %v3077
    %v4094 = vpack.c.b16 %v3080, %v3078
    %v4095 = vpack.c.b16 %v3083, %v3081
    %v4096 = vpack.c.b16 %v3084, %v3082
    %v4097 = vpack.c.b16 %v3087, %v3085
    %v4098 = vpack.c.b16 %v3088, %v3086
    %v4099 = vpack.c.b16 %v3091, %v3089
    %v4100 = vpack.c.b16 %v3092, %v3090
    %v4101 = vpack.c.b16 %v3095, %v3093
    %v4102 = vpack.c.b16 %v3096, %v3094
    %v4103 = vpack.c.b16 %v3099, %v3097
    %v4104 = vpack.c.b16 %v3100, %v3098
    %v4105 = vpack.c.b16 %v3103, %v3101
    %v4106 = vpack.c.b16 %v3104, %v3102
    %v4107 = vpack.c.b16 %v3107, %v3105
    %v4108 = vpack.c.b16 %v3108, %v3106
    %v4109 = vpack.c.b16 %v3111, %v3109
    %v4110 = vpack.c.b16 %v3112, %v3110
    %v4111 = vpack.c.b16 %v3115, %v3113
    %v4112 = vpack.c.b16 %v3116, %v3114
    %v4113 = vpack.c.b16 %v3119, %v3117
    %v4114 = vpack.c.b16 %v3120, %v3118
    %v4115 = vpack.c.b16 %v3123, %v3121
    %v4116 = vpack.c.b16 %v3124, %v3122
    %v4117 = vpack.c.b16 %v3127, %v3125
    %v4118 = vpack.c.b16 %v3128, %v3126
    %v4119 = vpack.c.b16 %v3131, %v3129
    %v4120 = vpack.c.b16 %v3132, %v3130
    %v4121 = vpack.c.b16 %v3135, %v3133
    %v4122 = vpack.c.b16 %v3136, %v3134
    %v4123 = vpack.c.b16 %v3139, %v3137
    %v4124 = vpack.c.b16 %v3140, %v3138
    %v4125 = vpack.c.b16 %v3143, %v3141
    %v4126 = vpack.c.b16 %v3144, %v3142
    %v4127 = vpack.c.b16 %v3147, %v3145
    %v4128 = vpack.c.b16 %v3148, %v3146
    %v4129 = vpack.c.b16 %v3151, %v3149
    %v4130 = vpack.c.b16 %v3152, %v3150
    %v4131 = vpack.c.b16 %v3155, %v3153
    %v4132 = vpack.c.b16 %v3156, %v3154
    %v4133 = vpack.c.b16 %v3159, %v3157
    %v4134 = vpack.c.b16 %v3160, %v3158
    %v4135 = vpack.c.b16 %v3163, %v3161
    %v4136 = vpack.c.b16 %v3164, %v3162
    %v4137 = vpack.c.b16 %v3167, %v3165
    %v4138 = vpack.c.b16 %v3168, %v3166
    %v4139 = vpack.c.b16 %v3171, %v3169
    %v4140 = vpack.c.b16 %v3172, %v3170
    %v4141 = vpack.c.b16 %v3175, %v3173
    %v4142 = vpack.c.b16 %v3176, %v3174
    %v4143 = vpack.c.b16 %v3179, %v3177
    %v4144 = vpack.c.b16 %v3180, %v3178
    %v4145 = vpack.c.b16 %v3183, %v3181
    %v4146 = vpack.c.b16 %v3184, %v3182
    %v4147 = vpack.c.b16 %v3187, %v3185
    %v4148 = vpack.c.b16 %v3188, %v3186
    %v4149 = vpack.c.b16 %v3191, %v3189
    %v4150 = vpack.c.b16 %v3192, %v3190
    %v4151 = vpack.c.b16 %v3195, %v3193
    %v4152 = vpack.c.b16 %v3196, %v3194
    %v4153 = vpack.c.b16 %v3199, %v3197
    %v4154 = vpack.c.b16 %v3200, %v3198
    %v4155 = vpack.c.b16 %v3203, %v3201
    %v4156 = vpack.c.b16 %v3204, %v3202
    %v4157 = vpack.c.b16 %v3207, %v3205
    %v4158 = vpack.c.b16 %v3208, %v3206
    %v4159 = vpack.c.b16 %v3211, %v3209
    %v4160 = vpack.c.b16 %v3212, %v3210
    %v4161 = vpack.c.b16 %v3215, %v3213
    %v4162 = vpack.c.b16 %v3216, %v3214
    %v4163 = vpack.c.b16 %v3219, %v3217
    %v4164 = vpack.c.b16 %v3220, %v3218
    %v4165 = vpack.c.b16 %v3223, %v3221
    %v4166 = vpack.c.b16 %v3224, %v3222
    %v4167 = vpack.c.b16 %v3227, %v3225
    %v4168 = vpack.c.b16 %v3228, %v3226
    %v4169 = vpack.c.b16 %v3231, %v3229
    %v4170 = vpack.c.b16 %v3232, %v3230
    %v4171 = vpack.c.b16 %v3235, %v3233
    %v4172 = vpack.c.b16 %v3236, %v3234
    %v4173 = vpack.c.b16 %v3239, %v3237
    %v4174 = vpack.c.b16 %v3240, %v3238
    %v4175 = vpack.c.b16 %v3243, %v3241
    %v4176 = vpack.c.b16 %v3244, %v3242
    %v4177 = vpack.c.b16 %v3247, %v3245
    %v4178 = vpack.c.b16 %v3248, %v3246
    %v4179 = vpack.c.b16 %v3251, %v3249
    %v4180 = vpack.c.b16 %v3252, %v3250
    %v4181 = vpack.c.b16 %v3255, %v3253
    %v4182 = vpack.c.b16 %v3256, %v3254
    %v4183 = vpack.c.b16 %v3259, %v3257
    %v4184 = vpack.c.b16 %v3260, %v3258
    %v4185 = vpack.c.b16 %v3263, %v3261
    %v4186 = vpack.c.b16 %v3264, %v3262
    %v4187 = vpack.c.b16 %v3267, %v3265
    %v4188 = vpack.c.b16 %v3268, %v3266
    %v4189 = vpack.c.b16 %v3271, %v3269
    %v4190 = vpack.c.b16 %v3272, %v3270
    %v4191 = vpack.c.b16 %v3275, %v3273
    %v4192 = vpack.c.b16 %v3276, %v3274
    %v4193 = vpack.c.b16 %v3279, %v3277
    %v4194 = vpack.c.b16 %v3280, %v3278
    %v4195 = vpack.c.b16 %v3283, %v3281
    %v4196 = vpack.c.b16 %v3284, %v3282
    %v4197 = vpack.c.b16 %v3287, %v3285
    %v4198 = vpack.c.b16 %v3288, %v3286
    %v4199 = vpack.c.b16 %v3291, %v3289
    %v4200 = vpack.c.b16 %v3292, %v3290
    %v4201 = vpack.c.b16 %v3295, %v3293
    %v4202 = vpack.c.b16 %v3296, %v3294
    %v4203 = vpack.c.b16 %v3299, %v3297
    %v4204 = vpack.c.b16 %v3300, %v3298
    %v4205 = vpack.c.b16 %v3303, %v3301
    %v4206 = vpack.c.b16 %v3304, %v3302
    %v4207 = vpack.c.b16 %v3307, %v3305
    %v4208 = vpack.c.b16 %v3308, %v3306
    %v4209 = vpack.c.b16 %v3311, %v3309
    %v4210 = vpack.c.b16 %v3312, %v3310
    %v4211 = vpack.c.b16 %v3315, %v3313
    %v4212 = vpack.c.b16 %v3316, %v3314
    %v4213 = vpack.c.b16 %v3319, %v3317
    %v4214 = vpack.c.b16 %v3320, %v3318
    %v4215 = vpack.c.b16 %v3323, %v3321
    %v4216 = vpack.c.b16 %v3324, %v3322
    %v4217 = vpack.c.b16 %v3327, %v3325
    %v4218 = vpack.c.b16 %v3328, %v3326
    %v4219 = vpack.c.b16 %v3331, %v3329
    %v4220 = vpack.c.b16 %v3332, %v3330
    %v4221 = vpack.c.b16 %v3335, %v3333
    %v4222 = vpack.c.b16 %v3336, %v3334
    %v4223 = vpack.c.b16 %v3339, %v3337
    %v4224 = vpack.c.b16 %v3340, %v3338
    %v4225 = vpack.c.b16 %v3343, %v3341
    %v4226 = vpack.c.b16 %v3344, %v3342
    %v4227 = vpack.c.b16 %v3347, %v3345
    %v4228 = vpack.c.b16 %v3348, %v3346
    %v4229 = vpack.c.b16 %v3351, %v3349
    %v4230 = vpack.c.b16 %v3352, %v3350
    %v4231 = vpack.c.b16 %v3355, %v3353
    %v4232 = vpack.c.b16 %v3356, %v3354
    %v4233 = vpack.c.b16 %v3359, %v3357
    %v4234 = vpack.c.b16 %v3360, %v3358
    %v4235 = vpack.c.b16 %v3363, %v3361
    %v4236 = vpack.c.b16 %v3364, %v3362
    %v4237 = vpack.c.b16 %v3367, %v3365
    %v4238 = vpack.c.b16 %v3368, %v3366
    %v4239 = vpack.c.b16 %v3371, %v3369
    %v4240 = vpack.c.b16 %v3372, %v3370
    %v4241 = vpack.c.b16 %v3375, %v3373
    %v4242 = vpack.c.b16 %v3376, %v3374
    %v4243 = vpack.c.b16 %v3379, %v3377
    %v4244 = vpack.c.b16 %v3380, %v3378
    %v4245 = vpack.c.b16 %v3383, %v3381
    %v4246 = vpack.c.b16 %v3384, %v3382
    %v4247 = vpack.c.b16 %v3387, %v3385
    %v4248 = vpack.c.b16 %v3388, %v3386
    %v4249 = vpack.c.b16 %v3391, %v3389
    %v4250 = vpack.c.b16 %v3392, %v3390
    %v4251 = vpack.c.b16 %v3395, %v3393
    %v4252 = vpack.c.b16 %v3396, %v3394
    %v4253 = vpack.c.b16 %v3399, %v3397
    %v4254 = vpack.c.b16 %v3400, %v3398
    %v4255 = vpack.c.b16 %v3403, %v3401
    %v4256 = vpack.c.b16 %v3404, %v3402
    %v4257 = vpack.c.b16 %v3407, %v3405
    %v4258 = vpack.c.b16 %v3408, %v3406
    %v4259 = vpack.c.b16 %v3411, %v3409
    %v4260 = vpack.c.b16 %v3412, %v3410
    %v4261 = vpack.c.b16 %v3415, %v3413
    %v4262 = vpack.c.b16 %v3416, %v3414
    %v4263 = vpack.c.b16 %v3419, %v3417
    %v4264 = vpack.c.b16 %v3420, %v3418
    %v4265 = vpack.c.b16 %v3423, %v3421
    %v4266 = vpack.c.b16 %v3424, %v3422
    %v4267 = vpack.c.b16 %v3427, %v3425
    %v4268 = vpack.c.b16 %v3428, %v3426
    %v4269 = vpack.c.b16 %v3431, %v3429
    %v4270 = vpack.c.b16 %v3432, %v3430
    %v4271 = vpack.c.b16 %v3435, %v3433
    %v4272 = vpack.c.b16 %v3436, %v3434
    %v4273 = vpack.c.b16 %v3439, %v3437
    %v4274 = vpack.c.b16 %v3440, %v3438
    %v4275 = vpack.c.b16 %v3443, %v3441
    %v4276 = vpack.c.b16 %v3444, %v3442
    %v4277 = vpack.c.b16 %v3447, %v3445
    %v4278 = vpack.c.b16 %v3448, %v3446
    %v4279 = vpack.c.b16 %v3451, %v3449
    %v4280 = vpack.c.b16 %v3452, %v3450
    %v4281 = vpack.c.b16 %v3455, %v3453
    %v4282 = vpack.c.b16 %v3456, %v3454
    %v4283 = vpack.c.b16 %v3459, %v3457
    %v4284 = vpack.c.b16 %v3460, %v3458
    %v4285 = vpack.c.b16 %v3463, %v3461
    %v4286 = vpack.c.b16 %v3464, %v3462
    %v4287 = vpack.c.b16 %v3467, %v3465
    %v4288 = vpack.c.b16 %v3468, %v3466
    %v4289 = vpack.c.b16 %v3471, %v3469
    %v4290 = vpack.c.b16 %v3472, %v3470
    %v4291 = vpack.c.b16 %v3475, %v3473
    %v4292 = vpack.c.b16 %v3476, %v3474
    %v4293 = vpack.c.b16 %v3479, %v3477
    %v4294 = vpack.c.b16 %v3480, %v3478
    %v4295 = vpack.c.b16 %v3483, %v3481
    %v4296 = vpack.c.b16 %v3484, %v3482
    %v4297 = vpack.c.b16 %v3487, %v3485
    %v4298 = vpack.c.b16 %v3488, %v3486
    %v4299 = vpack.c.b16 %v3491, %v3489
    %v4300 = vpack.c.b16 %v3492, %v3490
    %v4301 = vpack.c.b16 %v3495, %v3493
    %v4302 = vpack.c.b16 %v3496, %v3494
    %v4303 = vpack.c.b16 %v3499, %v3497
    %v4304 = vpack.c.b16 %v3500, %v3498
    %v4305 = vpack.c.b16 %v3503, %v3501
    %v4306 = vpack.c.b16 %v3504, %v3502
    %v4307 = vpack.c.b16 %v3507, %v3505
    %v4308 = vpack.c.b16 %v3508, %v3506
    %v4309 = vpack.c.b16 %v3511, %v3509
    %v4310 = vpack.c.b16 %v3512, %v3510
    %v4311 = vpack.c.b16 %v3515, %v3513
    %v4312 = vpack.c.b16 %v3516, %v3514
    %v4313 = vpack.c.b16 %v3519, %v3517
    %v4314 = vpack.c.b16 %v3520, %v3518
    %v4315 = vpack.c.b16 %v3523, %v3521
    %v4316 = vpack.c.b16 %v3524, %v3522
    %v4317 = vpack.c.b16 %v3527, %v3525
    %v4318 = vpack.c.b16 %v3528, %v3526
    %v4319 = vpack.c.b16 %v3531, %v3529
    %v4320 = vpack.c.b16 %v3532, %v3530
    %v4321 = vpack.c.b16 %v3535, %v3533
    %v4322 = vpack.c.b16 %v3536, %v3534
    %v4323 = vpack.c.b16 %v3539, %v3537
    %v4324 = vpack.c.b16 %v3540, %v3538
    %5109 = vmatprep.subr.bf16.mxu0 %v3542
    %5110 = vmatpush1.bf16.msra.mxu0 %v3541
    %5111 = vmatprep.subr.bf16.mxu0 %v3544
    %5112 = vmatpush1.bf16.msra.mxu0 %v3543
    %5113 = vmatprep.subr.bf16.mxu0 %v3546
    %5114 = vmatpush1.bf16.msra.mxu0 %v3545
    %5115 = vmatprep.subr.bf16.mxu0 %v3548
    %5116 = vmatpush1.bf16.msra.mxu0 %v3547
    %5117 = vmatprep.subr.bf16.mxu0 %v3550
    %5118 = vmatpush1.bf16.msra.mxu0 %v3549
    %5119 = vmatprep.subr.bf16.mxu0 %v3552
    %5120 = vmatpush1.bf16.msra.mxu0 %v3551
    %5121 = vmatprep.subr.bf16.mxu0 %v3554
    %5122 = vmatpush1.bf16.msra.mxu0 %v3553
    %5123 = vmatprep.subr.bf16.mxu0 %v3556
    %5124 = vmatpush1.bf16.msra.mxu0 %v3555
    %5125 = vmatprep.subr.bf16.mxu0 %v3558
    %5126 = vmatpush1.bf16.msra.mxu0 %v3557
    %5127 = vmatprep.subr.bf16.mxu0 %v3560
    %5128 = vmatpush1.bf16.msra.mxu0 %v3559
    %5129 = vmatprep.subr.bf16.mxu0 %v3562
    %5130 = vmatpush1.bf16.msra.mxu0 %v3561
    %5131 = vmatprep.subr.bf16.mxu0 %v3564
    %5132 = vmatpush1.bf16.msra.mxu0 %v3563
    %5133 = vmatprep.subr.bf16.mxu0 %v3566
    %5134 = vmatpush1.bf16.msra.mxu0 %v3565
    %5135 = vmatprep.subr.bf16.mxu0 %v3568
    %5136 = vmatpush1.bf16.msra.mxu0 %v3567
    %5137 = vmatprep.subr.bf16.mxu0 %v3570
    %5138 = vmatpush1.bf16.msra.mxu0 %v3569
    %5139 = vmatprep.subr.bf16.mxu0 %v3572
    %5140 = vmatpush1.bf16.msra.mxu0 %v3571
    %5141 = vmatprep.mubr.bf16.mxu0 %v869
    %5142 = vmatmul.mubr.bf16.gmra.mrb[0].mxu0 %v855
    %v5143 = vpop.f32.mrb[0].mxu0
    %v5144 = vadd.f32 %v818, %v5143
    %v5145 = vpop.f32.mrb[0].mxu0
    %v5146 = vadd.f32 %v822, %v5145
    %v5147 = vpop.f32.mrb[0].mxu0
    %v5148 = vpop.f32.mrb[0].mxu0
    %5149 = vdwg.mxu0
    %5150 = vmatprep.subr.bf16.mxu0 %v3574
    %5151 = vmatpush1.bf16.msra.mxu0 %v3573
    %5152 = vmatprep.subr.bf16.mxu0 %v3576
    %5153 = vmatpush1.bf16.msra.mxu0 %v3575
    %5154 = vmatprep.subr.bf16.mxu0 %v3578
    %5155 = vmatpush1.bf16.msra.mxu0 %v3577
    %5156 = vmatprep.subr.bf16.mxu0 %v3580
    %5157 = vmatpush1.bf16.msra.mxu0 %v3579
    %5158 = vmatprep.subr.bf16.mxu0 %v3582
    %5159 = vmatpush1.bf16.msra.mxu0 %v3581
    %5160 = vmatprep.subr.bf16.mxu0 %v3584
    %5161 = vmatpush1.bf16.msra.mxu0 %v3583
    %5162 = vmatprep.subr.bf16.mxu0 %v3586
    %5163 = vmatpush1.bf16.msra.mxu0 %v3585
    %5164 = vmatprep.subr.bf16.mxu0 %v3588
    %5165 = vmatpush1.bf16.msra.mxu0 %v3587
    %5166 = vmatprep.subr.bf16.mxu0 %v3590
    %5167 = vmatpush1.bf16.msra.mxu0 %v3589
    %5168 = vmatprep.subr.bf16.mxu0 %v3592
    %5169 = vmatpush1.bf16.msra.mxu0 %v3591
    %5170 = vmatprep.subr.bf16.mxu0 %v3594
    %5171 = vmatpush1.bf16.msra.mxu0 %v3593
    %5172 = vmatprep.subr.bf16.mxu0 %v3596
    %5173 = vmatpush1.bf16.msra.mxu0 %v3595
    %5174 = vmatprep.subr.bf16.mxu0 %v3598
    %5175 = vmatpush1.bf16.msra.mxu0 %v3597
    %5176 = vmatprep.subr.bf16.mxu0 %v3600
    %5177 = vmatpush1.bf16.msra.mxu0 %v3599
    %5178 = vmatprep.subr.bf16.mxu0 %v3602
    %5179 = vmatpush1.bf16.msra.mxu0 %v3601
    %5180 = vmatprep.subr.bf16.mxu0 %v3604
    %5181 = vmatpush1.bf16.msra.mxu0 %v3603
    %5182 = vmatprep.mubr.bf16.mxu0 %v879
    %5183 = vmatmul.mubr.bf16.gmra.mrb[0].mxu0 %v877
    %v5184 = vpop.f32.mrb[0].mxu0
    %v5185 = vadd.f32 %v5144, %v5184
    %v5186 = vpop.f32.mrb[0].mxu0
    %v5187 = vadd.f32 %v5146, %v5186
    %v5188 = vpop.f32.mrb[0].mxu0
    %v5189 = vpop.f32.mrb[0].mxu0
    %5190 = vdwg.mxu0
    %5191 = vmatprep.subr.bf16.mxu0 %v3606
    %5192 = vmatpush1.bf16.msra.mxu0 %v3605
    %5193 = vmatprep.subr.bf16.mxu0 %v3608
    %5194 = vmatpush1.bf16.msra.mxu0 %v3607
    %5195 = vmatprep.subr.bf16.mxu0 %v3610
    %5196 = vmatpush1.bf16.msra.mxu0 %v3609
    %5197 = vmatprep.subr.bf16.mxu0 %v3612
    %5198 = vmatpush1.bf16.msra.mxu0 %v3611
    %5199 = vmatprep.subr.bf16.mxu0 %v3614
    %5200 = vmatpush1.bf16.msra.mxu0 %v3613
    %5201 = vmatprep.subr.bf16.mxu0 %v3616
    %5202 = vmatpush1.bf16.msra.mxu0 %v3615
    %5203 = vmatprep.subr.bf16.mxu0 %v3618
    %5204 = vmatpush1.bf16.msra.mxu0 %v3617
    %5205 = vmatprep.subr.bf16.mxu0 %v3620
    %5206 = vmatpush1.bf16.msra.mxu0 %v3619
    %5207 = vmatprep.subr.bf16.mxu0 %v3622
    %5208 = vmatpush1.bf16.msra.mxu0 %v3621
    %5209 = vmatprep.subr.bf16.mxu0 %v3624
    %5210 = vmatpush1.bf16.msra.mxu0 %v3623
    %5211 = vmatprep.subr.bf16.mxu0 %v3626
    %5212 = vmatpush1.bf16.msra.mxu0 %v3625
    %5213 = vmatprep.subr.bf16.mxu0 %v3628
    %5214 = vmatpush1.bf16.msra.mxu0 %v3627
    %5215 = vmatprep.subr.bf16.mxu0 %v3630
    %5216 = vmatpush1.bf16.msra.mxu0 %v3629
    %5217 = vmatprep.subr.bf16.mxu0 %v3632
    %5218 = vmatpush1.bf16.msra.mxu0 %v3631
    %5219 = vmatprep.subr.bf16.mxu0 %v3634
    %5220 = vmatpush1.bf16.msra.mxu0 %v3633
    %5221 = vmatprep.subr.bf16.mxu0 %v3636
    %5222 = vmatpush1.bf16.msra.mxu0 %v3635
    %5223 = vmatprep.mubr.bf16.mxu0 %v876
    %5224 = vmatmul.mubr.bf16.gmra.mrb[0].mxu0 %v862
    %v5225 = vpop.f32.mrb[0].mxu0
    %v5226 = vadd.f32 %v5185, %v5225
    %v5227 = vpop.f32.mrb[0].mxu0
    %v5228 = vadd.f32 %v5187, %v5227
    %v5229 = vpop.f32.mrb[0].mxu0
    %v5230 = vpop.f32.mrb[0].mxu0
    %5231 = vdwg.mxu0
    %5232 = vmatprep.subr.bf16.mxu0 %v3638
    %5233 = vmatpush1.bf16.msra.mxu0 %v3637
    %5234 = vmatprep.subr.bf16.mxu0 %v3640
    %5235 = vmatpush1.bf16.msra.mxu0 %v3639
    %5236 = vmatprep.subr.bf16.mxu0 %v3642
    %5237 = vmatpush1.bf16.msra.mxu0 %v3641
    %5238 = vmatprep.subr.bf16.mxu0 %v3644
    %5239 = vmatpush1.bf16.msra.mxu0 %v3643
    %5240 = vmatprep.subr.bf16.mxu0 %v3646
    %5241 = vmatpush1.bf16.msra.mxu0 %v3645
    %5242 = vmatprep.subr.bf16.mxu0 %v3648
    %5243 = vmatpush1.bf16.msra.mxu0 %v3647
    %5244 = vmatprep.subr.bf16.mxu0 %v3650
    %5245 = vmatpush1.bf16.msra.mxu0 %v3649
    %5246 = vmatprep.subr.bf16.mxu0 %v3652
    %5247 = vmatpush1.bf16.msra.mxu0 %v3651
    %5248 = vmatprep.subr.bf16.mxu0 %v3654
    %5249 = vmatpush1.bf16.msra.mxu0 %v3653
    %5250 = vmatprep.subr.bf16.mxu0 %v3656
    %5251 = vmatpush1.bf16.msra.mxu0 %v3655
    %5252 = vmatprep.subr.bf16.mxu0 %v3658
    %5253 = vmatpush1.bf16.msra.mxu0 %v3657
    %5254 = vmatprep.subr.bf16.mxu0 %v3660
    %5255 = vmatpush1.bf16.msra.mxu0 %v3659
    %5256 = vmatprep.subr.bf16.mxu0 %v3662
    %5257 = vmatpush1.bf16.msra.mxu0 %v3661
    %5258 = vmatprep.subr.bf16.mxu0 %v3664
    %5259 = vmatpush1.bf16.msra.mxu0 %v3663
    %5260 = vmatprep.subr.bf16.mxu0 %v3666
    %5261 = vmatpush1.bf16.msra.mxu0 %v3665
    %5262 = vmatprep.subr.bf16.mxu0 %v3668
    %5263 = vmatpush1.bf16.msra.mxu0 %v3667
    %5264 = vmatprep.mubr.bf16.mxu0 %v880
    %5265 = vmatmul.mubr.bf16.gmra.mrb[0].mxu0 %v878
    %v5266 = vpop.f32.mrb[0].mxu0
    %v5267 = vadd.f32 %v5226, %v5266
    %v5268 = vpop.f32.mrb[0].mxu0
    %v5269 = vadd.f32 %v5228, %v5268
    %v5270 = vpop.f32.mrb[0].mxu0
    %v5271 = vpop.f32.mrb[0].mxu0
    %5272 = vdwg.mxu0
    %5273 = vmatprep.subr.bf16.mxu0 %v3670
    %5274 = vmatpush1.bf16.msra.mxu0 %v3669
    %5275 = vmatprep.subr.bf16.mxu0 %v3672
    %5276 = vmatpush1.bf16.msra.mxu0 %v3671
    %5277 = vmatprep.subr.bf16.mxu0 %v3674
    %5278 = vmatpush1.bf16.msra.mxu0 %v3673
    %5279 = vmatprep.subr.bf16.mxu0 %v3676
    %5280 = vmatpush1.bf16.msra.mxu0 %v3675
    %5281 = vmatprep.subr.bf16.mxu0 %v3678
    %5282 = vmatpush1.bf16.msra.mxu0 %v3677
    %5283 = vmatprep.subr.bf16.mxu0 %v3680
    %5284 = vmatpush1.bf16.msra.mxu0 %v3679
    %5285 = vmatprep.subr.bf16.mxu0 %v3682
    %5286 = vmatpush1.bf16.msra.mxu0 %v3681
    %5287 = vmatprep.subr.bf16.mxu0 %v3684
    %5288 = vmatpush1.bf16.msra.mxu0 %v3683
    %5289 = vmatprep.subr.bf16.mxu0 %v3686
    %5290 = vmatpush1.bf16.msra.mxu0 %v3685
    %5291 = vmatprep.subr.bf16.mxu0 %v3688
    %5292 = vmatpush1.bf16.msra.mxu0 %v3687
    %5293 = vmatprep.subr.bf16.mxu0 %v3690
    %5294 = vmatpush1.bf16.msra.mxu0 %v3689
    %5295 = vmatprep.subr.bf16.mxu0 %v3692
    %5296 = vmatpush1.bf16.msra.mxu0 %v3691
    %5297 = vmatprep.subr.bf16.mxu0 %v3694
    %5298 = vmatpush1.bf16.msra.mxu0 %v3693
    %5299 = vmatprep.subr.bf16.mxu0 %v3696
    %5300 = vmatpush1.bf16.msra.mxu0 %v3695
    %5301 = vmatprep.subr.bf16.mxu0 %v3698
    %5302 = vmatpush1.bf16.msra.mxu0 %v3697
    %5303 = vmatprep.subr.bf16.mxu0 %v3700
    %5304 = vmatpush1.bf16.msra.mxu0 %v3699
    %5305 = vmatprep.mubr.bf16.mxu0 %v918
    %5306 = vmatmul.mubr.bf16.gmra.mrb[0].mxu0 %v904
    %v5307 = vpop.f32.mrb[0].mxu0
    %v5308 = vadd.f32 %v5267, %v5307
    %v5309 = vpop.f32.mrb[0].mxu0
    %v5310 = vadd.f32 %v5269, %v5309
    %v5311 = vpop.f32.mrb[0].mxu0
    %v5312 = vpop.f32.mrb[0].mxu0
    %5313 = vdwg.mxu0
    %5314 = vmatprep.subr.bf16.mxu0 %v3702
    %5315 = vmatpush1.bf16.msra.mxu0 %v3701
    %5316 = vmatprep.subr.bf16.mxu0 %v3704
    %5317 = vmatpush1.bf16.msra.mxu0 %v3703
    %5318 = vmatprep.subr.bf16.mxu0 %v3706
    %5319 = vmatpush1.bf16.msra.mxu0 %v3705
    %5320 = vmatprep.subr.bf16.mxu0 %v3708
    %5321 = vmatpush1.bf16.msra.mxu0 %v3707
    %5322 = vmatprep.subr.bf16.mxu0 %v3710
    %5323 = vmatpush1.bf16.msra.mxu0 %v3709
    %5324 = vmatprep.subr.bf16.mxu0 %v3712
    %5325 = vmatpush1.bf16.msra.mxu0 %v3711
    %5326 = vmatprep.subr.bf16.mxu0 %v3714
    %5327 = vmatpush1.bf16.msra.mxu0 %v3713
    %5328 = vmatprep.subr.bf16.mxu0 %v3716
    %5329 = vmatpush1.bf16.msra.mxu0 %v3715
    %5330 = vmatprep.subr.bf16.mxu0 %v3718
    %5331 = vmatpush1.bf16.msra.mxu0 %v3717
    %5332 = vmatprep.subr.bf16.mxu0 %v3720
    %5333 = vmatpush1.bf16.msra.mxu0 %v3719
    %5334 = vmatprep.subr.bf16.mxu0 %v3722
    %5335 = vmatpush1.bf16.msra.mxu0 %v3721
    %5336 = vmatprep.subr.bf16.mxu0 %v3724
    %5337 = vmatpush1.bf16.msra.mxu0 %v3723
    %5338 = vmatprep.subr.bf16.mxu0 %v3726
    %5339 = vmatpush1.bf16.msra.mxu0 %v3725
    %5340 = vmatprep.subr.bf16.mxu0 %v3728
    %5341 = vmatpush1.bf16.msra.mxu0 %v3727
    %5342 = vmatprep.subr.bf16.mxu0 %v3730
    %5343 = vmatpush1.bf16.msra.mxu0 %v3729
    %5344 = vmatprep.subr.bf16.mxu0 %v3732
    %5345 = vmatpush1.bf16.msra.mxu0 %v3731
    %5346 = vmatprep.mubr.bf16.mxu0 %v928
    %5347 = vmatmul.mubr.bf16.gmra.mrb[0].mxu0 %v926
    %v5348 = vpop.f32.mrb[0].mxu0
    %v5349 = vadd.f32 %v5308, %v5348
    %v5350 = vpop.f32.mrb[0].mxu0
    %v5351 = vadd.f32 %v5310, %v5350
    %v5352 = vpop.f32.mrb[0].mxu0
    %v5353 = vpop.f32.mrb[0].mxu0
    %5354 = vdwg.mxu0
    %5355 = vmatprep.subr.bf16.mxu0 %v3734
    %5356 = vmatpush1.bf16.msra.mxu0 %v3733
    %5357 = vmatprep.subr.bf16.mxu0 %v3736
    %5358 = vmatpush1.bf16.msra.mxu0 %v3735
    %5359 = vmatprep.subr.bf16.mxu0 %v3738
    %5360 = vmatpush1.bf16.msra.mxu0 %v3737
    %5361 = vmatprep.subr.bf16.mxu0 %v3740
    %5362 = vmatpush1.bf16.msra.mxu0 %v3739
    %5363 = vmatprep.subr.bf16.mxu0 %v3742
    %5364 = vmatpush1.bf16.msra.mxu0 %v3741
    %5365 = vmatprep.subr.bf16.mxu0 %v3744
    %5366 = vmatpush1.bf16.msra.mxu0 %v3743
    %5367 = vmatprep.subr.bf16.mxu0 %v3746
    %5368 = vmatpush1.bf16.msra.mxu0 %v3745
    %5369 = vmatprep.subr.bf16.mxu0 %v3748
    %5370 = vmatpush1.bf16.msra.mxu0 %v3747
    %5371 = vmatprep.subr.bf16.mxu0 %v3750
    %5372 = vmatpush1.bf16.msra.mxu0 %v3749
    %5373 = vmatprep.subr.bf16.mxu0 %v3752
    %5374 = vmatpush1.bf16.msra.mxu0 %v3751
    %5375 = vmatprep.subr.bf16.mxu0 %v3754
    %5376 = vmatpush1.bf16.msra.mxu0 %v3753
    %5377 = vmatprep.subr.bf16.mxu0 %v3756
    %5378 = vmatpush1.bf16.msra.mxu0 %v3755
    %5379 = vmatprep.subr.bf16.mxu0 %v3758
    %5380 = vmatpush1.bf16.msra.mxu0 %v3757
    %5381 = vmatprep.subr.bf16.mxu0 %v3760
    %5382 = vmatpush1.bf16.msra.mxu0 %v3759
    %5383 = vmatprep.subr.bf16.mxu0 %v3762
    %5384 = vmatpush1.bf16.msra.mxu0 %v3761
    %5385 = vmatprep.subr.bf16.mxu0 %v3764
    %5386 = vmatpush1.bf16.msra.mxu0 %v3763
    %5387 = vmatprep.mubr.bf16.mxu0 %v925
    %5388 = vmatmul.mubr.bf16.gmra.mrb[0].mxu0 %v911
    %v5389 = vpop.f32.mrb[0].mxu0
    %v5390 = vadd.f32 %v5349, %v5389
    %v5391 = vpop.f32.mrb[0].mxu0
    %v5392 = vadd.f32 %v5351, %v5391
    %v5393 = vpop.f32.mrb[0].mxu0
    %v5394 = vpop.f32.mrb[0].mxu0
    %5395 = vdwg.mxu0
    %5396 = vmatprep.subr.bf16.mxu0 %v3766
    %5397 = vmatpush1.bf16.msra.mxu0 %v3765
    %5398 = vmatprep.subr.bf16.mxu0 %v3768
    %5399 = vmatpush1.bf16.msra.mxu0 %v3767
    %5400 = vmatprep.subr.bf16.mxu0 %v3770
    %5401 = vmatpush1.bf16.msra.mxu0 %v3769
    %5402 = vmatprep.subr.bf16.mxu0 %v3772
    %5403 = vmatpush1.bf16.msra.mxu0 %v3771
    %5404 = vmatprep.subr.bf16.mxu0 %v3774
    %5405 = vmatpush1.bf16.msra.mxu0 %v3773
    %5406 = vmatprep.subr.bf16.mxu0 %v3776
    %5407 = vmatpush1.bf16.msra.mxu0 %v3775
    %5408 = vmatprep.subr.bf16.mxu0 %v3778
    %5409 = vmatpush1.bf16.msra.mxu0 %v3777
    %5410 = vmatprep.subr.bf16.mxu0 %v3780
    %5411 = vmatpush1.bf16.msra.mxu0 %v3779
    %5412 = vmatprep.subr.bf16.mxu0 %v3782
    %5413 = vmatpush1.bf16.msra.mxu0 %v3781
    %5414 = vmatprep.subr.bf16.mxu0 %v3784
    %5415 = vmatpush1.bf16.msra.mxu0 %v3783
    %5416 = vmatprep.subr.bf16.mxu0 %v3786
    %5417 = vmatpush1.bf16.msra.mxu0 %v3785
    %5418 = vmatprep.subr.bf16.mxu0 %v3788
    %5419 = vmatpush1.bf16.msra.mxu0 %v3787
    %5420 = vmatprep.subr.bf16.mxu0 %v3790
    %5421 = vmatpush1.bf16.msra.mxu0 %v3789
    %5422 = vmatprep.subr.bf16.mxu0 %v3792
    %5423 = vmatpush1.bf16.msra.mxu0 %v3791
    %5424 = vmatprep.subr.bf16.mxu0 %v3794
    %5425 = vmatpush1.bf16.msra.mxu0 %v3793
    %5426 = vmatprep.subr.bf16.mxu0 %v3796
    %5427 = vmatpush1.bf16.msra.mxu0 %v3795
    %5428 = vmatprep.mubr.bf16.mxu0 %v929
    %5429 = vmatmul.mubr.bf16.gmra.mrb[0].mxu0 %v927
    %v5430 = vpop.f32.mrb[0].mxu0
    %v5431 = vadd.f32 %v5390, %v5430
    %v5432 = vpop.f32.mrb[0].mxu0
    %v5433 = vadd.f32 %v5392, %v5432
    %v5434 = vpop.f32.mrb[0].mxu0
    %v5435 = vpop.f32.mrb[0].mxu0
    %5436 = vdwg.mxu0
    %5437 = vmatprep.subr.bf16.mxu0 %v3798
    %5438 = vmatpush1.bf16.msra.mxu0 %v3797
    %5439 = vmatprep.subr.bf16.mxu0 %v3800
    %5440 = vmatpush1.bf16.msra.mxu0 %v3799
    %5441 = vmatprep.subr.bf16.mxu0 %v3802
    %5442 = vmatpush1.bf16.msra.mxu0 %v3801
    %5443 = vmatprep.subr.bf16.mxu0 %v3804
    %5444 = vmatpush1.bf16.msra.mxu0 %v3803
    %5445 = vmatprep.subr.bf16.mxu0 %v3806
    %5446 = vmatpush1.bf16.msra.mxu0 %v3805
    %5447 = vmatprep.subr.bf16.mxu0 %v3808
    %5448 = vmatpush1.bf16.msra.mxu0 %v3807
    %5449 = vmatprep.subr.bf16.mxu0 %v3810
    %5450 = vmatpush1.bf16.msra.mxu0 %v3809
    %5451 = vmatprep.subr.bf16.mxu0 %v3812
    %5452 = vmatpush1.bf16.msra.mxu0 %v3811
    %5453 = vmatprep.subr.bf16.mxu0 %v3814
    %5454 = vmatpush1.bf16.msra.mxu0 %v3813
    %5455 = vmatprep.subr.bf16.mxu0 %v3816
    %5456 = vmatpush1.bf16.msra.mxu0 %v3815
    %5457 = vmatprep.subr.bf16.mxu0 %v3818
    %5458 = vmatpush1.bf16.msra.mxu0 %v3817
    %5459 = vmatprep.subr.bf16.mxu0 %v3820
    %5460 = vmatpush1.bf16.msra.mxu0 %v3819
    %5461 = vmatprep.subr.bf16.mxu0 %v3822
    %5462 = vmatpush1.bf16.msra.mxu0 %v3821
    %5463 = vmatprep.subr.bf16.mxu0 %v3824
    %5464 = vmatpush1.bf16.msra.mxu0 %v3823
    %5465 = vmatprep.subr.bf16.mxu0 %v3826
    %5466 = vmatpush1.bf16.msra.mxu0 %v3825
    %5467 = vmatprep.subr.bf16.mxu0 %v3828
    %5468 = vmatpush1.bf16.msra.mxu0 %v3827
    %5469 = vmatprep.mubr.bf16.mxu0 %v967
    %5470 = vmatmul.mubr.bf16.gmra.mrb[0].mxu0 %v953
    %v5471 = vpop.f32.mrb[0].mxu0
    %v5472 = vadd.f32 %v5431, %v5471
    %v5473 = vpop.f32.mrb[0].mxu0
    %v5474 = vadd.f32 %v5433, %v5473
    %v5475 = vpop.f32.mrb[0].mxu0
    %v5476 = vpop.f32.mrb[0].mxu0
    %5477 = vdwg.mxu0
    %5478 = vmatprep.subr.bf16.mxu0 %v3830
    %5479 = vmatpush1.bf16.msra.mxu0 %v3829
    %5480 = vmatprep.subr.bf16.mxu0 %v3832
    %5481 = vmatpush1.bf16.msra.mxu0 %v3831
    %5482 = vmatprep.subr.bf16.mxu0 %v3834
    %5483 = vmatpush1.bf16.msra.mxu0 %v3833
    %5484 = vmatprep.subr.bf16.mxu0 %v3836
    %5485 = vmatpush1.bf16.msra.mxu0 %v3835
    %5486 = vmatprep.subr.bf16.mxu0 %v3838
    %5487 = vmatpush1.bf16.msra.mxu0 %v3837
    %5488 = vmatprep.subr.bf16.mxu0 %v3840
    %5489 = vmatpush1.bf16.msra.mxu0 %v3839
    %5490 = vmatprep.subr.bf16.mxu0 %v3842
    %5491 = vmatpush1.bf16.msra.mxu0 %v3841
    %5492 = vmatprep.subr.bf16.mxu0 %v3844
    %5493 = vmatpush1.bf16.msra.mxu0 %v3843
    %5494 = vmatprep.subr.bf16.mxu0 %v3846
    %5495 = vmatpush1.bf16.msra.mxu0 %v3845
    %5496 = vmatprep.subr.bf16.mxu0 %v3848
    %5497 = vmatpush1.bf16.msra.mxu0 %v3847
    %5498 = vmatprep.subr.bf16.mxu0 %v3850
    %5499 = vmatpush1.bf16.msra.mxu0 %v3849
    %5500 = vmatprep.subr.bf16.mxu0 %v3852
    %5501 = vmatpush1.bf16.msra.mxu0 %v3851
    %5502 = vmatprep.subr.bf16.mxu0 %v3854
    %5503 = vmatpush1.bf16.msra.mxu0 %v3853
    %5504 = vmatprep.subr.bf16.mxu0 %v3856
    %5505 = vmatpush1.bf16.msra.mxu0 %v3855
    %5506 = vmatprep.subr.bf16.mxu0 %v3858
    %5507 = vmatpush1.bf16.msra.mxu0 %v3857
    %5508 = vmatprep.subr.bf16.mxu0 %v3860
    %5509 = vmatpush1.bf16.msra.mxu0 %v3859
    %5510 = vmatprep.mubr.bf16.mxu0 %v977
    %5511 = vmatmul.mubr.bf16.gmra.mrb[0].mxu0 %v975
    %v5512 = vpop.f32.mrb[0].mxu0
    %v5513 = vadd.f32 %v5472, %v5512
    %v5514 = vpop.f32.mrb[0].mxu0
    %v5515 = vadd.f32 %v5474, %v5514
    %v5516 = vpop.f32.mrb[0].mxu0
    %v5517 = vpop.f32.mrb[0].mxu0
    %5518 = vdwg.mxu0
    %5519 = vmatprep.subr.bf16.mxu0 %v3862
    %5520 = vmatpush1.bf16.msra.mxu0 %v3861
    %5521 = vmatprep.subr.bf16.mxu0 %v3864
    %5522 = vmatpush1.bf16.msra.mxu0 %v3863
    %5523 = vmatprep.subr.bf16.mxu0 %v3866
    %5524 = vmatpush1.bf16.msra.mxu0 %v3865
    %5525 = vmatprep.subr.bf16.mxu0 %v3868
    %5526 = vmatpush1.bf16.msra.mxu0 %v3867
    %5527 = vmatprep.subr.bf16.mxu0 %v3870
    %5528 = vmatpush1.bf16.msra.mxu0 %v3869
    %5529 = vmatprep.subr.bf16.mxu0 %v3872
    %5530 = vmatpush1.bf16.msra.mxu0 %v3871
    %5531 = vmatprep.subr.bf16.mxu0 %v3874
    %5532 = vmatpush1.bf16.msra.mxu0 %v3873
    %5533 = vmatprep.subr.bf16.mxu0 %v3876
    %5534 = vmatpush1.bf16.msra.mxu0 %v3875
    %5535 = vmatprep.subr.bf16.mxu0 %v3878
    %5536 = vmatpush1.bf16.msra.mxu0 %v3877
    %5537 = vmatprep.subr.bf16.mxu0 %v3880
    %5538 = vmatpush1.bf16.msra.mxu0 %v3879
    %5539 = vmatprep.subr.bf16.mxu0 %v3882
    %5540 = vmatpush1.bf16.msra.mxu0 %v3881
    %5541 = vmatprep.subr.bf16.mxu0 %v3884
    %5542 = vmatpush1.bf16.msra.mxu0 %v3883
    %5543 = vmatprep.subr.bf16.mxu0 %v3886
    %5544 = vmatpush1.bf16.msra.mxu0 %v3885
    %5545 = vmatprep.subr.bf16.mxu0 %v3888
    %5546 = vmatpush1.bf16.msra.mxu0 %v3887
    %5547 = vmatprep.subr.bf16.mxu0 %v3890
    %5548 = vmatpush1.bf16.msra.mxu0 %v3889
    %5549 = vmatprep.subr.bf16.mxu0 %v3892
    %5550 = vmatpush1.bf16.msra.mxu0 %v3891
    %5551 = vmatprep.mubr.bf16.mxu0 %v974
    %5552 = vmatmul.mubr.bf16.gmra.mrb[0].mxu0 %v960
    %v5553 = vpop.f32.mrb[0].mxu0
    %v5554 = vadd.f32 %v5513, %v5553
    %v5555 = vpop.f32.mrb[0].mxu0
    %v5556 = vadd.f32 %v5515, %v5555
    %v5557 = vpop.f32.mrb[0].mxu0
    %v5558 = vpop.f32.mrb[0].mxu0
    %5559 = vdwg.mxu0
    %5560 = vmatprep.subr.bf16.mxu0 %v3894
    %5561 = vmatpush1.bf16.msra.mxu0 %v3893
    %5562 = vmatprep.subr.bf16.mxu0 %v3896
    %5563 = vmatpush1.bf16.msra.mxu0 %v3895
    %5564 = vmatprep.subr.bf16.mxu0 %v3898
    %5565 = vmatpush1.bf16.msra.mxu0 %v3897
    %5566 = vmatprep.subr.bf16.mxu0 %v3900
    %5567 = vmatpush1.bf16.msra.mxu0 %v3899
    %5568 = vmatprep.subr.bf16.mxu0 %v3902
    %5569 = vmatpush1.bf16.msra.mxu0 %v3901
    %5570 = vmatprep.subr.bf16.mxu0 %v3904
    %5571 = vmatpush1.bf16.msra.mxu0 %v3903
    %5572 = vmatprep.subr.bf16.mxu0 %v3906
    %5573 = vmatpush1.bf16.msra.mxu0 %v3905
    %5574 = vmatprep.subr.bf16.mxu0 %v3908
    %5575 = vmatpush1.bf16.msra.mxu0 %v3907
    %5576 = vmatprep.subr.bf16.mxu0 %v3910
    %5577 = vmatpush1.bf16.msra.mxu0 %v3909
    %5578 = vmatprep.subr.bf16.mxu0 %v3912
    %5579 = vmatpush1.bf16.msra.mxu0 %v3911
    %5580 = vmatprep.subr.bf16.mxu0 %v3914
    %5581 = vmatpush1.bf16.msra.mxu0 %v3913
    %5582 = vmatprep.subr.bf16.mxu0 %v3916
    %5583 = vmatpush1.bf16.msra.mxu0 %v3915
    %5584 = vmatprep.subr.bf16.mxu0 %v3918
    %5585 = vmatpush1.bf16.msra.mxu0 %v3917
    %5586 = vmatprep.subr.bf16.mxu0 %v3920
    %5587 = vmatpush1.bf16.msra.mxu0 %v3919
    %5588 = vmatprep.subr.bf16.mxu0 %v3922
    %5589 = vmatpush1.bf16.msra.mxu0 %v3921
    %5590 = vmatprep.subr.bf16.mxu0 %v3924
    %5591 = vmatpush1.bf16.msra.mxu0 %v3923
    %5592 = vmatprep.mubr.bf16.mxu0 %v978
    %5593 = vmatmul.mubr.bf16.gmra.mrb[0].mxu0 %v976
    %v5594 = vpop.f32.mrb[0].mxu0
    %v5595 = vadd.f32 %v5554, %v5594
    %v5596 = vpop.f32.mrb[0].mxu0
    %v5597 = vadd.f32 %v5556, %v5596
    %v5598 = vpop.f32.mrb[0].mxu0
    %v5599 = vpop.f32.mrb[0].mxu0
    %5600 = vdwg.mxu0
    %5601 = vmatprep.subr.bf16.mxu0 %v3926
    %5602 = vmatpush1.bf16.msra.mxu0 %v3925
    %5603 = vmatprep.subr.bf16.mxu0 %v3928
    %5604 = vmatpush1.bf16.msra.mxu0 %v3927
    %5605 = vmatprep.subr.bf16.mxu0 %v3930
    %5606 = vmatpush1.bf16.msra.mxu0 %v3929
    %5607 = vmatprep.subr.bf16.mxu0 %v3932
    %5608 = vmatpush1.bf16.msra.mxu0 %v3931
    %5609 = vmatprep.subr.bf16.mxu0 %v3934
    %5610 = vmatpush1.bf16.msra.mxu0 %v3933
    %5611 = vmatprep.subr.bf16.mxu0 %v3936
    %5612 = vmatpush1.bf16.msra.mxu0 %v3935
    %5613 = vmatprep.subr.bf16.mxu0 %v3938
    %5614 = vmatpush1.bf16.msra.mxu0 %v3937
    %5615 = vmatprep.subr.bf16.mxu0 %v3940
    %5616 = vmatpush1.bf16.msra.mxu0 %v3939
    %5617 = vmatprep.subr.bf16.mxu0 %v3942
    %5618 = vmatpush1.bf16.msra.mxu0 %v3941
    %5619 = vmatprep.subr.bf16.mxu0 %v3944
    %5620 = vmatpush1.bf16.msra.mxu0 %v3943
    %5621 = vmatprep.subr.bf16.mxu0 %v3946
    %5622 = vmatpush1.bf16.msra.mxu0 %v3945
    %5623 = vmatprep.subr.bf16.mxu0 %v3948
    %5624 = vmatpush1.bf16.msra.mxu0 %v3947
    %5625 = vmatprep.subr.bf16.mxu0 %v3950
    %5626 = vmatpush1.bf16.msra.mxu0 %v3949
    %5627 = vmatprep.subr.bf16.mxu0 %v3952
    %5628 = vmatpush1.bf16.msra.mxu0 %v3951
    %5629 = vmatprep.subr.bf16.mxu0 %v3954
    %5630 = vmatpush1.bf16.msra.mxu0 %v3953
    %5631 = vmatprep.subr.bf16.mxu0 %v3956
    %5632 = vmatpush1.bf16.msra.mxu0 %v3955
    %5633 = vmatprep.mubr.bf16.mxu0 %v1016
    %5634 = vmatmul.mubr.bf16.gmra.mrb[0].mxu0 %v1002
    %v5635 = vpop.f32.mrb[0].mxu0
    %v5636 = vadd.f32 %v5595, %v5635
    %v5637 = vpop.f32.mrb[0].mxu0
    %v5638 = vadd.f32 %v5597, %v5637
    %v5639 = vpop.f32.mrb[0].mxu0
    %v5640 = vpop.f32.mrb[0].mxu0
    %5641 = vdwg.mxu0
    %5642 = vmatprep.subr.bf16.mxu0 %v3958
    %5643 = vmatpush1.bf16.msra.mxu0 %v3957
    %5644 = vmatprep.subr.bf16.mxu0 %v3960
    %5645 = vmatpush1.bf16.msra.mxu0 %v3959
    %5646 = vmatprep.subr.bf16.mxu0 %v3962
    %5647 = vmatpush1.bf16.msra.mxu0 %v3961
    %5648 = vmatprep.subr.bf16.mxu0 %v3964
    %5649 = vmatpush1.bf16.msra.mxu0 %v3963
    %5650 = vmatprep.subr.bf16.mxu0 %v3966
    %5651 = vmatpush1.bf16.msra.mxu0 %v3965
    %5652 = vmatprep.subr.bf16.mxu0 %v3968
    %5653 = vmatpush1.bf16.msra.mxu0 %v3967
    %5654 = vmatprep.subr.bf16.mxu0 %v3970
    %5655 = vmatpush1.bf16.msra.mxu0 %v3969
    %5656 = vmatprep.subr.bf16.mxu0 %v3972
    %5657 = vmatpush1.bf16.msra.mxu0 %v3971
    %5658 = vmatprep.subr.bf16.mxu0 %v3974
    %5659 = vmatpush1.bf16.msra.mxu0 %v3973
    %5660 = vmatprep.subr.bf16.mxu0 %v3976
    %5661 = vmatpush1.bf16.msra.mxu0 %v3975
    %5662 = vmatprep.subr.bf16.mxu0 %v3978
    %5663 = vmatpush1.bf16.msra.mxu0 %v3977
    %5664 = vmatprep.subr.bf16.mxu0 %v3980
    %5665 = vmatpush1.bf16.msra.mxu0 %v3979
    %5666 = vmatprep.subr.bf16.mxu0 %v3982
    %5667 = vmatpush1.bf16.msra.mxu0 %v3981
    %5668 = vmatprep.subr.bf16.mxu0 %v3984
    %5669 = vmatpush1.bf16.msra.mxu0 %v3983
    %5670 = vmatprep.subr.bf16.mxu0 %v3986
    %5671 = vmatpush1.bf16.msra.mxu0 %v3985
    %5672 = vmatprep.subr.bf16.mxu0 %v3988
    %5673 = vmatpush1.bf16.msra.mxu0 %v3987
    %5674 = vmatprep.mubr.bf16.mxu0 %v1026
    %5675 = vmatmul.mubr.bf16.gmra.mrb[0].mxu0 %v1024
    %v5676 = vpop.f32.mrb[0].mxu0
    %v5677 = vadd.f32 %v5636, %v5676
    %v5678 = vpop.f32.mrb[0].mxu0
    %v5679 = vadd.f32 %v5638, %v5678
    %v5680 = vpop.f32.mrb[0].mxu0
    %v5681 = vpop.f32.mrb[0].mxu0
    %5682 = vdwg.mxu0
    %5683 = vmatprep.subr.bf16.mxu0 %v3990
    %5684 = vmatpush1.bf16.msra.mxu0 %v3989
    %5685 = vmatprep.subr.bf16.mxu0 %v3992
    %5686 = vmatpush1.bf16.msra.mxu0 %v3991
    %5687 = vmatprep.subr.bf16.mxu0 %v3994
    %5688 = vmatpush1.bf16.msra.mxu0 %v3993
    %5689 = vmatprep.subr.bf16.mxu0 %v3996
    %5690 = vmatpush1.bf16.msra.mxu0 %v3995
    %5691 = vmatprep.subr.bf16.mxu0 %v3998
    %5692 = vmatpush1.bf16.msra.mxu0 %v3997
    %5693 = vmatprep.subr.bf16.mxu0 %v4000
    %5694 = vmatpush1.bf16.msra.mxu0 %v3999
    %5695 = vmatprep.subr.bf16.mxu0 %v4002
    %5696 = vmatpush1.bf16.msra.mxu0 %v4001
    %5697 = vmatprep.subr.bf16.mxu0 %v4004
    %5698 = vmatpush1.bf16.msra.mxu0 %v4003
    %5699 = vmatprep.subr.bf16.mxu0 %v4006
    %5700 = vmatpush1.bf16.msra.mxu0 %v4005
    %5701 = vmatprep.subr.bf16.mxu0 %v4008
    %5702 = vmatpush1.bf16.msra.mxu0 %v4007
    %5703 = vmatprep.subr.bf16.mxu0 %v4010
    %5704 = vmatpush1.bf16.msra.mxu0 %v4009
    %5705 = vmatprep.subr.bf16.mxu0 %v4012
    %5706 = vmatpush1.bf16.msra.mxu0 %v4011
    %5707 = vmatprep.subr.bf16.mxu0 %v4014
    %5708 = vmatpush1.bf16.msra.mxu0 %v4013
    %5709 = vmatprep.subr.bf16.mxu0 %v4016
    %5710 = vmatpush1.bf16.msra.mxu0 %v4015
    %5711 = vmatprep.subr.bf16.mxu0 %v4018
    %5712 = vmatpush1.bf16.msra.mxu0 %v4017
    %5713 = vmatprep.subr.bf16.mxu0 %v4020
    %5714 = vmatpush1.bf16.msra.mxu0 %v4019
    %5715 = vmatprep.mubr.bf16.mxu0 %v1023
    %5716 = vmatmul.mubr.bf16.gmra.mrb[0].mxu0 %v1009
    %v5717 = vpop.f32.mrb[0].mxu0
    %v5718 = vadd.f32 %v5677, %v5717
    %v5719 = vpop.f32.mrb[0].mxu0
    %v5720 = vadd.f32 %v5679, %v5719
    %v5721 = vpop.f32.mrb[0].mxu0
    %v5722 = vpop.f32.mrb[0].mxu0
    %5723 = vdwg.mxu0
    %5724 = vmatprep.subr.bf16.mxu0 %v4022
    %5725 = vmatpush1.bf16.msra.mxu0 %v4021
    %5726 = vmatprep.subr.bf16.mxu0 %v4024
    %5727 = vmatpush1.bf16.msra.mxu0 %v4023
    %5728 = vmatprep.subr.bf16.mxu0 %v4026
    %5729 = vmatpush1.bf16.msra.mxu0 %v4025
    %5730 = vmatprep.subr.bf16.mxu0 %v4028
    %5731 = vmatpush1.bf16.msra.mxu0 %v4027
    %5732 = vmatprep.subr.bf16.mxu0 %v4030
    %5733 = vmatpush1.bf16.msra.mxu0 %v4029
    %5734 = vmatprep.subr.bf16.mxu0 %v4032
    %5735 = vmatpush1.bf16.msra.mxu0 %v4031
    %5736 = vmatprep.subr.bf16.mxu0 %v4034
    %5737 = vmatpush1.bf16.msra.mxu0 %v4033
    %5738 = vmatprep.subr.bf16.mxu0 %v4036
    %5739 = vmatpush1.bf16.msra.mxu0 %v4035
    %5740 = vmatprep.subr.bf16.mxu0 %v4038
    %5741 = vmatpush1.bf16.msra.mxu0 %v4037
    %5742 = vmatprep.subr.bf16.mxu0 %v4040
    %5743 = vmatpush1.bf16.msra.mxu0 %v4039
    %5744 = vmatprep.subr.bf16.mxu0 %v4042
    %5745 = vmatpush1.bf16.msra.mxu0 %v4041
    %5746 = vmatprep.subr.bf16.mxu0 %v4044
    %5747 = vmatpush1.bf16.msra.mxu0 %v4043
    %5748 = vmatprep.subr.bf16.mxu0 %v4046
    %5749 = vmatpush1.bf16.msra.mxu0 %v4045
    %5750 = vmatprep.subr.bf16.mxu0 %v4048
    %5751 = vmatpush1.bf16.msra.mxu0 %v4047
    %5752 = vmatprep.subr.bf16.mxu0 %v4050
    %5753 = vmatpush1.bf16.msra.mxu0 %v4049
    %5754 = vmatprep.subr.bf16.mxu0 %v4052
    %5755 = vmatpush1.bf16.msra.mxu0 %v4051
    %5756 = vmatprep.mubr.bf16.mxu0 %v1027
    %5757 = vmatmul.mubr.bf16.gmra.mrb[0].mxu0 %v1025
    %v5758 = vpop.f32.mrb[0].mxu0
    %v5759 = vadd.f32 %v5718, %v5758
    %v5760 = vpop.f32.mrb[0].mxu0
    %v5761 = vadd.f32 %v5720, %v5760
    %v5762 = vpop.f32.mrb[0].mxu0
    %v5763 = vpop.f32.mrb[0].mxu0
    %5764 = vdwg.mxu0
    %5765 = vmatprep.subr.bf16.mxu0 %v4054
    %5766 = vmatpush1.bf16.msra.mxu0 %v4053
    %5767 = vmatprep.subr.bf16.mxu0 %v4056
    %5768 = vmatpush1.bf16.msra.mxu0 %v4055
    %5769 = vmatprep.subr.bf16.mxu0 %v4058
    %5770 = vmatpush1.bf16.msra.mxu0 %v4057
    %5771 = vmatprep.subr.bf16.mxu0 %v4060
    %5772 = vmatpush1.bf16.msra.mxu0 %v4059
    %5773 = vmatprep.subr.bf16.mxu0 %v4062
    %5774 = vmatpush1.bf16.msra.mxu0 %v4061
    %5775 = vmatprep.subr.bf16.mxu0 %v4064
    %5776 = vmatpush1.bf16.msra.mxu0 %v4063
    %5777 = vmatprep.subr.bf16.mxu0 %v4066
    %5778 = vmatpush1.bf16.msra.mxu0 %v4065
    %5779 = vmatprep.subr.bf16.mxu0 %v4068
    %5780 = vmatpush1.bf16.msra.mxu0 %v4067
    %5781 = vmatprep.subr.bf16.mxu0 %v4070
    %5782 = vmatpush1.bf16.msra.mxu0 %v4069
    %5783 = vmatprep.subr.bf16.mxu0 %v4072
    %5784 = vmatpush1.bf16.msra.mxu0 %v4071
    %5785 = vmatprep.subr.bf16.mxu0 %v4074
    %5786 = vmatpush1.bf16.msra.mxu0 %v4073
    %5787 = vmatprep.subr.bf16.mxu0 %v4076
    %5788 = vmatpush1.bf16.msra.mxu0 %v4075
    %5789 = vmatprep.subr.bf16.mxu0 %v4078
    %5790 = vmatpush1.bf16.msra.mxu0 %v4077
    %5791 = vmatprep.subr.bf16.mxu0 %v4080
    %5792 = vmatpush1.bf16.msra.mxu0 %v4079
    %5793 = vmatprep.subr.bf16.mxu0 %v4082
    %5794 = vmatpush1.bf16.msra.mxu0 %v4081
    %5795 = vmatprep.subr.bf16.mxu0 %v4084
    %5796 = vmatpush1.bf16.msra.mxu0 %v4083
    %5797 = vmatprep.mubr.bf16.mxu0 %v1065
    %5798 = vmatmul.mubr.bf16.gmra.mrb[0].mxu0 %v1051
    %v5799 = vpop.f32.mrb[0].mxu0
    %v5800 = vadd.f32 %v5759, %v5799
    %v5801 = vpop.f32.mrb[0].mxu0
    %v5802 = vadd.f32 %v5761, %v5801
    %v5803 = vpop.f32.mrb[0].mxu0
    %v5804 = vpop.f32.mrb[0].mxu0
    %5805 = vdwg.mxu0
    %5806 = vmatprep.subr.bf16.mxu0 %v4086
    %5807 = vmatpush1.bf16.msra.mxu0 %v4085
    %5808 = vmatprep.subr.bf16.mxu0 %v4088
    %5809 = vmatpush1.bf16.msra.mxu0 %v4087
    %5810 = vmatprep.subr.bf16.mxu0 %v4090
    %5811 = vmatpush1.bf16.msra.mxu0 %v4089
    %5812 = vmatprep.subr.bf16.mxu0 %v4092
    %5813 = vmatpush1.bf16.msra.mxu0 %v4091
    %5814 = vmatprep.subr.bf16.mxu0 %v4094
    %5815 = vmatpush1.bf16.msra.mxu0 %v4093
    %5816 = vmatprep.subr.bf16.mxu0 %v4096
    %5817 = vmatpush1.bf16.msra.mxu0 %v4095
    %5818 = vmatprep.subr.bf16.mxu0 %v4098
    %5819 = vmatpush1.bf16.msra.mxu0 %v4097
    %5820 = vmatprep.subr.bf16.mxu0 %v4100
    %5821 = vmatpush1.bf16.msra.mxu0 %v4099
    %5822 = vmatprep.subr.bf16.mxu0 %v4102
    %5823 = vmatpush1.bf16.msra.mxu0 %v4101
    %5824 = vmatprep.subr.bf16.mxu0 %v4104
    %5825 = vmatpush1.bf16.msra.mxu0 %v4103
    %5826 = vmatprep.subr.bf16.mxu0 %v4106
    %5827 = vmatpush1.bf16.msra.mxu0 %v4105
    %5828 = vmatprep.subr.bf16.mxu0 %v4108
    %5829 = vmatpush1.bf16.msra.mxu0 %v4107
    %5830 = vmatprep.subr.bf16.mxu0 %v4110
    %5831 = vmatpush1.bf16.msra.mxu0 %v4109
    %5832 = vmatprep.subr.bf16.mxu0 %v4112
    %5833 = vmatpush1.bf16.msra.mxu0 %v4111
    %5834 = vmatprep.subr.bf16.mxu0 %v4114
    %5835 = vmatpush1.bf16.msra.mxu0 %v4113
    %5836 = vmatprep.subr.bf16.mxu0 %v4116
    %5837 = vmatpush1.bf16.msra.mxu0 %v4115
    %5838 = vmatprep.mubr.bf16.mxu0 %v1075
    %5839 = vmatmul.mubr.bf16.gmra.mrb[0].mxu0 %v1073
    %v5840 = vpop.f32.mrb[0].mxu0
    %v5841 = vadd.f32 %v5800, %v5840
    %v5842 = vpop.f32.mrb[0].mxu0
    %v5843 = vadd.f32 %v5802, %v5842
    %v5844 = vpop.f32.mrb[0].mxu0
    %v5845 = vpop.f32.mrb[0].mxu0
    %5846 = vdwg.mxu0
    %5847 = vmatprep.subr.bf16.mxu0 %v4118
    %5848 = vmatpush1.bf16.msra.mxu0 %v4117
    %5849 = vmatprep.subr.bf16.mxu0 %v4120
    %5850 = vmatpush1.bf16.msra.mxu0 %v4119
    %5851 = vmatprep.subr.bf16.mxu0 %v4122
    %5852 = vmatpush1.bf16.msra.mxu0 %v4121
    %5853 = vmatprep.subr.bf16.mxu0 %v4124
    %5854 = vmatpush1.bf16.msra.mxu0 %v4123
    %5855 = vmatprep.subr.bf16.mxu0 %v4126
    %5856 = vmatpush1.bf16.msra.mxu0 %v4125
    %5857 = vmatprep.subr.bf16.mxu0 %v4128
    %5858 = vmatpush1.bf16.msra.mxu0 %v4127
    %5859 = vmatprep.subr.bf16.mxu0 %v4130
    %5860 = vmatpush1.bf16.msra.mxu0 %v4129
    %5861 = vmatprep.subr.bf16.mxu0 %v4132
    %5862 = vmatpush1.bf16.msra.mxu0 %v4131
    %5863 = vmatprep.subr.bf16.mxu0 %v4134
    %5864 = vmatpush1.bf16.msra.mxu0 %v4133
    %5865 = vmatprep.subr.bf16.mxu0 %v4136
    %5866 = vmatpush1.bf16.msra.mxu0 %v4135
    %5867 = vmatprep.subr.bf16.mxu0 %v4138
    %5868 = vmatpush1.bf16.msra.mxu0 %v4137
    %5869 = vmatprep.subr.bf16.mxu0 %v4140
    %5870 = vmatpush1.bf16.msra.mxu0 %v4139
    %5871 = vmatprep.subr.bf16.mxu0 %v4142
    %5872 = vmatpush1.bf16.msra.mxu0 %v4141
    %5873 = vmatprep.subr.bf16.mxu0 %v4144
    %5874 = vmatpush1.bf16.msra.mxu0 %v4143
    %5875 = vmatprep.subr.bf16.mxu0 %v4146
    %5876 = vmatpush1.bf16.msra.mxu0 %v4145
    %5877 = vmatprep.subr.bf16.mxu0 %v4148
    %5878 = vmatpush1.bf16.msra.mxu0 %v4147
    %5879 = vmatprep.mubr.bf16.mxu0 %v1072
    %5880 = vmatmul.mubr.bf16.gmra.mrb[0].mxu0 %v1058
    %v5881 = vpop.f32.mrb[0].mxu0
    %v5882 = vadd.f32 %v5841, %v5881
    %v5883 = vpop.f32.mrb[0].mxu0
    %v5884 = vadd.f32 %v5843, %v5883
    %v5885 = vpop.f32.mrb[0].mxu0
    %v5886 = vpop.f32.mrb[0].mxu0
    %5887 = vdwg.mxu0
    %5888 = vmatprep.subr.bf16.mxu0 %v4150
    %5889 = vmatpush1.bf16.msra.mxu0 %v4149
    %5890 = vmatprep.subr.bf16.mxu0 %v4152
    %5891 = vmatpush1.bf16.msra.mxu0 %v4151
    %5892 = vmatprep.subr.bf16.mxu0 %v4154
    %5893 = vmatpush1.bf16.msra.mxu0 %v4153
    %5894 = vmatprep.subr.bf16.mxu0 %v4156
    %5895 = vmatpush1.bf16.msra.mxu0 %v4155
    %5896 = vmatprep.subr.bf16.mxu0 %v4158
    %5897 = vmatpush1.bf16.msra.mxu0 %v4157
    %5898 = vmatprep.subr.bf16.mxu0 %v4160
    %5899 = vmatpush1.bf16.msra.mxu0 %v4159
    %5900 = vmatprep.subr.bf16.mxu0 %v4162
    %5901 = vmatpush1.bf16.msra.mxu0 %v4161
    %5902 = vmatprep.subr.bf16.mxu0 %v4164
    %5903 = vmatpush1.bf16.msra.mxu0 %v4163
    %5904 = vmatprep.subr.bf16.mxu0 %v4166
    %5905 = vmatpush1.bf16.msra.mxu0 %v4165
    %5906 = vmatprep.subr.bf16.mxu0 %v4168
    %5907 = vmatpush1.bf16.msra.mxu0 %v4167
    %5908 = vmatprep.subr.bf16.mxu0 %v4170
    %5909 = vmatpush1.bf16.msra.mxu0 %v4169
    %5910 = vmatprep.subr.bf16.mxu0 %v4172
    %5911 = vmatpush1.bf16.msra.mxu0 %v4171
    %5912 = vmatprep.subr.bf16.mxu0 %v4174
    %5913 = vmatpush1.bf16.msra.mxu0 %v4173
    %5914 = vmatprep.subr.bf16.mxu0 %v4176
    %5915 = vmatpush1.bf16.msra.mxu0 %v4175
    %5916 = vmatprep.subr.bf16.mxu0 %v4178
    %5917 = vmatpush1.bf16.msra.mxu0 %v4177
    %5918 = vmatprep.subr.bf16.mxu0 %v4180
    %5919 = vmatpush1.bf16.msra.mxu0 %v4179
    %5920 = vmatprep.mubr.bf16.mxu0 %v1076
    %5921 = vmatmul.mubr.bf16.gmra.mrb[0].mxu0 %v1074
    %v5922 = vpop.f32.mrb[0].mxu0
    %v5923 = vadd.f32 %v5882, %v5922
    %v5924 = vpop.f32.mrb[0].mxu0
    %v5925 = vadd.f32 %v5884, %v5924
    %v5926 = vpop.f32.mrb[0].mxu0
    %v5927 = vpop.f32.mrb[0].mxu0
    %5928 = vdwg.mxu0
    %5929 = vmatprep.subr.bf16.mxu0 %v4182
    %5930 = vmatpush1.bf16.msra.mxu0 %v4181
    %5931 = vmatprep.subr.bf16.mxu0 %v4184
    %5932 = vmatpush1.bf16.msra.mxu0 %v4183
    %5933 = vmatprep.subr.bf16.mxu0 %v4186
    %5934 = vmatpush1.bf16.msra.mxu0 %v4185
    %5935 = vmatprep.subr.bf16.mxu0 %v4188
    %5936 = vmatpush1.bf16.msra.mxu0 %v4187
    %5937 = vmatprep.subr.bf16.mxu0 %v4190
    %5938 = vmatpush1.bf16.msra.mxu0 %v4189
    %5939 = vmatprep.subr.bf16.mxu0 %v4192
    %5940 = vmatpush1.bf16.msra.mxu0 %v4191
    %5941 = vmatprep.subr.bf16.mxu0 %v4194
    %5942 = vmatpush1.bf16.msra.mxu0 %v4193
    %5943 = vmatprep.subr.bf16.mxu0 %v4196
    %5944 = vmatpush1.bf16.msra.mxu0 %v4195
    %5945 = vmatprep.subr.bf16.mxu0 %v4198
    %5946 = vmatpush1.bf16.msra.mxu0 %v4197
    %5947 = vmatprep.subr.bf16.mxu0 %v4200
    %5948 = vmatpush1.bf16.msra.mxu0 %v4199
    %5949 = vmatprep.subr.bf16.mxu0 %v4202
    %5950 = vmatpush1.bf16.msra.mxu0 %v4201
    %5951 = vmatprep.subr.bf16.mxu0 %v4204
    %5952 = vmatpush1.bf16.msra.mxu0 %v4203
    %5953 = vmatprep.subr.bf16.mxu0 %v4206
    %5954 = vmatpush1.bf16.msra.mxu0 %v4205
    %5955 = vmatprep.subr.bf16.mxu0 %v4208
    %5956 = vmatpush1.bf16.msra.mxu0 %v4207
    %5957 = vmatprep.subr.bf16.mxu0 %v4210
    %5958 = vmatpush1.bf16.msra.mxu0 %v4209
    %5959 = vmatprep.subr.bf16.mxu0 %v4212
    %5960 = vmatpush1.bf16.msra.mxu0 %v4211
    %5961 = vmatprep.mubr.bf16.mxu0 %v1114
    %5962 = vmatmul.mubr.bf16.gmra.mrb[0].mxu0 %v1100
    %v5963 = vpop.f32.mrb[0].mxu0
    %v5964 = vadd.f32 %v5923, %v5963
    %v5965 = vpop.f32.mrb[0].mxu0
    %v5966 = vadd.f32 %v5925, %v5965
    %v5967 = vpop.f32.mrb[0].mxu0
    %v5968 = vpop.f32.mrb[0].mxu0
    %5969 = vdwg.mxu0
    %5970 = vmatprep.subr.bf16.mxu0 %v4214
    %5971 = vmatpush1.bf16.msra.mxu0 %v4213
    %5972 = vmatprep.subr.bf16.mxu0 %v4216
    %5973 = vmatpush1.bf16.msra.mxu0 %v4215
    %5974 = vmatprep.subr.bf16.mxu0 %v4218
    %5975 = vmatpush1.bf16.msra.mxu0 %v4217
    %5976 = vmatprep.subr.bf16.mxu0 %v4220
    %5977 = vmatpush1.bf16.msra.mxu0 %v4219
    %5978 = vmatprep.subr.bf16.mxu0 %v4222
    %5979 = vmatpush1.bf16.msra.mxu0 %v4221
    %5980 = vmatprep.subr.bf16.mxu0 %v4224
    %5981 = vmatpush1.bf16.msra.mxu0 %v4223
    %5982 = vmatprep.subr.bf16.mxu0 %v4226
    %5983 = vmatpush1.bf16.msra.mxu0 %v4225
    %5984 = vmatprep.subr.bf16.mxu0 %v4228
    %5985 = vmatpush1.bf16.msra.mxu0 %v4227
    %5986 = vmatprep.subr.bf16.mxu0 %v4230
    %5987 = vmatpush1.bf16.msra.mxu0 %v4229
    %5988 = vmatprep.subr.bf16.mxu0 %v4232
    %5989 = vmatpush1.bf16.msra.mxu0 %v4231
    %5990 = vmatprep.subr.bf16.mxu0 %v4234
    %5991 = vmatpush1.bf16.msra.mxu0 %v4233
    %5992 = vmatprep.subr.bf16.mxu0 %v4236
    %5993 = vmatpush1.bf16.msra.mxu0 %v4235
    %5994 = vmatprep.subr.bf16.mxu0 %v4238
    %5995 = vmatpush1.bf16.msra.mxu0 %v4237
    %5996 = vmatprep.subr.bf16.mxu0 %v4240
    %5997 = vmatpush1.bf16.msra.mxu0 %v4239
    %5998 = vmatprep.subr.bf16.mxu0 %v4242
    %5999 = vmatpush1.bf16.msra.mxu0 %v4241
    %6000 = vmatprep.subr.bf16.mxu0 %v4244
    %6001 = vmatpush1.bf16.msra.mxu0 %v4243
    %6002 = vmatprep.mubr.bf16.mxu0 %v1124
    %6003 = vmatmul.mubr.bf16.gmra.mrb[0].mxu0 %v1122
    %v6004 = vpop.f32.mrb[0].mxu0
    %v6005 = vadd.f32 %v5964, %v6004
    %v6006 = vpop.f32.mrb[0].mxu0
    %v6007 = vadd.f32 %v5966, %v6006
    %v6008 = vpop.f32.mrb[0].mxu0
    %v6009 = vpop.f32.mrb[0].mxu0
    %6010 = vdwg.mxu0
    %6011 = vmatprep.subr.bf16.mxu0 %v4246
    %6012 = vmatpush1.bf16.msra.mxu0 %v4245
    %6013 = vmatprep.subr.bf16.mxu0 %v4248
    %6014 = vmatpush1.bf16.msra.mxu0 %v4247
    %6015 = vmatprep.subr.bf16.mxu0 %v4250
    %6016 = vmatpush1.bf16.msra.mxu0 %v4249
    %6017 = vmatprep.subr.bf16.mxu0 %v4252
    %6018 = vmatpush1.bf16.msra.mxu0 %v4251
    %6019 = vmatprep.subr.bf16.mxu0 %v4254
    %6020 = vmatpush1.bf16.msra.mxu0 %v4253
    %6021 = vmatprep.subr.bf16.mxu0 %v4256
    %6022 = vmatpush1.bf16.msra.mxu0 %v4255
    %6023 = vmatprep.subr.bf16.mxu0 %v4258
    %6024 = vmatpush1.bf16.msra.mxu0 %v4257
    %6025 = vmatprep.subr.bf16.mxu0 %v4260
    %6026 = vmatpush1.bf16.msra.mxu0 %v4259
    %6027 = vmatprep.subr.bf16.mxu0 %v4262
    %6028 = vmatpush1.bf16.msra.mxu0 %v4261
    %6029 = vmatprep.subr.bf16.mxu0 %v4264
    %6030 = vmatpush1.bf16.msra.mxu0 %v4263
    %6031 = vmatprep.subr.bf16.mxu0 %v4266
    %6032 = vmatpush1.bf16.msra.mxu0 %v4265
    %6033 = vmatprep.subr.bf16.mxu0 %v4268
    %6034 = vmatpush1.bf16.msra.mxu0 %v4267
    %6035 = vmatprep.subr.bf16.mxu0 %v4270
    %6036 = vmatpush1.bf16.msra.mxu0 %v4269
    %6037 = vmatprep.subr.bf16.mxu0 %v4272
    %6038 = vmatpush1.bf16.msra.mxu0 %v4271
    %6039 = vmatprep.subr.bf16.mxu0 %v4274
    %6040 = vmatpush1.bf16.msra.mxu0 %v4273
    %6041 = vmatprep.subr.bf16.mxu0 %v4276
    %6042 = vmatpush1.bf16.msra.mxu0 %v4275
    %6043 = vmatprep.mubr.bf16.mxu0 %v1121
    %6044 = vmatmul.mubr.bf16.gmra.mrb[0].mxu0 %v1107
    %v6045 = vpop.f32.mrb[0].mxu0
    %v6046 = vadd.f32 %v6005, %v6045
    %v6047 = vpop.f32.mrb[0].mxu0
    %v6048 = vadd.f32 %v6007, %v6047
    %v6049 = vpop.f32.mrb[0].mxu0
    %v6050 = vpop.f32.mrb[0].mxu0
    %6051 = vdwg.mxu0
    %6052 = vmatprep.subr.bf16.mxu0 %v4278
    %6053 = vmatpush1.bf16.msra.mxu0 %v4277
    %6054 = vmatprep.subr.bf16.mxu0 %v4280
    %6055 = vmatpush1.bf16.msra.mxu0 %v4279
    %6056 = vmatprep.subr.bf16.mxu0 %v4282
    %6057 = vmatpush1.bf16.msra.mxu0 %v4281
    %6058 = vmatprep.subr.bf16.mxu0 %v4284
    %6059 = vmatpush1.bf16.msra.mxu0 %v4283
    %6060 = vmatprep.subr.bf16.mxu0 %v4286
    %6061 = vmatpush1.bf16.msra.mxu0 %v4285
    %6062 = vmatprep.subr.bf16.mxu0 %v4288
    %6063 = vmatpush1.bf16.msra.mxu0 %v4287
    %6064 = vmatprep.subr.bf16.mxu0 %v4290
    %6065 = vmatpush1.bf16.msra.mxu0 %v4289
    %6066 = vmatprep.subr.bf16.mxu0 %v4292
    %6067 = vmatpush1.bf16.msra.mxu0 %v4291
    %6068 = vmatprep.subr.bf16.mxu0 %v4294
    %6069 = vmatpush1.bf16.msra.mxu0 %v4293
    %6070 = vmatprep.subr.bf16.mxu0 %v4296
    %6071 = vmatpush1.bf16.msra.mxu0 %v4295
    %6072 = vmatprep.subr.bf16.mxu0 %v4298
    %6073 = vmatpush1.bf16.msra.mxu0 %v4297
    %6074 = vmatprep.subr.bf16.mxu0 %v4300
    %6075 = vmatpush1.bf16.msra.mxu0 %v4299
    %6076 = vmatprep.subr.bf16.mxu0 %v4302
    %6077 = vmatpush1.bf16.msra.mxu0 %v4301
    %6078 = vmatprep.subr.bf16.mxu0 %v4304
    %6079 = vmatpush1.bf16.msra.mxu0 %v4303
    %6080 = vmatprep.subr.bf16.mxu0 %v4306
    %6081 = vmatpush1.bf16.msra.mxu0 %v4305
    %6082 = vmatprep.subr.bf16.mxu0 %v4308
    %6083 = vmatpush1.bf16.msra.mxu0 %v4307
    %6084 = vmatprep.mubr.bf16.mxu0 %v1125
    %6085 = vmatmul.mubr.bf16.gmra.mrb[0].mxu0 %v1123
    %v6086 = vpop.f32.mrb[0].mxu0
    %v6087 = vadd.f32 %v6046, %v6086
    %v6088 = vpop.f32.mrb[0].mxu0
    %v6089 = vadd.f32 %v6048, %v6088
    %v6090 = vpop.f32.mrb[0].mxu0
    %v6091 = vpop.f32.mrb[0].mxu0
    %6092 = vdwg.mxu0
    %6093 = vmatprep.subr.bf16.mxu0 %v4310
    %6094 = vmatpush1.bf16.msra.mxu0 %v4309
    %6095 = vmatprep.subr.bf16.mxu0 %v4312
    %6096 = vmatpush1.bf16.msra.mxu0 %v4311
    %6097 = vmatprep.subr.bf16.mxu0 %v4314
    %6098 = vmatpush1.bf16.msra.mxu0 %v4313
    %6099 = vmatprep.subr.bf16.mxu0 %v4316
    %6100 = vmatpush1.bf16.msra.mxu0 %v4315
    %6101 = vmatprep.subr.bf16.mxu0 %v4318
    %6102 = vmatpush1.bf16.msra.mxu0 %v4317
    %6103 = vmatprep.subr.bf16.mxu0 %v4320
    %6104 = vmatpush1.bf16.msra.mxu0 %v4319
    %6105 = vmatprep.subr.bf16.mxu0 %v4322
    %6106 = vmatpush1.bf16.msra.mxu0 %v4321
    %6107 = vmatprep.subr.bf16.mxu0 %v4324
    %6108 = vmatpush1.bf16.msra.mxu0 %v4323
    %6109 = vmatprep.subr.bf16.mxu0 0
    %6110 = vmatpush1.bf16.msra.mxu0 0
    %6111 = vmatprep.subr.bf16.mxu0 0
    %6112 = vmatpush1.bf16.msra.mxu0 0
    %6113 = vmatprep.subr.bf16.mxu0 0
    %6114 = vmatpush1.bf16.msra.mxu0 0
    %6115 = vmatprep.subr.bf16.mxu0 0
    %6116 = vmatpush1.bf16.msra.mxu0 0
    %6117 = vmatprep.subr.bf16.mxu0 0
    %6118 = vmatpush1.bf16.msra.mxu0 0
    %6119 = vmatprep.subr.bf16.mxu0 0
    %6120 = vmatpush1.bf16.msra.mxu0 0
    %6121 = vmatprep.subr.bf16.mxu0 0
    %6122 = vmatpush1.bf16.msra.mxu0 0
    %6123 = vmatprep.subr.bf16.mxu0 0
    %6124 = vmatpush1.bf16.msra.mxu0 0
    %6125 = vmatprep.mubr.bf16.mxu0 0
    %6126 = vmatmul.mubr.bf16.gmra.mrb[0].mxu0 %v1139
    %v6127 = vpop.f32.mrb[0].mxu0
    %v6128 = vadd.f32 %v6087, %v6127
    %v6129 = vpop.f32.mrb[0].mxu0
    %v6130 = vadd.f32 %v6089, %v6129
    %v6131 = vpop.f32.mrb[0].mxu0
    %v6132 = vpop.f32.mrb[0].mxu0
    %6133 = vdwg.mxu0
    %v6134 = vmax.f32 %v6128, 0.0
    %v6135 = vmax.f32 %v6130, 0.0
    %v6136 = vpack.c.bf16 %v6134, %v6134
    %v6137 = vpack.c.bf16 %v6135, %v6135
    %v6138 = vld [vmem:[%s3] sm:$0xf]
    %v6139 = vld [vmem:[%s3 + $0x4] sm:$0xf]
    %v6140 = vld [vmem:[%s3 + $0x8] sm:$0xf]
    %v6141 = vld [vmem:[%s3 + $0xc] sm:$0xf]
    %v6142 = vld [vmem:[%s3 + $0x10] sm:$0xf]
    %v6143 = vld [vmem:[%s3 + $0x14] sm:$0xf]
    %v6144 = vld [vmem:[%s3 + $0x18] sm:$0xf]
    %v6145 = vld [vmem:[%s3 + $0x1c] sm:$0xf]
    %v6146 = vld [vmem:[%s3 + $0x20] sm:$0xf]
    %v6147 = vld [vmem:[%s3 + $0x24] sm:$0xf]
    %v6148 = vld [vmem:[%s3 + $0x28] sm:$0xf]
    %v6149 = vld [vmem:[%s3 + $0x2c] sm:$0xf]
    %v6150 = vld [vmem:[%s3 + $0x30] sm:$0xf]
    %v6151 = vld [vmem:[%s3 + $0x34] sm:$0xf]
    %v6152 = vld [vmem:[%s3 + $0x38] sm:$0xf]
    %v6153 = vld [vmem:[%s3 + $0x3c] sm:$0xf]
    %v6154 = vld [vmem:[%s3 + $0x40] sm:$0xf]
    %v6155 = vld [vmem:[%s3 + $0x44] sm:$0xf]
    %v6156 = vld [vmem:[%s3 + $0x48] sm:$0xf]
    %v6157 = vld [vmem:[%s3 + $0x4c] sm:$0xf]
    %v6158 = vld [vmem:[%s3 + $0x50] sm:$0xf]
    %v6159 = vld [vmem:[%s3 + $0x54] sm:$0xf]
    %v6160 = vld [vmem:[%s3 + $0x58] sm:$0xf]
    %v6161 = vld [vmem:[%s3 + $0x5c] sm:$0xf]
    %v6162 = vld [vmem:[%s3 + $0x60] sm:$0xf]
    %v6163 = vld [vmem:[%s3 + $0x64] sm:$0xf]
    %v6164 = vld [vmem:[%s3 + $0x68] sm:$0xf]
    %v6165 = vld [vmem:[%s3 + $0x6c] sm:$0xf]
    %v6166 = vld [vmem:[%s3 + $0x70] sm:$0xf]
    %v6167 = vld [vmem:[%s3 + $0x74] sm:$0xf]
    %v6168 = vld [vmem:[%s3 + $0x78] sm:$0xf]
    %v6169 = vld [vmem:[%s3 + $0x7c] sm:$0xf]
    %v6170 = vld [vmem:[%s4] sm:$0x1]
    %v6172 = vlaneseq
    %v6173 = vshrl.u32 %v6172, 7
    %v6174 = vsub.s32 0, %v6173
    %v6175 = vrot.slane %v6170, %v6174
    %v6209 = vunpack.c.l.b16 %v6138
    %v6210 = vunpack.c.l.b16 %v6139
    %v6211 = vunpack.c.l.b16 %v6140
    %v6212 = vunpack.c.l.b16 %v6141
    %v6213 = vunpack.c.l.b16 %v6142
    %v6214 = vunpack.c.l.b16 %v6143
    %v6215 = vunpack.c.l.b16 %v6144
    %v6216 = vunpack.c.l.b16 %v6145
    %v6217 = vunpack.c.l.b16 %v6146
    %v6218 = vunpack.c.l.b16 %v6147
    %v6219 = vunpack.c.l.b16 %v6148
    %v6220 = vunpack.c.l.b16 %v6149
    %v6221 = vunpack.c.l.b16 %v6150
    %v6222 = vunpack.c.l.b16 %v6151
    %v6223 = vunpack.c.l.b16 %v6152
    %v6224 = vunpack.c.l.b16 %v6153
    %v6225 = vunpack.c.l.b16 %v6154
    %v6226 = vunpack.c.l.b16 %v6155
    %v6227 = vunpack.c.l.b16 %v6156
    %v6228 = vunpack.c.l.b16 %v6157
    %v6229 = vunpack.c.l.b16 %v6158
    %v6230 = vunpack.c.l.b16 %v6159
    %v6231 = vunpack.c.l.b16 %v6160
    %v6232 = vunpack.c.l.b16 %v6161
    %v6233 = vunpack.c.l.b16 %v6162
    %v6234 = vunpack.c.l.b16 %v6163
    %v6235 = vunpack.c.l.b16 %v6164
    %v6236 = vunpack.c.l.b16 %v6165
    %v6237 = vunpack.c.l.b16 %v6166
    %v6238 = vunpack.c.l.b16 %v6167
    %v6239 = vunpack.c.l.b16 %v6168
    %v6240 = vunpack.c.l.b16 %v6169
    %v6241 = vpack.c.b16 %v6210, %v6209
    %v6242 = vpack.c.b16 %v6212, %v6211
    %v6243 = vpack.c.b16 %v6214, %v6213
    %v6244 = vpack.c.b16 %v6216, %v6215
    %v6245 = vpack.c.b16 %v6218, %v6217
    %v6246 = vpack.c.b16 %v6220, %v6219
    %v6247 = vpack.c.b16 %v6222, %v6221
    %v6248 = vpack.c.b16 %v6224, %v6223
    %v6249 = vpack.c.b16 %v6226, %v6225
    %v6250 = vpack.c.b16 %v6228, %v6227
    %v6251 = vpack.c.b16 %v6230, %v6229
    %v6252 = vpack.c.b16 %v6232, %v6231
    %v6253 = vpack.c.b16 %v6234, %v6233
    %v6254 = vpack.c.b16 %v6236, %v6235
    %v6255 = vpack.c.b16 %v6238, %v6237
    %v6256 = vpack.c.b16 %v6240, %v6239
    %6273 = vmatprep.subr.bf16.mxu0 0
    %6274 = vmatpush1.bf16.msra.mxu0 %v6241
    %6275 = vmatprep.subr.bf16.mxu0 0
    %6276 = vmatpush1.bf16.msra.mxu0 %v6242
    %6277 = vmatprep.subr.bf16.mxu0 0
    %6278 = vmatpush1.bf16.msra.mxu0 %v6243
    %6279 = vmatprep.subr.bf16.mxu0 0
    %6280 = vmatpush1.bf16.msra.mxu0 %v6244
    %6281 = vmatprep.subr.bf16.mxu0 0
    %6282 = vmatpush1.bf16.msra.mxu0 %v6245
    %6283 = vmatprep.subr.bf16.mxu0 0
    %6284 = vmatpush1.bf16.msra.mxu0 %v6246
    %6285 = vmatprep.subr.bf16.mxu0 0
    %6286 = vmatpush1.bf16.msra.mxu0 %v6247
    %6287 = vmatprep.subr.bf16.mxu0 0
    %6288 = vmatpush1.bf16.msra.mxu0 %v6248
    %6289 = vmatprep.subr.bf16.mxu0 0
    %6290 = vmatpush1.bf16.msra.mxu0 %v6249
    %6291 = vmatprep.subr.bf16.mxu0 0
    %6292 = vmatpush1.bf16.msra.mxu0 %v6250
    %6293 = vmatprep.subr.bf16.mxu0 0
    %6294 = vmatpush1.bf16.msra.mxu0 %v6251
    %6295 = vmatprep.subr.bf16.mxu0 0
    %6296 = vmatpush1.bf16.msra.mxu0 %v6252
    %6297 = vmatprep.subr.bf16.mxu0 0
    %6298 = vmatpush1.bf16.msra.mxu0 %v6253
    %6299 = vmatprep.subr.bf16.mxu0 0
    %6300 = vmatpush1.bf16.msra.mxu0 %v6254
    %6301 = vmatprep.subr.bf16.mxu0 0
    %6302 = vmatpush1.bf16.msra.mxu0 %v6255
    %6303 = vmatprep.subr.bf16.mxu0 0
    %6304 = vmatpush1.bf16.msra.mxu0 %v6256
    %6305 = vmatprep.mubr.bf16.mxu0 %v6137
    %6306 = vmatmul.mubr.bf16.gmra.mrb[0].mxu0 %v6136
    %v6307 = vpop.f32.mrb[0].mxu0
    %v6308 = vadd.f32 %v6175, %v6307
    %v6309 = vpop.f32.mrb[0].mxu0
    %v6310 = vpop.f32.mrb[0].mxu0
    %v6311 = vpop.f32.mrb[0].mxu0
    %6312 = vdwg.mxu0
    %vm6313 = vcmask 25600
    %6314 = vst.msk [vmem:[#allocation2] sm:$0x3] %vm6313, %v6308
    // Predicated region
    $region22: #{qnetwork_forward.5} parent=1 // pred_check
      _
    $region23: #{qnetwork_forward.5} parent=1 // pred_check_branch
      %6316 = sbr.rel (0) target = $region25
    $region24: #{qnetwork_forward.5} parent=1 // pred_region
      %s6318 = ssub.s32 32, 32
      %6319 = vsyncadd [#allocation3], %s6318
      %s6321 = sshll.u32 [#allocation2], 4
      %s6322 = int_to_ptr.vmem [resolvable:$true] %s6321
      %6324 = dma.vmem_to_hbm [thread:$0]  %s6322, 32, %s5, [#allocation3]
    $region25: #{qnetwork_forward.5} parent=1 // pred_fallthru
      _
    // Predicated region
    $region26: #{qnetwork_forward.5} parent=1 // pred_check
      _
    $region27: #{qnetwork_forward.5} parent=1 // pred_check_branch
      %6326 = sbr.rel (0) target = $region29
    $region28: #{qnetwork_forward.5} parent=1 // pred_region
      %6327 = dma.done [#allocation3], 32
    $region29: #{qnetwork_forward.5} parent=1 // pred_fallthru
      _
    %6328 = vsyncpa [#allocation3], 1

</llo_original>
